<compile_context>
chip_gen: v7x
topology: tpu7x:2x2x1
jax: 0.10.0
libtpu: 0.0.40
codegen_flags: <defaults>
</compile_context>

<pallas_src>
import numpy as np

import jax
import jax.numpy as jnp
from jax import lax
from jax.experimental import pallas as pl
from jax.experimental.pallas import tpu as pltpu


# ----------------------------- static geometry -----------------------------
# conv1: 10x10 input padded to 12x12 (flat row stride WP1).
WP1, N1, L1, K1 = 12, 144, 118, 105   # padded width, padded rows, acc rows, pool rows
# conv2: 5x5 pooled input padded to 7x7.
WP2, N2, L2, K2 = 7, 49, 33, 25
# conv3: 4x4 pooled input padded to 6x6.
WP3, N3, L3, K3 = 6, 36, 22, 15

BT = 8            # images per grid step (fills the f32 sublane axis for FC GEMMs)
NOUT_PAD = 256    # fc3/fc4 output padded to a lane-dense 2-vreg width


def _selection_matrices():
    """Constant 0/1 matrices that (decimate +) re-pad between layers."""
    # input1 output (compact 10x10, stride 10) -> conv1 padded 12x12 flat
    r1 = np.zeros((N1, 100), np.float32)
    for h in range(10):
        for w in range(10):
            r1[(h + 1) * WP1 + (w + 1), h * 10 + w] = 1.0
    # pool1 (stride-2 decimation of the 4-way max, stride 12) -> conv2 padded 7x7
    r2 = np.zeros((N2, K1), np.float32)
    for ph in range(5):
        for pw in range(5):
            r2[(ph + 1) * WP2 + (pw + 1), (2 * ph) * WP1 + 2 * pw] = 1.0
    # pool2 (stride-1, stride 7) -> conv3 padded 6x6
    r3 = np.zeros((N3, K2), np.float32)
    for ph in range(4):
        for pw in range(4):
            r3[(ph + 1) * WP3 + (pw + 1), ph * WP2 + pw] = 1.0
    return r1, r2, r3


# -------------------------------- the kernel --------------------------------

def _fused_forward_kernel(
    patches_ref, res_ref,
    w_in1_ref, b_in1_ref,
    w_c1_ref, b_c1_ref,
    w_c2_ref, b_c2_ref,
    w_c3_ref, b_c3_ref,
    r1_ref, r2_ref, r3_ref, m2_ref,
    w_fc1_ref, b_fc1_ref,
    w_fc2_ref, b_fc2_ref,
    w_fc3_ref, w_fc4_ref, b_fc34_ref,
    out_ref,
    x1s, x2s, x3s, feats,
):
    f32 = jnp.float32

    def mm(a, b):
        return jnp.dot(a, b, preferred_element_type=f32)

    def conv3x3(x_ref, w_ref, b_ref, wp, acc_rows):
        """9 tap matmuls over the flat padded layout (row stride `wp`)."""
        acc = None
        for dh in range(3):
            for dw in range(3):
                off = dh * wp + dw
                t = mm(x_ref[off:off + acc_rows, :], w_ref[dh, dw])
                acc = t if acc is None else acc + t
        return acc + b_ref[...]

    def pool2x2_max(o, wp, k_rows):
        """max over the 2x2 window starting at every flat position (value slices)."""
        return jnp.maximum(
            jnp.maximum(o[0:k_rows, :], o[1:k_rows + 1, :]),
            jnp.maximum(o[wp:wp + k_rows, :], o[wp + 1:wp + 1 + k_rows, :]),
        )

    # --------------- per-image conv pipeline over the batch tile -------------
    def image_body(b, carry):
        # input1 (3x3, s2, p1, Cin=1) as a patch matmul, then sigmoid
        s0 = jax.nn.sigmoid(mm(patches_ref[b], w_in1_ref[...]) + b_in1_ref[...])   # (100,32)
        # scatter into conv1's zero-padded 12x12 flat buffer
        x1s[...] = mm(r1_ref[...], s0)                                             # (144,32)

        # conv1 (value accumulator), pool1 (2x2,s2): decimate first, sigmoid the
        # 49 surviving rows, re-zero pad rows (sigmoid(0)=0.5) with the 0/1 mask.
        o1 = conv3x3(x1s, w_c1_ref, b_c1_ref, WP1, L1)                             # (118,64)
        d1 = mm(r2_ref[...], pool2x2_max(o1, WP1, K1))                             # (49,64)
        x2s[...] = m2_ref[...] * jax.nn.sigmoid(d1)

        # conv2, pool2 (2x2,s1) + sigmoid, re-pad via R3
        o2 = conv3x3(x2s, w_c2_ref, b_c2_ref, WP2, L2)                             # (33,128)
        x3s[...] = mm(r3_ref[...], jax.nn.sigmoid(pool2x2_max(o2, WP2, K2)))       # (36,128)

        # conv3, pool3 (2x2,s1); sigmoid only the 9 selected 3x3 rows and
        # scatter them into the batched feature buffer feats[tap, image, chan].
        o3 = conv3x3(x3s, w_c3_ref, b_c3_ref, WP3, L3)                             # (22,128)
        p3 = pool2x2_max(o3, WP3, K3)                                              # (15,128)
        for g in range(3):
            blk = jax.nn.sigmoid(p3[g * WP3:g * WP3 + 3, :])                       # (3,128)
            for k in range(3):
                feats[3 * g + k, pl.ds(b, 1), :] = blk[k:k + 1, :]
        return carry

    lax.fori_loop(0, BT, image_body, 0)

    # --------------------- batched FC head (M = BT) ---------------------------
    # fc1: 9 spatial-tap matmuls, w_fc1 pre-permuted to (9, 128, 640)
    h = None
    for p in range(9):
        t = mm(feats[p], w_fc1_ref[p])                                             # (BT,640)
        h = t if h is None else h + t
    h = jnp.maximum(h + b_fc1_ref[...], 0.0)                                       # relu
    h = jnp.maximum(mm(h, w_fc2_ref[...]) + b_fc2_ref[...], 0.0)                   # (BT,448)

    # fc3 + fc4 residual head with folded bias, lane-dense padded output
    y = mm(h, w_fc3_ref[...]) + mm(res_ref[...], w_fc4_ref[...]) + b_fc34_ref[...]
    out_ref[...] = jax.nn.sigmoid(y)                                               # (BT,256)


# --------------------------------- wrapper ----------------------------------

def forward(params, x_nchw):
    B = x_nchw.shape[0]
    f32 = jnp.float32
    x = x_nchw.reshape(B, 20, 20).astype(f32)
    res = x_nchw.reshape(B, 400).astype(f32)          # NCHW flatten (C=1)

    # Tiny wrapper-side im2col for the first conv only (Cin=1, stride 2): (B,100,9)
    xp = jnp.pad(x, ((0, 0), (1, 1), (1, 1)))
    cols = [xp[:, dh:dh + 20:2, dw:dw + 20:2] for dh in range(3) for dw in range(3)]
    patches = jnp.stack(cols, axis=-1).reshape(B, 100, 9)

    # Pad the batch up to a multiple of the batch tile.
    Bp = ((B + BT - 1) // BT) * BT
    if Bp != B:
        patches = jnp.pad(patches, ((0, Bp - B), (0, 0), (0, 0)))
        res = jnp.pad(res, ((0, Bp - B), (0, 0)))

    # Trace-time weight relayouts: fold Cin=1 of input1; permute fc1 rows from
    # torch's C,H,W flatten order to per-spatial-position taps; fold fc3/fc4
    # biases and zero-pad their output dim to 256 lanes.
    w_in1 = params["w_in1"].reshape(9, 32)
    w_fc1 = params["w_fc1"].reshape(128, 9, 640).transpose(1, 0, 2)      # (9,128,640)
    w_fc3p = jnp.zeros((448, NOUT_PAD), f32).at[:, :200].set(params["w_fc3"])
    w_fc4p = jnp.zeros((400, NOUT_PAD), f32).at[:, :200].set(params["w_fc4"])
    b_fc34 = jnp.zeros((1, NOUT_PAD), f32).at[:, :200].set(
        (params["b_fc3"] + params["b_fc4"]).reshape(1, 200))

    r1, r2, r3 = _selection_matrices()
    m2 = r2.sum(axis=1, keepdims=True)                                   # (49,1) 0/1 row mask

    def b2(v):
        return v.reshape(1, -1)

    inputs = (
        patches, res,
        w_in1, b2(params["b_in1"]),
        params["w_c1"], b2(params["b_c1"]),
        params["w_c2"], b2(params["b_c2"]),
        params["w_c3"], b2(params["b_c3"]),
        r1, r2, r3, m2,
        w_fc1, b2(params["b_fc1"]),
        params["w_fc2"], b2(params["b_fc2"]),
        w_fc3p, w_fc4p, b_fc34,
    )

    def batch_spec(tail):
        zeros = (0,) * len(tail)
        return pl.BlockSpec((BT,) + tail, lambda g, _z=zeros: (g,) + _z)

    def const_spec(arr):
        zeros = (0,) * arr.ndim
        return pl.BlockSpec(tuple(arr.shape), lambda g, _z=zeros: _z)

    in_specs = [batch_spec((100, 9)), batch_spec((400,))]
    in_specs += [const_spec(a) for a in inputs[2:]]

    out = pl.pallas_call(
        _fused_forward_kernel,
        grid=(Bp // BT,),
        out_shape=jax.ShapeDtypeStruct((Bp, NOUT_PAD), f32),
        in_specs=in_specs,
        out_specs=batch_spec((NOUT_PAD,)),
        scratch_shapes=[
            pltpu.VMEM((N1, 32), f32),       # x1s: conv1 padded input (12x12 flat)
            pltpu.VMEM((N2, 64), f32),       # x2s: conv2 padded input (7x7 flat)
            pltpu.VMEM((N3, 128), f32),      # x3s: conv3 padded input (6x6 flat)
            pltpu.VMEM((9, BT, 128), f32),   # feats: batched 3x3x128 pooled features
        ],
        compiler_params=pltpu.CompilerParams(
            dimension_semantics=("parallel",),       # batch tiles across TCs on v7x
            vmem_limit_bytes=32 * 1024 * 1024,
        ),
    )(*inputs)
    return out[:B, :200].reshape(B, 100, 2)


# ------------------------------- parameters ---------------------------------

def init_params(key):
    def uni(k, fan_in, shape):
        scale = 1.0 / jnp.sqrt(jnp.float32(fan_in))
        return jax.random.uniform(k, shape, jnp.float32, -1.0, 1.0) * scale

    ks = jax.random.split(key, 18)
    p = {}
    p["w_in1"] = uni(ks[0], 1 * 9, (3, 3, 1, 32));      p["b_in1"] = uni(ks[1], 1 * 9, (32,))
    p["w_c1"] = uni(ks[2], 32 * 9, (3, 3, 32, 64));     p["b_c1"] = uni(ks[3], 32 * 9, (64,))
    p["w_c2"] = uni(ks[4], 64 * 9, (3, 3, 64, 128));    p["b_c2"] = uni(ks[5], 64 * 9, (128,))
    p["w_c3"] = uni(ks[6], 128 * 9, (3, 3, 128, 128));  p["b_c3"] = uni(ks[7], 128 * 9, (128,))
    p["w_fc1"] = uni(ks[8], 1152, (1152, 640));         p["b_fc1"] = uni(ks[9], 1152, (640,))
    p["w_fc2"] = uni(ks[10], 640, (640, 448));          p["b_fc2"] = uni(ks[11], 640, (448,))
    p["w_fc3"] = uni(ks[12], 448, (448, 200));          p["b_fc3"] = uni(ks[13], 448, (200,))
    p["w_fc4"] = uni(ks[14], 400, (400, 200));          p["b_fc4"] = uni(ks[15], 400, (200,))
    return p


# --------------------------- pure-JAX reference ------------------------------

def reference_forward(params, x_nchw):
    B = x_nchw.shape[0]
    res = x_nchw.reshape(B, -1)
    x = jnp.transpose(x_nchw, (0, 2, 3, 1))
    dn = ("NHWC", "HWIO", "NHWC")

    def conv(x, w, b, stride, pad):
        y = lax.conv_general_dilated(x, w, (stride, stride),
                                     [(pad, pad), (pad, pad)],
                                     dimension_numbers=dn)
        return y + b.reshape(1, 1, 1, -1)

    def pool(x, stride):
        return lax.reduce_window(x, -jnp.inf, lax.max,
                                 (1, 2, 2, 1), (1, stride, stride, 1), "VALID")

    x = jax.nn.sigmoid(conv(x, params["w_in1"], params["b_in1"], 2, 1))
    x = conv(x, params["w_c1"], params["b_c1"], 1, 1)
    x = jax.nn.sigmoid(pool(x, 2))
    x = conv(x, params["w_c2"], params["b_c2"], 1, 1)
    x = jax.nn.sigmoid(pool(x, 1))
    x = conv(x, params["w_c3"], params["b_c3"], 1, 1)
    x = jax.nn.sigmoid(pool(x, 1))
    xf = jnp.transpose(x, (0, 3, 1, 2)).reshape(B, -1)   # C,H,W flatten, like torch
    h = jax.nn.relu(xf @ params["w_fc1"] + params["b_fc1"])
    h = jax.nn.relu(h @ params["w_fc2"] + params["b_fc2"])
    y = h @ params["w_fc3"] + params["b_fc3"]
    r = res @ params["w_fc4"] + params["b_fc4"]
    return jax.nn.sigmoid(y + r).reshape(B, 100, 2)


if __name__ == "__main__":
    key = jax.random.PRNGKey(0)
    kx, kp = jax.random.split(key)
    B = 2
    x = jax.random.normal(kx, (B, 1, 20, 20), dtype=jnp.float32)
    params = init_params(kp)

    out = jax.block_until_ready(jax.jit(forward)(params, x))
    assert out.shape == (B, 100, 2), out.shape

    ref = jax.block_until_ready(reference_forward(params, x))
    err = float(jnp.max(jnp.abs(out - ref)))
    assert jnp.allclose(out, ref, atol=3e-5, rtol=3e-5), err

    print("KERNEL_OK")
</pallas_src>

<mosaic_0001>
module attributes {stable_mosaic.version = 11 : i64} {
  func.func @_fused_forward_kernel(%arg0: i32, %arg1: memref<8x100x9xf32, #tpu.memory_space<vmem>>, %arg2: memref<8x400xf32, #tpu.memory_space<vmem>>, %arg3: memref<9x32xf32, #tpu.memory_space<vmem>>, %arg4: memref<1x32xf32, #tpu.memory_space<vmem>>, %arg5: memref<3x3x32x64xf32, #tpu.memory_space<vmem>>, %arg6: memref<1x64xf32, #tpu.memory_space<vmem>>, %arg7: memref<3x3x64x128xf32, #tpu.memory_space<vmem>>, %arg8: memref<1x128xf32, #tpu.memory_space<vmem>>, %arg9: memref<3x3x128x128xf32, #tpu.memory_space<vmem>>, %arg10: memref<1x128xf32, #tpu.memory_space<vmem>>, %arg11: memref<144x100xf32, #tpu.memory_space<vmem>>, %arg12: memref<49x105xf32, #tpu.memory_space<vmem>>, %arg13: memref<36x25xf32, #tpu.memory_space<vmem>>, %arg14: memref<49x1xf32, #tpu.memory_space<vmem>>, %arg15: memref<9x128x640xf32, #tpu.memory_space<vmem>>, %arg16: memref<1x640xf32, #tpu.memory_space<vmem>>, %arg17: memref<640x448xf32, #tpu.memory_space<vmem>>, %arg18: memref<1x448xf32, #tpu.memory_space<vmem>>, %arg19: memref<448x256xf32, #tpu.memory_space<vmem>>, %arg20: memref<400x256xf32, #tpu.memory_space<vmem>>, %arg21: memref<1x256xf32, #tpu.memory_space<vmem>>, %arg22: memref<8x256xf32, #tpu.memory_space<vmem>>, %arg23: memref<144x32xf32, #tpu.memory_space<vmem>>, %arg24: memref<49x64xf32, #tpu.memory_space<vmem>>, %arg25: memref<36x128xf32, #tpu.memory_space<vmem>>, %arg26: memref<9x8x128xf32, #tpu.memory_space<vmem>>) attributes {dimension_semantics = [#tpu.dimension_semantics<parallel>], iteration_bounds = array<i64: 1>, scalar_prefetch = 0 : i64, scratch_operands = 4 : i64, tpu.core_type = #tpu.core_type<tc>, window_params = [{transform_indices = @transform_0, window_bounds = array<i64: 8, 100, 9>}, {transform_indices = @transform_1, window_bounds = array<i64: 8, 400>}, {pipeline_mode = #tpu.pipeline_mode<synchronous>, transform_indices = @transform_2, window_bounds = array<i64: 9, 32>}, {pipeline_mode = #tpu.pipeline_mode<synchronous>, transform_indices = @transform_3, window_bounds = array<i64: 1, 32>}, {pipeline_mode = #tpu.pipeline_mode<synchronous>, transform_indices = @transform_4, window_bounds = array<i64: 3, 3, 32, 64>}, {pipeline_mode = #tpu.pipeline_mode<synchronous>, transform_indices = @transform_5, window_bounds = array<i64: 1, 64>}, {pipeline_mode = #tpu.pipeline_mode<synchronous>, transform_indices = @transform_6, window_bounds = array<i64: 3, 3, 64, 128>}, {pipeline_mode = #tpu.pipeline_mode<synchronous>, transform_indices = @transform_7, window_bounds = array<i64: 1, 128>}, {pipeline_mode = #tpu.pipeline_mode<synchronous>, transform_indices = @transform_8, window_bounds = array<i64: 3, 3, 128, 128>}, {pipeline_mode = #tpu.pipeline_mode<synchronous>, transform_indices = @transform_9, window_bounds = array<i64: 1, 128>}, {pipeline_mode = #tpu.pipeline_mode<synchronous>, transform_indices = @transform_10, window_bounds = array<i64: 144, 100>}, {pipeline_mode = #tpu.pipeline_mode<synchronous>, transform_indices = @transform_11, window_bounds = array<i64: 49, 105>}, {pipeline_mode = #tpu.pipeline_mode<synchronous>, transform_indices = @transform_12, window_bounds = array<i64: 36, 25>}, {pipeline_mode = #tpu.pipeline_mode<synchronous>, transform_indices = @transform_13, window_bounds = array<i64: 49, 1>}, {pipeline_mode = #tpu.pipeline_mode<synchronous>, transform_indices = @transform_14, window_bounds = array<i64: 9, 128, 640>}, {pipeline_mode = #tpu.pipeline_mode<synchronous>, transform_indices = @transform_15, window_bounds = array<i64: 1, 640>}, {pipeline_mode = #tpu.pipeline_mode<synchronous>, transform_indices = @transform_16, window_bounds = array<i64: 640, 448>}, {pipeline_mode = #tpu.pipeline_mode<synchronous>, transform_indices = @transform_17, window_bounds = array<i64: 1, 448>}, {pipeline_mode = #tpu.pipeline_mode<synchronous>, transform_indices = @transform_18, window_bounds = array<i64: 448, 256>}, {pipeline_mode = #tpu.pipeline_mode<synchronous>, transform_indices = @transform_19, window_bounds = array<i64: 400, 256>}, {pipeline_mode = #tpu.pipeline_mode<synchronous>, transform_indices = @transform_20, window_bounds = array<i64: 1, 256>}, {transform_indices = @transform_21, window_bounds = array<i64: 8, 256>}]} {
    %c0_i32 = arith.constant 0 : i32
    %c8_i32 = arith.constant 8 : i32
    %0 = arith.addi %c0_i32, %c8_i32 : i32
    %c1_i32 = arith.constant 1 : i32
    scf.for %arg27 = %c0_i32 to %0 step %c1_i32  : i32 {
      %81 = arith.index_cast %arg27 : i32 to index
      %c0_76 = arith.constant 0 : index
      %c0_77 = arith.constant 0 : index
      %82 = vector.load %arg1[%81, %c0_76, %c0_77] : memref<8x100x9xf32, #tpu.memory_space<vmem>>, vector<1x100x9xf32>
      %83 = vector.shape_cast %82 : vector<1x100x9xf32> to vector<100x9xf32>
      %c0_78 = arith.constant 0 : index
      %c0_79 = arith.constant 0 : index
      %84 = vector.load %arg3[%c0_78, %c0_79] : memref<9x32xf32, #tpu.memory_space<vmem>>, vector<9x32xf32>
      %cst_80 = arith.constant dense<0.000000e+00> : vector<100x32xf32>
      %85 = tpu.matmul %83, %84, %cst_80 {dimension_numbers = #tpu.dot_dimension_numbers<[1], [0], [0], [1], [0, 0, 1, 1], [], []>} : vector<100x9xf32>, vector<9x32xf32>, vector<100x32xf32> -> vector<100x32xf32>
      %c0_81 = arith.constant 0 : index
      %c0_82 = arith.constant 0 : index
      %86 = vector.load %arg4[%c0_81, %c0_82] : memref<1x32xf32, #tpu.memory_space<vmem>>, vector<1x32xf32>
      %87 = vector.broadcast %86 : vector<1x32xf32> to vector<100x32xf32>
      %88 = arith.addf %85, %87 : vector<100x32xf32>
      %89 = arith.negf %88 : vector<100x32xf32>
      %90 = math.exp %89 : vector<100x32xf32>
      %cst_83 = arith.constant 1.000000e+00 : f32
      %91 = vector.broadcast %cst_83 : f32 to vector<100x32xf32>
      %92 = arith.addf %91, %90 : vector<100x32xf32>
      %93 = arith.divf %91, %92 : vector<100x32xf32>
      %c0_84 = arith.constant 0 : index
      %c0_85 = arith.constant 0 : index
      %94 = vector.load %arg11[%c0_84, %c0_85] : memref<144x100xf32, #tpu.memory_space<vmem>>, vector<144x100xf32>
      %cst_86 = arith.constant dense<0.000000e+00> : vector<144x32xf32>
      %95 = tpu.matmul %94, %93, %cst_86 {dimension_numbers = #tpu.dot_dimension_numbers<[1], [0], [0], [1], [0, 0, 1, 1], [], []>} : vector<144x100xf32>, vector<100x32xf32>, vector<144x32xf32> -> vector<144x32xf32>
      %c0_87 = arith.constant 0 : index
      %c0_88 = arith.constant 0 : index
      %96 = vector.load %arg23[%c0_87, %c0_88] : memref<144x32xf32, #tpu.memory_space<vmem>>, vector<144x32xf32>
      tpu.vector_store %arg23[%c0_87, %c0_88], %95 {strides = array<i32>} : memref<144x32xf32, #tpu.memory_space<vmem>>, vector<144x32xf32>,
      %c0_89 = arith.constant 0 : index
      %c0_90 = arith.constant 0 : index
      %97 = vector.load %arg23[%c0_89, %c0_90] : memref<144x32xf32, #tpu.memory_space<vmem>>, vector<118x32xf32>
      %c0_91 = arith.constant 0 : index
      %c0_92 = arith.constant 0 : index
      %c0_93 = arith.constant 0 : index
      %c0_94 = arith.constant 0 : index
      %98 = vector.load %arg5[%c0_91, %c0_92, %c0_93, %c0_94] : memref<3x3x32x64xf32, #tpu.memory_space<vmem>>, vector<1x1x32x64xf32>
      %99 = vector.shape_cast %98 : vector<1x1x32x64xf32> to vector<32x64xf32>
      %cst_95 = arith.constant dense<0.000000e+00> : vector<118x64xf32>
      %100 = tpu.matmul %97, %99, %cst_95 {dimension_numbers = #tpu.dot_dimension_numbers<[1], [0], [0], [1], [0, 0, 1, 1], [], []>} : vector<118x32xf32>, vector<32x64xf32>, vector<118x64xf32> -> vector<118x64xf32>
      %c1_96 = arith.constant 1 : index
      %c0_97 = arith.constant 0 : index
      %101 = vector.load %arg23[%c1_96, %c0_97] : memref<144x32xf32, #tpu.memory_space<vmem>>, vector<118x32xf32>
      %c0_98 = arith.constant 0 : index
      %c1_99 = arith.constant 1 : index
      %c0_100 = arith.constant 0 : index
      %c0_101 = arith.constant 0 : index
      %102 = vector.load %arg5[%c0_98, %c1_99, %c0_100, %c0_101] : memref<3x3x32x64xf32, #tpu.memory_space<vmem>>, vector<1x1x32x64xf32>
      %103 = vector.shape_cast %102 : vector<1x1x32x64xf32> to vector<32x64xf32>
      %cst_102 = arith.constant dense<0.000000e+00> : vector<118x64xf32>
      %104 = tpu.matmul %101, %103, %cst_102 {dimension_numbers = #tpu.dot_dimension_numbers<[1], [0], [0], [1], [0, 0, 1, 1], [], []>} : vector<118x32xf32>, vector<32x64xf32>, vector<118x64xf32> -> vector<118x64xf32>
      %105 = arith.addf %100, %104 : vector<118x64xf32>
      %c2_103 = arith.constant 2 : index
      %c0_104 = arith.constant 0 : index
      %106 = vector.load %arg23[%c2_103, %c0_104] : memref<144x32xf32, #tpu.memory_space<vmem>>, vector<118x32xf32>
      %c0_105 = arith.constant 0 : index
      %c2_106 = arith.constant 2 : index
      %c0_107 = arith.constant 0 : index
      %c0_108 = arith.constant 0 : index
      %107 = vector.load %arg5[%c0_105, %c2_106, %c0_107, %c0_108] : memref<3x3x32x64xf32, #tpu.memory_space<vmem>>, vector<1x1x32x64xf32>
      %108 = vector.shape_cast %107 : vector<1x1x32x64xf32> to vector<32x64xf32>
      %cst_109 = arith.constant dense<0.000000e+00> : vector<118x64xf32>
      %109 = tpu.matmul %106, %108, %cst_109 {dimension_numbers = #tpu.dot_dimension_numbers<[1], [0], [0], [1], [0, 0, 1, 1], [], []>} : vector<118x32xf32>, vector<32x64xf32>, vector<118x64xf32> -> vector<118x64xf32>
      %110 = arith.addf %105, %109 : vector<118x64xf32>
      %c12 = arith.constant 12 : index
      %c0_110 = arith.constant 0 : index
      %111 = vector.load %arg23[%c12, %c0_110] : memref<144x32xf32, #tpu.memory_space<vmem>>, vector<118x32xf32>
      %c1_111 = arith.constant 1 : index
      %c0_112 = arith.constant 0 : index
      %c0_113 = arith.constant 0 : index
      %c0_114 = arith.constant 0 : index
      %112 = vector.load %arg5[%c1_111, %c0_112, %c0_113, %c0_114] : memref<3x3x32x64xf32, #tpu.memory_space<vmem>>, vector<1x1x32x64xf32>
      %113 = vector.shape_cast %112 : vector<1x1x32x64xf32> to vector<32x64xf32>
      %cst_115 = arith.constant dense<0.000000e+00> : vector<118x64xf32>
      %114 = tpu.matmul %111, %113, %cst_115 {dimension_numbers = #tpu.dot_dimension_numbers<[1], [0], [0], [1], [0, 0, 1, 1], [], []>} : vector<118x32xf32>, vector<32x64xf32>, vector<118x64xf32> -> vector<118x64xf32>
      %115 = arith.addf %110, %114 : vector<118x64xf32>
      %c13 = arith.constant 13 : index
      %c0_116 = arith.constant 0 : index
      %116 = vector.load %arg23[%c13, %c0_116] : memref<144x32xf32, #tpu.memory_space<vmem>>, vector<118x32xf32>
      %c1_117 = arith.constant 1 : index
      %c1_118 = arith.constant 1 : index
      %c0_119 = arith.constant 0 : index
      %c0_120 = arith.constant 0 : index
      %117 = vector.load %arg5[%c1_117, %c1_118, %c0_119, %c0_120] : memref<3x3x32x64xf32, #tpu.memory_space<vmem>>, vector<1x1x32x64xf32>
      %118 = vector.shape_cast %117 : vector<1x1x32x64xf32> to vector<32x64xf32>
      %cst_121 = arith.constant dense<0.000000e+00> : vector<118x64xf32>
      %119 = tpu.matmul %116, %118, %cst_121 {dimension_numbers = #tpu.dot_dimension_numbers<[1], [0], [0], [1], [0, 0, 1, 1], [], []>} : vector<118x32xf32>, vector<32x64xf32>, vector<118x64xf32> -> vector<118x64xf32>
      %120 = arith.addf %115, %119 : vector<118x64xf32>
      %c14 = arith.constant 14 : index
      %c0_122 = arith.constant 0 : index
      %121 = vector.load %arg23[%c14, %c0_122] : memref<144x32xf32, #tpu.memory_space<vmem>>, vector<118x32xf32>
      %c1_123 = arith.constant 1 : index
      %c2_124 = arith.constant 2 : index
      %c0_125 = arith.constant 0 : index
      %c0_126 = arith.constant 0 : index
      %122 = vector.load %arg5[%c1_123, %c2_124, %c0_125, %c0_126] : memref<3x3x32x64xf32, #tpu.memory_space<vmem>>, vector<1x1x32x64xf32>
      %123 = vector.shape_cast %122 : vector<1x1x32x64xf32> to vector<32x64xf32>
      %cst_127 = arith.constant dense<0.000000e+00> : vector<118x64xf32>
      %124 = tpu.matmul %121, %123, %cst_127 {dimension_numbers = #tpu.dot_dimension_numbers<[1], [0], [0], [1], [0, 0, 1, 1], [], []>} : vector<118x32xf32>, vector<32x64xf32>, vector<118x64xf32> -> vector<118x64xf32>
      %125 = arith.addf %120, %124 : vector<118x64xf32>
      %c24 = arith.constant 24 : index
      %c0_128 = arith.constant 0 : index
      %126 = vector.load %arg23[%c24, %c0_128] : memref<144x32xf32, #tpu.memory_space<vmem>>, vector<118x32xf32>
      %c2_129 = arith.constant 2 : index
      %c0_130 = arith.constant 0 : index
      %c0_131 = arith.constant 0 : index
      %c0_132 = arith.constant 0 : index
      %127 = vector.load %arg5[%c2_129, %c0_130, %c0_131, %c0_132] : memref<3x3x32x64xf32, #tpu.memory_space<vmem>>, vector<1x1x32x64xf32>
      %128 = vector.shape_cast %127 : vector<1x1x32x64xf32> to vector<32x64xf32>
      %cst_133 = arith.constant dense<0.000000e+00> : vector<118x64xf32>
      %129 = tpu.matmul %126, %128, %cst_133 {dimension_numbers = #tpu.dot_dimension_numbers<[1], [0], [0], [1], [0, 0, 1, 1], [], []>} : vector<118x32xf32>, vector<32x64xf32>, vector<118x64xf32> -> vector<118x64xf32>
      %130 = arith.addf %125, %129 : vector<118x64xf32>
      %c25 = arith.constant 25 : index
      %c0_134 = arith.constant 0 : index
      %131 = vector.load %arg23[%c25, %c0_134] : memref<144x32xf32, #tpu.memory_space<vmem>>, vector<118x32xf32>
      %c2_135 = arith.constant 2 : index
      %c1_136 = arith.constant 1 : index
      %c0_137 = arith.constant 0 : index
      %c0_138 = arith.constant 0 : index
      %132 = vector.load %arg5[%c2_135, %c1_136, %c0_137, %c0_138] : memref<3x3x32x64xf32, #tpu.memory_space<vmem>>, vector<1x1x32x64xf32>
      %133 = vector.shape_cast %132 : vector<1x1x32x64xf32> to vector<32x64xf32>
      %cst_139 = arith.constant dense<0.000000e+00> : vector<118x64xf32>
      %134 = tpu.matmul %131, %133, %cst_139 {dimension_numbers = #tpu.dot_dimension_numbers<[1], [0], [0], [1], [0, 0, 1, 1], [], []>} : vector<118x32xf32>, vector<32x64xf32>, vector<118x64xf32> -> vector<118x64xf32>
      %135 = arith.addf %130, %134 : vector<118x64xf32>
      %c26 = arith.constant 26 : index
      %c0_140 = arith.constant 0 : index
      %136 = vector.load %arg23[%c26, %c0_140] : memref<144x32xf32, #tpu.memory_space<vmem>>, vector<118x32xf32>
      %c2_141 = arith.constant 2 : index
      %c2_142 = arith.constant 2 : index
      %c0_143 = arith.constant 0 : index
      %c0_144 = arith.constant 0 : index
      %137 = vector.load %arg5[%c2_141, %c2_142, %c0_143, %c0_144] : memref<3x3x32x64xf32, #tpu.memory_space<vmem>>, vector<1x1x32x64xf32>
      %138 = vector.shape_cast %137 : vector<1x1x32x64xf32> to vector<32x64xf32>
      %cst_145 = arith.constant dense<0.000000e+00> : vector<118x64xf32>
      %139 = tpu.matmul %136, %138, %cst_145 {dimension_numbers = #tpu.dot_dimension_numbers<[1], [0], [0], [1], [0, 0, 1, 1], [], []>} : vector<118x32xf32>, vector<32x64xf32>, vector<118x64xf32> -> vector<118x64xf32>
      %140 = arith.addf %135, %139 : vector<118x64xf32>
      %c0_146 = arith.constant 0 : index
      %c0_147 = arith.constant 0 : index
      %141 = vector.load %arg6[%c0_146, %c0_147] : memref<1x64xf32, #tpu.memory_space<vmem>>, vector<1x64xf32>
      %142 = vector.broadcast %141 : vector<1x64xf32> to vector<118x64xf32>
      %143 = arith.addf %140, %142 : vector<118x64xf32>
      %c0_148 = arith.constant 0 : index
      %c0_149 = arith.constant 0 : index
      %144 = vector.load %arg12[%c0_148, %c0_149] : memref<49x105xf32, #tpu.memory_space<vmem>>, vector<49x105xf32>
      %145 = vector.extract_strided_slice %143 {offsets = [0, 0], sizes = [105, 64], strides = [1, 1]} : vector<118x64xf32> to vector<105x64xf32>
      %146 = vector.extract_strided_slice %143 {offsets = [1, 0], sizes = [105, 64], strides = [1, 1]} : vector<118x64xf32> to vector<105x64xf32>
      %147 = arith.maximumf %145, %146 : vector<105x64xf32>
      %148 = vector.extract_strided_slice %143 {offsets = [12, 0], sizes = [105, 64], strides = [1, 1]} : vector<118x64xf32> to vector<105x64xf32>
      %149 = vector.extract_strided_slice %143 {offsets = [13, 0], sizes = [105, 64], strides = [1, 1]} : vector<118x64xf32> to vector<105x64xf32>
      %150 = arith.maximumf %148, %149 : vector<105x64xf32>
      %151 = arith.maximumf %147, %150 : vector<105x64xf32>
      %cst_150 = arith.constant dense<0.000000e+00> : vector<49x64xf32>
      %152 = tpu.matmul %144, %151, %cst_150 {dimension_numbers = #tpu.dot_dimension_numbers<[1], [0], [0], [1], [0, 0, 1, 1], [], []>} : vector<49x105xf32>, vector<105x64xf32>, vector<49x64xf32> -> vector<49x64xf32>
      %c0_151 = arith.constant 0 : index
      %c0_152 = arith.constant 0 : index
      %153 = vector.load %arg14[%c0_151, %c0_152] : memref<49x1xf32, #tpu.memory_space<vmem>>, vector<49x1xf32>
      %154 = arith.negf %152 : vector<49x64xf32>
      %155 = math.exp %154 : vector<49x64xf32>
      %cst_153 = arith.constant 1.000000e+00 : f32
      %156 = vector.broadcast %cst_153 : f32 to vector<49x64xf32>
      %157 = arith.addf %156, %155 : vector<49x64xf32>
      %158 = arith.divf %156, %157 : vector<49x64xf32>
      %159 = vector.broadcast %153 : vector<49x1xf32> to vector<49x64xf32>
      %160 = arith.mulf %159, %158 : vector<49x64xf32>
      %c0_154 = arith.constant 0 : index
      %c0_155 = arith.constant 0 : index
      %161 = vector.load %arg24[%c0_154, %c0_155] : memref<49x64xf32, #tpu.memory_space<vmem>>, vector<49x64xf32>
      tpu.vector_store %arg24[%c0_154, %c0_155], %160 {strides = array<i32>} : memref<49x64xf32, #tpu.memory_space<vmem>>, vector<49x64xf32>,
      %c0_156 = arith.constant 0 : index
      %c0_157 = arith.constant 0 : index
      %162 = vector.load %arg24[%c0_156, %c0_157] : memref<49x64xf32, #tpu.memory_space<vmem>>, vector<33x64xf32>
      %c0_158 = arith.constant 0 : index
      %c0_159 = arith.constant 0 : index
      %c0_160 = arith.constant 0 : index
      %c0_161 = arith.constant 0 : index
      %163 = vector.load %arg7[%c0_158, %c0_159, %c0_160, %c0_161] : memref<3x3x64x128xf32, #tpu.memory_space<vmem>>, vector<1x1x64x128xf32>
      %164 = vector.shape_cast %163 : vector<1x1x64x128xf32> to vector<64x128xf32>
      %cst_162 = arith.constant dense<0.000000e+00> : vector<33x128xf32>
      %165 = tpu.matmul %162, %164, %cst_162 {dimension_numbers = #tpu.dot_dimension_numbers<[1], [0], [0], [1], [0, 0, 1, 1], [], []>} : vector<33x64xf32>, vector<64x128xf32>, vector<33x128xf32> -> vector<33x128xf32>
      %c1_163 = arith.constant 1 : index
      %c0_164 = arith.constant 0 : index
      %166 = vector.load %arg24[%c1_163, %c0_164] : memref<49x64xf32, #tpu.memory_space<vmem>>, vector<33x64xf32>
      %c0_165 = arith.constant 0 : index
      %c1_166 = arith.constant 1 : index
      %c0_167 = arith.constant 0 : index
      %c0_168 = arith.constant 0 : index
      %167 = vector.load %arg7[%c0_165, %c1_166, %c0_167, %c0_168] : memref<3x3x64x128xf32, #tpu.memory_space<vmem>>, vector<1x1x64x128xf32>
      %168 = vector.shape_cast %167 : vector<1x1x64x128xf32> to vector<64x128xf32>
      %cst_169 = arith.constant dense<0.000000e+00> : vector<33x128xf32>
      %169 = tpu.matmul %166, %168, %cst_169 {dimension_numbers = #tpu.dot_dimension_numbers<[1], [0], [0], [1], [0, 0, 1, 1], [], []>} : vector<33x64xf32>, vector<64x128xf32>, vector<33x128xf32> -> vector<33x128xf32>
      %170 = arith.addf %165, %169 : vector<33x128xf32>
      %c2_170 = arith.constant 2 : index
      %c0_171 = arith.constant 0 : index
      %171 = vector.load %arg24[%c2_170, %c0_171] : memref<49x64xf32, #tpu.memory_space<vmem>>, vector<33x64xf32>
      %c0_172 = arith.constant 0 : index
      %c2_173 = arith.constant 2 : index
      %c0_174 = arith.constant 0 : index
      %c0_175 = arith.constant 0 : index
      %172 = vector.load %arg7[%c0_172, %c2_173, %c0_174, %c0_175] : memref<3x3x64x128xf32, #tpu.memory_space<vmem>>, vector<1x1x64x128xf32>
      %173 = vector.shape_cast %172 : vector<1x1x64x128xf32> to vector<64x128xf32>
      %cst_176 = arith.constant dense<0.000000e+00> : vector<33x128xf32>
      %174 = tpu.matmul %171, %173, %cst_176 {dimension_numbers = #tpu.dot_dimension_numbers<[1], [0], [0], [1], [0, 0, 1, 1], [], []>} : vector<33x64xf32>, vector<64x128xf32>, vector<33x128xf32> -> vector<33x128xf32>
      %175 = arith.addf %170, %174 : vector<33x128xf32>
      %c7_177 = arith.constant 7 : index
      %c0_178 = arith.constant 0 : index
      %176 = vector.load %arg24[%c7_177, %c0_178] : memref<49x64xf32, #tpu.memory_space<vmem>>, vector<33x64xf32>
      %c1_179 = arith.constant 1 : index
      %c0_180 = arith.constant 0 : index
      %c0_181 = arith.constant 0 : index
      %c0_182 = arith.constant 0 : index
      %177 = vector.load %arg7[%c1_179, %c0_180, %c0_181, %c0_182] : memref<3x3x64x128xf32, #tpu.memory_space<vmem>>, vector<1x1x64x128xf32>
      %178 = vector.shape_cast %177 : vector<1x1x64x128xf32> to vector<64x128xf32>
      %cst_183 = arith.constant dense<0.000000e+00> : vector<33x128xf32>
      %179 = tpu.matmul %176, %178, %cst_183 {dimension_numbers = #tpu.dot_dimension_numbers<[1], [0], [0], [1], [0, 0, 1, 1], [], []>} : vector<33x64xf32>, vector<64x128xf32>, vector<33x128xf32> -> vector<33x128xf32>
      %180 = arith.addf %175, %179 : vector<33x128xf32>
      %c8_184 = arith.constant 8 : index
      %c0_185 = arith.constant 0 : index
      %181 = vector.load %arg24[%c8_184, %c0_185] : memref<49x64xf32, #tpu.memory_space<vmem>>, vector<33x64xf32>
      %c1_186 = arith.constant 1 : index
      %c1_187 = arith.constant 1 : index
      %c0_188 = arith.constant 0 : index
      %c0_189 = arith.constant 0 : index
      %182 = vector.load %arg7[%c1_186, %c1_187, %c0_188, %c0_189] : memref<3x3x64x128xf32, #tpu.memory_space<vmem>>, vector<1x1x64x128xf32>
      %183 = vector.shape_cast %182 : vector<1x1x64x128xf32> to vector<64x128xf32>
      %cst_190 = arith.constant dense<0.000000e+00> : vector<33x128xf32>
      %184 = tpu.matmul %181, %183, %cst_190 {dimension_numbers = #tpu.dot_dimension_numbers<[1], [0], [0], [1], [0, 0, 1, 1], [], []>} : vector<33x64xf32>, vector<64x128xf32>, vector<33x128xf32> -> vector<33x128xf32>
      %185 = arith.addf %180, %184 : vector<33x128xf32>
      %c9 = arith.constant 9 : index
      %c0_191 = arith.constant 0 : index
      %186 = vector.load %arg24[%c9, %c0_191] : memref<49x64xf32, #tpu.memory_space<vmem>>, vector<33x64xf32>
      %c1_192 = arith.constant 1 : index
      %c2_193 = arith.constant 2 : index
      %c0_194 = arith.constant 0 : index
      %c0_195 = arith.constant 0 : index
      %187 = vector.load %arg7[%c1_192, %c2_193, %c0_194, %c0_195] : memref<3x3x64x128xf32, #tpu.memory_space<vmem>>, vector<1x1x64x128xf32>
      %188 = vector.shape_cast %187 : vector<1x1x64x128xf32> to vector<64x128xf32>
      %cst_196 = arith.constant dense<0.000000e+00> : vector<33x128xf32>
      %189 = tpu.matmul %186, %188, %cst_196 {dimension_numbers = #tpu.dot_dimension_numbers<[1], [0], [0], [1], [0, 0, 1, 1], [], []>} : vector<33x64xf32>, vector<64x128xf32>, vector<33x128xf32> -> vector<33x128xf32>
      %190 = arith.addf %185, %189 : vector<33x128xf32>
      %c14_197 = arith.constant 14 : index
      %c0_198 = arith.constant 0 : index
      %191 = vector.load %arg24[%c14_197, %c0_198] : memref<49x64xf32, #tpu.memory_space<vmem>>, vector<33x64xf32>
      %c2_199 = arith.constant 2 : index
      %c0_200 = arith.constant 0 : index
      %c0_201 = arith.constant 0 : index
      %c0_202 = arith.constant 0 : index
      %192 = vector.load %arg7[%c2_199, %c0_200, %c0_201, %c0_202] : memref<3x3x64x128xf32, #tpu.memory_space<vmem>>, vector<1x1x64x128xf32>
      %193 = vector.shape_cast %192 : vector<1x1x64x128xf32> to vector<64x128xf32>
      %cst_203 = arith.constant dense<0.000000e+00> : vector<33x128xf32>
      %194 = tpu.matmul %191, %193, %cst_203 {dimension_numbers = #tpu.dot_dimension_numbers<[1], [0], [0], [1], [0, 0, 1, 1], [], []>} : vector<33x64xf32>, vector<64x128xf32>, vector<33x128xf32> -> vector<33x128xf32>
      %195 = arith.addf %190, %194 : vector<33x128xf32>
      %c15 = arith.constant 15 : index
      %c0_204 = arith.constant 0 : index
      %196 = vector.load %arg24[%c15, %c0_204] : memref<49x64xf32, #tpu.memory_space<vmem>>, vector<33x64xf32>
      %c2_205 = arith.constant 2 : index
      %c1_206 = arith.constant 1 : index
      %c0_207 = arith.constant 0 : index
      %c0_208 = arith.constant 0 : index
      %197 = vector.load %arg7[%c2_205, %c1_206, %c0_207, %c0_208] : memref<3x3x64x128xf32, #tpu.memory_space<vmem>>, vector<1x1x64x128xf32>
      %198 = vector.shape_cast %197 : vector<1x1x64x128xf32> to vector<64x128xf32>
      %cst_209 = arith.constant dense<0.000000e+00> : vector<33x128xf32>
      %199 = tpu.matmul %196, %198, %cst_209 {dimension_numbers = #tpu.dot_dimension_numbers<[1], [0], [0], [1], [0, 0, 1, 1], [], []>} : vector<33x64xf32>, vector<64x128xf32>, vector<33x128xf32> -> vector<33x128xf32>
      %200 = arith.addf %195, %199 : vector<33x128xf32>
      %c16 = arith.constant 16 : index
      %c0_210 = arith.constant 0 : index
      %201 = vector.load %arg24[%c16, %c0_210] : memref<49x64xf32, #tpu.memory_space<vmem>>, vector<33x64xf32>
      %c2_211 = arith.constant 2 : index
      %c2_212 = arith.constant 2 : index
      %c0_213 = arith.constant 0 : index
      %c0_214 = arith.constant 0 : index
      %202 = vector.load %arg7[%c2_211, %c2_212, %c0_213, %c0_214] : memref<3x3x64x128xf32, #tpu.memory_space<vmem>>, vector<1x1x64x128xf32>
      %203 = vector.shape_cast %202 : vector<1x1x64x128xf32> to vector<64x128xf32>
      %cst_215 = arith.constant dense<0.000000e+00> : vector<33x128xf32>
      %204 = tpu.matmul %201, %203, %cst_215 {dimension_numbers = #tpu.dot_dimension_numbers<[1], [0], [0], [1], [0, 0, 1, 1], [], []>} : vector<33x64xf32>, vector<64x128xf32>, vector<33x128xf32> -> vector<33x128xf32>
      %205 = arith.addf %200, %204 : vector<33x128xf32>
      %c0_216 = arith.constant 0 : index
      %c0_217 = arith.constant 0 : index
      %206 = vector.load %arg8[%c0_216, %c0_217] : memref<1x128xf32, #tpu.memory_space<vmem>>, vector<1x128xf32>
      %207 = vector.broadcast %206 : vector<1x128xf32> to vector<33x128xf32>
      %208 = arith.addf %205, %207 : vector<33x128xf32>
      %c0_218 = arith.constant 0 : index
      %c0_219 = arith.constant 0 : index
      %209 = vector.load %arg13[%c0_218, %c0_219] : memref<36x25xf32, #tpu.memory_space<vmem>>, vector<36x25xf32>
      %210 = vector.extract_strided_slice %208 {offsets = [0, 0], sizes = [25, 128], strides = [1, 1]} : vector<33x128xf32> to vector<25x128xf32>
      %211 = vector.extract_strided_slice %208 {offsets = [1, 0], sizes = [25, 128], strides = [1, 1]} : vector<33x128xf32> to vector<25x128xf32>
      %212 = arith.maximumf %210, %211 : vector<25x128xf32>
      %213 = vector.extract_strided_slice %208 {offsets = [7, 0], sizes = [25, 128], strides = [1, 1]} : vector<33x128xf32> to vector<25x128xf32>
      %214 = vector.extract_strided_slice %208 {offsets = [8, 0], sizes = [25, 128], strides = [1, 1]} : vector<33x128xf32> to vector<25x128xf32>
      %215 = arith.maximumf %213, %214 : vector<25x128xf32>
      %216 = arith.maximumf %212, %215 : vector<25x128xf32>
      %217 = arith.negf %216 : vector<25x128xf32>
      %218 = math.exp %217 : vector<25x128xf32>
      %cst_220 = arith.constant 1.000000e+00 : f32
      %219 = vector.broadcast %cst_220 : f32 to vector<25x128xf32>
      %220 = arith.addf %219, %218 : vector<25x128xf32>
      %221 = arith.divf %219, %220 : vector<25x128xf32>
      %cst_221 = arith.constant dense<0.000000e+00> : vector<36x128xf32>
      %222 = tpu.matmul %209, %221, %cst_221 {dimension_numbers = #tpu.dot_dimension_numbers<[1], [0], [0], [1], [0, 0, 1, 1], [], []>} : vector<36x25xf32>, vector<25x128xf32>, vector<36x128xf32> -> vector<36x128xf32>
      %c0_222 = arith.constant 0 : index
      %c0_223 = arith.constant 0 : index
      %223 = vector.load %arg25[%c0_222, %c0_223] : memref<36x128xf32, #tpu.memory_space<vmem>>, vector<36x128xf32>
      tpu.vector_store %arg25[%c0_222, %c0_223], %222 {strides = array<i32>} : memref<36x128xf32, #tpu.memory_space<vmem>>, vector<36x128xf32>,
      %c0_224 = arith.constant 0 : index
      %c0_225 = arith.constant 0 : index
      %224 = vector.load %arg25[%c0_224, %c0_225] : memref<36x128xf32, #tpu.memory_space<vmem>>, vector<22x128xf32>
      %c0_226 = arith.constant 0 : index
      %c0_227 = arith.constant 0 : index
      %c0_228 = arith.constant 0 : index
      %c0_229 = arith.constant 0 : index
      %225 = vector.load %arg9[%c0_226, %c0_227, %c0_228, %c0_229] : memref<3x3x128x128xf32, #tpu.memory_space<vmem>>, vector<1x1x128x128xf32>
      %226 = vector.shape_cast %225 : vector<1x1x128x128xf32> to vector<128x128xf32>
      %cst_230 = arith.constant dense<0.000000e+00> : vector<22x128xf32>
      %227 = tpu.matmul %224, %226, %cst_230 {dimension_numbers = #tpu.dot_dimension_numbers<[1], [0], [0], [1], [0, 0, 1, 1], [], []>} : vector<22x128xf32>, vector<128x128xf32>, vector<22x128xf32> -> vector<22x128xf32>
      %c1_231 = arith.constant 1 : index
      %c0_232 = arith.constant 0 : index
      %228 = vector.load %arg25[%c1_231, %c0_232] : memref<36x128xf32, #tpu.memory_space<vmem>>, vector<22x128xf32>
      %c0_233 = arith.constant 0 : index
      %c1_234 = arith.constant 1 : index
      %c0_235 = arith.constant 0 : index
      %c0_236 = arith.constant 0 : index
      %229 = vector.load %arg9[%c0_233, %c1_234, %c0_235, %c0_236] : memref<3x3x128x128xf32, #tpu.memory_space<vmem>>, vector<1x1x128x128xf32>
      %230 = vector.shape_cast %229 : vector<1x1x128x128xf32> to vector<128x128xf32>
      %cst_237 = arith.constant dense<0.000000e+00> : vector<22x128xf32>
      %231 = tpu.matmul %228, %230, %cst_237 {dimension_numbers = #tpu.dot_dimension_numbers<[1], [0], [0], [1], [0, 0, 1, 1], [], []>} : vector<22x128xf32>, vector<128x128xf32>, vector<22x128xf32> -> vector<22x128xf32>
      %232 = arith.addf %227, %231 : vector<22x128xf32>
      %c2_238 = arith.constant 2 : index
      %c0_239 = arith.constant 0 : index
      %233 = vector.load %arg25[%c2_238, %c0_239] : memref<36x128xf32, #tpu.memory_space<vmem>>, vector<22x128xf32>
      %c0_240 = arith.constant 0 : index
      %c2_241 = arith.constant 2 : index
      %c0_242 = arith.constant 0 : index
      %c0_243 = arith.constant 0 : index
      %234 = vector.load %arg9[%c0_240, %c2_241, %c0_242, %c0_243] : memref<3x3x128x128xf32, #tpu.memory_space<vmem>>, vector<1x1x128x128xf32>
      %235 = vector.shape_cast %234 : vector<1x1x128x128xf32> to vector<128x128xf32>
      %cst_244 = arith.constant dense<0.000000e+00> : vector<22x128xf32>
      %236 = tpu.matmul %233, %235, %cst_244 {dimension_numbers = #tpu.dot_dimension_numbers<[1], [0], [0], [1], [0, 0, 1, 1], [], []>} : vector<22x128xf32>, vector<128x128xf32>, vector<22x128xf32> -> vector<22x128xf32>
      %237 = arith.addf %232, %236 : vector<22x128xf32>
      %c6_245 = arith.constant 6 : index
      %c0_246 = arith.constant 0 : index
      %238 = vector.load %arg25[%c6_245, %c0_246] : memref<36x128xf32, #tpu.memory_space<vmem>>, vector<22x128xf32>
      %c1_247 = arith.constant 1 : index
      %c0_248 = arith.constant 0 : index
      %c0_249 = arith.constant 0 : index
      %c0_250 = arith.constant 0 : index
      %239 = vector.load %arg9[%c1_247, %c0_248, %c0_249, %c0_250] : memref<3x3x128x128xf32, #tpu.memory_space<vmem>>, vector<1x1x128x128xf32>
      %240 = vector.shape_cast %239 : vector<1x1x128x128xf32> to vector<128x128xf32>
      %cst_251 = arith.constant dense<0.000000e+00> : vector<22x128xf32>
      %241 = tpu.matmul %238, %240, %cst_251 {dimension_numbers = #tpu.dot_dimension_numbers<[1], [0], [0], [1], [0, 0, 1, 1], [], []>} : vector<22x128xf32>, vector<128x128xf32>, vector<22x128xf32> -> vector<22x128xf32>
      %242 = arith.addf %237, %241 : vector<22x128xf32>
      %c7_252 = arith.constant 7 : index
      %c0_253 = arith.constant 0 : index
      %243 = vector.load %arg25[%c7_252, %c0_253] : memref<36x128xf32, #tpu.memory_space<vmem>>, vector<22x128xf32>
      %c1_254 = arith.constant 1 : index
      %c1_255 = arith.constant 1 : index
      %c0_256 = arith.constant 0 : index
      %c0_257 = arith.constant 0 : index
      %244 = vector.load %arg9[%c1_254, %c1_255, %c0_256, %c0_257] : memref<3x3x128x128xf32, #tpu.memory_space<vmem>>, vector<1x1x128x128xf32>
      %245 = vector.shape_cast %244 : vector<1x1x128x128xf32> to vector<128x128xf32>
      %cst_258 = arith.constant dense<0.000000e+00> : vector<22x128xf32>
      %246 = tpu.matmul %243, %245, %cst_258 {dimension_numbers = #tpu.dot_dimension_numbers<[1], [0], [0], [1], [0, 0, 1, 1], [], []>} : vector<22x128xf32>, vector<128x128xf32>, vector<22x128xf32> -> vector<22x128xf32>
      %247 = arith.addf %242, %246 : vector<22x128xf32>
      %c8_259 = arith.constant 8 : index
      %c0_260 = arith.constant 0 : index
      %248 = vector.load %arg25[%c8_259, %c0_260] : memref<36x128xf32, #tpu.memory_space<vmem>>, vector<22x128xf32>
      %c1_261 = arith.constant 1 : index
      %c2_262 = arith.constant 2 : index
      %c0_263 = arith.constant 0 : index
      %c0_264 = arith.constant 0 : index
      %249 = vector.load %arg9[%c1_261, %c2_262, %c0_263, %c0_264] : memref<3x3x128x128xf32, #tpu.memory_space<vmem>>, vector<1x1x128x128xf32>
      %250 = vector.shape_cast %249 : vector<1x1x128x128xf32> to vector<128x128xf32>
      %cst_265 = arith.constant dense<0.000000e+00> : vector<22x128xf32>
      %251 = tpu.matmul %248, %250, %cst_265 {dimension_numbers = #tpu.dot_dimension_numbers<[1], [0], [0], [1], [0, 0, 1, 1], [], []>} : vector<22x128xf32>, vector<128x128xf32>, vector<22x128xf32> -> vector<22x128xf32>
      %252 = arith.addf %247, %251 : vector<22x128xf32>
      %c12_266 = arith.constant 12 : index
      %c0_267 = arith.constant 0 : index
      %253 = vector.load %arg25[%c12_266, %c0_267] : memref<36x128xf32, #tpu.memory_space<vmem>>, vector<22x128xf32>
      %c2_268 = arith.constant 2 : index
      %c0_269 = arith.constant 0 : index
      %c0_270 = arith.constant 0 : index
      %c0_271 = arith.constant 0 : index
      %254 = vector.load %arg9[%c2_268, %c0_269, %c0_270, %c0_271] : memref<3x3x128x128xf32, #tpu.memory_space<vmem>>, vector<1x1x128x128xf32>
      %255 = vector.shape_cast %254 : vector<1x1x128x128xf32> to vector<128x128xf32>
      %cst_272 = arith.constant dense<0.000000e+00> : vector<22x128xf32>
      %256 = tpu.matmul %253, %255, %cst_272 {dimension_numbers = #tpu.dot_dimension_numbers<[1], [0], [0], [1], [0, 0, 1, 1], [], []>} : vector<22x128xf32>, vector<128x128xf32>, vector<22x128xf32> -> vector<22x128xf32>
      %257 = arith.addf %252, %256 : vector<22x128xf32>
      %c13_273 = arith.constant 13 : index
      %c0_274 = arith.constant 0 : index
      %258 = vector.load %arg25[%c13_273, %c0_274] : memref<36x128xf32, #tpu.memory_space<vmem>>, vector<22x128xf32>
      %c2_275 = arith.constant 2 : index
      %c1_276 = arith.constant 1 : index
      %c0_277 = arith.constant 0 : index
      %c0_278 = arith.constant 0 : index
      %259 = vector.load %arg9[%c2_275, %c1_276, %c0_277, %c0_278] : memref<3x3x128x128xf32, #tpu.memory_space<vmem>>, vector<1x1x128x128xf32>
      %260 = vector.shape_cast %259 : vector<1x1x128x128xf32> to vector<128x128xf32>
      %cst_279 = arith.constant dense<0.000000e+00> : vector<22x128xf32>
      %261 = tpu.matmul %258, %260, %cst_279 {dimension_numbers = #tpu.dot_dimension_numbers<[1], [0], [0], [1], [0, 0, 1, 1], [], []>} : vector<22x128xf32>, vector<128x128xf32>, vector<22x128xf32> -> vector<22x128xf32>
      %262 = arith.addf %257, %261 : vector<22x128xf32>
      %c14_280 = arith.constant 14 : index
      %c0_281 = arith.constant 0 : index
      %263 = vector.load %arg25[%c14_280, %c0_281] : memref<36x128xf32, #tpu.memory_space<vmem>>, vector<22x128xf32>
      %c2_282 = arith.constant 2 : index
      %c2_283 = arith.constant 2 : index
      %c0_284 = arith.constant 0 : index
      %c0_285 = arith.constant 0 : index
      %264 = vector.load %arg9[%c2_282, %c2_283, %c0_284, %c0_285] : memref<3x3x128x128xf32, #tpu.memory_space<vmem>>, vector<1x1x128x128xf32>
      %265 = vector.shape_cast %264 : vector<1x1x128x128xf32> to vector<128x128xf32>
      %cst_286 = arith.constant dense<0.000000e+00> : vector<22x128xf32>
      %266 = tpu.matmul %263, %265, %cst_286 {dimension_numbers = #tpu.dot_dimension_numbers<[1], [0], [0], [1], [0, 0, 1, 1], [], []>} : vector<22x128xf32>, vector<128x128xf32>, vector<22x128xf32> -> vector<22x128xf32>
      %267 = arith.addf %262, %266 : vector<22x128xf32>
      %c0_287 = arith.constant 0 : index
      %c0_288 = arith.constant 0 : index
      %268 = vector.load %arg10[%c0_287, %c0_288] : memref<1x128xf32, #tpu.memory_space<vmem>>, vector<1x128xf32>
      %269 = vector.broadcast %268 : vector<1x128xf32> to vector<22x128xf32>
      %270 = arith.addf %267, %269 : vector<22x128xf32>
      %271 = vector.extract_strided_slice %270 {offsets = [0, 0], sizes = [15, 128], strides = [1, 1]} : vector<22x128xf32> to vector<15x128xf32>
      %272 = vector.extract_strided_slice %270 {offsets = [1, 0], sizes = [15, 128], strides = [1, 1]} : vector<22x128xf32> to vector<15x128xf32>
      %273 = arith.maximumf %271, %272 : vector<15x128xf32>
      %274 = vector.extract_strided_slice %270 {offsets = [6, 0], sizes = [15, 128], strides = [1, 1]} : vector<22x128xf32> to vector<15x128xf32>
      %275 = vector.extract_strided_slice %270 {offsets = [7, 0], sizes = [15, 128], strides = [1, 1]} : vector<22x128xf32> to vector<15x128xf32>
      %276 = arith.maximumf %274, %275 : vector<15x128xf32>
      %277 = arith.maximumf %273, %276 : vector<15x128xf32>
      %278 = vector.extract_strided_slice %277 {offsets = [0, 0], sizes = [3, 128], strides = [1, 1]} : vector<15x128xf32> to vector<3x128xf32>
      %279 = arith.negf %278 : vector<3x128xf32>
      %280 = math.exp %279 : vector<3x128xf32>
      %cst_289 = arith.constant 1.000000e+00 : f32
      %281 = vector.broadcast %cst_289 : f32 to vector<3x128xf32>
      %282 = arith.addf %281, %280 : vector<3x128xf32>
      %283 = arith.divf %281, %282 : vector<3x128xf32>
      %284 = vector.extract_strided_slice %283 {offsets = [0, 0], sizes = [1, 128], strides = [1, 1]} : vector<3x128xf32> to vector<1x128xf32>
      %c0_290 = arith.constant 0 : index
      %285 = arith.index_cast %arg27 : i32 to index
      %c0_291 = arith.constant 0 : index
      %286 = vector.load %arg26[%c0_290, %285, %c0_291] : memref<9x8x128xf32, #tpu.memory_space<vmem>>, vector<1x1x128xf32>
      %287 = vector.shape_cast %286 : vector<1x1x128xf32> to vector<1x128xf32>
      %288 = vector.shape_cast %284 : vector<1x128xf32> to vector<1x1x128xf32>
      tpu.vector_store %arg26[%c0_290, %285, %c0_291], %288 {strides = array<i32>} : memref<9x8x128xf32, #tpu.memory_space<vmem>>, vector<1x1x128xf32>,
      %289 = vector.extract_strided_slice %283 {offsets = [1, 0], sizes = [1, 128], strides = [1, 1]} : vector<3x128xf32> to vector<1x128xf32>
      %c1_292 = arith.constant 1 : index
      %290 = arith.index_cast %arg27 : i32 to index
      %c0_293 = arith.constant 0 : index
      %291 = vector.load %arg26[%c1_292, %290, %c0_293] : memref<9x8x128xf32, #tpu.memory_space<vmem>>, vector<1x1x128xf32>
      %292 = vector.shape_cast %291 : vector<1x1x128xf32> to vector<1x128xf32>
      %293 = vector.shape_cast %289 : vector<1x128xf32> to vector<1x1x128xf32>
      tpu.vector_store %arg26[%c1_292, %290, %c0_293], %293 {strides = array<i32>} : memref<9x8x128xf32, #tpu.memory_space<vmem>>, vector<1x1x128xf32>,
      %294 = vector.extract_strided_slice %283 {offsets = [2, 0], sizes = [1, 128], strides = [1, 1]} : vector<3x128xf32> to vector<1x128xf32>
      %c2_294 = arith.constant 2 : index
      %295 = arith.index_cast %arg27 : i32 to index
      %c0_295 = arith.constant 0 : index
      %296 = vector.load %arg26[%c2_294, %295, %c0_295] : memref<9x8x128xf32, #tpu.memory_space<vmem>>, vector<1x1x128xf32>
      %297 = vector.shape_cast %296 : vector<1x1x128xf32> to vector<1x128xf32>
      %298 = vector.shape_cast %294 : vector<1x128xf32> to vector<1x1x128xf32>
      tpu.vector_store %arg26[%c2_294, %295, %c0_295], %298 {strides = array<i32>} : memref<9x8x128xf32, #tpu.memory_space<vmem>>, vector<1x1x128xf32>,
      %299 = vector.extract_strided_slice %277 {offsets = [6, 0], sizes = [3, 128], strides = [1, 1]} : vector<15x128xf32> to vector<3x128xf32>
      %300 = arith.negf %299 : vector<3x128xf32>
      %301 = math.exp %300 : vector<3x128xf32>
      %cst_296 = arith.constant 1.000000e+00 : f32
      %302 = vector.broadcast %cst_296 : f32 to vector<3x128xf32>
      %303 = arith.addf %302, %301 : vector<3x128xf32>
      %304 = arith.divf %302, %303 : vector<3x128xf32>
      %305 = vector.extract_strided_slice %304 {offsets = [0, 0], sizes = [1, 128], strides = [1, 1]} : vector<3x128xf32> to vector<1x128xf32>
      %c3_297 = arith.constant 3 : index
      %306 = arith.index_cast %arg27 : i32 to index
      %c0_298 = arith.constant 0 : index
      %307 = vector.load %arg26[%c3_297, %306, %c0_298] : memref<9x8x128xf32, #tpu.memory_space<vmem>>, vector<1x1x128xf32>
      %308 = vector.shape_cast %307 : vector<1x1x128xf32> to vector<1x128xf32>
      %309 = vector.shape_cast %305 : vector<1x128xf32> to vector<1x1x128xf32>
      tpu.vector_store %arg26[%c3_297, %306, %c0_298], %309 {strides = array<i32>} : memref<9x8x128xf32, #tpu.memory_space<vmem>>, vector<1x1x128xf32>,
      %310 = vector.extract_strided_slice %304 {offsets = [1, 0], sizes = [1, 128], strides = [1, 1]} : vector<3x128xf32> to vector<1x128xf32>
      %c4_299 = arith.constant 4 : index
      %311 = arith.index_cast %arg27 : i32 to index
      %c0_300 = arith.constant 0 : index
      %312 = vector.load %arg26[%c4_299, %311, %c0_300] : memref<9x8x128xf32, #tpu.memory_space<vmem>>, vector<1x1x128xf32>
      %313 = vector.shape_cast %312 : vector<1x1x128xf32> to vector<1x128xf32>
      %314 = vector.shape_cast %310 : vector<1x128xf32> to vector<1x1x128xf32>
      tpu.vector_store %arg26[%c4_299, %311, %c0_300], %314 {strides = array<i32>} : memref<9x8x128xf32, #tpu.memory_space<vmem>>, vector<1x1x128xf32>,
      %315 = vector.extract_strided_slice %304 {offsets = [2, 0], sizes = [1, 128], strides = [1, 1]} : vector<3x128xf32> to vector<1x128xf32>
      %c5_301 = arith.constant 5 : index
      %316 = arith.index_cast %arg27 : i32 to index
      %c0_302 = arith.constant 0 : index
      %317 = vector.load %arg26[%c5_301, %316, %c0_302] : memref<9x8x128xf32, #tpu.memory_space<vmem>>, vector<1x1x128xf32>
      %318 = vector.shape_cast %317 : vector<1x1x128xf32> to vector<1x128xf32>
      %319 = vector.shape_cast %315 : vector<1x128xf32> to vector<1x1x128xf32>
      tpu.vector_store %arg26[%c5_301, %316, %c0_302], %319 {strides = array<i32>} : memref<9x8x128xf32, #tpu.memory_space<vmem>>, vector<1x1x128xf32>,
      %320 = vector.extract_strided_slice %277 {offsets = [12, 0], sizes = [3, 128], strides = [1, 1]} : vector<15x128xf32> to vector<3x128xf32>
      %321 = arith.negf %320 : vector<3x128xf32>
      %322 = math.exp %321 : vector<3x128xf32>
      %cst_303 = arith.constant 1.000000e+00 : f32
      %323 = vector.broadcast %cst_303 : f32 to vector<3x128xf32>
      %324 = arith.addf %323, %322 : vector<3x128xf32>
      %325 = arith.divf %323, %324 : vector<3x128xf32>
      %326 = vector.extract_strided_slice %325 {offsets = [0, 0], sizes = [1, 128], strides = [1, 1]} : vector<3x128xf32> to vector<1x128xf32>
      %c6_304 = arith.constant 6 : index
      %327 = arith.index_cast %arg27 : i32 to index
      %c0_305 = arith.constant 0 : index
      %328 = vector.load %arg26[%c6_304, %327, %c0_305] : memref<9x8x128xf32, #tpu.memory_space<vmem>>, vector<1x1x128xf32>
      %329 = vector.shape_cast %328 : vector<1x1x128xf32> to vector<1x128xf32>
      %330 = vector.shape_cast %326 : vector<1x128xf32> to vector<1x1x128xf32>
      tpu.vector_store %arg26[%c6_304, %327, %c0_305], %330 {strides = array<i32>} : memref<9x8x128xf32, #tpu.memory_space<vmem>>, vector<1x1x128xf32>,
      %331 = vector.extract_strided_slice %325 {offsets = [1, 0], sizes = [1, 128], strides = [1, 1]} : vector<3x128xf32> to vector<1x128xf32>
      %c7_306 = arith.constant 7 : index
      %332 = arith.index_cast %arg27 : i32 to index
      %c0_307 = arith.constant 0 : index
      %333 = vector.load %arg26[%c7_306, %332, %c0_307] : memref<9x8x128xf32, #tpu.memory_space<vmem>>, vector<1x1x128xf32>
      %334 = vector.shape_cast %333 : vector<1x1x128xf32> to vector<1x128xf32>
      %335 = vector.shape_cast %331 : vector<1x128xf32> to vector<1x1x128xf32>
      tpu.vector_store %arg26[%c7_306, %332, %c0_307], %335 {strides = array<i32>} : memref<9x8x128xf32, #tpu.memory_space<vmem>>, vector<1x1x128xf32>,
      %336 = vector.extract_strided_slice %325 {offsets = [2, 0], sizes = [1, 128], strides = [1, 1]} : vector<3x128xf32> to vector<1x128xf32>
      %c8_308 = arith.constant 8 : index
      %337 = arith.index_cast %arg27 : i32 to index
      %c0_309 = arith.constant 0 : index
      %338 = vector.load %arg26[%c8_308, %337, %c0_309] : memref<9x8x128xf32, #tpu.memory_space<vmem>>, vector<1x1x128xf32>
      %339 = vector.shape_cast %338 : vector<1x1x128xf32> to vector<1x128xf32>
      %340 = vector.shape_cast %336 : vector<1x128xf32> to vector<1x1x128xf32>
      tpu.vector_store %arg26[%c8_308, %337, %c0_309], %340 {strides = array<i32>} : memref<9x8x128xf32, #tpu.memory_space<vmem>>, vector<1x1x128xf32>,
    }
    %c8_i32_0 = arith.constant 8 : i32
    %c0 = arith.constant 0 : index
    %c0_1 = arith.constant 0 : index
    %c0_2 = arith.constant 0 : index
    %1 = vector.load %arg26[%c0, %c0_1, %c0_2] : memref<9x8x128xf32, #tpu.memory_space<vmem>>, vector<1x8x128xf32>
    %2 = vector.shape_cast %1 : vector<1x8x128xf32> to vector<8x128xf32>
    %c0_3 = arith.constant 0 : index
    %c0_4 = arith.constant 0 : index
    %c0_5 = arith.constant 0 : index
    %3 = vector.load %arg15[%c0_3, %c0_4, %c0_5] : memref<9x128x640xf32, #tpu.memory_space<vmem>>, vector<1x128x640xf32>
    %4 = vector.shape_cast %3 : vector<1x128x640xf32> to vector<128x640xf32>
    %cst = arith.constant dense<0.000000e+00> : vector<8x640xf32>
    %5 = tpu.matmul %2, %4, %cst {dimension_numbers = #tpu.dot_dimension_numbers<[1], [0], [0], [1], [0, 0, 1, 1], [], []>} : vector<8x128xf32>, vector<128x640xf32>, vector<8x640xf32> -> vector<8x640xf32>
    %c1 = arith.constant 1 : index
    %c0_6 = arith.constant 0 : index
    %c0_7 = arith.constant 0 : index
    %6 = vector.load %arg26[%c1, %c0_6, %c0_7] : memref<9x8x128xf32, #tpu.memory_space<vmem>>, vector<1x8x128xf32>
    %7 = vector.shape_cast %6 : vector<1x8x128xf32> to vector<8x128xf32>
    %c1_8 = arith.constant 1 : index
    %c0_9 = arith.constant 0 : index
    %c0_10 = arith.constant 0 : index
    %8 = vector.load %arg15[%c1_8, %c0_9, %c0_10] : memref<9x128x640xf32, #tpu.memory_space<vmem>>, vector<1x128x640xf32>
    %9 = vector.shape_cast %8 : vector<1x128x640xf32> to vector<128x640xf32>
    %cst_11 = arith.constant dense<0.000000e+00> : vector<8x640xf32>
    %10 = tpu.matmul %7, %9, %cst_11 {dimension_numbers = #tpu.dot_dimension_numbers<[1], [0], [0], [1], [0, 0, 1, 1], [], []>} : vector<8x128xf32>, vector<128x640xf32>, vector<8x640xf32> -> vector<8x640xf32>
    %11 = arith.addf %5, %10 : vector<8x640xf32>
    %c2 = arith.constant 2 : index
    %c0_12 = arith.constant 0 : index
    %c0_13 = arith.constant 0 : index
    %12 = vector.load %arg26[%c2, %c0_12, %c0_13] : memref<9x8x128xf32, #tpu.memory_space<vmem>>, vector<1x8x128xf32>
    %13 = vector.shape_cast %12 : vector<1x8x128xf32> to vector<8x128xf32>
    %c2_14 = arith.constant 2 : index
    %c0_15 = arith.constant 0 : index
    %c0_16 = arith.constant 0 : index
    %14 = vector.load %arg15[%c2_14, %c0_15, %c0_16] : memref<9x128x640xf32, #tpu.memory_space<vmem>>, vector<1x128x640xf32>
    %15 = vector.shape_cast %14 : vector<1x128x640xf32> to vector<128x640xf32>
    %cst_17 = arith.constant dense<0.000000e+00> : vector<8x640xf32>
    %16 = tpu.matmul %13, %15, %cst_17 {dimension_numbers = #tpu.dot_dimension_numbers<[1], [0], [0], [1], [0, 0, 1, 1], [], []>} : vector<8x128xf32>, vector<128x640xf32>, vector<8x640xf32> -> vector<8x640xf32>
    %17 = arith.addf %11, %16 : vector<8x640xf32>
    %c3 = arith.constant 3 : index
    %c0_18 = arith.constant 0 : index
    %c0_19 = arith.constant 0 : index
    %18 = vector.load %arg26[%c3, %c0_18, %c0_19] : memref<9x8x128xf32, #tpu.memory_space<vmem>>, vector<1x8x128xf32>
    %19 = vector.shape_cast %18 : vector<1x8x128xf32> to vector<8x128xf32>
    %c3_20 = arith.constant 3 : index
    %c0_21 = arith.constant 0 : index
    %c0_22 = arith.constant 0 : index
    %20 = vector.load %arg15[%c3_20, %c0_21, %c0_22] : memref<9x128x640xf32, #tpu.memory_space<vmem>>, vector<1x128x640xf32>
    %21 = vector.shape_cast %20 : vector<1x128x640xf32> to vector<128x640xf32>
    %cst_23 = arith.constant dense<0.000000e+00> : vector<8x640xf32>
    %22 = tpu.matmul %19, %21, %cst_23 {dimension_numbers = #tpu.dot_dimension_numbers<[1], [0], [0], [1], [0, 0, 1, 1], [], []>} : vector<8x128xf32>, vector<128x640xf32>, vector<8x640xf32> -> vector<8x640xf32>
    %23 = arith.addf %17, %22 : vector<8x640xf32>
    %c4 = arith.constant 4 : index
    %c0_24 = arith.constant 0 : index
    %c0_25 = arith.constant 0 : index
    %24 = vector.load %arg26[%c4, %c0_24, %c0_25] : memref<9x8x128xf32, #tpu.memory_space<vmem>>, vector<1x8x128xf32>
    %25 = vector.shape_cast %24 : vector<1x8x128xf32> to vector<8x128xf32>
    %c4_26 = arith.constant 4 : index
    %c0_27 = arith.constant 0 : index
    %c0_28 = arith.constant 0 : index
    %26 = vector.load %arg15[%c4_26, %c0_27, %c0_28] : memref<9x128x640xf32, #tpu.memory_space<vmem>>, vector<1x128x640xf32>
    %27 = vector.shape_cast %26 : vector<1x128x640xf32> to vector<128x640xf32>
    %cst_29 = arith.constant dense<0.000000e+00> : vector<8x640xf32>
    %28 = tpu.matmul %25, %27, %cst_29 {dimension_numbers = #tpu.dot_dimension_numbers<[1], [0], [0], [1], [0, 0, 1, 1], [], []>} : vector<8x128xf32>, vector<128x640xf32>, vector<8x640xf32> -> vector<8x640xf32>
    %29 = arith.addf %23, %28 : vector<8x640xf32>
    %c5 = arith.constant 5 : index
    %c0_30 = arith.constant 0 : index
    %c0_31 = arith.constant 0 : index
    %30 = vector.load %arg26[%c5, %c0_30, %c0_31] : memref<9x8x128xf32, #tpu.memory_space<vmem>>, vector<1x8x128xf32>
    %31 = vector.shape_cast %30 : vector<1x8x128xf32> to vector<8x128xf32>
    %c5_32 = arith.constant 5 : index
    %c0_33 = arith.constant 0 : index
    %c0_34 = arith.constant 0 : index
    %32 = vector.load %arg15[%c5_32, %c0_33, %c0_34] : memref<9x128x640xf32, #tpu.memory_space<vmem>>, vector<1x128x640xf32>
    %33 = vector.shape_cast %32 : vector<1x128x640xf32> to vector<128x640xf32>
    %cst_35 = arith.constant dense<0.000000e+00> : vector<8x640xf32>
    %34 = tpu.matmul %31, %33, %cst_35 {dimension_numbers = #tpu.dot_dimension_numbers<[1], [0], [0], [1], [0, 0, 1, 1], [], []>} : vector<8x128xf32>, vector<128x640xf32>, vector<8x640xf32> -> vector<8x640xf32>
    %35 = arith.addf %29, %34 : vector<8x640xf32>
    %c6 = arith.constant 6 : index
    %c0_36 = arith.constant 0 : index
    %c0_37 = arith.constant 0 : index
    %36 = vector.load %arg26[%c6, %c0_36, %c0_37] : memref<9x8x128xf32, #tpu.memory_space<vmem>>, vector<1x8x128xf32>
    %37 = vector.shape_cast %36 : vector<1x8x128xf32> to vector<8x128xf32>
    %c6_38 = arith.constant 6 : index
    %c0_39 = arith.constant 0 : index
    %c0_40 = arith.constant 0 : index
    %38 = vector.load %arg15[%c6_38, %c0_39, %c0_40] : memref<9x128x640xf32, #tpu.memory_space<vmem>>, vector<1x128x640xf32>
    %39 = vector.shape_cast %38 : vector<1x128x640xf32> to vector<128x640xf32>
    %cst_41 = arith.constant dense<0.000000e+00> : vector<8x640xf32>
    %40 = tpu.matmul %37, %39, %cst_41 {dimension_numbers = #tpu.dot_dimension_numbers<[1], [0], [0], [1], [0, 0, 1, 1], [], []>} : vector<8x128xf32>, vector<128x640xf32>, vector<8x640xf32> -> vector<8x640xf32>
    %41 = arith.addf %35, %40 : vector<8x640xf32>
    %c7 = arith.constant 7 : index
    %c0_42 = arith.constant 0 : index
    %c0_43 = arith.constant 0 : index
    %42 = vector.load %arg26[%c7, %c0_42, %c0_43] : memref<9x8x128xf32, #tpu.memory_space<vmem>>, vector<1x8x128xf32>
    %43 = vector.shape_cast %42 : vector<1x8x128xf32> to vector<8x128xf32>
    %c7_44 = arith.constant 7 : index
    %c0_45 = arith.constant 0 : index
    %c0_46 = arith.constant 0 : index
    %44 = vector.load %arg15[%c7_44, %c0_45, %c0_46] : memref<9x128x640xf32, #tpu.memory_space<vmem>>, vector<1x128x640xf32>
    %45 = vector.shape_cast %44 : vector<1x128x640xf32> to vector<128x640xf32>
    %cst_47 = arith.constant dense<0.000000e+00> : vector<8x640xf32>
    %46 = tpu.matmul %43, %45, %cst_47 {dimension_numbers = #tpu.dot_dimension_numbers<[1], [0], [0], [1], [0, 0, 1, 1], [], []>} : vector<8x128xf32>, vector<128x640xf32>, vector<8x640xf32> -> vector<8x640xf32>
    %47 = arith.addf %41, %46 : vector<8x640xf32>
    %c8 = arith.constant 8 : index
    %c0_48 = arith.constant 0 : index
    %c0_49 = arith.constant 0 : index
    %48 = vector.load %arg26[%c8, %c0_48, %c0_49] : memref<9x8x128xf32, #tpu.memory_space<vmem>>, vector<1x8x128xf32>
    %49 = vector.shape_cast %48 : vector<1x8x128xf32> to vector<8x128xf32>
    %c8_50 = arith.constant 8 : index
    %c0_51 = arith.constant 0 : index
    %c0_52 = arith.constant 0 : index
    %50 = vector.load %arg15[%c8_50, %c0_51, %c0_52] : memref<9x128x640xf32, #tpu.memory_space<vmem>>, vector<1x128x640xf32>
    %51 = vector.shape_cast %50 : vector<1x128x640xf32> to vector<128x640xf32>
    %cst_53 = arith.constant dense<0.000000e+00> : vector<8x640xf32>
    %52 = tpu.matmul %49, %51, %cst_53 {dimension_numbers = #tpu.dot_dimension_numbers<[1], [0], [0], [1], [0, 0, 1, 1], [], []>} : vector<8x128xf32>, vector<128x640xf32>, vector<8x640xf32> -> vector<8x640xf32>
    %53 = arith.addf %47, %52 : vector<8x640xf32>
    %c0_54 = arith.constant 0 : index
    %c0_55 = arith.constant 0 : index
    %54 = vector.load %arg16[%c0_54, %c0_55] : memref<1x640xf32, #tpu.memory_space<vmem>>, vector<1x640xf32>
    %55 = vector.broadcast %54 : vector<1x640xf32> to vector<8x640xf32>
    %56 = arith.addf %53, %55 : vector<8x640xf32>
    %cst_56 = arith.constant 0.000000e+00 : f32
    %57 = vector.broadcast %cst_56 : f32 to vector<8x640xf32>
    %58 = arith.maximumf %56, %57 : vector<8x640xf32>
    %c0_57 = arith.constant 0 : index
    %c0_58 = arith.constant 0 : index
    %59 = vector.load %arg17[%c0_57, %c0_58] : memref<640x448xf32, #tpu.memory_space<vmem>>, vector<640x448xf32>
    %cst_59 = arith.constant dense<0.000000e+00> : vector<8x448xf32>
    %60 = tpu.matmul %58, %59, %cst_59 {dimension_numbers = #tpu.dot_dimension_numbers<[1], [0], [0], [1], [0, 0, 1, 1], [], []>} : vector<8x640xf32>, vector<640x448xf32>, vector<8x448xf32> -> vector<8x448xf32>
    %c0_60 = arith.constant 0 : index
    %c0_61 = arith.constant 0 : index
    %61 = vector.load %arg18[%c0_60, %c0_61] : memref<1x448xf32, #tpu.memory_space<vmem>>, vector<1x448xf32>
    %62 = vector.broadcast %61 : vector<1x448xf32> to vector<8x448xf32>
    %63 = arith.addf %60, %62 : vector<8x448xf32>
    %cst_62 = arith.constant 0.000000e+00 : f32
    %64 = vector.broadcast %cst_62 : f32 to vector<8x448xf32>
    %65 = arith.maximumf %63, %64 : vector<8x448xf32>
    %c0_63 = arith.constant 0 : index
    %c0_64 = arith.constant 0 : index
    %66 = vector.load %arg19[%c0_63, %c0_64] : memref<448x256xf32, #tpu.memory_space<vmem>>, vector<448x256xf32>
    %cst_65 = arith.constant dense<0.000000e+00> : vector<8x256xf32>
    %67 = tpu.matmul %65, %66, %cst_65 {dimension_numbers = #tpu.dot_dimension_numbers<[1], [0], [0], [1], [0, 0, 1, 1], [], []>} : vector<8x448xf32>, vector<448x256xf32>, vector<8x256xf32> -> vector<8x256xf32>
    %c0_66 = arith.constant 0 : index
    %c0_67 = arith.constant 0 : index
    %68 = vector.load %arg2[%c0_66, %c0_67] : memref<8x400xf32, #tpu.memory_space<vmem>>, vector<8x400xf32>
    %c0_68 = arith.constant 0 : index
    %c0_69 = arith.constant 0 : index
    %69 = vector.load %arg20[%c0_68, %c0_69] : memref<400x256xf32, #tpu.memory_space<vmem>>, vector<400x256xf32>
    %cst_70 = arith.constant dense<0.000000e+00> : vector<8x256xf32>
    %70 = tpu.matmul %68, %69, %cst_70 {dimension_numbers = #tpu.dot_dimension_numbers<[1], [0], [0], [1], [0, 0, 1, 1], [], []>} : vector<8x400xf32>, vector<400x256xf32>, vector<8x256xf32> -> vector<8x256xf32>
    %71 = arith.addf %67, %70 : vector<8x256xf32>
    %c0_71 = arith.constant 0 : index
    %c0_72 = arith.constant 0 : index
    %72 = vector.load %arg21[%c0_71, %c0_72] : memref<1x256xf32, #tpu.memory_space<vmem>>, vector<1x256xf32>
    %73 = vector.broadcast %72 : vector<1x256xf32> to vector<8x256xf32>
    %74 = arith.addf %71, %73 : vector<8x256xf32>
    %75 = arith.negf %74 : vector<8x256xf32>
    %76 = math.exp %75 : vector<8x256xf32>
    %cst_73 = arith.constant 1.000000e+00 : f32
    %77 = vector.broadcast %cst_73 : f32 to vector<8x256xf32>
    %78 = arith.addf %77, %76 : vector<8x256xf32>
    %79 = arith.divf %77, %78 : vector<8x256xf32>
    %c0_74 = arith.constant 0 : index
    %c0_75 = arith.constant 0 : index
    %80 = vector.load %arg22[%c0_74, %c0_75] : memref<8x256xf32, #tpu.memory_space<vmem>>, vector<8x256xf32>
    tpu.vector_store %arg22[%c0_74, %c0_75], %79 {strides = array<i32>} : memref<8x256xf32, #tpu.memory_space<vmem>>, vector<8x256xf32>,
    return
  }
  func.func @transform_0(%arg0: i32) -> (i32, i32, i32) {
    %c0_i32 = arith.constant 0 : i32
    %c0_i32_0 = arith.constant 0 : i32
    %c0_i32_1 = arith.constant 0 : i32
    return %arg0, %c0_i32, %c0_i32_0 : i32, i32, i32
  }
  func.func @transform_1(%arg0: i32) -> (i32, i32) {
    %c0_i32 = arith.constant 0 : i32
    %c0_i32_0 = arith.constant 0 : i32
    return %arg0, %c0_i32 : i32, i32
  }
  func.func @transform_2(%arg0: i32) -> (i32, i32) {
    %c0_i32 = arith.constant 0 : i32
    %c0_i32_0 = arith.constant 0 : i32
    %c0_i32_1 = arith.constant 0 : i32
    return %c0_i32, %c0_i32_0 : i32, i32
  }
  func.func @transform_3(%arg0: i32) -> (i32, i32) {
    %c0_i32 = arith.constant 0 : i32
    %c0_i32_0 = arith.constant 0 : i32
    %c0_i32_1 = arith.constant 0 : i32
    return %c0_i32, %c0_i32_0 : i32, i32
  }
  func.func @transform_4(%arg0: i32) -> (i32, i32, i32, i32) {
    %c0_i32 = arith.constant 0 : i32
    %c0_i32_0 = arith.constant 0 : i32
    %c0_i32_1 = arith.constant 0 : i32
    %c0_i32_2 = arith.constant 0 : i32
    %c0_i32_3 = arith.constant 0 : i32
    return %c0_i32, %c0_i32_0, %c0_i32_1, %c0_i32_2 : i32, i32, i32, i32
  }
  func.func @transform_5(%arg0: i32) -> (i32, i32) {
    %c0_i32 = arith.constant 0 : i32
    %c0_i32_0 = arith.constant 0 : i32
    %c0_i32_1 = arith.constant 0 : i32
    return %c0_i32, %c0_i32_0 : i32, i32
  }
  func.func @transform_6(%arg0: i32) -> (i32, i32, i32, i32) {
    %c0_i32 = arith.constant 0 : i32
    %c0_i32_0 = arith.constant 0 : i32
    %c0_i32_1 = arith.constant 0 : i32
    %c0_i32_2 = arith.constant 0 : i32
    %c0_i32_3 = arith.constant 0 : i32
    return %c0_i32, %c0_i32_0, %c0_i32_1, %c0_i32_2 : i32, i32, i32, i32
  }
  func.func @transform_7(%arg0: i32) -> (i32, i32) {
    %c0_i32 = arith.constant 0 : i32
    %c0_i32_0 = arith.constant 0 : i32
    %c0_i32_1 = arith.constant 0 : i32
    return %c0_i32, %c0_i32_0 : i32, i32
  }
  func.func @transform_8(%arg0: i32) -> (i32, i32, i32, i32) {
    %c0_i32 = arith.constant 0 : i32
    %c0_i32_0 = arith.constant 0 : i32
    %c0_i32_1 = arith.constant 0 : i32
    %c0_i32_2 = arith.constant 0 : i32
    %c0_i32_3 = arith.constant 0 : i32
    return %c0_i32, %c0_i32_0, %c0_i32_1, %c0_i32_2 : i32, i32, i32, i32
  }
  func.func @transform_9(%arg0: i32) -> (i32, i32) {
    %c0_i32 = arith.constant 0 : i32
    %c0_i32_0 = arith.constant 0 : i32
    %c0_i32_1 = arith.constant 0 : i32
    return %c0_i32, %c0_i32_0 : i32, i32
  }
  func.func @transform_10(%arg0: i32) -> (i32, i32) {
    %c0_i32 = arith.constant 0 : i32
    %c0_i32_0 = arith.constant 0 : i32
    %c0_i32_1 = arith.constant 0 : i32
    return %c0_i32, %c0_i32_0 : i32, i32
  }
  func.func @transform_11(%arg0: i32) -> (i32, i32) {
    %c0_i32 = arith.constant 0 : i32
    %c0_i32_0 = arith.constant 0 : i32
    %c0_i32_1 = arith.constant 0 : i32
    return %c0_i32, %c0_i32_0 : i32, i32
  }
  func.func @transform_12(%arg0: i32) -> (i32, i32) {
    %c0_i32 = arith.constant 0 : i32
    %c0_i32_0 = arith.constant 0 : i32
    %c0_i32_1 = arith.constant 0 : i32
    return %c0_i32, %c0_i32_0 : i32, i32
  }
  func.func @transform_13(%arg0: i32) -> (i32, i32) {
    %c0_i32 = arith.constant 0 : i32
    %c0_i32_0 = arith.constant 0 : i32
    %c0_i32_1 = arith.constant 0 : i32
    return %c0_i32, %c0_i32_0 : i32, i32
  }
  func.func @transform_14(%arg0: i32) -> (i32, i32, i32) {
    %c0_i32 = arith.constant 0 : i32
    %c0_i32_0 = arith.constant 0 : i32
    %c0_i32_1 = arith.constant 0 : i32
    %c0_i32_2 = arith.constant 0 : i32
    return %c0_i32, %c0_i32_0, %c0_i32_1 : i32, i32, i32
  }
  func.func @transform_15(%arg0: i32) -> (i32, i32) {
    %c0_i32 = arith.constant 0 : i32
    %c0_i32_0 = arith.constant 0 : i32
    %c0_i32_1 = arith.constant 0 : i32
    return %c0_i32, %c0_i32_0 : i32, i32
  }
  func.func @transform_16(%arg0: i32) -> (i32, i32) {
    %c0_i32 = arith.constant 0 : i32
    %c0_i32_0 = arith.constant 0 : i32
    %c0_i32_1 = arith.constant 0 : i32
    return %c0_i32, %c0_i32_0 : i32, i32
  }
  func.func @transform_17(%arg0: i32) -> (i32, i32) {
    %c0_i32 = arith.constant 0 : i32
    %c0_i32_0 = arith.constant 0 : i32
    %c0_i32_1 = arith.constant 0 : i32
    return %c0_i32, %c0_i32_0 : i32, i32
  }
  func.func @transform_18(%arg0: i32) -> (i32, i32) {
    %c0_i32 = arith.constant 0 : i32
    %c0_i32_0 = arith.constant 0 : i32
    %c0_i32_1 = arith.constant 0 : i32
    return %c0_i32, %c0_i32_0 : i32, i32
  }
  func.func @transform_19(%arg0: i32) -> (i32, i32) {
    %c0_i32 = arith.constant 0 : i32
    %c0_i32_0 = arith.constant 0 : i32
    %c0_i32_1 = arith.constant 0 : i32
    return %c0_i32, %c0_i32_0 : i32, i32
  }
  func.func @transform_20(%arg0: i32) -> (i32, i32) {
    %c0_i32 = arith.constant 0 : i32
    %c0_i32_0 = arith.constant 0 : i32
    %c0_i32_1 = arith.constant 0 : i32
    return %c0_i32, %c0_i32_0 : i32, i32
  }
  func.func @transform_21(%arg0: i32) -> (i32, i32) {
    %c0_i32 = arith.constant 0 : i32
    %c0_i32_0 = arith.constant 0 : i32
    return %arg0, %c0_i32 : i32, i32
  }
}

</mosaic_0001>

<llo_original>
// kernel: forward.1
$region0: #{forward.1}
  #allocation0 [shape = 'u32[]', space=smem, size = 0x4, offset = 0x4, fixed_abs, tag = 'smem constant byte address 0x4 - core index']
  #allocation1 [shape = 'u32[144,128]{1,0:T(1,128)}', space=vmem, size = 0x12000, scoped, tag = 'internal scratch']
  #allocation2 [shape = 'f32[144,32]{1,0:T(8,128)}', space=vmem, size = 0x12000, scoped, tag = 'scratch operand']
  #allocation3 [shape = 'f32[49,64]{1,0:T(8,128)}', space=vmem, size = 0x7000, scoped, tag = 'scratch operand']
  #allocation4 [shape = 'f32[36,128]{1,0:T(8,128)}', space=vmem, size = 0x5000, scoped, tag = 'scratch operand']
  #allocation5 [shape = 'f32[9,8,128]{2,1,0:T(8,128)}', space=vmem, size = 0x9000, scoped, tag = 'scratch operand']
  %s0 = inlined_call_operand.vmem [shape: f32[8,100,9], index: 0, kind: input, shape index: {}]
  %s1 = inlined_call_operand.vmem [shape: f32[8,400], index: 1, kind: input, shape index: {}]
  %s2 = inlined_call_operand.vmem [shape: f32[9,32], index: 2, kind: input, shape index: {}]
  %s3 = inlined_call_operand.vmem [shape: f32[1,32], index: 3, kind: input, shape index: {}]
  %s4 = inlined_call_operand.vmem [shape: f32[3,3,32,64], index: 4, kind: input, shape index: {}]
  %s5 = inlined_call_operand.vmem [shape: f32[1,64], index: 5, kind: input, shape index: {}]
  %s6 = inlined_call_operand.vmem [shape: f32[3,3,64,128], index: 6, kind: input, shape index: {}]
  %s7 = inlined_call_operand.vmem [shape: f32[1,128], index: 7, kind: input, shape index: {}]
  %s8 = inlined_call_operand.vmem [shape: f32[3,3,128,128], index: 8, kind: input, shape index: {}]
  %s9 = inlined_call_operand.vmem [shape: f32[1,128], index: 9, kind: input, shape index: {}]
  %s10 = inlined_call_operand.vmem [shape: f32[144,100], index: 10, kind: input, shape index: {}]
  %s11 = inlined_call_operand.vmem [shape: f32[49,105], index: 11, kind: input, shape index: {}]
  %s12 = inlined_call_operand.vmem [shape: f32[36,25], index: 12, kind: input, shape index: {}]
  %s13 = inlined_call_operand.vmem [shape: f32[49,1], index: 13, kind: input, shape index: {}]
  %s14 = inlined_call_operand.vmem [shape: f32[9,128,640], index: 14, kind: input, shape index: {}]
  %s15 = inlined_call_operand.vmem [shape: f32[1,640], index: 15, kind: input, shape index: {}]
  %s16 = inlined_call_operand.vmem [shape: f32[640,448], index: 16, kind: input, shape index: {}]
  %s17 = inlined_call_operand.vmem [shape: f32[1,448], index: 17, kind: input, shape index: {}]
  %s18 = inlined_call_operand.vmem [shape: f32[448,256], index: 18, kind: input, shape index: {}]
  %s19 = inlined_call_operand.vmem [shape: f32[400,256], index: 19, kind: input, shape index: {}]
  %s20 = inlined_call_operand.vmem [shape: f32[1,256], index: 20, kind: input, shape index: {}]
  %s21 = inlined_call_operand.vmem [shape: f32[8,256], index: 21, kind: output, shape index: {}]
  %s22 = sld [smem:[#allocation0]]
  $region101: #{forward.1} parent=0
    _
  %s24 = ssub.s32 1, %s22
  %s25 = scalar_select 0, %s24, %s22
  // Predicated region
  $region2: #{forward.1} parent=0 // pred_check
    _
  $region3: #{forward.1} parent=0 // pred_check_branch
    %27 = sbr.rel (0) target = $region5
  $region4: #{forward.1} parent=0 // pred_region
    _
  $region5: #{forward.1} parent=0 // pred_fallthru
    _
  // Predicated region
  $region6: #{forward.1} parent=0 // pred_check
    _
  $region7: #{forward.1} parent=0 // pred_check_branch
    %29 = sbr.rel (0) target = $region9
  $region8: #{forward.1} parent=0 // pred_region
    _
  $region9: #{forward.1} parent=0 // pred_fallthru
    _
  // Predicated region
  $region10: #{forward.1} parent=0 // pred_check
    _
  $region11: #{forward.1} parent=0 // pred_check_branch
    %31 = sbr.rel (0) target = $region13
  $region12: #{forward.1} parent=0 // pred_region
    _
  $region13: #{forward.1} parent=0 // pred_fallthru
    _
  // Predicated region
  $region14: #{forward.1} parent=0 // pred_check
    _
  $region15: #{forward.1} parent=0 // pred_check_branch
    %33 = sbr.rel (0) target = $region17
  $region16: #{forward.1} parent=0 // pred_region
    _
  $region17: #{forward.1} parent=0 // pred_fallthru
    _
  // Predicated region
  $region18: #{forward.1} parent=0 // pred_check
    _
  $region19: #{forward.1} parent=0 // pred_check_branch
    %35 = sbr.rel (0) target = $region21
  $region20: #{forward.1} parent=0 // pred_region
    _
  $region21: #{forward.1} parent=0 // pred_fallthru
    _
  // Predicated region
  $region22: #{forward.1} parent=0 // pred_check
    _
  $region23: #{forward.1} parent=0 // pred_check_branch
    %37 = sbr.rel (0) target = $region25
  $region24: #{forward.1} parent=0 // pred_region
    _
  $region25: #{forward.1} parent=0 // pred_fallthru
    _
  // Predicated region
  $region26: #{forward.1} parent=0 // pred_check
    _
  $region27: #{forward.1} parent=0 // pred_check_branch
    %39 = sbr.rel (0) target = $region29
  $region28: #{forward.1} parent=0 // pred_region
    _
  $region29: #{forward.1} parent=0 // pred_fallthru
    _
  // Predicated region
  $region30: #{forward.1} parent=0 // pred_check
    _
  $region31: #{forward.1} parent=0 // pred_check_branch
    %41 = sbr.rel (0) target = $region33
  $region32: #{forward.1} parent=0 // pred_region
    _
  $region33: #{forward.1} parent=0 // pred_fallthru
    _
  // Predicated region
  $region34: #{forward.1} parent=0 // pred_check
    _
  $region35: #{forward.1} parent=0 // pred_check_branch
    %43 = sbr.rel (0) target = $region37
  $region36: #{forward.1} parent=0 // pred_region
    _
  $region37: #{forward.1} parent=0 // pred_fallthru
    _
  // Predicated region
  $region38: #{forward.1} parent=0 // pred_check
    _
  $region39: #{forward.1} parent=0 // pred_check_branch
    %45 = sbr.rel (0) target = $region41
  $region40: #{forward.1} parent=0 // pred_region
    _
  $region41: #{forward.1} parent=0 // pred_fallthru
    _
  // Predicated region
  $region42: #{forward.1} parent=0 // pred_check
    _
  $region43: #{forward.1} parent=0 // pred_check_branch
    %47 = sbr.rel (0) target = $region45
  $region44: #{forward.1} parent=0 // pred_region
    _
  $region45: #{forward.1} parent=0 // pred_fallthru
    _
  // Predicated region
  $region46: #{forward.1} parent=0 // pred_check
    _
  $region47: #{forward.1} parent=0 // pred_check_branch
    %49 = sbr.rel (0) target = $region49
  $region48: #{forward.1} parent=0 // pred_region
    _
  $region49: #{forward.1} parent=0 // pred_fallthru
    _
  // Predicated region
  $region50: #{forward.1} parent=0 // pred_check
    _
  $region51: #{forward.1} parent=0 // pred_check_branch
    %51 = sbr.rel (0) target = $region53
  $region52: #{forward.1} parent=0 // pred_region
    _
  $region53: #{forward.1} parent=0 // pred_fallthru
    _
  // Predicated region
  $region54: #{forward.1} parent=0 // pred_check
    _
  $region55: #{forward.1} parent=0 // pred_check_branch
    %53 = sbr.rel (0) target = $region57
  $region56: #{forward.1} parent=0 // pred_region
    _
  $region57: #{forward.1} parent=0 // pred_fallthru
    _
  // Predicated region
  $region58: #{forward.1} parent=0 // pred_check
    _
  $region59: #{forward.1} parent=0 // pred_check_branch
    %55 = sbr.rel (0) target = $region61
  $region60: #{forward.1} parent=0 // pred_region
    _
  $region61: #{forward.1} parent=0 // pred_fallthru
    _
  // Predicated region
  $region62: #{forward.1} parent=0 // pred_check
    _
  $region63: #{forward.1} parent=0 // pred_check_branch
    %57 = sbr.rel (0) target = $region65
  $region64: #{forward.1} parent=0 // pred_region
    _
  $region65: #{forward.1} parent=0 // pred_fallthru
    _
  // Predicated region
  $region66: #{forward.1} parent=0 // pred_check
    _
  $region67: #{forward.1} parent=0 // pred_check_branch
    %59 = sbr.rel (0) target = $region69
  $region68: #{forward.1} parent=0 // pred_region
    _
  $region69: #{forward.1} parent=0 // pred_fallthru
    _
  // Predicated region
  $region70: #{forward.1} parent=0 // pred_check
    _
  $region71: #{forward.1} parent=0 // pred_check_branch
    %61 = sbr.rel (0) target = $region73
  $region72: #{forward.1} parent=0 // pred_region
    _
  $region73: #{forward.1} parent=0 // pred_fallthru
    _
  // Predicated region
  $region74: #{forward.1} parent=0 // pred_check
    _
  $region75: #{forward.1} parent=0 // pred_check_branch
    %63 = sbr.rel (0) target = $region77
  $region76: #{forward.1} parent=0 // pred_region
    _
  $region77: #{forward.1} parent=0 // pred_fallthru
    _
  // Predicated region
  $region78: #{forward.1} parent=0 // pred_check
    _
  $region79: #{forward.1} parent=0 // pred_check_branch
    %65 = sbr.rel (0) target = $region81
  $region80: #{forward.1} parent=0 // pred_region
    _
  $region81: #{forward.1} parent=0 // pred_fallthru
    _
  // Predicated region
  $region82: #{forward.1} parent=0 // pred_check
    _
  $region83: #{forward.1} parent=0 // pred_check_branch
    %67 = sbr.rel (0) target = $region85
  $region84: #{forward.1} parent=0 // pred_region
    _
  $region85: #{forward.1} parent=0 // pred_fallthru
    _
  loop: start=0, step=1, limit=8
  $region86: #{forward.1} parent=0 // loop_pre_header
    _
  $region87: #{forward.1} parent=0 // loop_header
    %s69 = sphi 0, %s73
    %p70 = scmp.ge.s32.totalorder %s69, 8
  $region88: #{forward.1} parent=0 // loop_header_branch
    %72 = sbr.rel (%p70) target = $region92
  $region89: #{forward.1} parent=0 // loop_body
    %s74 = smul.u32 %s69, 104
    %s75 = scalar_lea.vmem %s0, %s74
    %v76 = vld [vmem:[%s75] sm:$0xff]
    %v77 = vld [vmem:[%s75 + $0x8] sm:$0xff]
    %v78 = vld [vmem:[%s75 + $0x10] sm:$0xff]
    %v79 = vld [vmem:[%s75 + $0x18] sm:$0xff]
    %v80 = vld [vmem:[%s75 + $0x20] sm:$0xff]
    %v81 = vld [vmem:[%s75 + $0x28] sm:$0xff]
    %v82 = vld [vmem:[%s75 + $0x30] sm:$0xff]
    %v83 = vld [vmem:[%s75 + $0x38] sm:$0xff]
    %v84 = vld [vmem:[%s75 + $0x40] sm:$0xff]
    %v85 = vld [vmem:[%s75 + $0x48] sm:$0xff]
    %v86 = vld [vmem:[%s75 + $0x50] sm:$0xff]
    %v87 = vld [vmem:[%s75 + $0x58] sm:$0xff]
    %v88 = vld [vmem:[%s75 + $0x60] sm:$0xf]
    %v89 = vld [vmem:[%s2] sm:$0xff]
    %v90 = vld [vmem:[%s2 + $0x8] sm:$0x1]
    %v91 = vld [vmem:[%s3] sm:$0x1]
    %v93 = vlaneseq
    %v94 = vshrl.u32 %v93, 7
    %v95 = vsub.s32 0, %v94
    %v96 = vrot.slane %v91, %v95
    %vm98 = vcmask 72704
    %v100 = vsel %vm98, %v76, 0
    %v103 = vsel %vm98, %v77, 0
    %v106 = vsel %vm98, %v78, 0
    %v109 = vsel %vm98, %v79, 0
    %v112 = vsel %vm98, %v80, 0
    %v115 = vsel %vm98, %v81, 0
    %v118 = vsel %vm98, %v82, 0
    %v121 = vsel %vm98, %v83, 0
    %v124 = vsel %vm98, %v84, 0
    %v127 = vsel %vm98, %v85, 0
    %v130 = vsel %vm98, %v86, 0
    %v133 = vsel %vm98, %v87, 0
    %v136 = vsel %vm98, %v88, 0
    %vm138 = vcmask 1040384
    %v140 = vsel %vm138, %v90, 0
    %142 = vmatprep.subr.mxu0 0.0
    %143 = vmatpush1.msra.mxu0 %v89
    %144 = vmatprep.subr.mxu0 0.0
    %145 = vmatpush1.msra.mxu0 %v140
    %146 = vmatprep.subr.mxu0 0.0
    %147 = vmatpush1.msra.mxu0 0.0
    %148 = vmatprep.subr.mxu0 0.0
    %149 = vmatpush1.msra.mxu0 0.0
    %150 = vmatprep.subr.mxu0 0.0
    %151 = vmatpush1.msra.mxu0 0.0
    %152 = vmatprep.subr.mxu0 0.0
    %153 = vmatpush1.msra.mxu0 0.0
    %154 = vmatprep.subr.mxu0 0.0
    %155 = vmatpush1.msra.mxu0 0.0
    %156 = vmatprep.subr.mxu0 0.0
    %157 = vmatpush1.msra.mxu0 0.0
    %158 = vmatprep.subr.mxu0 0.0
    %159 = vmatpush1.msra.mxu0 0.0
    %160 = vmatprep.subr.mxu0 0.0
    %161 = vmatpush1.msra.mxu0 0.0
    %162 = vmatprep.subr.mxu0 0.0
    %163 = vmatpush1.msra.mxu0 0.0
    %164 = vmatprep.subr.mxu0 0.0
    %165 = vmatpush1.msra.mxu0 0.0
    %166 = vmatprep.subr.mxu0 0.0
    %167 = vmatpush1.msra.mxu0 0.0
    %168 = vmatprep.subr.mxu0 0.0
    %169 = vmatpush1.msra.mxu0 0.0
    %170 = vmatprep.subr.mxu0 0.0
    %171 = vmatpush1.msra.mxu0 0.0
    %172 = vmatprep.subr.mxu0 0.0
    %173 = vmatpush1.msra.mxu0 0.0
    %174 = vmatprep.subr.mxu0 0.0
    %175 = vmatpush1.msra.mxu0 0.0
    %176 = vmatprep.subr.mxu0 0.0
    %177 = vmatpush1.msra.mxu0 0.0
    %178 = vmatprep.subr.mxu0 0.0
    %179 = vmatpush1.msra.mxu0 0.0
    %180 = vmatprep.subr.mxu0 0.0
    %181 = vmatpush1.msra.mxu0 0.0
    %182 = vmatprep.subr.mxu0 0.0
    %183 = vmatpush1.msra.mxu0 0.0
    %184 = vmatprep.subr.mxu0 0.0
    %185 = vmatpush1.msra.mxu0 0.0
    %186 = vmatprep.subr.mxu0 0.0
    %187 = vmatpush1.msra.mxu0 0.0
    %188 = vmatprep.subr.mxu0 0.0
    %189 = vmatpush1.msra.mxu0 0.0
    %190 = vmatprep.subr.mxu0 0.0
    %191 = vmatpush1.msra.mxu0 0.0
    %192 = vmatprep.subr.mxu0 0.0
    %193 = vmatpush1.msra.mxu0 0.0
    %194 = vmatprep.subr.mxu0 0.0
    %195 = vmatpush1.msra.mxu0 0.0
    %196 = vmatprep.subr.mxu0 0.0
    %197 = vmatpush1.msra.mxu0 0.0
    %198 = vmatprep.subr.mxu0 0.0
    %199 = vmatpush1.msra.mxu0 0.0
    %200 = vmatprep.subr.mxu0 0.0
    %201 = vmatpush1.msra.mxu0 0.0
    %202 = vmatprep.subr.mxu0 0.0
    %203 = vmatpush1.msra.mxu0 0.0
    %204 = vmatprep.subr.mxu0 0.0
    %205 = vmatpush1.msra.mxu0 0.0
    %206 = vmatprep.mubr.f32.mxu0 0.0
    %207 = vmatmul.mubr.f32.gmra.mrb[0].mxu0 %v100
    %v208 = vpop.f32.mrb[0].mxu0
    %v209 = vadd.f32 %v96, %v208
    %v210 = vpop.f32.mrb[0].mxu0
    %211 = vmatprep.mubr.f32.mxu0 0.0
    %212 = vmatmul.mubr.f32.gmra.mrb[0].mxu0 %v103
    %v213 = vpop.f32.mrb[0].mxu0
    %v214 = vadd.f32 %v96, %v213
    %v215 = vpop.f32.mrb[0].mxu0
    %216 = vmatprep.mubr.f32.mxu0 0.0
    %217 = vmatmul.mubr.f32.gmra.mrb[0].mxu0 %v106
    %v218 = vpop.f32.mrb[0].mxu0
    %v219 = vadd.f32 %v96, %v218
    %v220 = vpop.f32.mrb[0].mxu0
    %221 = vmatprep.mubr.f32.mxu0 0.0
    %222 = vmatmul.mubr.f32.gmra.mrb[0].mxu0 %v109
    %v223 = vpop.f32.mrb[0].mxu0
    %v224 = vadd.f32 %v96, %v223
    %v225 = vpop.f32.mrb[0].mxu0
    %226 = vmatprep.mubr.f32.mxu0 0.0
    %227 = vmatmul.mubr.f32.gmra.mrb[0].mxu0 %v112
    %v228 = vpop.f32.mrb[0].mxu0
    %v229 = vadd.f32 %v96, %v228
    %v230 = vpop.f32.mrb[0].mxu0
    %231 = vmatprep.mubr.f32.mxu0 0.0
    %232 = vmatmul.mubr.f32.gmra.mrb[0].mxu0 %v115
    %v233 = vpop.f32.mrb[0].mxu0
    %v234 = vadd.f32 %v96, %v233
    %v235 = vpop.f32.mrb[0].mxu0
    %236 = vmatprep.mubr.f32.mxu0 0.0
    %237 = vmatmul.mubr.f32.gmra.mrb[0].mxu0 %v118
    %v238 = vpop.f32.mrb[0].mxu0
    %v239 = vadd.f32 %v96, %v238
    %v240 = vpop.f32.mrb[0].mxu0
    %241 = vmatprep.mubr.f32.mxu0 0.0
    %242 = vmatmul.mubr.f32.gmra.mrb[0].mxu0 %v121
    %v243 = vpop.f32.mrb[0].mxu0
    %v244 = vadd.f32 %v96, %v243
    %v245 = vpop.f32.mrb[0].mxu0
    %246 = vmatprep.mubr.f32.mxu0 0.0
    %247 = vmatmul.mubr.f32.gmra.mrb[0].mxu0 %v124
    %v248 = vpop.f32.mrb[0].mxu0
    %v249 = vadd.f32 %v96, %v248
    %v250 = vpop.f32.mrb[0].mxu0
    %251 = vmatprep.mubr.f32.mxu0 0.0
    %252 = vmatmul.mubr.f32.gmra.mrb[0].mxu0 %v127
    %v253 = vpop.f32.mrb[0].mxu0
    %v254 = vadd.f32 %v96, %v253
    %v255 = vpop.f32.mrb[0].mxu0
    %256 = vmatprep.mubr.f32.mxu0 0.0
    %257 = vmatmul.mubr.f32.gmra.mrb[0].mxu0 %v130
    %v258 = vpop.f32.mrb[0].mxu0
    %v259 = vadd.f32 %v96, %v258
    %v260 = vpop.f32.mrb[0].mxu0
    %261 = vmatprep.mubr.f32.mxu0 0.0
    %262 = vmatmul.mubr.f32.gmra.mrb[0].mxu0 %v133
    %v263 = vpop.f32.mrb[0].mxu0
    %v264 = vadd.f32 %v96, %v263
    %v265 = vpop.f32.mrb[0].mxu0
    %266 = vmatprep.mubr.f32.mxu0 0.0
    %267 = vmatmul.mubr.f32.gmra.mrb[0].mxu0 %v136
    %v268 = vpop.f32.mrb[0].mxu0
    %v269 = vadd.f32 %v96, %v268
    %v270 = vpop.f32.mrb[0].mxu0
    %271 = vdwg.mxu0
    %v272 = vxor.u32 %v209, 2147483648
    %v273 = vxor.u32 %v214, 2147483648
    %v274 = vxor.u32 %v219, 2147483648
    %v275 = vxor.u32 %v224, 2147483648
    %v276 = vxor.u32 %v229, 2147483648
    %v277 = vxor.u32 %v234, 2147483648
    %v278 = vxor.u32 %v239, 2147483648
    %v279 = vxor.u32 %v244, 2147483648
    %v280 = vxor.u32 %v249, 2147483648
    %v281 = vxor.u32 %v254, 2147483648
    %v282 = vxor.u32 %v259, 2147483648
    %v283 = vxor.u32 %v264, 2147483648
    %v284 = vxor.u32 %v269, 2147483648
    %v285 = vmul.f32 %v272, 1.442695
    %v286 = vpow.pop %v285
    %v287 = vmul.f32 %v273, 1.442695
    %v288 = vpow.pop %v287
    %v289 = vmul.f32 %v274, 1.442695
    %v290 = vpow.pop %v289
    %v291 = vmul.f32 %v275, 1.442695
    %v292 = vpow.pop %v291
    %v293 = vmul.f32 %v276, 1.442695
    %v294 = vpow.pop %v293
    %v295 = vmul.f32 %v277, 1.442695
    %v296 = vpow.pop %v295
    %v297 = vmul.f32 %v278, 1.442695
    %v298 = vpow.pop %v297
    %v299 = vmul.f32 %v279, 1.442695
    %v300 = vpow.pop %v299
    %v301 = vmul.f32 %v280, 1.442695
    %v302 = vpow.pop %v301
    %v303 = vmul.f32 %v281, 1.442695
    %v304 = vpow.pop %v303
    %v305 = vmul.f32 %v282, 1.442695
    %v306 = vpow.pop %v305
    %v307 = vmul.f32 %v283, 1.442695
    %v308 = vpow.pop %v307
    %v309 = vmul.f32 %v284, 1.442695
    %v310 = vpow.pop %v309
    %v311 = vadd.f32 %v286, 1.0
    %v312 = vadd.f32 %v288, 1.0
    %v313 = vadd.f32 %v290, 1.0
    %v314 = vadd.f32 %v292, 1.0
    %v315 = vadd.f32 %v294, 1.0
    %v316 = vadd.f32 %v296, 1.0
    %v317 = vadd.f32 %v298, 1.0
    %v318 = vadd.f32 %v300, 1.0
    %v319 = vadd.f32 %v302, 1.0
    %v320 = vadd.f32 %v304, 1.0
    %v321 = vadd.f32 %v306, 1.0
    %v322 = vadd.f32 %v308, 1.0
    %v323 = vadd.f32 %v310, 1.0
    %v324 = vrcp.pop %v311
    %v325 = vmul.f32 1.0, %v324
    %v326 = vrcp.pop %v312
    %v327 = vmul.f32 1.0, %v326
    %v328 = vrcp.pop %v313
    %v329 = vmul.f32 1.0, %v328
    %v330 = vrcp.pop %v314
    %v331 = vmul.f32 1.0, %v330
    %v332 = vrcp.pop %v315
    %v333 = vmul.f32 1.0, %v332
    %v334 = vrcp.pop %v316
    %v335 = vmul.f32 1.0, %v334
    %v336 = vrcp.pop %v317
    %v337 = vmul.f32 1.0, %v336
    %v338 = vrcp.pop %v318
    %v339 = vmul.f32 1.0, %v338
    %v340 = vrcp.pop %v319
    %v341 = vmul.f32 1.0, %v340
    %v342 = vrcp.pop %v320
    %v343 = vmul.f32 1.0, %v342
    %v344 = vrcp.pop %v321
    %v345 = vmul.f32 1.0, %v344
    %v346 = vrcp.pop %v322
    %v347 = vmul.f32 1.0, %v346
    %v348 = vrcp.pop %v323
    %v349 = vmul.f32 1.0, %v348
    %v350 = vld [vmem:[%s10] sm:$0xff]
    %v351 = vld [vmem:[%s10 + $0x8] sm:$0xff]
    %v352 = vld [vmem:[%s10 + $0x10] sm:$0xff]
    %v353 = vld [vmem:[%s10 + $0x18] sm:$0xff]
    %v354 = vld [vmem:[%s10 + $0x20] sm:$0xff]
    %v355 = vld [vmem:[%s10 + $0x28] sm:$0xff]
    %v356 = vld [vmem:[%s10 + $0x30] sm:$0xff]
    %v357 = vld [vmem:[%s10 + $0x38] sm:$0xff]
    %v358 = vld [vmem:[%s10 + $0x40] sm:$0xff]
    %v359 = vld [vmem:[%s10 + $0x48] sm:$0xff]
    %v360 = vld [vmem:[%s10 + $0x50] sm:$0xff]
    %v361 = vld [vmem:[%s10 + $0x58] sm:$0xff]
    %v362 = vld [vmem:[%s10 + $0x60] sm:$0xff]
    %v363 = vld [vmem:[%s10 + $0x68] sm:$0xff]
    %v364 = vld [vmem:[%s10 + $0x70] sm:$0xff]
    %v365 = vld [vmem:[%s10 + $0x78] sm:$0xff]
    %v366 = vld [vmem:[%s10 + $0x80] sm:$0xff]
    %v367 = vld [vmem:[%s10 + $0x88] sm:$0xff]
    %vm368 = vcmask 818176
    %v370 = vsel %vm368, %v350, 0
    %v373 = vsel %vm368, %v351, 0
    %v376 = vsel %vm368, %v352, 0
    %v379 = vsel %vm368, %v353, 0
    %v382 = vsel %vm368, %v354, 0
    %v385 = vsel %vm368, %v355, 0
    %v388 = vsel %vm368, %v356, 0
    %v391 = vsel %vm368, %v357, 0
    %v394 = vsel %vm368, %v358, 0
    %v397 = vsel %vm368, %v359, 0
    %v400 = vsel %vm368, %v360, 0
    %v403 = vsel %vm368, %v361, 0
    %v406 = vsel %vm368, %v362, 0
    %v409 = vsel %vm368, %v363, 0
    %v412 = vsel %vm368, %v364, 0
    %v415 = vsel %vm368, %v365, 0
    %v418 = vsel %vm368, %v366, 0
    %v421 = vsel %vm368, %v367, 0
    %vm423 = vcmask 1043456
    %v425 = vsel %vm423, %v349, 0
    %427 = vmatprep.subr.mxu0 0.0
    %428 = vmatpush1.msra.mxu0 %v325
    %429 = vmatprep.subr.mxu0 0.0
    %430 = vmatpush1.msra.mxu0 %v327
    %431 = vmatprep.subr.mxu0 0.0
    %432 = vmatpush1.msra.mxu0 %v329
    %433 = vmatprep.subr.mxu0 0.0
    %434 = vmatpush1.msra.mxu0 %v331
    %435 = vmatprep.subr.mxu0 0.0
    %436 = vmatpush1.msra.mxu0 %v333
    %437 = vmatprep.subr.mxu0 0.0
    %438 = vmatpush1.msra.mxu0 %v335
    %439 = vmatprep.subr.mxu0 0.0
    %440 = vmatpush1.msra.mxu0 %v337
    %441 = vmatprep.subr.mxu0 0.0
    %442 = vmatpush1.msra.mxu0 %v339
    %443 = vmatprep.subr.mxu0 0.0
    %444 = vmatpush1.msra.mxu0 %v341
    %445 = vmatprep.subr.mxu0 0.0
    %446 = vmatpush1.msra.mxu0 %v343
    %447 = vmatprep.subr.mxu0 0.0
    %448 = vmatpush1.msra.mxu0 %v345
    %449 = vmatprep.subr.mxu0 0.0
    %450 = vmatpush1.msra.mxu0 %v347
    %451 = vmatprep.subr.mxu0 0.0
    %452 = vmatpush1.msra.mxu0 %v425
    %453 = vmatprep.subr.mxu0 0.0
    %454 = vmatpush1.msra.mxu0 0.0
    %455 = vmatprep.subr.mxu0 0.0
    %456 = vmatpush1.msra.mxu0 0.0
    %457 = vmatprep.subr.mxu0 0.0
    %458 = vmatpush1.msra.mxu0 0.0
    %459 = vmatprep.subr.mxu0 0.0
    %460 = vmatpush1.msra.mxu0 0.0
    %461 = vmatprep.subr.mxu0 0.0
    %462 = vmatpush1.msra.mxu0 0.0
    %463 = vmatprep.subr.mxu0 0.0
    %464 = vmatpush1.msra.mxu0 0.0
    %465 = vmatprep.subr.mxu0 0.0
    %466 = vmatpush1.msra.mxu0 0.0
    %467 = vmatprep.subr.mxu0 0.0
    %468 = vmatpush1.msra.mxu0 0.0
    %469 = vmatprep.subr.mxu0 0.0
    %470 = vmatpush1.msra.mxu0 0.0
    %471 = vmatprep.subr.mxu0 0.0
    %472 = vmatpush1.msra.mxu0 0.0
    %473 = vmatprep.subr.mxu0 0.0
    %474 = vmatpush1.msra.mxu0 0.0
    %475 = vmatprep.subr.mxu0 0.0
    %476 = vmatpush1.msra.mxu0 0.0
    %477 = vmatprep.subr.mxu0 0.0
    %478 = vmatpush1.msra.mxu0 0.0
    %479 = vmatprep.subr.mxu0 0.0
    %480 = vmatpush1.msra.mxu0 0.0
    %481 = vmatprep.subr.mxu0 0.0
    %482 = vmatpush1.msra.mxu0 0.0
    %483 = vmatprep.subr.mxu0 0.0
    %484 = vmatpush1.msra.mxu0 0.0
    %485 = vmatprep.subr.mxu0 0.0
    %486 = vmatpush1.msra.mxu0 0.0
    %487 = vmatprep.subr.mxu0 0.0
    %488 = vmatpush1.msra.mxu0 0.0
    %489 = vmatprep.subr.mxu0 0.0
    %490 = vmatpush1.msra.mxu0 0.0
    %491 = vmatprep.mubr.f32.mxu0 0.0
    %492 = vmatmul.mubr.f32.gmra.mrb[0].mxu0 %v370
    %v493 = vpop.f32.mrb[0].mxu0
    %v494 = vadd.f32 0.0, %v493
    %v495 = vpop.f32.mrb[0].mxu0
    %496 = vmatprep.mubr.f32.mxu0 0.0
    %497 = vmatmul.mubr.f32.gmra.mrb[0].mxu0 %v373
    %v498 = vpop.f32.mrb[0].mxu0
    %v499 = vadd.f32 0.0, %v498
    %v500 = vpop.f32.mrb[0].mxu0
    %501 = vmatprep.mubr.f32.mxu0 0.0
    %502 = vmatmul.mubr.f32.gmra.mrb[0].mxu0 %v376
    %v503 = vpop.f32.mrb[0].mxu0
    %v504 = vadd.f32 0.0, %v503
    %v505 = vpop.f32.mrb[0].mxu0
    %506 = vmatprep.mubr.f32.mxu0 0.0
    %507 = vmatmul.mubr.f32.gmra.mrb[0].mxu0 %v379
    %v508 = vpop.f32.mrb[0].mxu0
    %v509 = vadd.f32 0.0, %v508
    %v510 = vpop.f32.mrb[0].mxu0
    %511 = vmatprep.mubr.f32.mxu0 0.0
    %512 = vmatmul.mubr.f32.gmra.mrb[0].mxu0 %v382
    %v513 = vpop.f32.mrb[0].mxu0
    %v514 = vadd.f32 0.0, %v513
    %v515 = vpop.f32.mrb[0].mxu0
    %516 = vmatprep.mubr.f32.mxu0 0.0
    %517 = vmatmul.mubr.f32.gmra.mrb[0].mxu0 %v385
    %v518 = vpop.f32.mrb[0].mxu0
    %v519 = vadd.f32 0.0, %v518
    %v520 = vpop.f32.mrb[0].mxu0
    %521 = vmatprep.mubr.f32.mxu0 0.0
    %522 = vmatmul.mubr.f32.gmra.mrb[0].mxu0 %v388
    %v523 = vpop.f32.mrb[0].mxu0
    %v524 = vadd.f32 0.0, %v523
    %v525 = vpop.f32.mrb[0].mxu0
    %526 = vmatprep.mubr.f32.mxu0 0.0
    %527 = vmatmul.mubr.f32.gmra.mrb[0].mxu0 %v391
    %v528 = vpop.f32.mrb[0].mxu0
    %v529 = vadd.f32 0.0, %v528
    %v530 = vpop.f32.mrb[0].mxu0
    %531 = vmatprep.mubr.f32.mxu0 0.0
    %532 = vmatmul.mubr.f32.gmra.mrb[0].mxu0 %v394
    %v533 = vpop.f32.mrb[0].mxu0
    %v534 = vadd.f32 0.0, %v533
    %v535 = vpop.f32.mrb[0].mxu0
    %536 = vmatprep.mubr.f32.mxu0 0.0
    %537 = vmatmul.mubr.f32.gmra.mrb[0].mxu0 %v397
    %v538 = vpop.f32.mrb[0].mxu0
    %v539 = vadd.f32 0.0, %v538
    %v540 = vpop.f32.mrb[0].mxu0
    %541 = vmatprep.mubr.f32.mxu0 0.0
    %542 = vmatmul.mubr.f32.gmra.mrb[0].mxu0 %v400
    %v543 = vpop.f32.mrb[0].mxu0
    %v544 = vadd.f32 0.0, %v543
    %v545 = vpop.f32.mrb[0].mxu0
    %546 = vmatprep.mubr.f32.mxu0 0.0
    %547 = vmatmul.mubr.f32.gmra.mrb[0].mxu0 %v403
    %v548 = vpop.f32.mrb[0].mxu0
    %v549 = vadd.f32 0.0, %v548
    %v550 = vpop.f32.mrb[0].mxu0
    %551 = vmatprep.mubr.f32.mxu0 0.0
    %552 = vmatmul.mubr.f32.gmra.mrb[0].mxu0 %v406
    %v553 = vpop.f32.mrb[0].mxu0
    %v554 = vadd.f32 0.0, %v553
    %v555 = vpop.f32.mrb[0].mxu0
    %556 = vmatprep.mubr.f32.mxu0 0.0
    %557 = vmatmul.mubr.f32.gmra.mrb[0].mxu0 %v409
    %v558 = vpop.f32.mrb[0].mxu0
    %v559 = vadd.f32 0.0, %v558
    %v560 = vpop.f32.mrb[0].mxu0
    %561 = vmatprep.mubr.f32.mxu0 0.0
    %562 = vmatmul.mubr.f32.gmra.mrb[0].mxu0 %v412
    %v563 = vpop.f32.mrb[0].mxu0
    %v564 = vadd.f32 0.0, %v563
    %v565 = vpop.f32.mrb[0].mxu0
    %566 = vmatprep.mubr.f32.mxu0 0.0
    %567 = vmatmul.mubr.f32.gmra.mrb[0].mxu0 %v415
    %v568 = vpop.f32.mrb[0].mxu0
    %v569 = vadd.f32 0.0, %v568
    %v570 = vpop.f32.mrb[0].mxu0
    %571 = vmatprep.mubr.f32.mxu0 0.0
    %572 = vmatmul.mubr.f32.gmra.mrb[0].mxu0 %v418
    %v573 = vpop.f32.mrb[0].mxu0
    %v574 = vadd.f32 0.0, %v573
    %v575 = vpop.f32.mrb[0].mxu0
    %576 = vmatprep.mubr.f32.mxu0 0.0
    %577 = vmatmul.mubr.f32.gmra.mrb[0].mxu0 %v421
    %v578 = vpop.f32.mrb[0].mxu0
    %v579 = vadd.f32 0.0, %v578
    %v580 = vpop.f32.mrb[0].mxu0
    %581 = vdwg.mxu0
    %vm582 = vcmask 261120
    %583 = vst.msk [vmem:[#allocation2] sm:$0xff] %vm582, %v494
    %584 = vst.msk [vmem:[#allocation2 + $0x8] sm:$0xff] %vm582, %v499
    %585 = vst.msk [vmem:[#allocation2 + $0x10] sm:$0xff] %vm582, %v504
    %586 = vst.msk [vmem:[#allocation2 + $0x18] sm:$0xff] %vm582, %v509
    %587 = vst.msk [vmem:[#allocation2 + $0x20] sm:$0xff] %vm582, %v514
    %588 = vst.msk [vmem:[#allocation2 + $0x28] sm:$0xff] %vm582, %v519
    %589 = vst.msk [vmem:[#allocation2 + $0x30] sm:$0xff] %vm582, %v524
    %590 = vst.msk [vmem:[#allocation2 + $0x38] sm:$0xff] %vm582, %v529
    %591 = vst.msk [vmem:[#allocation2 + $0x40] sm:$0xff] %vm582, %v534
    %592 = vst.msk [vmem:[#allocation2 + $0x48] sm:$0xff] %vm582, %v539
    %593 = vst.msk [vmem:[#allocation2 + $0x50] sm:$0xff] %vm582, %v544
    %594 = vst.msk [vmem:[#allocation2 + $0x58] sm:$0xff] %vm582, %v549
    %595 = vst.msk [vmem:[#allocation2 + $0x60] sm:$0xff] %vm582, %v554
    %596 = vst.msk [vmem:[#allocation2 + $0x68] sm:$0xff] %vm582, %v559
    %597 = vst.msk [vmem:[#allocation2 + $0x70] sm:$0xff] %vm582, %v564
    %598 = vst.msk [vmem:[#allocation2 + $0x78] sm:$0xff] %vm582, %v569
    %599 = vst.msk [vmem:[#allocation2 + $0x80] sm:$0xff] %vm582, %v574
    %600 = vst.msk [vmem:[#allocation2 + $0x88] sm:$0xff] %vm582, %v579
    %v601 = vld [vmem:[#allocation2] sm:$0xff]
    %v602 = vld [vmem:[#allocation2 + $0x8] sm:$0xff]
    %v603 = vld [vmem:[#allocation2 + $0x10] sm:$0xff]
    %v604 = vld [vmem:[#allocation2 + $0x18] sm:$0xff]
    %v605 = vld [vmem:[#allocation2 + $0x20] sm:$0xff]
    %v606 = vld [vmem:[#allocation2 + $0x28] sm:$0xff]
    %v607 = vld [vmem:[#allocation2 + $0x30] sm:$0xff]
    %v608 = vld [vmem:[#allocation2 + $0x38] sm:$0xff]
    %v609 = vld [vmem:[#allocation2 + $0x40] sm:$0xff]
    %v610 = vld [vmem:[#allocation2 + $0x48] sm:$0xff]
    %v611 = vld [vmem:[#allocation2 + $0x50] sm:$0xff]
    %v612 = vld [vmem:[#allocation2 + $0x58] sm:$0xff]
    %v613 = vld [vmem:[#allocation2 + $0x60] sm:$0xff]
    %v614 = vld [vmem:[#allocation2 + $0x68] sm:$0xff]
    %v615 = vld [vmem:[#allocation2 + $0x70] sm:$0x3f]
    %v616 = vld [vmem:[%s4] sm:$0xff]
    %v617 = vld [vmem:[%s4 + $0x8] sm:$0xff]
    %v618 = vld [vmem:[%s4 + $0x10] sm:$0xff]
    %v619 = vld [vmem:[%s4 + $0x18] sm:$0xff]
    %v620 = vld [vmem:[#allocation2 + $0x1] sm:$0xff]
    %v621 = vld [vmem:[#allocation2 + $0x9] sm:$0xff]
    %v622 = vld [vmem:[#allocation2 + $0x11] sm:$0xff]
    %v623 = vld [vmem:[#allocation2 + $0x19] sm:$0xff]
    %v624 = vld [vmem:[#allocation2 + $0x21] sm:$0xff]
    %v625 = vld [vmem:[#allocation2 + $0x29] sm:$0xff]
    %v626 = vld [vmem:[#allocation2 + $0x31] sm:$0xff]
    %v627 = vld [vmem:[#allocation2 + $0x39] sm:$0xff]
    %v628 = vld [vmem:[#allocation2 + $0x41] sm:$0xff]
    %v629 = vld [vmem:[#allocation2 + $0x49] sm:$0xff]
    %v630 = vld [vmem:[#allocation2 + $0x51] sm:$0xff]
    %v631 = vld [vmem:[#allocation2 + $0x59] sm:$0xff]
    %v632 = vld [vmem:[#allocation2 + $0x61] sm:$0xff]
    %v633 = vld [vmem:[#allocation2 + $0x69] sm:$0xff]
    %v634 = vld [vmem:[#allocation2 + $0x71] sm:$0x3f]
    %s635 = scalar_lea.vmem %s4, 32
    %v636 = vld [vmem:[%s635] sm:$0xff]
    %v637 = vld [vmem:[%s635 + $0x8] sm:$0xff]
    %v638 = vld [vmem:[%s635 + $0x10] sm:$0xff]
    %v639 = vld [vmem:[%s635 + $0x18] sm:$0xff]
    %v641 = vsel %vm582, %v620, 0
    %v644 = vsel %vm582, %v621, 0
    %v647 = vsel %vm582, %v622, 0
    %v650 = vsel %vm582, %v623, 0
    %v653 = vsel %vm582, %v624, 0
    %v656 = vsel %vm582, %v625, 0
    %v659 = vsel %vm582, %v626, 0
    %v662 = vsel %vm582, %v627, 0
    %v665 = vsel %vm582, %v628, 0
    %v668 = vsel %vm582, %v629, 0
    %v671 = vsel %vm582, %v630, 0
    %v674 = vsel %vm582, %v631, 0
    %v677 = vsel %vm582, %v632, 0
    %v680 = vsel %vm582, %v633, 0
    %v683 = vsel %vm582, %v634, 0
    %685 = vmatprep.subr.mxu0 0.0
    %686 = vmatpush1.msra.mxu0 %v636
    %687 = vmatprep.subr.mxu0 0.0
    %688 = vmatpush1.msra.mxu0 %v637
    %689 = vmatprep.subr.mxu0 0.0
    %690 = vmatpush1.msra.mxu0 %v638
    %691 = vmatprep.subr.mxu0 0.0
    %692 = vmatpush1.msra.mxu0 %v639
    %693 = vmatprep.subr.mxu0 0.0
    %694 = vmatpush1.msra.mxu0 0.0
    %695 = vmatprep.subr.mxu0 0.0
    %696 = vmatpush1.msra.mxu0 0.0
    %697 = vmatprep.subr.mxu0 0.0
    %698 = vmatpush1.msra.mxu0 0.0
    %699 = vmatprep.subr.mxu0 0.0
    %700 = vmatpush1.msra.mxu0 0.0
    %701 = vmatprep.subr.mxu0 0.0
    %702 = vmatpush1.msra.mxu0 0.0
    %703 = vmatprep.subr.mxu0 0.0
    %704 = vmatpush1.msra.mxu0 0.0
    %705 = vmatprep.subr.mxu0 0.0
    %706 = vmatpush1.msra.mxu0 0.0
    %707 = vmatprep.subr.mxu0 0.0
    %708 = vmatpush1.msra.mxu0 0.0
    %709 = vmatprep.subr.mxu0 0.0
    %710 = vmatpush1.msra.mxu0 0.0
    %711 = vmatprep.subr.mxu0 0.0
    %712 = vmatpush1.msra.mxu0 0.0
    %713 = vmatprep.subr.mxu0 0.0
    %714 = vmatpush1.msra.mxu0 0.0
    %715 = vmatprep.subr.mxu0 0.0
    %716 = vmatpush1.msra.mxu0 0.0
    %717 = vmatprep.subr.mxu0 0.0
    %718 = vmatpush1.msra.mxu0 0.0
    %719 = vmatprep.subr.mxu0 0.0
    %720 = vmatpush1.msra.mxu0 0.0
    %721 = vmatprep.subr.mxu0 0.0
    %722 = vmatpush1.msra.mxu0 0.0
    %723 = vmatprep.subr.mxu0 0.0
    %724 = vmatpush1.msra.mxu0 0.0
    %725 = vmatprep.subr.mxu0 0.0
    %726 = vmatpush1.msra.mxu0 0.0
    %727 = vmatprep.subr.mxu0 0.0
    %728 = vmatpush1.msra.mxu0 0.0
    %729 = vmatprep.subr.mxu0 0.0
    %730 = vmatpush1.msra.mxu0 0.0
    %731 = vmatprep.subr.mxu0 0.0
    %732 = vmatpush1.msra.mxu0 0.0
    %733 = vmatprep.subr.mxu0 0.0
    %734 = vmatpush1.msra.mxu0 0.0
    %735 = vmatprep.subr.mxu0 0.0
    %736 = vmatpush1.msra.mxu0 0.0
    %737 = vmatprep.subr.mxu0 0.0
    %738 = vmatpush1.msra.mxu0 0.0
    %739 = vmatprep.subr.mxu0 0.0
    %740 = vmatpush1.msra.mxu0 0.0
    %741 = vmatprep.subr.mxu0 0.0
    %742 = vmatpush1.msra.mxu0 0.0
    %743 = vmatprep.subr.mxu0 0.0
    %744 = vmatpush1.msra.mxu0 0.0
    %745 = vmatprep.subr.mxu0 0.0
    %746 = vmatpush1.msra.mxu0 0.0
    %747 = vmatprep.subr.mxu0 0.0
    %748 = vmatpush1.msra.mxu0 0.0
    %749 = vmatprep.mubr.f32.mxu0 0.0
    %750 = vmatmul.mubr.f32.gmra.mrb[0].mxu0 %v641
    %v751 = vpop.f32.mrb[0].mxu0
    %v752 = vadd.f32 0.0, %v751
    %v753 = vpop.f32.mrb[0].mxu0
    %754 = vmatprep.mubr.f32.mxu0 0.0
    %755 = vmatmul.mubr.f32.gmra.mrb[0].mxu0 %v644
    %v756 = vpop.f32.mrb[0].mxu0
    %v757 = vadd.f32 0.0, %v756
    %v758 = vpop.f32.mrb[0].mxu0
    %759 = vmatprep.mubr.f32.mxu0 0.0
    %760 = vmatmul.mubr.f32.gmra.mrb[0].mxu0 %v647
    %v761 = vpop.f32.mrb[0].mxu0
    %v762 = vadd.f32 0.0, %v761
    %v763 = vpop.f32.mrb[0].mxu0
    %764 = vmatprep.mubr.f32.mxu0 0.0
    %765 = vmatmul.mubr.f32.gmra.mrb[0].mxu0 %v650
    %v766 = vpop.f32.mrb[0].mxu0
    %v767 = vadd.f32 0.0, %v766
    %v768 = vpop.f32.mrb[0].mxu0
    %769 = vmatprep.mubr.f32.mxu0 0.0
    %770 = vmatmul.mubr.f32.gmra.mrb[0].mxu0 %v653
    %v771 = vpop.f32.mrb[0].mxu0
    %v772 = vadd.f32 0.0, %v771
    %v773 = vpop.f32.mrb[0].mxu0
    %774 = vmatprep.mubr.f32.mxu0 0.0
    %775 = vmatmul.mubr.f32.gmra.mrb[0].mxu0 %v656
    %v776 = vpop.f32.mrb[0].mxu0
    %v777 = vadd.f32 0.0, %v776
    %v778 = vpop.f32.mrb[0].mxu0
    %779 = vmatprep.mubr.f32.mxu0 0.0
    %780 = vmatmul.mubr.f32.gmra.mrb[0].mxu0 %v659
    %v781 = vpop.f32.mrb[0].mxu0
    %v782 = vadd.f32 0.0, %v781
    %v783 = vpop.f32.mrb[0].mxu0
    %784 = vmatprep.mubr.f32.mxu0 0.0
    %785 = vmatmul.mubr.f32.gmra.mrb[0].mxu0 %v662
    %v786 = vpop.f32.mrb[0].mxu0
    %v787 = vadd.f32 0.0, %v786
    %v788 = vpop.f32.mrb[0].mxu0
    %789 = vmatprep.mubr.f32.mxu0 0.0
    %790 = vmatmul.mubr.f32.gmra.mrb[0].mxu0 %v665
    %v791 = vpop.f32.mrb[0].mxu0
    %v792 = vadd.f32 0.0, %v791
    %v793 = vpop.f32.mrb[0].mxu0
    %794 = vmatprep.mubr.f32.mxu0 0.0
    %795 = vmatmul.mubr.f32.gmra.mrb[0].mxu0 %v668
    %v796 = vpop.f32.mrb[0].mxu0
    %v797 = vadd.f32 0.0, %v796
    %v798 = vpop.f32.mrb[0].mxu0
    %799 = vmatprep.mubr.f32.mxu0 0.0
    %800 = vmatmul.mubr.f32.gmra.mrb[0].mxu0 %v671
    %v801 = vpop.f32.mrb[0].mxu0
    %v802 = vadd.f32 0.0, %v801
    %v803 = vpop.f32.mrb[0].mxu0
    %804 = vmatprep.mubr.f32.mxu0 0.0
    %805 = vmatmul.mubr.f32.gmra.mrb[0].mxu0 %v674
    %v806 = vpop.f32.mrb[0].mxu0
    %v807 = vadd.f32 0.0, %v806
    %v808 = vpop.f32.mrb[0].mxu0
    %809 = vmatprep.mubr.f32.mxu0 0.0
    %810 = vmatmul.mubr.f32.gmra.mrb[0].mxu0 %v677
    %v811 = vpop.f32.mrb[0].mxu0
    %v812 = vadd.f32 0.0, %v811
    %v813 = vpop.f32.mrb[0].mxu0
    %814 = vmatprep.mubr.f32.mxu0 0.0
    %815 = vmatmul.mubr.f32.gmra.mrb[0].mxu0 %v680
    %v816 = vpop.f32.mrb[0].mxu0
    %v817 = vadd.f32 0.0, %v816
    %v818 = vpop.f32.mrb[0].mxu0
    %819 = vmatprep.mubr.f32.mxu0 0.0
    %820 = vmatmul.mubr.f32.gmra.mrb[0].mxu0 %v683
    %v821 = vpop.f32.mrb[0].mxu0
    %v822 = vadd.f32 0.0, %v821
    %v823 = vpop.f32.mrb[0].mxu0
    %824 = vdwg.mxu0
    %v826 = vsel %vm582, %v601, 0
    %v829 = vsel %vm582, %v602, 0
    %v832 = vsel %vm582, %v603, 0
    %v835 = vsel %vm582, %v604, 0
    %v838 = vsel %vm582, %v605, 0
    %v841 = vsel %vm582, %v606, 0
    %v844 = vsel %vm582, %v607, 0
    %v847 = vsel %vm582, %v608, 0
    %v850 = vsel %vm582, %v609, 0
    %v853 = vsel %vm582, %v610, 0
    %v856 = vsel %vm582, %v611, 0
    %v859 = vsel %vm582, %v612, 0
    %v862 = vsel %vm582, %v613, 0
    %v865 = vsel %vm582, %v614, 0
    %v868 = vsel %vm582, %v615, 0
    %870 = vmatprep.subr.mxu0 0.0
    %871 = vmatpush1.msra.mxu0 %v616
    %872 = vmatprep.subr.mxu0 0.0
    %873 = vmatpush1.msra.mxu0 %v617
    %874 = vmatprep.subr.mxu0 0.0
    %875 = vmatpush1.msra.mxu0 %v618
    %876 = vmatprep.subr.mxu0 0.0
    %877 = vmatpush1.msra.mxu0 %v619
    %878 = vmatprep.subr.mxu0 0.0
    %879 = vmatpush1.msra.mxu0 0.0
    %880 = vmatprep.subr.mxu0 0.0
    %881 = vmatpush1.msra.mxu0 0.0
    %882 = vmatprep.subr.mxu0 0.0
    %883 = vmatpush1.msra.mxu0 0.0
    %884 = vmatprep.subr.mxu0 0.0
    %885 = vmatpush1.msra.mxu0 0.0
    %886 = vmatprep.subr.mxu0 0.0
    %887 = vmatpush1.msra.mxu0 0.0
    %888 = vmatprep.subr.mxu0 0.0
    %889 = vmatpush1.msra.mxu0 0.0
    %890 = vmatprep.subr.mxu0 0.0
    %891 = vmatpush1.msra.mxu0 0.0
    %892 = vmatprep.subr.mxu0 0.0
    %893 = vmatpush1.msra.mxu0 0.0
    %894 = vmatprep.subr.mxu0 0.0
    %895 = vmatpush1.msra.mxu0 0.0
    %896 = vmatprep.subr.mxu0 0.0
    %897 = vmatpush1.msra.mxu0 0.0
    %898 = vmatprep.subr.mxu0 0.0
    %899 = vmatpush1.msra.mxu0 0.0
    %900 = vmatprep.subr.mxu0 0.0
    %901 = vmatpush1.msra.mxu0 0.0
    %902 = vmatprep.subr.mxu0 0.0
    %903 = vmatpush1.msra.mxu0 0.0
    %904 = vmatprep.subr.mxu0 0.0
    %905 = vmatpush1.msra.mxu0 0.0
    %906 = vmatprep.subr.mxu0 0.0
    %907 = vmatpush1.msra.mxu0 0.0
    %908 = vmatprep.subr.mxu0 0.0
    %909 = vmatpush1.msra.mxu0 0.0
    %910 = vmatprep.subr.mxu0 0.0
    %911 = vmatpush1.msra.mxu0 0.0
    %912 = vmatprep.subr.mxu0 0.0
    %913 = vmatpush1.msra.mxu0 0.0
    %914 = vmatprep.subr.mxu0 0.0
    %915 = vmatpush1.msra.mxu0 0.0
    %916 = vmatprep.subr.mxu0 0.0
    %917 = vmatpush1.msra.mxu0 0.0
    %918 = vmatprep.subr.mxu0 0.0
    %919 = vmatpush1.msra.mxu0 0.0
    %920 = vmatprep.subr.mxu0 0.0
    %921 = vmatpush1.msra.mxu0 0.0
    %922 = vmatprep.subr.mxu0 0.0
    %923 = vmatpush1.msra.mxu0 0.0
    %924 = vmatprep.subr.mxu0 0.0
    %925 = vmatpush1.msra.mxu0 0.0
    %926 = vmatprep.subr.mxu0 0.0
    %927 = vmatpush1.msra.mxu0 0.0
    %928 = vmatprep.subr.mxu0 0.0
    %929 = vmatpush1.msra.mxu0 0.0
    %930 = vmatprep.subr.mxu0 0.0
    %931 = vmatpush1.msra.mxu0 0.0
    %932 = vmatprep.subr.mxu0 0.0
    %933 = vmatpush1.msra.mxu0 0.0
    %934 = vmatprep.mubr.f32.mxu0 0.0
    %935 = vmatmul.mubr.f32.gmra.mrb[0].mxu0 %v826
    %v936 = vpop.f32.mrb[0].mxu0
    %v937 = vadd.f32 %v752, %v936
    %v938 = vpop.f32.mrb[0].mxu0
    %939 = vmatprep.mubr.f32.mxu0 0.0
    %940 = vmatmul.mubr.f32.gmra.mrb[0].mxu0 %v829
    %v941 = vpop.f32.mrb[0].mxu0
    %v942 = vadd.f32 %v757, %v941
    %v943 = vpop.f32.mrb[0].mxu0
    %944 = vmatprep.mubr.f32.mxu0 0.0
    %945 = vmatmul.mubr.f32.gmra.mrb[0].mxu0 %v832
    %v946 = vpop.f32.mrb[0].mxu0
    %v947 = vadd.f32 %v762, %v946
    %v948 = vpop.f32.mrb[0].mxu0
    %949 = vmatprep.mubr.f32.mxu0 0.0
    %950 = vmatmul.mubr.f32.gmra.mrb[0].mxu0 %v835
    %v951 = vpop.f32.mrb[0].mxu0
    %v952 = vadd.f32 %v767, %v951
    %v953 = vpop.f32.mrb[0].mxu0
    %954 = vmatprep.mubr.f32.mxu0 0.0
    %955 = vmatmul.mubr.f32.gmra.mrb[0].mxu0 %v838
    %v956 = vpop.f32.mrb[0].mxu0
    %v957 = vadd.f32 %v772, %v956
    %v958 = vpop.f32.mrb[0].mxu0
    %959 = vmatprep.mubr.f32.mxu0 0.0
    %960 = vmatmul.mubr.f32.gmra.mrb[0].mxu0 %v841
    %v961 = vpop.f32.mrb[0].mxu0
    %v962 = vadd.f32 %v777, %v961
    %v963 = vpop.f32.mrb[0].mxu0
    %964 = vmatprep.mubr.f32.mxu0 0.0
    %965 = vmatmul.mubr.f32.gmra.mrb[0].mxu0 %v844
    %v966 = vpop.f32.mrb[0].mxu0
    %v967 = vadd.f32 %v782, %v966
    %v968 = vpop.f32.mrb[0].mxu0
    %969 = vmatprep.mubr.f32.mxu0 0.0
    %970 = vmatmul.mubr.f32.gmra.mrb[0].mxu0 %v847
    %v971 = vpop.f32.mrb[0].mxu0
    %v972 = vadd.f32 %v787, %v971
    %v973 = vpop.f32.mrb[0].mxu0
    %974 = vmatprep.mubr.f32.mxu0 0.0
    %975 = vmatmul.mubr.f32.gmra.mrb[0].mxu0 %v850
    %v976 = vpop.f32.mrb[0].mxu0
    %v977 = vadd.f32 %v792, %v976
    %v978 = vpop.f32.mrb[0].mxu0
    %979 = vmatprep.mubr.f32.mxu0 0.0
    %980 = vmatmul.mubr.f32.gmra.mrb[0].mxu0 %v853
    %v981 = vpop.f32.mrb[0].mxu0
    %v982 = vadd.f32 %v797, %v981
    %v983 = vpop.f32.mrb[0].mxu0
    %984 = vmatprep.mubr.f32.mxu0 0.0
    %985 = vmatmul.mubr.f32.gmra.mrb[0].mxu0 %v856
    %v986 = vpop.f32.mrb[0].mxu0
    %v987 = vadd.f32 %v802, %v986
    %v988 = vpop.f32.mrb[0].mxu0
    %989 = vmatprep.mubr.f32.mxu0 0.0
    %990 = vmatmul.mubr.f32.gmra.mrb[0].mxu0 %v859
    %v991 = vpop.f32.mrb[0].mxu0
    %v992 = vadd.f32 %v807, %v991
    %v993 = vpop.f32.mrb[0].mxu0
    %994 = vmatprep.mubr.f32.mxu0 0.0
    %995 = vmatmul.mubr.f32.gmra.mrb[0].mxu0 %v862
    %v996 = vpop.f32.mrb[0].mxu0
    %v997 = vadd.f32 %v812, %v996
    %v998 = vpop.f32.mrb[0].mxu0
    %999 = vmatprep.mubr.f32.mxu0 0.0
    %1000 = vmatmul.mubr.f32.gmra.mrb[0].mxu0 %v865
    %v1001 = vpop.f32.mrb[0].mxu0
    %v1002 = vadd.f32 %v817, %v1001
    %v1003 = vpop.f32.mrb[0].mxu0
    %1004 = vmatprep.mubr.f32.mxu0 0.0
    %1005 = vmatmul.mubr.f32.gmra.mrb[0].mxu0 %v868
    %v1006 = vpop.f32.mrb[0].mxu0
    %v1007 = vadd.f32 %v822, %v1006
    %v1008 = vpop.f32.mrb[0].mxu0
    %1009 = vdwg.mxu0
    %v1010 = vld [vmem:[#allocation2 + $0x2] sm:$0xff]
    %v1011 = vld [vmem:[#allocation2 + $0xa] sm:$0xff]
    %v1012 = vld [vmem:[#allocation2 + $0x12] sm:$0xff]
    %v1013 = vld [vmem:[#allocation2 + $0x1a] sm:$0xff]
    %v1014 = vld [vmem:[#allocation2 + $0x22] sm:$0xff]
    %v1015 = vld [vmem:[#allocation2 + $0x2a] sm:$0xff]
    %v1016 = vld [vmem:[#allocation2 + $0x32] sm:$0xff]
    %v1017 = vld [vmem:[#allocation2 + $0x3a] sm:$0xff]
    %v1018 = vld [vmem:[#allocation2 + $0x42] sm:$0xff]
    %v1019 = vld [vmem:[#allocation2 + $0x4a] sm:$0xff]
    %v1020 = vld [vmem:[#allocation2 + $0x52] sm:$0xff]
    %v1021 = vld [vmem:[#allocation2 + $0x5a] sm:$0xff]
    %v1022 = vld [vmem:[#allocation2 + $0x62] sm:$0xff]
    %v1023 = vld [vmem:[#allocation2 + $0x6a] sm:$0xff]
    %v1024 = vld [vmem:[#allocation2 + $0x72] sm:$0x3f]
    %s1025 = scalar_lea.vmem %s4, 64
    %v1026 = vld [vmem:[%s1025] sm:$0xff]
    %v1027 = vld [vmem:[%s1025 + $0x8] sm:$0xff]
    %v1028 = vld [vmem:[%s1025 + $0x10] sm:$0xff]
    %v1029 = vld [vmem:[%s1025 + $0x18] sm:$0xff]
    %v1031 = vsel %vm582, %v1010, 0
    %v1034 = vsel %vm582, %v1011, 0
    %v1037 = vsel %vm582, %v1012, 0
    %v1040 = vsel %vm582, %v1013, 0
    %v1043 = vsel %vm582, %v1014, 0
    %v1046 = vsel %vm582, %v1015, 0
    %v1049 = vsel %vm582, %v1016, 0
    %v1052 = vsel %vm582, %v1017, 0
    %v1055 = vsel %vm582, %v1018, 0
    %v1058 = vsel %vm582, %v1019, 0
    %v1061 = vsel %vm582, %v1020, 0
    %v1064 = vsel %vm582, %v1021, 0
    %v1067 = vsel %vm582, %v1022, 0
    %v1070 = vsel %vm582, %v1023, 0
    %v1073 = vsel %vm582, %v1024, 0
    %1075 = vmatprep.subr.mxu0 0.0
    %1076 = vmatpush1.msra.mxu0 %v1026
    %1077 = vmatprep.subr.mxu0 0.0
    %1078 = vmatpush1.msra.mxu0 %v1027
    %1079 = vmatprep.subr.mxu0 0.0
    %1080 = vmatpush1.msra.mxu0 %v1028
    %1081 = vmatprep.subr.mxu0 0.0
    %1082 = vmatpush1.msra.mxu0 %v1029
    %1083 = vmatprep.subr.mxu0 0.0
    %1084 = vmatpush1.msra.mxu0 0.0
    %1085 = vmatprep.subr.mxu0 0.0
    %1086 = vmatpush1.msra.mxu0 0.0
    %1087 = vmatprep.subr.mxu0 0.0
    %1088 = vmatpush1.msra.mxu0 0.0
    %1089 = vmatprep.subr.mxu0 0.0
    %1090 = vmatpush1.msra.mxu0 0.0
    %1091 = vmatprep.subr.mxu0 0.0
    %1092 = vmatpush1.msra.mxu0 0.0
    %1093 = vmatprep.subr.mxu0 0.0
    %1094 = vmatpush1.msra.mxu0 0.0
    %1095 = vmatprep.subr.mxu0 0.0
    %1096 = vmatpush1.msra.mxu0 0.0
    %1097 = vmatprep.subr.mxu0 0.0
    %1098 = vmatpush1.msra.mxu0 0.0
    %1099 = vmatprep.subr.mxu0 0.0
    %1100 = vmatpush1.msra.mxu0 0.0
    %1101 = vmatprep.subr.mxu0 0.0
    %1102 = vmatpush1.msra.mxu0 0.0
    %1103 = vmatprep.subr.mxu0 0.0
    %1104 = vmatpush1.msra.mxu0 0.0
    %1105 = vmatprep.subr.mxu0 0.0
    %1106 = vmatpush1.msra.mxu0 0.0
    %1107 = vmatprep.subr.mxu0 0.0
    %1108 = vmatpush1.msra.mxu0 0.0
    %1109 = vmatprep.subr.mxu0 0.0
    %1110 = vmatpush1.msra.mxu0 0.0
    %1111 = vmatprep.subr.mxu0 0.0
    %1112 = vmatpush1.msra.mxu0 0.0
    %1113 = vmatprep.subr.mxu0 0.0
    %1114 = vmatpush1.msra.mxu0 0.0
    %1115 = vmatprep.subr.mxu0 0.0
    %1116 = vmatpush1.msra.mxu0 0.0
    %1117 = vmatprep.subr.mxu0 0.0
    %1118 = vmatpush1.msra.mxu0 0.0
    %1119 = vmatprep.subr.mxu0 0.0
    %1120 = vmatpush1.msra.mxu0 0.0
    %1121 = vmatprep.subr.mxu0 0.0
    %1122 = vmatpush1.msra.mxu0 0.0
    %1123 = vmatprep.subr.mxu0 0.0
    %1124 = vmatpush1.msra.mxu0 0.0
    %1125 = vmatprep.subr.mxu0 0.0
    %1126 = vmatpush1.msra.mxu0 0.0
    %1127 = vmatprep.subr.mxu0 0.0
    %1128 = vmatpush1.msra.mxu0 0.0
    %1129 = vmatprep.subr.mxu0 0.0
    %1130 = vmatpush1.msra.mxu0 0.0
    %1131 = vmatprep.subr.mxu0 0.0
    %1132 = vmatpush1.msra.mxu0 0.0
    %1133 = vmatprep.subr.mxu0 0.0
    %1134 = vmatpush1.msra.mxu0 0.0
    %1135 = vmatprep.subr.mxu0 0.0
    %1136 = vmatpush1.msra.mxu0 0.0
    %1137 = vmatprep.subr.mxu0 0.0
    %1138 = vmatpush1.msra.mxu0 0.0
    %1139 = vmatprep.mubr.f32.mxu0 0.0
    %1140 = vmatmul.mubr.f32.gmra.mrb[0].mxu0 %v1031
    %v1141 = vpop.f32.mrb[0].mxu0
    %v1142 = vadd.f32 0.0, %v1141
    %v1143 = vpop.f32.mrb[0].mxu0
    %1144 = vmatprep.mubr.f32.mxu0 0.0
    %1145 = vmatmul.mubr.f32.gmra.mrb[0].mxu0 %v1034
    %v1146 = vpop.f32.mrb[0].mxu0
    %v1147 = vadd.f32 0.0, %v1146
    %v1148 = vpop.f32.mrb[0].mxu0
    %1149 = vmatprep.mubr.f32.mxu0 0.0
    %1150 = vmatmul.mubr.f32.gmra.mrb[0].mxu0 %v1037
    %v1151 = vpop.f32.mrb[0].mxu0
    %v1152 = vadd.f32 0.0, %v1151
    %v1153 = vpop.f32.mrb[0].mxu0
    %1154 = vmatprep.mubr.f32.mxu0 0.0
    %1155 = vmatmul.mubr.f32.gmra.mrb[0].mxu0 %v1040
    %v1156 = vpop.f32.mrb[0].mxu0
    %v1157 = vadd.f32 0.0, %v1156
    %v1158 = vpop.f32.mrb[0].mxu0
    %1159 = vmatprep.mubr.f32.mxu0 0.0
    %1160 = vmatmul.mubr.f32.gmra.mrb[0].mxu0 %v1043
    %v1161 = vpop.f32.mrb[0].mxu0
    %v1162 = vadd.f32 0.0, %v1161
    %v1163 = vpop.f32.mrb[0].mxu0
    %1164 = vmatprep.mubr.f32.mxu0 0.0
    %1165 = vmatmul.mubr.f32.gmra.mrb[0].mxu0 %v1046
    %v1166 = vpop.f32.mrb[0].mxu0
    %v1167 = vadd.f32 0.0, %v1166
    %v1168 = vpop.f32.mrb[0].mxu0
    %1169 = vmatprep.mubr.f32.mxu0 0.0
    %1170 = vmatmul.mubr.f32.gmra.mrb[0].mxu0 %v1049
    %v1171 = vpop.f32.mrb[0].mxu0
    %v1172 = vadd.f32 0.0, %v1171
    %v1173 = vpop.f32.mrb[0].mxu0
    %1174 = vmatprep.mubr.f32.mxu0 0.0
    %1175 = vmatmul.mubr.f32.gmra.mrb[0].mxu0 %v1052
    %v1176 = vpop.f32.mrb[0].mxu0
    %v1177 = vadd.f32 0.0, %v1176
    %v1178 = vpop.f32.mrb[0].mxu0
    %1179 = vmatprep.mubr.f32.mxu0 0.0
    %1180 = vmatmul.mubr.f32.gmra.mrb[0].mxu0 %v1055
    %v1181 = vpop.f32.mrb[0].mxu0
    %v1182 = vadd.f32 0.0, %v1181
    %v1183 = vpop.f32.mrb[0].mxu0
    %1184 = vmatprep.mubr.f32.mxu0 0.0
    %1185 = vmatmul.mubr.f32.gmra.mrb[0].mxu0 %v1058
    %v1186 = vpop.f32.mrb[0].mxu0
    %v1187 = vadd.f32 0.0, %v1186
    %v1188 = vpop.f32.mrb[0].mxu0
    %1189 = vmatprep.mubr.f32.mxu0 0.0
    %1190 = vmatmul.mubr.f32.gmra.mrb[0].mxu0 %v1061
    %v1191 = vpop.f32.mrb[0].mxu0
    %v1192 = vadd.f32 0.0, %v1191
    %v1193 = vpop.f32.mrb[0].mxu0
    %1194 = vmatprep.mubr.f32.mxu0 0.0
    %1195 = vmatmul.mubr.f32.gmra.mrb[0].mxu0 %v1064
    %v1196 = vpop.f32.mrb[0].mxu0
    %v1197 = vadd.f32 0.0, %v1196
    %v1198 = vpop.f32.mrb[0].mxu0
    %1199 = vmatprep.mubr.f32.mxu0 0.0
    %1200 = vmatmul.mubr.f32.gmra.mrb[0].mxu0 %v1067
    %v1201 = vpop.f32.mrb[0].mxu0
    %v1202 = vadd.f32 0.0, %v1201
    %v1203 = vpop.f32.mrb[0].mxu0
    %1204 = vmatprep.mubr.f32.mxu0 0.0
    %1205 = vmatmul.mubr.f32.gmra.mrb[0].mxu0 %v1070
    %v1206 = vpop.f32.mrb[0].mxu0
    %v1207 = vadd.f32 0.0, %v1206
    %v1208 = vpop.f32.mrb[0].mxu0
    %1209 = vmatprep.mubr.f32.mxu0 0.0
    %1210 = vmatmul.mubr.f32.gmra.mrb[0].mxu0 %v1073
    %v1211 = vpop.f32.mrb[0].mxu0
    %v1212 = vadd.f32 0.0, %v1211
    %v1213 = vpop.f32.mrb[0].mxu0
    %1214 = vdwg.mxu0
    %v1215 = vadd.f32 %v937, %v1142
    %v1216 = vadd.f32 %v942, %v1147
    %v1217 = vadd.f32 %v947, %v1152
    %v1218 = vadd.f32 %v952, %v1157
    %v1219 = vadd.f32 %v957, %v1162
    %v1220 = vadd.f32 %v962, %v1167
    %v1221 = vadd.f32 %v967, %v1172
    %v1222 = vadd.f32 %v972, %v1177
    %v1223 = vadd.f32 %v977, %v1182
    %v1224 = vadd.f32 %v982, %v1187
    %v1225 = vadd.f32 %v987, %v1192
    %v1226 = vadd.f32 %v992, %v1197
    %v1227 = vadd.f32 %v997, %v1202
    %v1228 = vadd.f32 %v1002, %v1207
    %v1229 = vadd.f32 %v1007, %v1212
    %v1230 = vld [vmem:[#allocation2 + $0xc] sm:$0xff]
    %v1231 = vld [vmem:[#allocation2 + $0x14] sm:$0xff]
    %v1232 = vld [vmem:[#allocation2 + $0x1c] sm:$0xff]
    %v1233 = vld [vmem:[#allocation2 + $0x24] sm:$0xff]
    %v1234 = vld [vmem:[#allocation2 + $0x2c] sm:$0xff]
    %v1235 = vld [vmem:[#allocation2 + $0x34] sm:$0xff]
    %v1236 = vld [vmem:[#allocation2 + $0x3c] sm:$0xff]
    %v1237 = vld [vmem:[#allocation2 + $0x44] sm:$0xff]
    %v1238 = vld [vmem:[#allocation2 + $0x4c] sm:$0xff]
    %v1239 = vld [vmem:[#allocation2 + $0x54] sm:$0xff]
    %v1240 = vld [vmem:[#allocation2 + $0x5c] sm:$0xff]
    %v1241 = vld [vmem:[#allocation2 + $0x64] sm:$0xff]
    %v1242 = vld [vmem:[#allocation2 + $0x6c] sm:$0xff]
    %v1243 = vld [vmem:[#allocation2 + $0x74] sm:$0xff]
    %v1244 = vld [vmem:[#allocation2 + $0x7c] sm:$0x3f]
    %s1245 = scalar_lea.vmem %s4, 96
    %v1246 = vld [vmem:[%s1245] sm:$0xff]
    %v1247 = vld [vmem:[%s1245 + $0x8] sm:$0xff]
    %v1248 = vld [vmem:[%s1245 + $0x10] sm:$0xff]
    %v1249 = vld [vmem:[%s1245 + $0x18] sm:$0xff]
    %v1251 = vsel %vm582, %v1230, 0
    %v1254 = vsel %vm582, %v1231, 0
    %v1257 = vsel %vm582, %v1232, 0
    %v1260 = vsel %vm582, %v1233, 0
    %v1263 = vsel %vm582, %v1234, 0
    %v1266 = vsel %vm582, %v1235, 0
    %v1269 = vsel %vm582, %v1236, 0
    %v1272 = vsel %vm582, %v1237, 0
    %v1275 = vsel %vm582, %v1238, 0
    %v1278 = vsel %vm582, %v1239, 0
    %v1281 = vsel %vm582, %v1240, 0
    %v1284 = vsel %vm582, %v1241, 0
    %v1287 = vsel %vm582, %v1242, 0
    %v1290 = vsel %vm582, %v1243, 0
    %v1293 = vsel %vm582, %v1244, 0
    %1295 = vmatprep.subr.mxu0 0.0
    %1296 = vmatpush1.msra.mxu0 %v1246
    %1297 = vmatprep.subr.mxu0 0.0
    %1298 = vmatpush1.msra.mxu0 %v1247
    %1299 = vmatprep.subr.mxu0 0.0
    %1300 = vmatpush1.msra.mxu0 %v1248
    %1301 = vmatprep.subr.mxu0 0.0
    %1302 = vmatpush1.msra.mxu0 %v1249
    %1303 = vmatprep.subr.mxu0 0.0
    %1304 = vmatpush1.msra.mxu0 0.0
    %1305 = vmatprep.subr.mxu0 0.0
    %1306 = vmatpush1.msra.mxu0 0.0
    %1307 = vmatprep.subr.mxu0 0.0
    %1308 = vmatpush1.msra.mxu0 0.0
    %1309 = vmatprep.subr.mxu0 0.0
    %1310 = vmatpush1.msra.mxu0 0.0
    %1311 = vmatprep.subr.mxu0 0.0
    %1312 = vmatpush1.msra.mxu0 0.0
    %1313 = vmatprep.subr.mxu0 0.0
    %1314 = vmatpush1.msra.mxu0 0.0
    %1315 = vmatprep.subr.mxu0 0.0
    %1316 = vmatpush1.msra.mxu0 0.0
    %1317 = vmatprep.subr.mxu0 0.0
    %1318 = vmatpush1.msra.mxu0 0.0
    %1319 = vmatprep.subr.mxu0 0.0
    %1320 = vmatpush1.msra.mxu0 0.0
    %1321 = vmatprep.subr.mxu0 0.0
    %1322 = vmatpush1.msra.mxu0 0.0
    %1323 = vmatprep.subr.mxu0 0.0
    %1324 = vmatpush1.msra.mxu0 0.0
    %1325 = vmatprep.subr.mxu0 0.0
    %1326 = vmatpush1.msra.mxu0 0.0
    %1327 = vmatprep.subr.mxu0 0.0
    %1328 = vmatpush1.msra.mxu0 0.0
    %1329 = vmatprep.subr.mxu0 0.0
    %1330 = vmatpush1.msra.mxu0 0.0
    %1331 = vmatprep.subr.mxu0 0.0
    %1332 = vmatpush1.msra.mxu0 0.0
    %1333 = vmatprep.subr.mxu0 0.0
    %1334 = vmatpush1.msra.mxu0 0.0
    %1335 = vmatprep.subr.mxu0 0.0
    %1336 = vmatpush1.msra.mxu0 0.0
    %1337 = vmatprep.subr.mxu0 0.0
    %1338 = vmatpush1.msra.mxu0 0.0
    %1339 = vmatprep.subr.mxu0 0.0
    %1340 = vmatpush1.msra.mxu0 0.0
    %1341 = vmatprep.subr.mxu0 0.0
    %1342 = vmatpush1.msra.mxu0 0.0
    %1343 = vmatprep.subr.mxu0 0.0
    %1344 = vmatpush1.msra.mxu0 0.0
    %1345 = vmatprep.subr.mxu0 0.0
    %1346 = vmatpush1.msra.mxu0 0.0
    %1347 = vmatprep.subr.mxu0 0.0
    %1348 = vmatpush1.msra.mxu0 0.0
    %1349 = vmatprep.subr.mxu0 0.0
    %1350 = vmatpush1.msra.mxu0 0.0
    %1351 = vmatprep.subr.mxu0 0.0
    %1352 = vmatpush1.msra.mxu0 0.0
    %1353 = vmatprep.subr.mxu0 0.0
    %1354 = vmatpush1.msra.mxu0 0.0
    %1355 = vmatprep.subr.mxu0 0.0
    %1356 = vmatpush1.msra.mxu0 0.0
    %1357 = vmatprep.subr.mxu0 0.0
    %1358 = vmatpush1.msra.mxu0 0.0
    %1359 = vmatprep.mubr.f32.mxu0 0.0
    %1360 = vmatmul.mubr.f32.gmra.mrb[0].mxu0 %v1251
    %v1361 = vpop.f32.mrb[0].mxu0
    %v1362 = vadd.f32 0.0, %v1361
    %v1363 = vpop.f32.mrb[0].mxu0
    %1364 = vmatprep.mubr.f32.mxu0 0.0
    %1365 = vmatmul.mubr.f32.gmra.mrb[0].mxu0 %v1254
    %v1366 = vpop.f32.mrb[0].mxu0
    %v1367 = vadd.f32 0.0, %v1366
    %v1368 = vpop.f32.mrb[0].mxu0
    %1369 = vmatprep.mubr.f32.mxu0 0.0
    %1370 = vmatmul.mubr.f32.gmra.mrb[0].mxu0 %v1257
    %v1371 = vpop.f32.mrb[0].mxu0
    %v1372 = vadd.f32 0.0, %v1371
    %v1373 = vpop.f32.mrb[0].mxu0
    %1374 = vmatprep.mubr.f32.mxu0 0.0
    %1375 = vmatmul.mubr.f32.gmra.mrb[0].mxu0 %v1260
    %v1376 = vpop.f32.mrb[0].mxu0
    %v1377 = vadd.f32 0.0, %v1376
    %v1378 = vpop.f32.mrb[0].mxu0
    %1379 = vmatprep.mubr.f32.mxu0 0.0
    %1380 = vmatmul.mubr.f32.gmra.mrb[0].mxu0 %v1263
    %v1381 = vpop.f32.mrb[0].mxu0
    %v1382 = vadd.f32 0.0, %v1381
    %v1383 = vpop.f32.mrb[0].mxu0
    %1384 = vmatprep.mubr.f32.mxu0 0.0
    %1385 = vmatmul.mubr.f32.gmra.mrb[0].mxu0 %v1266
    %v1386 = vpop.f32.mrb[0].mxu0
    %v1387 = vadd.f32 0.0, %v1386
    %v1388 = vpop.f32.mrb[0].mxu0
    %1389 = vmatprep.mubr.f32.mxu0 0.0
    %1390 = vmatmul.mubr.f32.gmra.mrb[0].mxu0 %v1269
    %v1391 = vpop.f32.mrb[0].mxu0
    %v1392 = vadd.f32 0.0, %v1391
    %v1393 = vpop.f32.mrb[0].mxu0
    %1394 = vmatprep.mubr.f32.mxu0 0.0
    %1395 = vmatmul.mubr.f32.gmra.mrb[0].mxu0 %v1272
    %v1396 = vpop.f32.mrb[0].mxu0
    %v1397 = vadd.f32 0.0, %v1396
    %v1398 = vpop.f32.mrb[0].mxu0
    %1399 = vmatprep.mubr.f32.mxu0 0.0
    %1400 = vmatmul.mubr.f32.gmra.mrb[0].mxu0 %v1275
    %v1401 = vpop.f32.mrb[0].mxu0
    %v1402 = vadd.f32 0.0, %v1401
    %v1403 = vpop.f32.mrb[0].mxu0
    %1404 = vmatprep.mubr.f32.mxu0 0.0
    %1405 = vmatmul.mubr.f32.gmra.mrb[0].mxu0 %v1278
    %v1406 = vpop.f32.mrb[0].mxu0
    %v1407 = vadd.f32 0.0, %v1406
    %v1408 = vpop.f32.mrb[0].mxu0
    %1409 = vmatprep.mubr.f32.mxu0 0.0
    %1410 = vmatmul.mubr.f32.gmra.mrb[0].mxu0 %v1281
    %v1411 = vpop.f32.mrb[0].mxu0
    %v1412 = vadd.f32 0.0, %v1411
    %v1413 = vpop.f32.mrb[0].mxu0
    %1414 = vmatprep.mubr.f32.mxu0 0.0
    %1415 = vmatmul.mubr.f32.gmra.mrb[0].mxu0 %v1284
    %v1416 = vpop.f32.mrb[0].mxu0
    %v1417 = vadd.f32 0.0, %v1416
    %v1418 = vpop.f32.mrb[0].mxu0
    %1419 = vmatprep.mubr.f32.mxu0 0.0
    %1420 = vmatmul.mubr.f32.gmra.mrb[0].mxu0 %v1287
    %v1421 = vpop.f32.mrb[0].mxu0
    %v1422 = vadd.f32 0.0, %v1421
    %v1423 = vpop.f32.mrb[0].mxu0
    %1424 = vmatprep.mubr.f32.mxu0 0.0
    %1425 = vmatmul.mubr.f32.gmra.mrb[0].mxu0 %v1290
    %v1426 = vpop.f32.mrb[0].mxu0
    %v1427 = vadd.f32 0.0, %v1426
    %v1428 = vpop.f32.mrb[0].mxu0
    %1429 = vmatprep.mubr.f32.mxu0 0.0
    %1430 = vmatmul.mubr.f32.gmra.mrb[0].mxu0 %v1293
    %v1431 = vpop.f32.mrb[0].mxu0
    %v1432 = vadd.f32 0.0, %v1431
    %v1433 = vpop.f32.mrb[0].mxu0
    %1434 = vdwg.mxu0
    %v1435 = vadd.f32 %v1215, %v1362
    %v1436 = vadd.f32 %v1216, %v1367
    %v1437 = vadd.f32 %v1217, %v1372
    %v1438 = vadd.f32 %v1218, %v1377
    %v1439 = vadd.f32 %v1219, %v1382
    %v1440 = vadd.f32 %v1220, %v1387
    %v1441 = vadd.f32 %v1221, %v1392
    %v1442 = vadd.f32 %v1222, %v1397
    %v1443 = vadd.f32 %v1223, %v1402
    %v1444 = vadd.f32 %v1224, %v1407
    %v1445 = vadd.f32 %v1225, %v1412
    %v1446 = vadd.f32 %v1226, %v1417
    %v1447 = vadd.f32 %v1227, %v1422
    %v1448 = vadd.f32 %v1228, %v1427
    %v1449 = vadd.f32 %v1229, %v1432
    %v1450 = vld [vmem:[#allocation2 + $0xd] sm:$0xff]
    %v1451 = vld [vmem:[#allocation2 + $0x15] sm:$0xff]
    %v1452 = vld [vmem:[#allocation2 + $0x1d] sm:$0xff]
    %v1453 = vld [vmem:[#allocation2 + $0x25] sm:$0xff]
    %v1454 = vld [vmem:[#allocation2 + $0x2d] sm:$0xff]
    %v1455 = vld [vmem:[#allocation2 + $0x35] sm:$0xff]
    %v1456 = vld [vmem:[#allocation2 + $0x3d] sm:$0xff]
    %v1457 = vld [vmem:[#allocation2 + $0x45] sm:$0xff]
    %v1458 = vld [vmem:[#allocation2 + $0x4d] sm:$0xff]
    %v1459 = vld [vmem:[#allocation2 + $0x55] sm:$0xff]
    %v1460 = vld [vmem:[#allocation2 + $0x5d] sm:$0xff]
    %v1461 = vld [vmem:[#allocation2 + $0x65] sm:$0xff]
    %v1462 = vld [vmem:[#allocation2 + $0x6d] sm:$0xff]
    %v1463 = vld [vmem:[#allocation2 + $0x75] sm:$0xff]
    %v1464 = vld [vmem:[#allocation2 + $0x7d] sm:$0x3f]
    %s1465 = scalar_lea.vmem %s4, 128
    %v1466 = vld [vmem:[%s1465] sm:$0xff]
    %v1467 = vld [vmem:[%s1465 + $0x8] sm:$0xff]
    %v1468 = vld [vmem:[%s1465 + $0x10] sm:$0xff]
    %v1469 = vld [vmem:[%s1465 + $0x18] sm:$0xff]
    %v1471 = vsel %vm582, %v1450, 0
    %v1474 = vsel %vm582, %v1451, 0
    %v1477 = vsel %vm582, %v1452, 0
    %v1480 = vsel %vm582, %v1453, 0
    %v1483 = vsel %vm582, %v1454, 0
    %v1486 = vsel %vm582, %v1455, 0
    %v1489 = vsel %vm582, %v1456, 0
    %v1492 = vsel %vm582, %v1457, 0
    %v1495 = vsel %vm582, %v1458, 0
    %v1498 = vsel %vm582, %v1459, 0
    %v1501 = vsel %vm582, %v1460, 0
    %v1504 = vsel %vm582, %v1461, 0
    %v1507 = vsel %vm582, %v1462, 0
    %v1510 = vsel %vm582, %v1463, 0
    %v1513 = vsel %vm582, %v1464, 0
    %1515 = vmatprep.subr.mxu0 0.0
    %1516 = vmatpush1.msra.mxu0 %v1466
    %1517 = vmatprep.subr.mxu0 0.0
    %1518 = vmatpush1.msra.mxu0 %v1467
    %1519 = vmatprep.subr.mxu0 0.0
    %1520 = vmatpush1.msra.mxu0 %v1468
    %1521 = vmatprep.subr.mxu0 0.0
    %1522 = vmatpush1.msra.mxu0 %v1469
    %1523 = vmatprep.subr.mxu0 0.0
    %1524 = vmatpush1.msra.mxu0 0.0
    %1525 = vmatprep.subr.mxu0 0.0
    %1526 = vmatpush1.msra.mxu0 0.0
    %1527 = vmatprep.subr.mxu0 0.0
    %1528 = vmatpush1.msra.mxu0 0.0
    %1529 = vmatprep.subr.mxu0 0.0
    %1530 = vmatpush1.msra.mxu0 0.0
    %1531 = vmatprep.subr.mxu0 0.0
    %1532 = vmatpush1.msra.mxu0 0.0
    %1533 = vmatprep.subr.mxu0 0.0
    %1534 = vmatpush1.msra.mxu0 0.0
    %1535 = vmatprep.subr.mxu0 0.0
    %1536 = vmatpush1.msra.mxu0 0.0
    %1537 = vmatprep.subr.mxu0 0.0
    %1538 = vmatpush1.msra.mxu0 0.0
    %1539 = vmatprep.subr.mxu0 0.0
    %1540 = vmatpush1.msra.mxu0 0.0
    %1541 = vmatprep.subr.mxu0 0.0
    %1542 = vmatpush1.msra.mxu0 0.0
    %1543 = vmatprep.subr.mxu0 0.0
    %1544 = vmatpush1.msra.mxu0 0.0
    %1545 = vmatprep.subr.mxu0 0.0
    %1546 = vmatpush1.msra.mxu0 0.0
    %1547 = vmatprep.subr.mxu0 0.0
    %1548 = vmatpush1.msra.mxu0 0.0
    %1549 = vmatprep.subr.mxu0 0.0
    %1550 = vmatpush1.msra.mxu0 0.0
    %1551 = vmatprep.subr.mxu0 0.0
    %1552 = vmatpush1.msra.mxu0 0.0
    %1553 = vmatprep.subr.mxu0 0.0
    %1554 = vmatpush1.msra.mxu0 0.0
    %1555 = vmatprep.subr.mxu0 0.0
    %1556 = vmatpush1.msra.mxu0 0.0
    %1557 = vmatprep.subr.mxu0 0.0
    %1558 = vmatpush1.msra.mxu0 0.0
    %1559 = vmatprep.subr.mxu0 0.0
    %1560 = vmatpush1.msra.mxu0 0.0
    %1561 = vmatprep.subr.mxu0 0.0
    %1562 = vmatpush1.msra.mxu0 0.0
    %1563 = vmatprep.subr.mxu0 0.0
    %1564 = vmatpush1.msra.mxu0 0.0
    %1565 = vmatprep.subr.mxu0 0.0
    %1566 = vmatpush1.msra.mxu0 0.0
    %1567 = vmatprep.subr.mxu0 0.0
    %1568 = vmatpush1.msra.mxu0 0.0
    %1569 = vmatprep.subr.mxu0 0.0
    %1570 = vmatpush1.msra.mxu0 0.0
    %1571 = vmatprep.subr.mxu0 0.0
    %1572 = vmatpush1.msra.mxu0 0.0
    %1573 = vmatprep.subr.mxu0 0.0
    %1574 = vmatpush1.msra.mxu0 0.0
    %1575 = vmatprep.subr.mxu0 0.0
    %1576 = vmatpush1.msra.mxu0 0.0
    %1577 = vmatprep.subr.mxu0 0.0
    %1578 = vmatpush1.msra.mxu0 0.0
    %1579 = vmatprep.mubr.f32.mxu0 0.0
    %1580 = vmatmul.mubr.f32.gmra.mrb[0].mxu0 %v1471
    %v1581 = vpop.f32.mrb[0].mxu0
    %v1582 = vadd.f32 0.0, %v1581
    %v1583 = vpop.f32.mrb[0].mxu0
    %1584 = vmatprep.mubr.f32.mxu0 0.0
    %1585 = vmatmul.mubr.f32.gmra.mrb[0].mxu0 %v1474
    %v1586 = vpop.f32.mrb[0].mxu0
    %v1587 = vadd.f32 0.0, %v1586
    %v1588 = vpop.f32.mrb[0].mxu0
    %1589 = vmatprep.mubr.f32.mxu0 0.0
    %1590 = vmatmul.mubr.f32.gmra.mrb[0].mxu0 %v1477
    %v1591 = vpop.f32.mrb[0].mxu0
    %v1592 = vadd.f32 0.0, %v1591
    %v1593 = vpop.f32.mrb[0].mxu0
    %1594 = vmatprep.mubr.f32.mxu0 0.0
    %1595 = vmatmul.mubr.f32.gmra.mrb[0].mxu0 %v1480
    %v1596 = vpop.f32.mrb[0].mxu0
    %v1597 = vadd.f32 0.0, %v1596
    %v1598 = vpop.f32.mrb[0].mxu0
    %1599 = vmatprep.mubr.f32.mxu0 0.0
    %1600 = vmatmul.mubr.f32.gmra.mrb[0].mxu0 %v1483
    %v1601 = vpop.f32.mrb[0].mxu0
    %v1602 = vadd.f32 0.0, %v1601
    %v1603 = vpop.f32.mrb[0].mxu0
    %1604 = vmatprep.mubr.f32.mxu0 0.0
    %1605 = vmatmul.mubr.f32.gmra.mrb[0].mxu0 %v1486
    %v1606 = vpop.f32.mrb[0].mxu0
    %v1607 = vadd.f32 0.0, %v1606
    %v1608 = vpop.f32.mrb[0].mxu0
    %1609 = vmatprep.mubr.f32.mxu0 0.0
    %1610 = vmatmul.mubr.f32.gmra.mrb[0].mxu0 %v1489
    %v1611 = vpop.f32.mrb[0].mxu0
    %v1612 = vadd.f32 0.0, %v1611
    %v1613 = vpop.f32.mrb[0].mxu0
    %1614 = vmatprep.mubr.f32.mxu0 0.0
    %1615 = vmatmul.mubr.f32.gmra.mrb[0].mxu0 %v1492
    %v1616 = vpop.f32.mrb[0].mxu0
    %v1617 = vadd.f32 0.0, %v1616
    %v1618 = vpop.f32.mrb[0].mxu0
    %1619 = vmatprep.mubr.f32.mxu0 0.0
    %1620 = vmatmul.mubr.f32.gmra.mrb[0].mxu0 %v1495
    %v1621 = vpop.f32.mrb[0].mxu0
    %v1622 = vadd.f32 0.0, %v1621
    %v1623 = vpop.f32.mrb[0].mxu0
    %1624 = vmatprep.mubr.f32.mxu0 0.0
    %1625 = vmatmul.mubr.f32.gmra.mrb[0].mxu0 %v1498
    %v1626 = vpop.f32.mrb[0].mxu0
    %v1627 = vadd.f32 0.0, %v1626
    %v1628 = vpop.f32.mrb[0].mxu0
    %1629 = vmatprep.mubr.f32.mxu0 0.0
    %1630 = vmatmul.mubr.f32.gmra.mrb[0].mxu0 %v1501
    %v1631 = vpop.f32.mrb[0].mxu0
    %v1632 = vadd.f32 0.0, %v1631
    %v1633 = vpop.f32.mrb[0].mxu0
    %1634 = vmatprep.mubr.f32.mxu0 0.0
    %1635 = vmatmul.mubr.f32.gmra.mrb[0].mxu0 %v1504
    %v1636 = vpop.f32.mrb[0].mxu0
    %v1637 = vadd.f32 0.0, %v1636
    %v1638 = vpop.f32.mrb[0].mxu0
    %1639 = vmatprep.mubr.f32.mxu0 0.0
    %1640 = vmatmul.mubr.f32.gmra.mrb[0].mxu0 %v1507
    %v1641 = vpop.f32.mrb[0].mxu0
    %v1642 = vadd.f32 0.0, %v1641
    %v1643 = vpop.f32.mrb[0].mxu0
    %1644 = vmatprep.mubr.f32.mxu0 0.0
    %1645 = vmatmul.mubr.f32.gmra.mrb[0].mxu0 %v1510
    %v1646 = vpop.f32.mrb[0].mxu0
    %v1647 = vadd.f32 0.0, %v1646
    %v1648 = vpop.f32.mrb[0].mxu0
    %1649 = vmatprep.mubr.f32.mxu0 0.0
    %1650 = vmatmul.mubr.f32.gmra.mrb[0].mxu0 %v1513
    %v1651 = vpop.f32.mrb[0].mxu0
    %v1652 = vadd.f32 0.0, %v1651
    %v1653 = vpop.f32.mrb[0].mxu0
    %1654 = vdwg.mxu0
    %v1655 = vadd.f32 %v1435, %v1582
    %v1656 = vadd.f32 %v1436, %v1587
    %v1657 = vadd.f32 %v1437, %v1592
    %v1658 = vadd.f32 %v1438, %v1597
    %v1659 = vadd.f32 %v1439, %v1602
    %v1660 = vadd.f32 %v1440, %v1607
    %v1661 = vadd.f32 %v1441, %v1612
    %v1662 = vadd.f32 %v1442, %v1617
    %v1663 = vadd.f32 %v1443, %v1622
    %v1664 = vadd.f32 %v1444, %v1627
    %v1665 = vadd.f32 %v1445, %v1632
    %v1666 = vadd.f32 %v1446, %v1637
    %v1667 = vadd.f32 %v1447, %v1642
    %v1668 = vadd.f32 %v1448, %v1647
    %v1669 = vadd.f32 %v1449, %v1652
    %v1670 = vld [vmem:[#allocation2 + $0xe] sm:$0xff]
    %v1671 = vld [vmem:[#allocation2 + $0x16] sm:$0xff]
    %v1672 = vld [vmem:[#allocation2 + $0x1e] sm:$0xff]
    %v1673 = vld [vmem:[#allocation2 + $0x26] sm:$0xff]
    %v1674 = vld [vmem:[#allocation2 + $0x2e] sm:$0xff]
    %v1675 = vld [vmem:[#allocation2 + $0x36] sm:$0xff]
    %v1676 = vld [vmem:[#allocation2 + $0x3e] sm:$0xff]
    %v1677 = vld [vmem:[#allocation2 + $0x46] sm:$0xff]
    %v1678 = vld [vmem:[#allocation2 + $0x4e] sm:$0xff]
    %v1679 = vld [vmem:[#allocation2 + $0x56] sm:$0xff]
    %v1680 = vld [vmem:[#allocation2 + $0x5e] sm:$0xff]
    %v1681 = vld [vmem:[#allocation2 + $0x66] sm:$0xff]
    %v1682 = vld [vmem:[#allocation2 + $0x6e] sm:$0xff]
    %v1683 = vld [vmem:[#allocation2 + $0x76] sm:$0xff]
    %v1684 = vld [vmem:[#allocation2 + $0x7e] sm:$0x3f]
    %s1685 = scalar_lea.vmem %s4, 160
    %v1686 = vld [vmem:[%s1685] sm:$0xff]
    %v1687 = vld [vmem:[%s1685 + $0x8] sm:$0xff]
    %v1688 = vld [vmem:[%s1685 + $0x10] sm:$0xff]
    %v1689 = vld [vmem:[%s1685 + $0x18] sm:$0xff]
    %v1691 = vsel %vm582, %v1670, 0
    %v1694 = vsel %vm582, %v1671, 0
    %v1697 = vsel %vm582, %v1672, 0
    %v1700 = vsel %vm582, %v1673, 0
    %v1703 = vsel %vm582, %v1674, 0
    %v1706 = vsel %vm582, %v1675, 0
    %v1709 = vsel %vm582, %v1676, 0
    %v1712 = vsel %vm582, %v1677, 0
    %v1715 = vsel %vm582, %v1678, 0
    %v1718 = vsel %vm582, %v1679, 0
    %v1721 = vsel %vm582, %v1680, 0
    %v1724 = vsel %vm582, %v1681, 0
    %v1727 = vsel %vm582, %v1682, 0
    %v1730 = vsel %vm582, %v1683, 0
    %v1733 = vsel %vm582, %v1684, 0
    %1735 = vmatprep.subr.mxu0 0.0
    %1736 = vmatpush1.msra.mxu0 %v1686
    %1737 = vmatprep.subr.mxu0 0.0
    %1738 = vmatpush1.msra.mxu0 %v1687
    %1739 = vmatprep.subr.mxu0 0.0
    %1740 = vmatpush1.msra.mxu0 %v1688
    %1741 = vmatprep.subr.mxu0 0.0
    %1742 = vmatpush1.msra.mxu0 %v1689
    %1743 = vmatprep.subr.mxu0 0.0
    %1744 = vmatpush1.msra.mxu0 0.0
    %1745 = vmatprep.subr.mxu0 0.0
    %1746 = vmatpush1.msra.mxu0 0.0
    %1747 = vmatprep.subr.mxu0 0.0
    %1748 = vmatpush1.msra.mxu0 0.0
    %1749 = vmatprep.subr.mxu0 0.0
    %1750 = vmatpush1.msra.mxu0 0.0
    %1751 = vmatprep.subr.mxu0 0.0
    %1752 = vmatpush1.msra.mxu0 0.0
    %1753 = vmatprep.subr.mxu0 0.0
    %1754 = vmatpush1.msra.mxu0 0.0
    %1755 = vmatprep.subr.mxu0 0.0
    %1756 = vmatpush1.msra.mxu0 0.0
    %1757 = vmatprep.subr.mxu0 0.0
    %1758 = vmatpush1.msra.mxu0 0.0
    %1759 = vmatprep.subr.mxu0 0.0
    %1760 = vmatpush1.msra.mxu0 0.0
    %1761 = vmatprep.subr.mxu0 0.0
    %1762 = vmatpush1.msra.mxu0 0.0
    %1763 = vmatprep.subr.mxu0 0.0
    %1764 = vmatpush1.msra.mxu0 0.0
    %1765 = vmatprep.subr.mxu0 0.0
    %1766 = vmatpush1.msra.mxu0 0.0
    %1767 = vmatprep.subr.mxu0 0.0
    %1768 = vmatpush1.msra.mxu0 0.0
    %1769 = vmatprep.subr.mxu0 0.0
    %1770 = vmatpush1.msra.mxu0 0.0
    %1771 = vmatprep.subr.mxu0 0.0
    %1772 = vmatpush1.msra.mxu0 0.0
    %1773 = vmatprep.subr.mxu0 0.0
    %1774 = vmatpush1.msra.mxu0 0.0
    %1775 = vmatprep.subr.mxu0 0.0
    %1776 = vmatpush1.msra.mxu0 0.0
    %1777 = vmatprep.subr.mxu0 0.0
    %1778 = vmatpush1.msra.mxu0 0.0
    %1779 = vmatprep.subr.mxu0 0.0
    %1780 = vmatpush1.msra.mxu0 0.0
    %1781 = vmatprep.subr.mxu0 0.0
    %1782 = vmatpush1.msra.mxu0 0.0
    %1783 = vmatprep.subr.mxu0 0.0
    %1784 = vmatpush1.msra.mxu0 0.0
    %1785 = vmatprep.subr.mxu0 0.0
    %1786 = vmatpush1.msra.mxu0 0.0
    %1787 = vmatprep.subr.mxu0 0.0
    %1788 = vmatpush1.msra.mxu0 0.0
    %1789 = vmatprep.subr.mxu0 0.0
    %1790 = vmatpush1.msra.mxu0 0.0
    %1791 = vmatprep.subr.mxu0 0.0
    %1792 = vmatpush1.msra.mxu0 0.0
    %1793 = vmatprep.subr.mxu0 0.0
    %1794 = vmatpush1.msra.mxu0 0.0
    %1795 = vmatprep.subr.mxu0 0.0
    %1796 = vmatpush1.msra.mxu0 0.0
    %1797 = vmatprep.subr.mxu0 0.0
    %1798 = vmatpush1.msra.mxu0 0.0
    %1799 = vmatprep.mubr.f32.mxu0 0.0
    %1800 = vmatmul.mubr.f32.gmra.mrb[0].mxu0 %v1691
    %v1801 = vpop.f32.mrb[0].mxu0
    %v1802 = vadd.f32 0.0, %v1801
    %v1803 = vpop.f32.mrb[0].mxu0
    %1804 = vmatprep.mubr.f32.mxu0 0.0
    %1805 = vmatmul.mubr.f32.gmra.mrb[0].mxu0 %v1694
    %v1806 = vpop.f32.mrb[0].mxu0
    %v1807 = vadd.f32 0.0, %v1806
    %v1808 = vpop.f32.mrb[0].mxu0
    %1809 = vmatprep.mubr.f32.mxu0 0.0
    %1810 = vmatmul.mubr.f32.gmra.mrb[0].mxu0 %v1697
    %v1811 = vpop.f32.mrb[0].mxu0
    %v1812 = vadd.f32 0.0, %v1811
    %v1813 = vpop.f32.mrb[0].mxu0
    %1814 = vmatprep.mubr.f32.mxu0 0.0
    %1815 = vmatmul.mubr.f32.gmra.mrb[0].mxu0 %v1700
    %v1816 = vpop.f32.mrb[0].mxu0
    %v1817 = vadd.f32 0.0, %v1816
    %v1818 = vpop.f32.mrb[0].mxu0
    %1819 = vmatprep.mubr.f32.mxu0 0.0
    %1820 = vmatmul.mubr.f32.gmra.mrb[0].mxu0 %v1703
    %v1821 = vpop.f32.mrb[0].mxu0
    %v1822 = vadd.f32 0.0, %v1821
    %v1823 = vpop.f32.mrb[0].mxu0
    %1824 = vmatprep.mubr.f32.mxu0 0.0
    %1825 = vmatmul.mubr.f32.gmra.mrb[0].mxu0 %v1706
    %v1826 = vpop.f32.mrb[0].mxu0
    %v1827 = vadd.f32 0.0, %v1826
    %v1828 = vpop.f32.mrb[0].mxu0
    %1829 = vmatprep.mubr.f32.mxu0 0.0
    %1830 = vmatmul.mubr.f32.gmra.mrb[0].mxu0 %v1709
    %v1831 = vpop.f32.mrb[0].mxu0
    %v1832 = vadd.f32 0.0, %v1831
    %v1833 = vpop.f32.mrb[0].mxu0
    %1834 = vmatprep.mubr.f32.mxu0 0.0
    %1835 = vmatmul.mubr.f32.gmra.mrb[0].mxu0 %v1712
    %v1836 = vpop.f32.mrb[0].mxu0
    %v1837 = vadd.f32 0.0, %v1836
    %v1838 = vpop.f32.mrb[0].mxu0
    %1839 = vmatprep.mubr.f32.mxu0 0.0
    %1840 = vmatmul.mubr.f32.gmra.mrb[0].mxu0 %v1715
    %v1841 = vpop.f32.mrb[0].mxu0
    %v1842 = vadd.f32 0.0, %v1841
    %v1843 = vpop.f32.mrb[0].mxu0
    %1844 = vmatprep.mubr.f32.mxu0 0.0
    %1845 = vmatmul.mubr.f32.gmra.mrb[0].mxu0 %v1718
    %v1846 = vpop.f32.mrb[0].mxu0
    %v1847 = vadd.f32 0.0, %v1846
    %v1848 = vpop.f32.mrb[0].mxu0
    %1849 = vmatprep.mubr.f32.mxu0 0.0
    %1850 = vmatmul.mubr.f32.gmra.mrb[0].mxu0 %v1721
    %v1851 = vpop.f32.mrb[0].mxu0
    %v1852 = vadd.f32 0.0, %v1851
    %v1853 = vpop.f32.mrb[0].mxu0
    %1854 = vmatprep.mubr.f32.mxu0 0.0
    %1855 = vmatmul.mubr.f32.gmra.mrb[0].mxu0 %v1724
    %v1856 = vpop.f32.mrb[0].mxu0
    %v1857 = vadd.f32 0.0, %v1856
    %v1858 = vpop.f32.mrb[0].mxu0
    %1859 = vmatprep.mubr.f32.mxu0 0.0
    %1860 = vmatmul.mubr.f32.gmra.mrb[0].mxu0 %v1727
    %v1861 = vpop.f32.mrb[0].mxu0
    %v1862 = vadd.f32 0.0, %v1861
    %v1863 = vpop.f32.mrb[0].mxu0
    %1864 = vmatprep.mubr.f32.mxu0 0.0
    %1865 = vmatmul.mubr.f32.gmra.mrb[0].mxu0 %v1730
    %v1866 = vpop.f32.mrb[0].mxu0
    %v1867 = vadd.f32 0.0, %v1866
    %v1868 = vpop.f32.mrb[0].mxu0
    %1869 = vmatprep.mubr.f32.mxu0 0.0
    %1870 = vmatmul.mubr.f32.gmra.mrb[0].mxu0 %v1733
    %v1871 = vpop.f32.mrb[0].mxu0
    %v1872 = vadd.f32 0.0, %v1871
    %v1873 = vpop.f32.mrb[0].mxu0
    %1874 = vdwg.mxu0
    %v1875 = vadd.f32 %v1655, %v1802
    %v1876 = vadd.f32 %v1656, %v1807
    %v1877 = vadd.f32 %v1657, %v1812
    %v1878 = vadd.f32 %v1658, %v1817
    %v1879 = vadd.f32 %v1659, %v1822
    %v1880 = vadd.f32 %v1660, %v1827
    %v1881 = vadd.f32 %v1661, %v1832
    %v1882 = vadd.f32 %v1662, %v1837
    %v1883 = vadd.f32 %v1663, %v1842
    %v1884 = vadd.f32 %v1664, %v1847
    %v1885 = vadd.f32 %v1665, %v1852
    %v1886 = vadd.f32 %v1666, %v1857
    %v1887 = vadd.f32 %v1667, %v1862
    %v1888 = vadd.f32 %v1668, %v1867
    %v1889 = vadd.f32 %v1669, %v1872
    %v1890 = vld [vmem:[#allocation2 + $0x18] sm:$0xff]
    %v1891 = vld [vmem:[#allocation2 + $0x20] sm:$0xff]
    %v1892 = vld [vmem:[#allocation2 + $0x28] sm:$0xff]
    %v1893 = vld [vmem:[#allocation2 + $0x30] sm:$0xff]
    %v1894 = vld [vmem:[#allocation2 + $0x38] sm:$0xff]
    %v1895 = vld [vmem:[#allocation2 + $0x40] sm:$0xff]
    %v1896 = vld [vmem:[#allocation2 + $0x48] sm:$0xff]
    %v1897 = vld [vmem:[#allocation2 + $0x50] sm:$0xff]
    %v1898 = vld [vmem:[#allocation2 + $0x58] sm:$0xff]
    %v1899 = vld [vmem:[#allocation2 + $0x60] sm:$0xff]
    %v1900 = vld [vmem:[#allocation2 + $0x68] sm:$0xff]
    %v1901 = vld [vmem:[#allocation2 + $0x70] sm:$0xff]
    %v1902 = vld [vmem:[#allocation2 + $0x78] sm:$0xff]
    %v1903 = vld [vmem:[#allocation2 + $0x80] sm:$0xff]
    %v1904 = vld [vmem:[#allocation2 + $0x88] sm:$0x3f]
    %s1905 = scalar_lea.vmem %s4, 192
    %v1906 = vld [vmem:[%s1905] sm:$0xff]
    %v1907 = vld [vmem:[%s1905 + $0x8] sm:$0xff]
    %v1908 = vld [vmem:[%s1905 + $0x10] sm:$0xff]
    %v1909 = vld [vmem:[%s1905 + $0x18] sm:$0xff]
    %v1911 = vsel %vm582, %v1890, 0
    %v1914 = vsel %vm582, %v1891, 0
    %v1917 = vsel %vm582, %v1892, 0
    %v1920 = vsel %vm582, %v1893, 0
    %v1923 = vsel %vm582, %v1894, 0
    %v1926 = vsel %vm582, %v1895, 0
    %v1929 = vsel %vm582, %v1896, 0
    %v1932 = vsel %vm582, %v1897, 0
    %v1935 = vsel %vm582, %v1898, 0
    %v1938 = vsel %vm582, %v1899, 0
    %v1941 = vsel %vm582, %v1900, 0
    %v1944 = vsel %vm582, %v1901, 0
    %v1947 = vsel %vm582, %v1902, 0
    %v1950 = vsel %vm582, %v1903, 0
    %v1953 = vsel %vm582, %v1904, 0
    %1955 = vmatprep.subr.mxu0 0.0
    %1956 = vmatpush1.msra.mxu0 %v1906
    %1957 = vmatprep.subr.mxu0 0.0
    %1958 = vmatpush1.msra.mxu0 %v1907
    %1959 = vmatprep.subr.mxu0 0.0
    %1960 = vmatpush1.msra.mxu0 %v1908
    %1961 = vmatprep.subr.mxu0 0.0
    %1962 = vmatpush1.msra.mxu0 %v1909
    %1963 = vmatprep.subr.mxu0 0.0
    %1964 = vmatpush1.msra.mxu0 0.0
    %1965 = vmatprep.subr.mxu0 0.0
    %1966 = vmatpush1.msra.mxu0 0.0
    %1967 = vmatprep.subr.mxu0 0.0
    %1968 = vmatpush1.msra.mxu0 0.0
    %1969 = vmatprep.subr.mxu0 0.0
    %1970 = vmatpush1.msra.mxu0 0.0
    %1971 = vmatprep.subr.mxu0 0.0
    %1972 = vmatpush1.msra.mxu0 0.0
    %1973 = vmatprep.subr.mxu0 0.0
    %1974 = vmatpush1.msra.mxu0 0.0
    %1975 = vmatprep.subr.mxu0 0.0
    %1976 = vmatpush1.msra.mxu0 0.0
    %1977 = vmatprep.subr.mxu0 0.0
    %1978 = vmatpush1.msra.mxu0 0.0
    %1979 = vmatprep.subr.mxu0 0.0
    %1980 = vmatpush1.msra.mxu0 0.0
    %1981 = vmatprep.subr.mxu0 0.0
    %1982 = vmatpush1.msra.mxu0 0.0
    %1983 = vmatprep.subr.mxu0 0.0
    %1984 = vmatpush1.msra.mxu0 0.0
    %1985 = vmatprep.subr.mxu0 0.0
    %1986 = vmatpush1.msra.mxu0 0.0
    %1987 = vmatprep.subr.mxu0 0.0
    %1988 = vmatpush1.msra.mxu0 0.0
    %1989 = vmatprep.subr.mxu0 0.0
    %1990 = vmatpush1.msra.mxu0 0.0
    %1991 = vmatprep.subr.mxu0 0.0
    %1992 = vmatpush1.msra.mxu0 0.0
    %1993 = vmatprep.subr.mxu0 0.0
    %1994 = vmatpush1.msra.mxu0 0.0
    %1995 = vmatprep.subr.mxu0 0.0
    %1996 = vmatpush1.msra.mxu0 0.0
    %1997 = vmatprep.subr.mxu0 0.0
    %1998 = vmatpush1.msra.mxu0 0.0
    %1999 = vmatprep.subr.mxu0 0.0
    %2000 = vmatpush1.msra.mxu0 0.0
    %2001 = vmatprep.subr.mxu0 0.0
    %2002 = vmatpush1.msra.mxu0 0.0
    %2003 = vmatprep.subr.mxu0 0.0
    %2004 = vmatpush1.msra.mxu0 0.0
    %2005 = vmatprep.subr.mxu0 0.0
    %2006 = vmatpush1.msra.mxu0 0.0
    %2007 = vmatprep.subr.mxu0 0.0
    %2008 = vmatpush1.msra.mxu0 0.0
    %2009 = vmatprep.subr.mxu0 0.0
    %2010 = vmatpush1.msra.mxu0 0.0
    %2011 = vmatprep.subr.mxu0 0.0
    %2012 = vmatpush1.msra.mxu0 0.0
    %2013 = vmatprep.subr.mxu0 0.0
    %2014 = vmatpush1.msra.mxu0 0.0
    %2015 = vmatprep.subr.mxu0 0.0
    %2016 = vmatpush1.msra.mxu0 0.0
    %2017 = vmatprep.subr.mxu0 0.0
    %2018 = vmatpush1.msra.mxu0 0.0
    %2019 = vmatprep.mubr.f32.mxu0 0.0
    %2020 = vmatmul.mubr.f32.gmra.mrb[0].mxu0 %v1911
    %v2021 = vpop.f32.mrb[0].mxu0
    %v2022 = vadd.f32 0.0, %v2021
    %v2023 = vpop.f32.mrb[0].mxu0
    %2024 = vmatprep.mubr.f32.mxu0 0.0
    %2025 = vmatmul.mubr.f32.gmra.mrb[0].mxu0 %v1914
    %v2026 = vpop.f32.mrb[0].mxu0
    %v2027 = vadd.f32 0.0, %v2026
    %v2028 = vpop.f32.mrb[0].mxu0
    %2029 = vmatprep.mubr.f32.mxu0 0.0
    %2030 = vmatmul.mubr.f32.gmra.mrb[0].mxu0 %v1917
    %v2031 = vpop.f32.mrb[0].mxu0
    %v2032 = vadd.f32 0.0, %v2031
    %v2033 = vpop.f32.mrb[0].mxu0
    %2034 = vmatprep.mubr.f32.mxu0 0.0
    %2035 = vmatmul.mubr.f32.gmra.mrb[0].mxu0 %v1920
    %v2036 = vpop.f32.mrb[0].mxu0
    %v2037 = vadd.f32 0.0, %v2036
    %v2038 = vpop.f32.mrb[0].mxu0
    %2039 = vmatprep.mubr.f32.mxu0 0.0
    %2040 = vmatmul.mubr.f32.gmra.mrb[0].mxu0 %v1923
    %v2041 = vpop.f32.mrb[0].mxu0
    %v2042 = vadd.f32 0.0, %v2041
    %v2043 = vpop.f32.mrb[0].mxu0
    %2044 = vmatprep.mubr.f32.mxu0 0.0
    %2045 = vmatmul.mubr.f32.gmra.mrb[0].mxu0 %v1926
    %v2046 = vpop.f32.mrb[0].mxu0
    %v2047 = vadd.f32 0.0, %v2046
    %v2048 = vpop.f32.mrb[0].mxu0
    %2049 = vmatprep.mubr.f32.mxu0 0.0
    %2050 = vmatmul.mubr.f32.gmra.mrb[0].mxu0 %v1929
    %v2051 = vpop.f32.mrb[0].mxu0
    %v2052 = vadd.f32 0.0, %v2051
    %v2053 = vpop.f32.mrb[0].mxu0
    %2054 = vmatprep.mubr.f32.mxu0 0.0
    %2055 = vmatmul.mubr.f32.gmra.mrb[0].mxu0 %v1932
    %v2056 = vpop.f32.mrb[0].mxu0
    %v2057 = vadd.f32 0.0, %v2056
    %v2058 = vpop.f32.mrb[0].mxu0
    %2059 = vmatprep.mubr.f32.mxu0 0.0
    %2060 = vmatmul.mubr.f32.gmra.mrb[0].mxu0 %v1935
    %v2061 = vpop.f32.mrb[0].mxu0
    %v2062 = vadd.f32 0.0, %v2061
    %v2063 = vpop.f32.mrb[0].mxu0
    %2064 = vmatprep.mubr.f32.mxu0 0.0
    %2065 = vmatmul.mubr.f32.gmra.mrb[0].mxu0 %v1938
    %v2066 = vpop.f32.mrb[0].mxu0
    %v2067 = vadd.f32 0.0, %v2066
    %v2068 = vpop.f32.mrb[0].mxu0
    %2069 = vmatprep.mubr.f32.mxu0 0.0
    %2070 = vmatmul.mubr.f32.gmra.mrb[0].mxu0 %v1941
    %v2071 = vpop.f32.mrb[0].mxu0
    %v2072 = vadd.f32 0.0, %v2071
    %v2073 = vpop.f32.mrb[0].mxu0
    %2074 = vmatprep.mubr.f32.mxu0 0.0
    %2075 = vmatmul.mubr.f32.gmra.mrb[0].mxu0 %v1944
    %v2076 = vpop.f32.mrb[0].mxu0
    %v2077 = vadd.f32 0.0, %v2076
    %v2078 = vpop.f32.mrb[0].mxu0
    %2079 = vmatprep.mubr.f32.mxu0 0.0
    %2080 = vmatmul.mubr.f32.gmra.mrb[0].mxu0 %v1947
    %v2081 = vpop.f32.mrb[0].mxu0
    %v2082 = vadd.f32 0.0, %v2081
    %v2083 = vpop.f32.mrb[0].mxu0
    %2084 = vmatprep.mubr.f32.mxu0 0.0
    %2085 = vmatmul.mubr.f32.gmra.mrb[0].mxu0 %v1950
    %v2086 = vpop.f32.mrb[0].mxu0
    %v2087 = vadd.f32 0.0, %v2086
    %v2088 = vpop.f32.mrb[0].mxu0
    %2089 = vmatprep.mubr.f32.mxu0 0.0
    %2090 = vmatmul.mubr.f32.gmra.mrb[0].mxu0 %v1953
    %v2091 = vpop.f32.mrb[0].mxu0
    %v2092 = vadd.f32 0.0, %v2091
    %v2093 = vpop.f32.mrb[0].mxu0
    %2094 = vdwg.mxu0
    %v2095 = vadd.f32 %v1875, %v2022
    %v2096 = vadd.f32 %v1876, %v2027
    %v2097 = vadd.f32 %v1877, %v2032
    %v2098 = vadd.f32 %v1878, %v2037
    %v2099 = vadd.f32 %v1879, %v2042
    %v2100 = vadd.f32 %v1880, %v2047
    %v2101 = vadd.f32 %v1881, %v2052
    %v2102 = vadd.f32 %v1882, %v2057
    %v2103 = vadd.f32 %v1883, %v2062
    %v2104 = vadd.f32 %v1884, %v2067
    %v2105 = vadd.f32 %v1885, %v2072
    %v2106 = vadd.f32 %v1886, %v2077
    %v2107 = vadd.f32 %v1887, %v2082
    %v2108 = vadd.f32 %v1888, %v2087
    %v2109 = vadd.f32 %v1889, %v2092
    %v2110 = vld [vmem:[#allocation2 + $0x19] sm:$0xff]
    %v2111 = vld [vmem:[#allocation2 + $0x21] sm:$0xff]
    %v2112 = vld [vmem:[#allocation2 + $0x29] sm:$0xff]
    %v2113 = vld [vmem:[#allocation2 + $0x31] sm:$0xff]
    %v2114 = vld [vmem:[#allocation2 + $0x39] sm:$0xff]
    %v2115 = vld [vmem:[#allocation2 + $0x41] sm:$0xff]
    %v2116 = vld [vmem:[#allocation2 + $0x49] sm:$0xff]
    %v2117 = vld [vmem:[#allocation2 + $0x51] sm:$0xff]
    %v2118 = vld [vmem:[#allocation2 + $0x59] sm:$0xff]
    %v2119 = vld [vmem:[#allocation2 + $0x61] sm:$0xff]
    %v2120 = vld [vmem:[#allocation2 + $0x69] sm:$0xff]
    %v2121 = vld [vmem:[#allocation2 + $0x71] sm:$0xff]
    %v2122 = vld [vmem:[#allocation2 + $0x79] sm:$0xff]
    %v2123 = vld [vmem:[#allocation2 + $0x81] sm:$0xff]
    %v2124 = vld [vmem:[#allocation2 + $0x89] sm:$0x3f]
    %s2125 = scalar_lea.vmem %s4, 224
    %v2126 = vld [vmem:[%s2125] sm:$0xff]
    %v2127 = vld [vmem:[%s2125 + $0x8] sm:$0xff]
    %v2128 = vld [vmem:[%s2125 + $0x10] sm:$0xff]
    %v2129 = vld [vmem:[%s2125 + $0x18] sm:$0xff]
    %v2131 = vsel %vm582, %v2110, 0
    %v2134 = vsel %vm582, %v2111, 0
    %v2137 = vsel %vm582, %v2112, 0
    %v2140 = vsel %vm582, %v2113, 0
    %v2143 = vsel %vm582, %v2114, 0
    %v2146 = vsel %vm582, %v2115, 0
    %v2149 = vsel %vm582, %v2116, 0
    %v2152 = vsel %vm582, %v2117, 0
    %v2155 = vsel %vm582, %v2118, 0
    %v2158 = vsel %vm582, %v2119, 0
    %v2161 = vsel %vm582, %v2120, 0
    %v2164 = vsel %vm582, %v2121, 0
    %v2167 = vsel %vm582, %v2122, 0
    %v2170 = vsel %vm582, %v2123, 0
    %v2173 = vsel %vm582, %v2124, 0
    %2175 = vmatprep.subr.mxu0 0.0
    %2176 = vmatpush1.msra.mxu0 %v2126
    %2177 = vmatprep.subr.mxu0 0.0
    %2178 = vmatpush1.msra.mxu0 %v2127
    %2179 = vmatprep.subr.mxu0 0.0
    %2180 = vmatpush1.msra.mxu0 %v2128
    %2181 = vmatprep.subr.mxu0 0.0
    %2182 = vmatpush1.msra.mxu0 %v2129
    %2183 = vmatprep.subr.mxu0 0.0
    %2184 = vmatpush1.msra.mxu0 0.0
    %2185 = vmatprep.subr.mxu0 0.0
    %2186 = vmatpush1.msra.mxu0 0.0
    %2187 = vmatprep.subr.mxu0 0.0
    %2188 = vmatpush1.msra.mxu0 0.0
    %2189 = vmatprep.subr.mxu0 0.0
    %2190 = vmatpush1.msra.mxu0 0.0
    %2191 = vmatprep.subr.mxu0 0.0
    %2192 = vmatpush1.msra.mxu0 0.0
    %2193 = vmatprep.subr.mxu0 0.0
    %2194 = vmatpush1.msra.mxu0 0.0
    %2195 = vmatprep.subr.mxu0 0.0
    %2196 = vmatpush1.msra.mxu0 0.0
    %2197 = vmatprep.subr.mxu0 0.0
    %2198 = vmatpush1.msra.mxu0 0.0
    %2199 = vmatprep.subr.mxu0 0.0
    %2200 = vmatpush1.msra.mxu0 0.0
    %2201 = vmatprep.subr.mxu0 0.0
    %2202 = vmatpush1.msra.mxu0 0.0
    %2203 = vmatprep.subr.mxu0 0.0
    %2204 = vmatpush1.msra.mxu0 0.0
    %2205 = vmatprep.subr.mxu0 0.0
    %2206 = vmatpush1.msra.mxu0 0.0
    %2207 = vmatprep.subr.mxu0 0.0
    %2208 = vmatpush1.msra.mxu0 0.0
    %2209 = vmatprep.subr.mxu0 0.0
    %2210 = vmatpush1.msra.mxu0 0.0
    %2211 = vmatprep.subr.mxu0 0.0
    %2212 = vmatpush1.msra.mxu0 0.0
    %2213 = vmatprep.subr.mxu0 0.0
    %2214 = vmatpush1.msra.mxu0 0.0
    %2215 = vmatprep.subr.mxu0 0.0
    %2216 = vmatpush1.msra.mxu0 0.0
    %2217 = vmatprep.subr.mxu0 0.0
    %2218 = vmatpush1.msra.mxu0 0.0
    %2219 = vmatprep.subr.mxu0 0.0
    %2220 = vmatpush1.msra.mxu0 0.0
    %2221 = vmatprep.subr.mxu0 0.0
    %2222 = vmatpush1.msra.mxu0 0.0
    %2223 = vmatprep.subr.mxu0 0.0
    %2224 = vmatpush1.msra.mxu0 0.0
    %2225 = vmatprep.subr.mxu0 0.0
    %2226 = vmatpush1.msra.mxu0 0.0
    %2227 = vmatprep.subr.mxu0 0.0
    %2228 = vmatpush1.msra.mxu0 0.0
    %2229 = vmatprep.subr.mxu0 0.0
    %2230 = vmatpush1.msra.mxu0 0.0
    %2231 = vmatprep.subr.mxu0 0.0
    %2232 = vmatpush1.msra.mxu0 0.0
    %2233 = vmatprep.subr.mxu0 0.0
    %2234 = vmatpush1.msra.mxu0 0.0
    %2235 = vmatprep.subr.mxu0 0.0
    %2236 = vmatpush1.msra.mxu0 0.0
    %2237 = vmatprep.subr.mxu0 0.0
    %2238 = vmatpush1.msra.mxu0 0.0
    %2239 = vmatprep.mubr.f32.mxu0 0.0
    %2240 = vmatmul.mubr.f32.gmra.mrb[0].mxu0 %v2131
    %v2241 = vpop.f32.mrb[0].mxu0
    %v2242 = vadd.f32 0.0, %v2241
    %v2243 = vpop.f32.mrb[0].mxu0
    %2244 = vmatprep.mubr.f32.mxu0 0.0
    %2245 = vmatmul.mubr.f32.gmra.mrb[0].mxu0 %v2134
    %v2246 = vpop.f32.mrb[0].mxu0
    %v2247 = vadd.f32 0.0, %v2246
    %v2248 = vpop.f32.mrb[0].mxu0
    %2249 = vmatprep.mubr.f32.mxu0 0.0
    %2250 = vmatmul.mubr.f32.gmra.mrb[0].mxu0 %v2137
    %v2251 = vpop.f32.mrb[0].mxu0
    %v2252 = vadd.f32 0.0, %v2251
    %v2253 = vpop.f32.mrb[0].mxu0
    %2254 = vmatprep.mubr.f32.mxu0 0.0
    %2255 = vmatmul.mubr.f32.gmra.mrb[0].mxu0 %v2140
    %v2256 = vpop.f32.mrb[0].mxu0
    %v2257 = vadd.f32 0.0, %v2256
    %v2258 = vpop.f32.mrb[0].mxu0
    %2259 = vmatprep.mubr.f32.mxu0 0.0
    %2260 = vmatmul.mubr.f32.gmra.mrb[0].mxu0 %v2143
    %v2261 = vpop.f32.mrb[0].mxu0
    %v2262 = vadd.f32 0.0, %v2261
    %v2263 = vpop.f32.mrb[0].mxu0
    %2264 = vmatprep.mubr.f32.mxu0 0.0
    %2265 = vmatmul.mubr.f32.gmra.mrb[0].mxu0 %v2146
    %v2266 = vpop.f32.mrb[0].mxu0
    %v2267 = vadd.f32 0.0, %v2266
    %v2268 = vpop.f32.mrb[0].mxu0
    %2269 = vmatprep.mubr.f32.mxu0 0.0
    %2270 = vmatmul.mubr.f32.gmra.mrb[0].mxu0 %v2149
    %v2271 = vpop.f32.mrb[0].mxu0
    %v2272 = vadd.f32 0.0, %v2271
    %v2273 = vpop.f32.mrb[0].mxu0
    %2274 = vmatprep.mubr.f32.mxu0 0.0
    %2275 = vmatmul.mubr.f32.gmra.mrb[0].mxu0 %v2152
    %v2276 = vpop.f32.mrb[0].mxu0
    %v2277 = vadd.f32 0.0, %v2276
    %v2278 = vpop.f32.mrb[0].mxu0
    %2279 = vmatprep.mubr.f32.mxu0 0.0
    %2280 = vmatmul.mubr.f32.gmra.mrb[0].mxu0 %v2155
    %v2281 = vpop.f32.mrb[0].mxu0
    %v2282 = vadd.f32 0.0, %v2281
    %v2283 = vpop.f32.mrb[0].mxu0
    %2284 = vmatprep.mubr.f32.mxu0 0.0
    %2285 = vmatmul.mubr.f32.gmra.mrb[0].mxu0 %v2158
    %v2286 = vpop.f32.mrb[0].mxu0
    %v2287 = vadd.f32 0.0, %v2286
    %v2288 = vpop.f32.mrb[0].mxu0
    %2289 = vmatprep.mubr.f32.mxu0 0.0
    %2290 = vmatmul.mubr.f32.gmra.mrb[0].mxu0 %v2161
    %v2291 = vpop.f32.mrb[0].mxu0
    %v2292 = vadd.f32 0.0, %v2291
    %v2293 = vpop.f32.mrb[0].mxu0
    %2294 = vmatprep.mubr.f32.mxu0 0.0
    %2295 = vmatmul.mubr.f32.gmra.mrb[0].mxu0 %v2164
    %v2296 = vpop.f32.mrb[0].mxu0
    %v2297 = vadd.f32 0.0, %v2296
    %v2298 = vpop.f32.mrb[0].mxu0
    %2299 = vmatprep.mubr.f32.mxu0 0.0
    %2300 = vmatmul.mubr.f32.gmra.mrb[0].mxu0 %v2167
    %v2301 = vpop.f32.mrb[0].mxu0
    %v2302 = vadd.f32 0.0, %v2301
    %v2303 = vpop.f32.mrb[0].mxu0
    %2304 = vmatprep.mubr.f32.mxu0 0.0
    %2305 = vmatmul.mubr.f32.gmra.mrb[0].mxu0 %v2170
    %v2306 = vpop.f32.mrb[0].mxu0
    %v2307 = vadd.f32 0.0, %v2306
    %v2308 = vpop.f32.mrb[0].mxu0
    %2309 = vmatprep.mubr.f32.mxu0 0.0
    %2310 = vmatmul.mubr.f32.gmra.mrb[0].mxu0 %v2173
    %v2311 = vpop.f32.mrb[0].mxu0
    %v2312 = vadd.f32 0.0, %v2311
    %v2313 = vpop.f32.mrb[0].mxu0
    %2314 = vdwg.mxu0
    %v2315 = vadd.f32 %v2095, %v2242
    %v2316 = vadd.f32 %v2096, %v2247
    %v2317 = vadd.f32 %v2097, %v2252
    %v2318 = vadd.f32 %v2098, %v2257
    %v2319 = vadd.f32 %v2099, %v2262
    %v2320 = vadd.f32 %v2100, %v2267
    %v2321 = vadd.f32 %v2101, %v2272
    %v2322 = vadd.f32 %v2102, %v2277
    %v2323 = vadd.f32 %v2103, %v2282
    %v2324 = vadd.f32 %v2104, %v2287
    %v2325 = vadd.f32 %v2105, %v2292
    %v2326 = vadd.f32 %v2106, %v2297
    %v2327 = vadd.f32 %v2107, %v2302
    %v2328 = vadd.f32 %v2108, %v2307
    %v2329 = vadd.f32 %v2109, %v2312
    %v2330 = vld [vmem:[#allocation2 + $0x1a] sm:$0xff]
    %v2331 = vld [vmem:[#allocation2 + $0x22] sm:$0xff]
    %v2332 = vld [vmem:[#allocation2 + $0x2a] sm:$0xff]
    %v2333 = vld [vmem:[#allocation2 + $0x32] sm:$0xff]
    %v2334 = vld [vmem:[#allocation2 + $0x3a] sm:$0xff]
    %v2335 = vld [vmem:[#allocation2 + $0x42] sm:$0xff]
    %v2336 = vld [vmem:[#allocation2 + $0x4a] sm:$0xff]
    %v2337 = vld [vmem:[#allocation2 + $0x52] sm:$0xff]
    %v2338 = vld [vmem:[#allocation2 + $0x5a] sm:$0xff]
    %v2339 = vld [vmem:[#allocation2 + $0x62] sm:$0xff]
    %v2340 = vld [vmem:[#allocation2 + $0x6a] sm:$0xff]
    %v2341 = vld [vmem:[#allocation2 + $0x72] sm:$0xff]
    %v2342 = vld [vmem:[#allocation2 + $0x7a] sm:$0xff]
    %v2343 = vld [vmem:[#allocation2 + $0x82] sm:$0xff]
    %v2344 = vld [vmem:[#allocation2 + $0x8a] sm:$0x3f]
    %s2345 = scalar_lea.vmem %s4, 256
    %v2346 = vld [vmem:[%s2345] sm:$0xff]
    %v2347 = vld [vmem:[%s2345 + $0x8] sm:$0xff]
    %v2348 = vld [vmem:[%s2345 + $0x10] sm:$0xff]
    %v2349 = vld [vmem:[%s2345 + $0x18] sm:$0xff]
    %v2351 = vsel %vm582, %v2330, 0
    %v2354 = vsel %vm582, %v2331, 0
    %v2357 = vsel %vm582, %v2332, 0
    %v2360 = vsel %vm582, %v2333, 0
    %v2363 = vsel %vm582, %v2334, 0
    %v2366 = vsel %vm582, %v2335, 0
    %v2369 = vsel %vm582, %v2336, 0
    %v2372 = vsel %vm582, %v2337, 0
    %v2375 = vsel %vm582, %v2338, 0
    %v2378 = vsel %vm582, %v2339, 0
    %v2381 = vsel %vm582, %v2340, 0
    %v2384 = vsel %vm582, %v2341, 0
    %v2387 = vsel %vm582, %v2342, 0
    %v2390 = vsel %vm582, %v2343, 0
    %v2393 = vsel %vm582, %v2344, 0
    %2395 = vmatprep.subr.mxu0 0.0
    %2396 = vmatpush1.msra.mxu0 %v2346
    %2397 = vmatprep.subr.mxu0 0.0
    %2398 = vmatpush1.msra.mxu0 %v2347
    %2399 = vmatprep.subr.mxu0 0.0
    %2400 = vmatpush1.msra.mxu0 %v2348
    %2401 = vmatprep.subr.mxu0 0.0
    %2402 = vmatpush1.msra.mxu0 %v2349
    %2403 = vmatprep.subr.mxu0 0.0
    %2404 = vmatpush1.msra.mxu0 0.0
    %2405 = vmatprep.subr.mxu0 0.0
    %2406 = vmatpush1.msra.mxu0 0.0
    %2407 = vmatprep.subr.mxu0 0.0
    %2408 = vmatpush1.msra.mxu0 0.0
    %2409 = vmatprep.subr.mxu0 0.0
    %2410 = vmatpush1.msra.mxu0 0.0
    %2411 = vmatprep.subr.mxu0 0.0
    %2412 = vmatpush1.msra.mxu0 0.0
    %2413 = vmatprep.subr.mxu0 0.0
    %2414 = vmatpush1.msra.mxu0 0.0
    %2415 = vmatprep.subr.mxu0 0.0
    %2416 = vmatpush1.msra.mxu0 0.0
    %2417 = vmatprep.subr.mxu0 0.0
    %2418 = vmatpush1.msra.mxu0 0.0
    %2419 = vmatprep.subr.mxu0 0.0
    %2420 = vmatpush1.msra.mxu0 0.0
    %2421 = vmatprep.subr.mxu0 0.0
    %2422 = vmatpush1.msra.mxu0 0.0
    %2423 = vmatprep.subr.mxu0 0.0
    %2424 = vmatpush1.msra.mxu0 0.0
    %2425 = vmatprep.subr.mxu0 0.0
    %2426 = vmatpush1.msra.mxu0 0.0
    %2427 = vmatprep.subr.mxu0 0.0
    %2428 = vmatpush1.msra.mxu0 0.0
    %2429 = vmatprep.subr.mxu0 0.0
    %2430 = vmatpush1.msra.mxu0 0.0
    %2431 = vmatprep.subr.mxu0 0.0
    %2432 = vmatpush1.msra.mxu0 0.0
    %2433 = vmatprep.subr.mxu0 0.0
    %2434 = vmatpush1.msra.mxu0 0.0
    %2435 = vmatprep.subr.mxu0 0.0
    %2436 = vmatpush1.msra.mxu0 0.0
    %2437 = vmatprep.subr.mxu0 0.0
    %2438 = vmatpush1.msra.mxu0 0.0
    %2439 = vmatprep.subr.mxu0 0.0
    %2440 = vmatpush1.msra.mxu0 0.0
    %2441 = vmatprep.subr.mxu0 0.0
    %2442 = vmatpush1.msra.mxu0 0.0
    %2443 = vmatprep.subr.mxu0 0.0
    %2444 = vmatpush1.msra.mxu0 0.0
    %2445 = vmatprep.subr.mxu0 0.0
    %2446 = vmatpush1.msra.mxu0 0.0
    %2447 = vmatprep.subr.mxu0 0.0
    %2448 = vmatpush1.msra.mxu0 0.0
    %2449 = vmatprep.subr.mxu0 0.0
    %2450 = vmatpush1.msra.mxu0 0.0
    %2451 = vmatprep.subr.mxu0 0.0
    %2452 = vmatpush1.msra.mxu0 0.0
    %2453 = vmatprep.subr.mxu0 0.0
    %2454 = vmatpush1.msra.mxu0 0.0
    %2455 = vmatprep.subr.mxu0 0.0
    %2456 = vmatpush1.msra.mxu0 0.0
    %2457 = vmatprep.subr.mxu0 0.0
    %2458 = vmatpush1.msra.mxu0 0.0
    %2459 = vmatprep.mubr.f32.mxu0 0.0
    %2460 = vmatmul.mubr.f32.gmra.mrb[0].mxu0 %v2351
    %v2461 = vpop.f32.mrb[0].mxu0
    %v2462 = vadd.f32 0.0, %v2461
    %v2463 = vpop.f32.mrb[0].mxu0
    %2464 = vmatprep.mubr.f32.mxu0 0.0
    %2465 = vmatmul.mubr.f32.gmra.mrb[0].mxu0 %v2354
    %v2466 = vpop.f32.mrb[0].mxu0
    %v2467 = vadd.f32 0.0, %v2466
    %v2468 = vpop.f32.mrb[0].mxu0
    %2469 = vmatprep.mubr.f32.mxu0 0.0
    %2470 = vmatmul.mubr.f32.gmra.mrb[0].mxu0 %v2357
    %v2471 = vpop.f32.mrb[0].mxu0
    %v2472 = vadd.f32 0.0, %v2471
    %v2473 = vpop.f32.mrb[0].mxu0
    %2474 = vmatprep.mubr.f32.mxu0 0.0
    %2475 = vmatmul.mubr.f32.gmra.mrb[0].mxu0 %v2360
    %v2476 = vpop.f32.mrb[0].mxu0
    %v2477 = vadd.f32 0.0, %v2476
    %v2478 = vpop.f32.mrb[0].mxu0
    %2479 = vmatprep.mubr.f32.mxu0 0.0
    %2480 = vmatmul.mubr.f32.gmra.mrb[0].mxu0 %v2363
    %v2481 = vpop.f32.mrb[0].mxu0
    %v2482 = vadd.f32 0.0, %v2481
    %v2483 = vpop.f32.mrb[0].mxu0
    %2484 = vmatprep.mubr.f32.mxu0 0.0
    %2485 = vmatmul.mubr.f32.gmra.mrb[0].mxu0 %v2366
    %v2486 = vpop.f32.mrb[0].mxu0
    %v2487 = vadd.f32 0.0, %v2486
    %v2488 = vpop.f32.mrb[0].mxu0
    %2489 = vmatprep.mubr.f32.mxu0 0.0
    %2490 = vmatmul.mubr.f32.gmra.mrb[0].mxu0 %v2369
    %v2491 = vpop.f32.mrb[0].mxu0
    %v2492 = vadd.f32 0.0, %v2491
    %v2493 = vpop.f32.mrb[0].mxu0
    %2494 = vmatprep.mubr.f32.mxu0 0.0
    %2495 = vmatmul.mubr.f32.gmra.mrb[0].mxu0 %v2372
    %v2496 = vpop.f32.mrb[0].mxu0
    %v2497 = vadd.f32 0.0, %v2496
    %v2498 = vpop.f32.mrb[0].mxu0
    %2499 = vmatprep.mubr.f32.mxu0 0.0
    %2500 = vmatmul.mubr.f32.gmra.mrb[0].mxu0 %v2375
    %v2501 = vpop.f32.mrb[0].mxu0
    %v2502 = vadd.f32 0.0, %v2501
    %v2503 = vpop.f32.mrb[0].mxu0
    %2504 = vmatprep.mubr.f32.mxu0 0.0
    %2505 = vmatmul.mubr.f32.gmra.mrb[0].mxu0 %v2378
    %v2506 = vpop.f32.mrb[0].mxu0
    %v2507 = vadd.f32 0.0, %v2506
    %v2508 = vpop.f32.mrb[0].mxu0
    %2509 = vmatprep.mubr.f32.mxu0 0.0
    %2510 = vmatmul.mubr.f32.gmra.mrb[0].mxu0 %v2381
    %v2511 = vpop.f32.mrb[0].mxu0
    %v2512 = vadd.f32 0.0, %v2511
    %v2513 = vpop.f32.mrb[0].mxu0
    %2514 = vmatprep.mubr.f32.mxu0 0.0
    %2515 = vmatmul.mubr.f32.gmra.mrb[0].mxu0 %v2384
    %v2516 = vpop.f32.mrb[0].mxu0
    %v2517 = vadd.f32 0.0, %v2516
    %v2518 = vpop.f32.mrb[0].mxu0
    %2519 = vmatprep.mubr.f32.mxu0 0.0
    %2520 = vmatmul.mubr.f32.gmra.mrb[0].mxu0 %v2387
    %v2521 = vpop.f32.mrb[0].mxu0
    %v2522 = vadd.f32 0.0, %v2521
    %v2523 = vpop.f32.mrb[0].mxu0
    %2524 = vmatprep.mubr.f32.mxu0 0.0
    %2525 = vmatmul.mubr.f32.gmra.mrb[0].mxu0 %v2390
    %v2526 = vpop.f32.mrb[0].mxu0
    %v2527 = vadd.f32 0.0, %v2526
    %v2528 = vpop.f32.mrb[0].mxu0
    %2529 = vmatprep.mubr.f32.mxu0 0.0
    %2530 = vmatmul.mubr.f32.gmra.mrb[0].mxu0 %v2393
    %v2531 = vpop.f32.mrb[0].mxu0
    %v2532 = vadd.f32 0.0, %v2531
    %v2533 = vpop.f32.mrb[0].mxu0
    %2534 = vdwg.mxu0
    %v2535 = vadd.f32 %v2315, %v2462
    %v2536 = vadd.f32 %v2316, %v2467
    %v2537 = vadd.f32 %v2317, %v2472
    %v2538 = vadd.f32 %v2318, %v2477
    %v2539 = vadd.f32 %v2319, %v2482
    %v2540 = vadd.f32 %v2320, %v2487
    %v2541 = vadd.f32 %v2321, %v2492
    %v2542 = vadd.f32 %v2322, %v2497
    %v2543 = vadd.f32 %v2323, %v2502
    %v2544 = vadd.f32 %v2324, %v2507
    %v2545 = vadd.f32 %v2325, %v2512
    %v2546 = vadd.f32 %v2326, %v2517
    %v2547 = vadd.f32 %v2327, %v2522
    %v2548 = vadd.f32 %v2328, %v2527
    %v2549 = vadd.f32 %v2329, %v2532
    %v2550 = vld [vmem:[%s5] sm:$0x1]
    %v2552 = vlaneseq
    %v2553 = vshrl.u32 %v2552, 7
    %v2554 = vsub.s32 0, %v2553
    %v2555 = vrot.slane %v2550, %v2554
    %v2557 = vadd.f32 %v2535, %v2555
    %v2558 = vadd.f32 %v2536, %v2555
    %v2559 = vadd.f32 %v2537, %v2555
    %v2560 = vadd.f32 %v2538, %v2555
    %v2561 = vadd.f32 %v2539, %v2555
    %v2562 = vadd.f32 %v2540, %v2555
    %v2563 = vadd.f32 %v2541, %v2555
    %v2564 = vadd.f32 %v2542, %v2555
    %v2565 = vadd.f32 %v2543, %v2555
    %v2566 = vadd.f32 %v2544, %v2555
    %v2567 = vadd.f32 %v2545, %v2555
    %v2568 = vadd.f32 %v2546, %v2555
    %v2569 = vadd.f32 %v2547, %v2555
    %v2570 = vadd.f32 %v2548, %v2555
    %v2571 = vadd.f32 %v2549, %v2555
    %v2572 = vld [vmem:[%s11] sm:$0xff]
    %v2573 = vld [vmem:[%s11 + $0x8] sm:$0xff]
    %v2574 = vld [vmem:[%s11 + $0x10] sm:$0xff]
    %v2575 = vld [vmem:[%s11 + $0x18] sm:$0xff]
    %v2576 = vld [vmem:[%s11 + $0x20] sm:$0xff]
    %v2577 = vld [vmem:[%s11 + $0x28] sm:$0xff]
    %v2578 = vld [vmem:[%s11 + $0x30] sm:$0x1]
    %vm2593 = vcmask 1046528
    %v2594 = vrot.slane %v2557, 1
    %v2595 = vrot.slane %v2558, 1
    %v2596 = vsel %vm2593, %v2594, %v2595
    %v2597 = vrot.slane %v2559, 1
    %v2598 = vsel %vm2593, %v2595, %v2597
    %v2599 = vrot.slane %v2560, 1
    %v2600 = vsel %vm2593, %v2597, %v2599
    %v2601 = vrot.slane %v2561, 1
    %v2602 = vsel %vm2593, %v2599, %v2601
    %v2603 = vrot.slane %v2562, 1
    %v2604 = vsel %vm2593, %v2601, %v2603
    %v2605 = vrot.slane %v2563, 1
    %v2606 = vsel %vm2593, %v2603, %v2605
    %v2607 = vrot.slane %v2564, 1
    %v2608 = vsel %vm2593, %v2605, %v2607
    %v2609 = vrot.slane %v2565, 1
    %v2610 = vsel %vm2593, %v2607, %v2609
    %v2611 = vrot.slane %v2566, 1
    %v2612 = vsel %vm2593, %v2609, %v2611
    %v2613 = vrot.slane %v2567, 1
    %v2614 = vsel %vm2593, %v2611, %v2613
    %v2615 = vrot.slane %v2568, 1
    %v2616 = vsel %vm2593, %v2613, %v2615
    %v2617 = vrot.slane %v2569, 1
    %v2618 = vsel %vm2593, %v2615, %v2617
    %v2619 = vrot.slane %v2570, 1
    %v2620 = vsel %vm2593, %v2617, %v2619
    %v2635 = vmax.f32 %v2557, %v2596
    %v2636 = vmax.f32 %v2558, %v2598
    %v2637 = vmax.f32 %v2559, %v2600
    %v2638 = vmax.f32 %v2560, %v2602
    %v2639 = vmax.f32 %v2561, %v2604
    %v2640 = vmax.f32 %v2562, %v2606
    %v2641 = vmax.f32 %v2563, %v2608
    %v2642 = vmax.f32 %v2564, %v2610
    %v2643 = vmax.f32 %v2565, %v2612
    %v2644 = vmax.f32 %v2566, %v2614
    %v2645 = vmax.f32 %v2567, %v2616
    %v2646 = vmax.f32 %v2568, %v2618
    %v2647 = vmax.f32 %v2569, %v2620
    %v2648 = vmax.f32 %v2570, %v2619
    %v2650 = vrot.slane %v2571, 1
    %v2651 = vsel %vm2593, %v2619, %v2650
    %v2654 = vmax.f32 %v2570, %v2651
    %v2655 = vmax.f32 %v2571, %v2650
    %v2670 = vrot.slane %v2636, 4
    %v2671 = vrot.slane %v2637, 4
    %v2672 = vsel %vm423, %v2670, %v2671
    %v2673 = vrot.slane %v2638, 4
    %v2674 = vsel %vm423, %v2671, %v2673
    %v2675 = vrot.slane %v2639, 4
    %v2676 = vsel %vm423, %v2673, %v2675
    %v2677 = vrot.slane %v2640, 4
    %v2678 = vsel %vm423, %v2675, %v2677
    %v2679 = vrot.slane %v2641, 4
    %v2680 = vsel %vm423, %v2677, %v2679
    %v2681 = vrot.slane %v2642, 4
    %v2682 = vsel %vm423, %v2679, %v2681
    %v2683 = vrot.slane %v2643, 4
    %v2684 = vsel %vm423, %v2681, %v2683
    %v2685 = vrot.slane %v2644, 4
    %v2686 = vsel %vm423, %v2683, %v2685
    %v2687 = vrot.slane %v2645, 4
    %v2688 = vsel %vm423, %v2685, %v2687
    %v2689 = vrot.slane %v2646, 4
    %v2690 = vsel %vm423, %v2687, %v2689
    %v2691 = vrot.slane %v2647, 4
    %v2692 = vsel %vm423, %v2689, %v2691
    %v2693 = vrot.slane %v2654, 4
    %v2694 = vsel %vm423, %v2691, %v2693
    %v2695 = vrot.slane %v2655, 4
    %v2696 = vsel %vm423, %v2693, %v2695
    %v2711 = vmax.f32 %v2635, %v2672
    %v2712 = vmax.f32 %v2636, %v2674
    %v2713 = vmax.f32 %v2637, %v2676
    %v2714 = vmax.f32 %v2638, %v2678
    %v2715 = vmax.f32 %v2639, %v2680
    %v2716 = vmax.f32 %v2640, %v2682
    %v2717 = vmax.f32 %v2641, %v2684
    %v2718 = vmax.f32 %v2642, %v2686
    %v2719 = vmax.f32 %v2643, %v2688
    %v2720 = vmax.f32 %v2644, %v2690
    %v2721 = vmax.f32 %v2645, %v2692
    %v2722 = vmax.f32 %v2646, %v2694
    %v2723 = vmax.f32 %v2647, %v2696
    %v2724 = vmax.f32 %v2648, %v2695
    %vm2725 = vcmask 859136
    %v2727 = vsel %vm2725, %v2572, 0
    %v2730 = vsel %vm2725, %v2573, 0
    %v2733 = vsel %vm2725, %v2574, 0
    %v2736 = vsel %vm2725, %v2575, 0
    %v2739 = vsel %vm2725, %v2576, 0
    %v2742 = vsel %vm2725, %v2577, 0
    %v2745 = vsel %vm2725, %v2578, 0
    %v2748 = vsel %vm138, %v2724, 0
    %2750 = vmatprep.subr.mxu0 0.0
    %2751 = vmatpush1.msra.mxu0 %v2711
    %2752 = vmatprep.subr.mxu0 0.0
    %2753 = vmatpush1.msra.mxu0 %v2712
    %2754 = vmatprep.subr.mxu0 0.0
    %2755 = vmatpush1.msra.mxu0 %v2713
    %2756 = vmatprep.subr.mxu0 0.0
    %2757 = vmatpush1.msra.mxu0 %v2714
    %2758 = vmatprep.subr.mxu0 0.0
    %2759 = vmatpush1.msra.mxu0 %v2715
    %2760 = vmatprep.subr.mxu0 0.0
    %2761 = vmatpush1.msra.mxu0 %v2716
    %2762 = vmatprep.subr.mxu0 0.0
    %2763 = vmatpush1.msra.mxu0 %v2717
    %2764 = vmatprep.subr.mxu0 0.0
    %2765 = vmatpush1.msra.mxu0 %v2718
    %2766 = vmatprep.subr.mxu0 0.0
    %2767 = vmatpush1.msra.mxu0 %v2719
    %2768 = vmatprep.subr.mxu0 0.0
    %2769 = vmatpush1.msra.mxu0 %v2720
    %2770 = vmatprep.subr.mxu0 0.0
    %2771 = vmatpush1.msra.mxu0 %v2721
    %2772 = vmatprep.subr.mxu0 0.0
    %2773 = vmatpush1.msra.mxu0 %v2722
    %2774 = vmatprep.subr.mxu0 0.0
    %2775 = vmatpush1.msra.mxu0 %v2723
    %2776 = vmatprep.subr.mxu0 0.0
    %2777 = vmatpush1.msra.mxu0 %v2748
    %2778 = vmatprep.subr.mxu0 0.0
    %2779 = vmatpush1.msra.mxu0 0.0
    %2780 = vmatprep.subr.mxu0 0.0
    %2781 = vmatpush1.msra.mxu0 0.0
    %2782 = vmatprep.subr.mxu0 0.0
    %2783 = vmatpush1.msra.mxu0 0.0
    %2784 = vmatprep.subr.mxu0 0.0
    %2785 = vmatpush1.msra.mxu0 0.0
    %2786 = vmatprep.subr.mxu0 0.0
    %2787 = vmatpush1.msra.mxu0 0.0
    %2788 = vmatprep.subr.mxu0 0.0
    %2789 = vmatpush1.msra.mxu0 0.0
    %2790 = vmatprep.subr.mxu0 0.0
    %2791 = vmatpush1.msra.mxu0 0.0
    %2792 = vmatprep.subr.mxu0 0.0
    %2793 = vmatpush1.msra.mxu0 0.0
    %2794 = vmatprep.subr.mxu0 0.0
    %2795 = vmatpush1.msra.mxu0 0.0
    %2796 = vmatprep.subr.mxu0 0.0
    %2797 = vmatpush1.msra.mxu0 0.0
    %2798 = vmatprep.subr.mxu0 0.0
    %2799 = vmatpush1.msra.mxu0 0.0
    %2800 = vmatprep.subr.mxu0 0.0
    %2801 = vmatpush1.msra.mxu0 0.0
    %2802 = vmatprep.subr.mxu0 0.0
    %2803 = vmatpush1.msra.mxu0 0.0
    %2804 = vmatprep.subr.mxu0 0.0
    %2805 = vmatpush1.msra.mxu0 0.0
    %2806 = vmatprep.subr.mxu0 0.0
    %2807 = vmatpush1.msra.mxu0 0.0
    %2808 = vmatprep.subr.mxu0 0.0
    %2809 = vmatpush1.msra.mxu0 0.0
    %2810 = vmatprep.subr.mxu0 0.0
    %2811 = vmatpush1.msra.mxu0 0.0
    %2812 = vmatprep.subr.mxu0 0.0
    %2813 = vmatpush1.msra.mxu0 0.0
    %2814 = vmatprep.mubr.f32.mxu0 0.0
    %2815 = vmatmul.mubr.f32.gmra.mrb[0].mxu0 %v2727
    %v2816 = vpop.f32.mrb[0].mxu0
    %v2817 = vadd.f32 0.0, %v2816
    %v2818 = vpop.f32.mrb[0].mxu0
    %2819 = vmatprep.mubr.f32.mxu0 0.0
    %2820 = vmatmul.mubr.f32.gmra.mrb[0].mxu0 %v2730
    %v2821 = vpop.f32.mrb[0].mxu0
    %v2822 = vadd.f32 0.0, %v2821
    %v2823 = vpop.f32.mrb[0].mxu0
    %2824 = vmatprep.mubr.f32.mxu0 0.0
    %2825 = vmatmul.mubr.f32.gmra.mrb[0].mxu0 %v2733
    %v2826 = vpop.f32.mrb[0].mxu0
    %v2827 = vadd.f32 0.0, %v2826
    %v2828 = vpop.f32.mrb[0].mxu0
    %2829 = vmatprep.mubr.f32.mxu0 0.0
    %2830 = vmatmul.mubr.f32.gmra.mrb[0].mxu0 %v2736
    %v2831 = vpop.f32.mrb[0].mxu0
    %v2832 = vadd.f32 0.0, %v2831
    %v2833 = vpop.f32.mrb[0].mxu0
    %2834 = vmatprep.mubr.f32.mxu0 0.0
    %2835 = vmatmul.mubr.f32.gmra.mrb[0].mxu0 %v2739
    %v2836 = vpop.f32.mrb[0].mxu0
    %v2837 = vadd.f32 0.0, %v2836
    %v2838 = vpop.f32.mrb[0].mxu0
    %2839 = vmatprep.mubr.f32.mxu0 0.0
    %2840 = vmatmul.mubr.f32.gmra.mrb[0].mxu0 %v2742
    %v2841 = vpop.f32.mrb[0].mxu0
    %v2842 = vadd.f32 0.0, %v2841
    %v2843 = vpop.f32.mrb[0].mxu0
    %2844 = vmatprep.mubr.f32.mxu0 0.0
    %2845 = vmatmul.mubr.f32.gmra.mrb[0].mxu0 %v2745
    %v2846 = vpop.f32.mrb[0].mxu0
    %v2847 = vadd.f32 0.0, %v2846
    %v2848 = vpop.f32.mrb[0].mxu0
    %2849 = vdwg.mxu0
    %v2850 = vld [vmem:[%s13] sm:$0xff]
    %v2851 = vld [vmem:[%s13 + $0x8] sm:$0xff]
    %v2852 = vld [vmem:[%s13 + $0x10] sm:$0xff]
    %v2853 = vld [vmem:[%s13 + $0x18] sm:$0xff]
    %v2854 = vld [vmem:[%s13 + $0x20] sm:$0xff]
    %v2855 = vld [vmem:[%s13 + $0x28] sm:$0xff]
    %v2856 = vld [vmem:[%s13 + $0x30] sm:$0x1]
    %v2857 = vxor.u32 %v2817, 2147483648
    %v2858 = vxor.u32 %v2822, 2147483648
    %v2859 = vxor.u32 %v2827, 2147483648
    %v2860 = vxor.u32 %v2832, 2147483648
    %v2861 = vxor.u32 %v2837, 2147483648
    %v2862 = vxor.u32 %v2842, 2147483648
    %v2863 = vxor.u32 %v2847, 2147483648
    %v2864 = vmul.f32 %v2857, 1.442695
    %v2865 = vpow.pop %v2864
    %v2866 = vmul.f32 %v2858, 1.442695
    %v2867 = vpow.pop %v2866
    %v2868 = vmul.f32 %v2859, 1.442695
    %v2869 = vpow.pop %v2868
    %v2870 = vmul.f32 %v2860, 1.442695
    %v2871 = vpow.pop %v2870
    %v2872 = vmul.f32 %v2861, 1.442695
    %v2873 = vpow.pop %v2872
    %v2874 = vmul.f32 %v2862, 1.442695
    %v2875 = vpow.pop %v2874
    %v2876 = vmul.f32 %v2863, 1.442695
    %v2877 = vpow.pop %v2876
    %v2878 = vadd.f32 %v2865, 1.0
    %v2879 = vadd.f32 %v2867, 1.0
    %v2880 = vadd.f32 %v2869, 1.0
    %v2881 = vadd.f32 %v2871, 1.0
    %v2882 = vadd.f32 %v2873, 1.0
    %v2883 = vadd.f32 %v2875, 1.0
    %v2884 = vadd.f32 %v2877, 1.0
    %v2885 = vrcp.pop %v2878
    %v2886 = vmul.f32 1.0, %v2885
    %v2887 = vrcp.pop %v2879
    %v2888 = vmul.f32 1.0, %v2887
    %v2889 = vrcp.pop %v2880
    %v2890 = vmul.f32 1.0, %v2889
    %v2891 = vrcp.pop %v2881
    %v2892 = vmul.f32 1.0, %v2891
    %v2893 = vrcp.pop %v2882
    %v2894 = vmul.f32 1.0, %v2893
    %v2895 = vrcp.pop %v2883
    %v2896 = vmul.f32 1.0, %v2895
    %v2897 = vrcp.pop %v2884
    %v2898 = vmul.f32 1.0, %v2897
    %2900 = vset.pattern.permute.xlu0 0
    %2901 = vperm.xlu0 %2900, %v2850
    %v2902 = vpop.permute.xlu0 %2901
    %2905 = vset.pattern.permute.xlu0 0
    %2906 = vperm.xlu0 %2905, %v2851
    %v2907 = vpop.permute.xlu0 %2906
    %2910 = vset.pattern.permute.xlu0 0
    %2911 = vperm.xlu0 %2910, %v2852
    %v2912 = vpop.permute.xlu0 %2911
    %2915 = vset.pattern.permute.xlu0 0
    %2916 = vperm.xlu0 %2915, %v2853
    %v2917 = vpop.permute.xlu0 %2916
    %2920 = vset.pattern.permute.xlu0 0
    %2921 = vperm.xlu0 %2920, %v2854
    %v2922 = vpop.permute.xlu0 %2921
    %2925 = vset.pattern.permute.xlu0 0
    %2926 = vperm.xlu0 %2925, %v2855
    %v2927 = vpop.permute.xlu0 %2926
    %2930 = vset.pattern.permute.xlu0 0
    %2931 = vperm.xlu0 %2930, %v2856
    %v2932 = vpop.permute.xlu0 %2931
    %v2934 = vmul.f32 %v2902, %v2886
    %v2935 = vmul.f32 %v2907, %v2888
    %v2936 = vmul.f32 %v2912, %v2890
    %v2937 = vmul.f32 %v2917, %v2892
    %v2938 = vmul.f32 %v2922, %v2894
    %v2939 = vmul.f32 %v2927, %v2896
    %v2940 = vmul.f32 %v2932, %v2898
    %vm2941 = vcmask 523264
    %2942 = vst.msk [vmem:[#allocation3] sm:$0xff] %vm2941, %v2934
    %2943 = vst.msk [vmem:[#allocation3 + $0x8] sm:$0xff] %vm2941, %v2935
    %2944 = vst.msk [vmem:[#allocation3 + $0x10] sm:$0xff] %vm2941, %v2936
    %2945 = vst.msk [vmem:[#allocation3 + $0x18] sm:$0xff] %vm2941, %v2937
    %2946 = vst.msk [vmem:[#allocation3 + $0x20] sm:$0xff] %vm2941, %v2938
    %2947 = vst.msk [vmem:[#allocation3 + $0x28] sm:$0xff] %vm2941, %v2939
    %vm2948 = vcmask 516096
    %2949 = vst.msk [vmem:[#allocation3 + $0x30] sm:$0x1] %vm2948, %v2940
    %v2950 = vld [vmem:[#allocation3] sm:$0xff]
    %v2951 = vld [vmem:[#allocation3 + $0x8] sm:$0xff]
    %v2952 = vld [vmem:[#allocation3 + $0x10] sm:$0xff]
    %v2953 = vld [vmem:[#allocation3 + $0x18] sm:$0xff]
    %v2954 = vld [vmem:[#allocation3 + $0x20] sm:$0x1]
    %v2955 = vld [vmem:[%s6] sm:$0xff]
    %v2956 = vld [vmem:[%s6 + $0x8] sm:$0xff]
    %v2957 = vld [vmem:[%s6 + $0x10] sm:$0xff]
    %v2958 = vld [vmem:[%s6 + $0x18] sm:$0xff]
    %v2959 = vld [vmem:[%s6 + $0x20] sm:$0xff]
    %v2960 = vld [vmem:[%s6 + $0x28] sm:$0xff]
    %v2961 = vld [vmem:[%s6 + $0x30] sm:$0xff]
    %v2962 = vld [vmem:[%s6 + $0x38] sm:$0xff]
    %v2963 = vld [vmem:[#allocation3 + $0x1] sm:$0xff]
    %v2964 = vld [vmem:[#allocation3 + $0x9] sm:$0xff]
    %v2965 = vld [vmem:[#allocation3 + $0x11] sm:$0xff]
    %v2966 = vld [vmem:[#allocation3 + $0x19] sm:$0xff]
    %v2967 = vld [vmem:[#allocation3 + $0x21] sm:$0x1]
    %s2968 = scalar_lea.vmem %s6, 64
    %v2969 = vld [vmem:[%s2968] sm:$0xff]
    %v2970 = vld [vmem:[%s2968 + $0x8] sm:$0xff]
    %v2971 = vld [vmem:[%s2968 + $0x10] sm:$0xff]
    %v2972 = vld [vmem:[%s2968 + $0x18] sm:$0xff]
    %v2973 = vld [vmem:[%s2968 + $0x20] sm:$0xff]
    %v2974 = vld [vmem:[%s2968 + $0x28] sm:$0xff]
    %v2975 = vld [vmem:[%s2968 + $0x30] sm:$0xff]
    %v2976 = vld [vmem:[%s2968 + $0x38] sm:$0xff]
    %v2978 = vsel %vm2941, %v2963, 0
    %v2981 = vsel %vm2941, %v2964, 0
    %v2984 = vsel %vm2941, %v2965, 0
    %v2987 = vsel %vm2941, %v2966, 0
    %v2990 = vsel %vm2941, %v2967, 0
    %2992 = vmatprep.subr.mxu0 0.0
    %2993 = vmatpush1.msra.mxu0 %v2969
    %2994 = vmatprep.subr.mxu0 0.0
    %2995 = vmatpush1.msra.mxu0 %v2970
    %2996 = vmatprep.subr.mxu0 0.0
    %2997 = vmatpush1.msra.mxu0 %v2971
    %2998 = vmatprep.subr.mxu0 0.0
    %2999 = vmatpush1.msra.mxu0 %v2972
    %3000 = vmatprep.subr.mxu0 0.0
    %3001 = vmatpush1.msra.mxu0 %v2973
    %3002 = vmatprep.subr.mxu0 0.0
    %3003 = vmatpush1.msra.mxu0 %v2974
    %3004 = vmatprep.subr.mxu0 0.0
    %3005 = vmatpush1.msra.mxu0 %v2975
    %3006 = vmatprep.subr.mxu0 0.0
    %3007 = vmatpush1.msra.mxu0 %v2976
    %3008 = vmatprep.subr.mxu0 0.0
    %3009 = vmatpush1.msra.mxu0 0.0
    %3010 = vmatprep.subr.mxu0 0.0
    %3011 = vmatpush1.msra.mxu0 0.0
    %3012 = vmatprep.subr.mxu0 0.0
    %3013 = vmatpush1.msra.mxu0 0.0
    %3014 = vmatprep.subr.mxu0 0.0
    %3015 = vmatpush1.msra.mxu0 0.0
    %3016 = vmatprep.subr.mxu0 0.0
    %3017 = vmatpush1.msra.mxu0 0.0
    %3018 = vmatprep.subr.mxu0 0.0
    %3019 = vmatpush1.msra.mxu0 0.0
    %3020 = vmatprep.subr.mxu0 0.0
    %3021 = vmatpush1.msra.mxu0 0.0
    %3022 = vmatprep.subr.mxu0 0.0
    %3023 = vmatpush1.msra.mxu0 0.0
    %3024 = vmatprep.subr.mxu0 0.0
    %3025 = vmatpush1.msra.mxu0 0.0
    %3026 = vmatprep.subr.mxu0 0.0
    %3027 = vmatpush1.msra.mxu0 0.0
    %3028 = vmatprep.subr.mxu0 0.0
    %3029 = vmatpush1.msra.mxu0 0.0
    %3030 = vmatprep.subr.mxu0 0.0
    %3031 = vmatpush1.msra.mxu0 0.0
    %3032 = vmatprep.subr.mxu0 0.0
    %3033 = vmatpush1.msra.mxu0 0.0
    %3034 = vmatprep.subr.mxu0 0.0
    %3035 = vmatpush1.msra.mxu0 0.0
    %3036 = vmatprep.subr.mxu0 0.0
    %3037 = vmatpush1.msra.mxu0 0.0
    %3038 = vmatprep.subr.mxu0 0.0
    %3039 = vmatpush1.msra.mxu0 0.0
    %3040 = vmatprep.subr.mxu0 0.0
    %3041 = vmatpush1.msra.mxu0 0.0
    %3042 = vmatprep.subr.mxu0 0.0
    %3043 = vmatpush1.msra.mxu0 0.0
    %3044 = vmatprep.subr.mxu0 0.0
    %3045 = vmatpush1.msra.mxu0 0.0
    %3046 = vmatprep.subr.mxu0 0.0
    %3047 = vmatpush1.msra.mxu0 0.0
    %3048 = vmatprep.subr.mxu0 0.0
    %3049 = vmatpush1.msra.mxu0 0.0
    %3050 = vmatprep.subr.mxu0 0.0
    %3051 = vmatpush1.msra.mxu0 0.0
    %3052 = vmatprep.subr.mxu0 0.0
    %3053 = vmatpush1.msra.mxu0 0.0
    %3054 = vmatprep.subr.mxu0 0.0
    %3055 = vmatpush1.msra.mxu0 0.0
    %3056 = vmatprep.mubr.f32.mxu0 0.0
    %3057 = vmatmul.mubr.f32.gmra.mrb[0].mxu0 %v2978
    %v3058 = vpop.f32.mrb[0].mxu0
    %v3059 = vadd.f32 0.0, %v3058
    %v3060 = vpop.f32.mrb[0].mxu0
    %3061 = vmatprep.mubr.f32.mxu0 0.0
    %3062 = vmatmul.mubr.f32.gmra.mrb[0].mxu0 %v2981
    %v3063 = vpop.f32.mrb[0].mxu0
    %v3064 = vadd.f32 0.0, %v3063
    %v3065 = vpop.f32.mrb[0].mxu0
    %3066 = vmatprep.mubr.f32.mxu0 0.0
    %3067 = vmatmul.mubr.f32.gmra.mrb[0].mxu0 %v2984
    %v3068 = vpop.f32.mrb[0].mxu0
    %v3069 = vadd.f32 0.0, %v3068
    %v3070 = vpop.f32.mrb[0].mxu0
    %3071 = vmatprep.mubr.f32.mxu0 0.0
    %3072 = vmatmul.mubr.f32.gmra.mrb[0].mxu0 %v2987
    %v3073 = vpop.f32.mrb[0].mxu0
    %v3074 = vadd.f32 0.0, %v3073
    %v3075 = vpop.f32.mrb[0].mxu0
    %3076 = vmatprep.mubr.f32.mxu0 0.0
    %3077 = vmatmul.mubr.f32.gmra.mrb[0].mxu0 %v2990
    %v3078 = vpop.f32.mrb[0].mxu0
    %v3079 = vadd.f32 0.0, %v3078
    %v3080 = vpop.f32.mrb[0].mxu0
    %3081 = vdwg.mxu0
    %v3083 = vsel %vm2941, %v2950, 0
    %v3086 = vsel %vm2941, %v2951, 0
    %v3089 = vsel %vm2941, %v2952, 0
    %v3092 = vsel %vm2941, %v2953, 0
    %v3095 = vsel %vm2941, %v2954, 0
    %3097 = vmatprep.subr.mxu0 0.0
    %3098 = vmatpush1.msra.mxu0 %v2955
    %3099 = vmatprep.subr.mxu0 0.0
    %3100 = vmatpush1.msra.mxu0 %v2956
    %3101 = vmatprep.subr.mxu0 0.0
    %3102 = vmatpush1.msra.mxu0 %v2957
    %3103 = vmatprep.subr.mxu0 0.0
    %3104 = vmatpush1.msra.mxu0 %v2958
    %3105 = vmatprep.subr.mxu0 0.0
    %3106 = vmatpush1.msra.mxu0 %v2959
    %3107 = vmatprep.subr.mxu0 0.0
    %3108 = vmatpush1.msra.mxu0 %v2960
    %3109 = vmatprep.subr.mxu0 0.0
    %3110 = vmatpush1.msra.mxu0 %v2961
    %3111 = vmatprep.subr.mxu0 0.0
    %3112 = vmatpush1.msra.mxu0 %v2962
    %3113 = vmatprep.subr.mxu0 0.0
    %3114 = vmatpush1.msra.mxu0 0.0
    %3115 = vmatprep.subr.mxu0 0.0
    %3116 = vmatpush1.msra.mxu0 0.0
    %3117 = vmatprep.subr.mxu0 0.0
    %3118 = vmatpush1.msra.mxu0 0.0
    %3119 = vmatprep.subr.mxu0 0.0
    %3120 = vmatpush1.msra.mxu0 0.0
    %3121 = vmatprep.subr.mxu0 0.0
    %3122 = vmatpush1.msra.mxu0 0.0
    %3123 = vmatprep.subr.mxu0 0.0
    %3124 = vmatpush1.msra.mxu0 0.0
    %3125 = vmatprep.subr.mxu0 0.0
    %3126 = vmatpush1.msra.mxu0 0.0
    %3127 = vmatprep.subr.mxu0 0.0
    %3128 = vmatpush1.msra.mxu0 0.0
    %3129 = vmatprep.subr.mxu0 0.0
    %3130 = vmatpush1.msra.mxu0 0.0
    %3131 = vmatprep.subr.mxu0 0.0
    %3132 = vmatpush1.msra.mxu0 0.0
    %3133 = vmatprep.subr.mxu0 0.0
    %3134 = vmatpush1.msra.mxu0 0.0
    %3135 = vmatprep.subr.mxu0 0.0
    %3136 = vmatpush1.msra.mxu0 0.0
    %3137 = vmatprep.subr.mxu0 0.0
    %3138 = vmatpush1.msra.mxu0 0.0
    %3139 = vmatprep.subr.mxu0 0.0
    %3140 = vmatpush1.msra.mxu0 0.0
    %3141 = vmatprep.subr.mxu0 0.0
    %3142 = vmatpush1.msra.mxu0 0.0
    %3143 = vmatprep.subr.mxu0 0.0
    %3144 = vmatpush1.msra.mxu0 0.0
    %3145 = vmatprep.subr.mxu0 0.0
    %3146 = vmatpush1.msra.mxu0 0.0
    %3147 = vmatprep.subr.mxu0 0.0
    %3148 = vmatpush1.msra.mxu0 0.0
    %3149 = vmatprep.subr.mxu0 0.0
    %3150 = vmatpush1.msra.mxu0 0.0
    %3151 = vmatprep.subr.mxu0 0.0
    %3152 = vmatpush1.msra.mxu0 0.0
    %3153 = vmatprep.subr.mxu0 0.0
    %3154 = vmatpush1.msra.mxu0 0.0
    %3155 = vmatprep.subr.mxu0 0.0
    %3156 = vmatpush1.msra.mxu0 0.0
    %3157 = vmatprep.subr.mxu0 0.0
    %3158 = vmatpush1.msra.mxu0 0.0
    %3159 = vmatprep.subr.mxu0 0.0
    %3160 = vmatpush1.msra.mxu0 0.0
    %3161 = vmatprep.mubr.f32.mxu0 0.0
    %3162 = vmatmul.mubr.f32.gmra.mrb[0].mxu0 %v3083
    %v3163 = vpop.f32.mrb[0].mxu0
    %v3164 = vadd.f32 %v3059, %v3163
    %v3165 = vpop.f32.mrb[0].mxu0
    %3166 = vmatprep.mubr.f32.mxu0 0.0
    %3167 = vmatmul.mubr.f32.gmra.mrb[0].mxu0 %v3086
    %v3168 = vpop.f32.mrb[0].mxu0
    %v3169 = vadd.f32 %v3064, %v3168
    %v3170 = vpop.f32.mrb[0].mxu0
    %3171 = vmatprep.mubr.f32.mxu0 0.0
    %3172 = vmatmul.mubr.f32.gmra.mrb[0].mxu0 %v3089
    %v3173 = vpop.f32.mrb[0].mxu0
    %v3174 = vadd.f32 %v3069, %v3173
    %v3175 = vpop.f32.mrb[0].mxu0
    %3176 = vmatprep.mubr.f32.mxu0 0.0
    %3177 = vmatmul.mubr.f32.gmra.mrb[0].mxu0 %v3092
    %v3178 = vpop.f32.mrb[0].mxu0
    %v3179 = vadd.f32 %v3074, %v3178
    %v3180 = vpop.f32.mrb[0].mxu0
    %3181 = vmatprep.mubr.f32.mxu0 0.0
    %3182 = vmatmul.mubr.f32.gmra.mrb[0].mxu0 %v3095
    %v3183 = vpop.f32.mrb[0].mxu0
    %v3184 = vadd.f32 %v3079, %v3183
    %v3185 = vpop.f32.mrb[0].mxu0
    %3186 = vdwg.mxu0
    %v3187 = vld [vmem:[#allocation3 + $0x2] sm:$0xff]
    %v3188 = vld [vmem:[#allocation3 + $0xa] sm:$0xff]
    %v3189 = vld [vmem:[#allocation3 + $0x12] sm:$0xff]
    %v3190 = vld [vmem:[#allocation3 + $0x1a] sm:$0xff]
    %v3191 = vld [vmem:[#allocation3 + $0x22] sm:$0x1]
    %s3192 = scalar_lea.vmem %s6, 128
    %v3193 = vld [vmem:[%s3192] sm:$0xff]
    %v3194 = vld [vmem:[%s3192 + $0x8] sm:$0xff]
    %v3195 = vld [vmem:[%s3192 + $0x10] sm:$0xff]
    %v3196 = vld [vmem:[%s3192 + $0x18] sm:$0xff]
    %v3197 = vld [vmem:[%s3192 + $0x20] sm:$0xff]
    %v3198 = vld [vmem:[%s3192 + $0x28] sm:$0xff]
    %v3199 = vld [vmem:[%s3192 + $0x30] sm:$0xff]
    %v3200 = vld [vmem:[%s3192 + $0x38] sm:$0xff]
    %v3202 = vsel %vm2941, %v3187, 0
    %v3205 = vsel %vm2941, %v3188, 0
    %v3208 = vsel %vm2941, %v3189, 0
    %v3211 = vsel %vm2941, %v3190, 0
    %v3214 = vsel %vm2941, %v3191, 0
    %3216 = vmatprep.subr.mxu0 0.0
    %3217 = vmatpush1.msra.mxu0 %v3193
    %3218 = vmatprep.subr.mxu0 0.0
    %3219 = vmatpush1.msra.mxu0 %v3194
    %3220 = vmatprep.subr.mxu0 0.0
    %3221 = vmatpush1.msra.mxu0 %v3195
    %3222 = vmatprep.subr.mxu0 0.0
    %3223 = vmatpush1.msra.mxu0 %v3196
    %3224 = vmatprep.subr.mxu0 0.0
    %3225 = vmatpush1.msra.mxu0 %v3197
    %3226 = vmatprep.subr.mxu0 0.0
    %3227 = vmatpush1.msra.mxu0 %v3198
    %3228 = vmatprep.subr.mxu0 0.0
    %3229 = vmatpush1.msra.mxu0 %v3199
    %3230 = vmatprep.subr.mxu0 0.0
    %3231 = vmatpush1.msra.mxu0 %v3200
    %3232 = vmatprep.subr.mxu0 0.0
    %3233 = vmatpush1.msra.mxu0 0.0
    %3234 = vmatprep.subr.mxu0 0.0
    %3235 = vmatpush1.msra.mxu0 0.0
    %3236 = vmatprep.subr.mxu0 0.0
    %3237 = vmatpush1.msra.mxu0 0.0
    %3238 = vmatprep.subr.mxu0 0.0
    %3239 = vmatpush1.msra.mxu0 0.0
    %3240 = vmatprep.subr.mxu0 0.0
    %3241 = vmatpush1.msra.mxu0 0.0
    %3242 = vmatprep.subr.mxu0 0.0
    %3243 = vmatpush1.msra.mxu0 0.0
    %3244 = vmatprep.subr.mxu0 0.0
    %3245 = vmatpush1.msra.mxu0 0.0
    %3246 = vmatprep.subr.mxu0 0.0
    %3247 = vmatpush1.msra.mxu0 0.0
    %3248 = vmatprep.subr.mxu0 0.0
    %3249 = vmatpush1.msra.mxu0 0.0
    %3250 = vmatprep.subr.mxu0 0.0
    %3251 = vmatpush1.msra.mxu0 0.0
    %3252 = vmatprep.subr.mxu0 0.0
    %3253 = vmatpush1.msra.mxu0 0.0
    %3254 = vmatprep.subr.mxu0 0.0
    %3255 = vmatpush1.msra.mxu0 0.0
    %3256 = vmatprep.subr.mxu0 0.0
    %3257 = vmatpush1.msra.mxu0 0.0
    %3258 = vmatprep.subr.mxu0 0.0
    %3259 = vmatpush1.msra.mxu0 0.0
    %3260 = vmatprep.subr.mxu0 0.0
    %3261 = vmatpush1.msra.mxu0 0.0
    %3262 = vmatprep.subr.mxu0 0.0
    %3263 = vmatpush1.msra.mxu0 0.0
    %3264 = vmatprep.subr.mxu0 0.0
    %3265 = vmatpush1.msra.mxu0 0.0
    %3266 = vmatprep.subr.mxu0 0.0
    %3267 = vmatpush1.msra.mxu0 0.0
    %3268 = vmatprep.subr.mxu0 0.0
    %3269 = vmatpush1.msra.mxu0 0.0
    %3270 = vmatprep.subr.mxu0 0.0
    %3271 = vmatpush1.msra.mxu0 0.0
    %3272 = vmatprep.subr.mxu0 0.0
    %3273 = vmatpush1.msra.mxu0 0.0
    %3274 = vmatprep.subr.mxu0 0.0
    %3275 = vmatpush1.msra.mxu0 0.0
    %3276 = vmatprep.subr.mxu0 0.0
    %3277 = vmatpush1.msra.mxu0 0.0
    %3278 = vmatprep.subr.mxu0 0.0
    %3279 = vmatpush1.msra.mxu0 0.0
    %3280 = vmatprep.mubr.f32.mxu0 0.0
    %3281 = vmatmul.mubr.f32.gmra.mrb[0].mxu0 %v3202
    %v3282 = vpop.f32.mrb[0].mxu0
    %v3283 = vadd.f32 0.0, %v3282
    %v3284 = vpop.f32.mrb[0].mxu0
    %3285 = vmatprep.mubr.f32.mxu0 0.0
    %3286 = vmatmul.mubr.f32.gmra.mrb[0].mxu0 %v3205
    %v3287 = vpop.f32.mrb[0].mxu0
    %v3288 = vadd.f32 0.0, %v3287
    %v3289 = vpop.f32.mrb[0].mxu0
    %3290 = vmatprep.mubr.f32.mxu0 0.0
    %3291 = vmatmul.mubr.f32.gmra.mrb[0].mxu0 %v3208
    %v3292 = vpop.f32.mrb[0].mxu0
    %v3293 = vadd.f32 0.0, %v3292
    %v3294 = vpop.f32.mrb[0].mxu0
    %3295 = vmatprep.mubr.f32.mxu0 0.0
    %3296 = vmatmul.mubr.f32.gmra.mrb[0].mxu0 %v3211
    %v3297 = vpop.f32.mrb[0].mxu0
    %v3298 = vadd.f32 0.0, %v3297
    %v3299 = vpop.f32.mrb[0].mxu0
    %3300 = vmatprep.mubr.f32.mxu0 0.0
    %3301 = vmatmul.mubr.f32.gmra.mrb[0].mxu0 %v3214
    %v3302 = vpop.f32.mrb[0].mxu0
    %v3303 = vadd.f32 0.0, %v3302
    %v3304 = vpop.f32.mrb[0].mxu0
    %3305 = vdwg.mxu0
    %v3306 = vadd.f32 %v3164, %v3283
    %v3307 = vadd.f32 %v3169, %v3288
    %v3308 = vadd.f32 %v3174, %v3293
    %v3309 = vadd.f32 %v3179, %v3298
    %v3310 = vadd.f32 %v3184, %v3303
    %v3311 = vld [vmem:[#allocation3 + $0x7] sm:$0xff]
    %v3312 = vld [vmem:[#allocation3 + $0xf] sm:$0xff]
    %v3313 = vld [vmem:[#allocation3 + $0x17] sm:$0xff]
    %v3314 = vld [vmem:[#allocation3 + $0x1f] sm:$0xff]
    %v3315 = vld [vmem:[#allocation3 + $0x27] sm:$0x1]
    %s3316 = scalar_lea.vmem %s6, 192
    %v3317 = vld [vmem:[%s3316] sm:$0xff]
    %v3318 = vld [vmem:[%s3316 + $0x8] sm:$0xff]
    %v3319 = vld [vmem:[%s3316 + $0x10] sm:$0xff]
    %v3320 = vld [vmem:[%s3316 + $0x18] sm:$0xff]
    %v3321 = vld [vmem:[%s3316 + $0x20] sm:$0xff]
    %v3322 = vld [vmem:[%s3316 + $0x28] sm:$0xff]
    %v3323 = vld [vmem:[%s3316 + $0x30] sm:$0xff]
    %v3324 = vld [vmem:[%s3316 + $0x38] sm:$0xff]
    %v3326 = vsel %vm2941, %v3311, 0
    %v3329 = vsel %vm2941, %v3312, 0
    %v3332 = vsel %vm2941, %v3313, 0
    %v3335 = vsel %vm2941, %v3314, 0
    %v3338 = vsel %vm2941, %v3315, 0
    %3340 = vmatprep.subr.mxu0 0.0
    %3341 = vmatpush1.msra.mxu0 %v3317
    %3342 = vmatprep.subr.mxu0 0.0
    %3343 = vmatpush1.msra.mxu0 %v3318
    %3344 = vmatprep.subr.mxu0 0.0
    %3345 = vmatpush1.msra.mxu0 %v3319
    %3346 = vmatprep.subr.mxu0 0.0
    %3347 = vmatpush1.msra.mxu0 %v3320
    %3348 = vmatprep.subr.mxu0 0.0
    %3349 = vmatpush1.msra.mxu0 %v3321
    %3350 = vmatprep.subr.mxu0 0.0
    %3351 = vmatpush1.msra.mxu0 %v3322
    %3352 = vmatprep.subr.mxu0 0.0
    %3353 = vmatpush1.msra.mxu0 %v3323
    %3354 = vmatprep.subr.mxu0 0.0
    %3355 = vmatpush1.msra.mxu0 %v3324
    %3356 = vmatprep.subr.mxu0 0.0
    %3357 = vmatpush1.msra.mxu0 0.0
    %3358 = vmatprep.subr.mxu0 0.0
    %3359 = vmatpush1.msra.mxu0 0.0
    %3360 = vmatprep.subr.mxu0 0.0
    %3361 = vmatpush1.msra.mxu0 0.0
    %3362 = vmatprep.subr.mxu0 0.0
    %3363 = vmatpush1.msra.mxu0 0.0
    %3364 = vmatprep.subr.mxu0 0.0
    %3365 = vmatpush1.msra.mxu0 0.0
    %3366 = vmatprep.subr.mxu0 0.0
    %3367 = vmatpush1.msra.mxu0 0.0
    %3368 = vmatprep.subr.mxu0 0.0
    %3369 = vmatpush1.msra.mxu0 0.0
    %3370 = vmatprep.subr.mxu0 0.0
    %3371 = vmatpush1.msra.mxu0 0.0
    %3372 = vmatprep.subr.mxu0 0.0
    %3373 = vmatpush1.msra.mxu0 0.0
    %3374 = vmatprep.subr.mxu0 0.0
    %3375 = vmatpush1.msra.mxu0 0.0
    %3376 = vmatprep.subr.mxu0 0.0
    %3377 = vmatpush1.msra.mxu0 0.0
    %3378 = vmatprep.subr.mxu0 0.0
    %3379 = vmatpush1.msra.mxu0 0.0
    %3380 = vmatprep.subr.mxu0 0.0
    %3381 = vmatpush1.msra.mxu0 0.0
    %3382 = vmatprep.subr.mxu0 0.0
    %3383 = vmatpush1.msra.mxu0 0.0
    %3384 = vmatprep.subr.mxu0 0.0
    %3385 = vmatpush1.msra.mxu0 0.0
    %3386 = vmatprep.subr.mxu0 0.0
    %3387 = vmatpush1.msra.mxu0 0.0
    %3388 = vmatprep.subr.mxu0 0.0
    %3389 = vmatpush1.msra.mxu0 0.0
    %3390 = vmatprep.subr.mxu0 0.0
    %3391 = vmatpush1.msra.mxu0 0.0
    %3392 = vmatprep.subr.mxu0 0.0
    %3393 = vmatpush1.msra.mxu0 0.0
    %3394 = vmatprep.subr.mxu0 0.0
    %3395 = vmatpush1.msra.mxu0 0.0
    %3396 = vmatprep.subr.mxu0 0.0
    %3397 = vmatpush1.msra.mxu0 0.0
    %3398 = vmatprep.subr.mxu0 0.0
    %3399 = vmatpush1.msra.mxu0 0.0
    %3400 = vmatprep.subr.mxu0 0.0
    %3401 = vmatpush1.msra.mxu0 0.0
    %3402 = vmatprep.subr.mxu0 0.0
    %3403 = vmatpush1.msra.mxu0 0.0
    %3404 = vmatprep.mubr.f32.mxu0 0.0
    %3405 = vmatmul.mubr.f32.gmra.mrb[0].mxu0 %v3326
    %v3406 = vpop.f32.mrb[0].mxu0
    %v3407 = vadd.f32 0.0, %v3406
    %v3408 = vpop.f32.mrb[0].mxu0
    %3409 = vmatprep.mubr.f32.mxu0 0.0
    %3410 = vmatmul.mubr.f32.gmra.mrb[0].mxu0 %v3329
    %v3411 = vpop.f32.mrb[0].mxu0
    %v3412 = vadd.f32 0.0, %v3411
    %v3413 = vpop.f32.mrb[0].mxu0
    %3414 = vmatprep.mubr.f32.mxu0 0.0
    %3415 = vmatmul.mubr.f32.gmra.mrb[0].mxu0 %v3332
    %v3416 = vpop.f32.mrb[0].mxu0
    %v3417 = vadd.f32 0.0, %v3416
    %v3418 = vpop.f32.mrb[0].mxu0
    %3419 = vmatprep.mubr.f32.mxu0 0.0
    %3420 = vmatmul.mubr.f32.gmra.mrb[0].mxu0 %v3335
    %v3421 = vpop.f32.mrb[0].mxu0
    %v3422 = vadd.f32 0.0, %v3421
    %v3423 = vpop.f32.mrb[0].mxu0
    %3424 = vmatprep.mubr.f32.mxu0 0.0
    %3425 = vmatmul.mubr.f32.gmra.mrb[0].mxu0 %v3338
    %v3426 = vpop.f32.mrb[0].mxu0
    %v3427 = vadd.f32 0.0, %v3426
    %v3428 = vpop.f32.mrb[0].mxu0
    %3429 = vdwg.mxu0
    %v3430 = vadd.f32 %v3306, %v3407
    %v3431 = vadd.f32 %v3307, %v3412
    %v3432 = vadd.f32 %v3308, %v3417
    %v3433 = vadd.f32 %v3309, %v3422
    %v3434 = vadd.f32 %v3310, %v3427
    %v3435 = vld [vmem:[#allocation3 + $0x8] sm:$0xff]
    %v3436 = vld [vmem:[#allocation3 + $0x10] sm:$0xff]
    %v3437 = vld [vmem:[#allocation3 + $0x18] sm:$0xff]
    %v3438 = vld [vmem:[#allocation3 + $0x20] sm:$0xff]
    %v3439 = vld [vmem:[#allocation3 + $0x28] sm:$0x1]
    %s3440 = scalar_lea.vmem %s6, 256
    %v3441 = vld [vmem:[%s3440] sm:$0xff]
    %v3442 = vld [vmem:[%s3440 + $0x8] sm:$0xff]
    %v3443 = vld [vmem:[%s3440 + $0x10] sm:$0xff]
    %v3444 = vld [vmem:[%s3440 + $0x18] sm:$0xff]
    %v3445 = vld [vmem:[%s3440 + $0x20] sm:$0xff]
    %v3446 = vld [vmem:[%s3440 + $0x28] sm:$0xff]
    %v3447 = vld [vmem:[%s3440 + $0x30] sm:$0xff]
    %v3448 = vld [vmem:[%s3440 + $0x38] sm:$0xff]
    %v3450 = vsel %vm2941, %v3435, 0
    %v3453 = vsel %vm2941, %v3436, 0
    %v3456 = vsel %vm2941, %v3437, 0
    %v3459 = vsel %vm2941, %v3438, 0
    %v3462 = vsel %vm2941, %v3439, 0
    %3464 = vmatprep.subr.mxu0 0.0
    %3465 = vmatpush1.msra.mxu0 %v3441
    %3466 = vmatprep.subr.mxu0 0.0
    %3467 = vmatpush1.msra.mxu0 %v3442
    %3468 = vmatprep.subr.mxu0 0.0
    %3469 = vmatpush1.msra.mxu0 %v3443
    %3470 = vmatprep.subr.mxu0 0.0
    %3471 = vmatpush1.msra.mxu0 %v3444
    %3472 = vmatprep.subr.mxu0 0.0
    %3473 = vmatpush1.msra.mxu0 %v3445
    %3474 = vmatprep.subr.mxu0 0.0
    %3475 = vmatpush1.msra.mxu0 %v3446
    %3476 = vmatprep.subr.mxu0 0.0
    %3477 = vmatpush1.msra.mxu0 %v3447
    %3478 = vmatprep.subr.mxu0 0.0
    %3479 = vmatpush1.msra.mxu0 %v3448
    %3480 = vmatprep.subr.mxu0 0.0
    %3481 = vmatpush1.msra.mxu0 0.0
    %3482 = vmatprep.subr.mxu0 0.0
    %3483 = vmatpush1.msra.mxu0 0.0
    %3484 = vmatprep.subr.mxu0 0.0
    %3485 = vmatpush1.msra.mxu0 0.0
    %3486 = vmatprep.subr.mxu0 0.0
    %3487 = vmatpush1.msra.mxu0 0.0
    %3488 = vmatprep.subr.mxu0 0.0
    %3489 = vmatpush1.msra.mxu0 0.0
    %3490 = vmatprep.subr.mxu0 0.0
    %3491 = vmatpush1.msra.mxu0 0.0
    %3492 = vmatprep.subr.mxu0 0.0
    %3493 = vmatpush1.msra.mxu0 0.0
    %3494 = vmatprep.subr.mxu0 0.0
    %3495 = vmatpush1.msra.mxu0 0.0
    %3496 = vmatprep.subr.mxu0 0.0
    %3497 = vmatpush1.msra.mxu0 0.0
    %3498 = vmatprep.subr.mxu0 0.0
    %3499 = vmatpush1.msra.mxu0 0.0
    %3500 = vmatprep.subr.mxu0 0.0
    %3501 = vmatpush1.msra.mxu0 0.0
    %3502 = vmatprep.subr.mxu0 0.0
    %3503 = vmatpush1.msra.mxu0 0.0
    %3504 = vmatprep.subr.mxu0 0.0
    %3505 = vmatpush1.msra.mxu0 0.0
    %3506 = vmatprep.subr.mxu0 0.0
    %3507 = vmatpush1.msra.mxu0 0.0
    %3508 = vmatprep.subr.mxu0 0.0
    %3509 = vmatpush1.msra.mxu0 0.0
    %3510 = vmatprep.subr.mxu0 0.0
    %3511 = vmatpush1.msra.mxu0 0.0
    %3512 = vmatprep.subr.mxu0 0.0
    %3513 = vmatpush1.msra.mxu0 0.0
    %3514 = vmatprep.subr.mxu0 0.0
    %3515 = vmatpush1.msra.mxu0 0.0
    %3516 = vmatprep.subr.mxu0 0.0
    %3517 = vmatpush1.msra.mxu0 0.0
    %3518 = vmatprep.subr.mxu0 0.0
    %3519 = vmatpush1.msra.mxu0 0.0
    %3520 = vmatprep.subr.mxu0 0.0
    %3521 = vmatpush1.msra.mxu0 0.0
    %3522 = vmatprep.subr.mxu0 0.0
    %3523 = vmatpush1.msra.mxu0 0.0
    %3524 = vmatprep.subr.mxu0 0.0
    %3525 = vmatpush1.msra.mxu0 0.0
    %3526 = vmatprep.subr.mxu0 0.0
    %3527 = vmatpush1.msra.mxu0 0.0
    %3528 = vmatprep.mubr.f32.mxu0 0.0
    %3529 = vmatmul.mubr.f32.gmra.mrb[0].mxu0 %v3450
    %v3530 = vpop.f32.mrb[0].mxu0
    %v3531 = vadd.f32 0.0, %v3530
    %v3532 = vpop.f32.mrb[0].mxu0
    %3533 = vmatprep.mubr.f32.mxu0 0.0
    %3534 = vmatmul.mubr.f32.gmra.mrb[0].mxu0 %v3453
    %v3535 = vpop.f32.mrb[0].mxu0
    %v3536 = vadd.f32 0.0, %v3535
    %v3537 = vpop.f32.mrb[0].mxu0
    %3538 = vmatprep.mubr.f32.mxu0 0.0
    %3539 = vmatmul.mubr.f32.gmra.mrb[0].mxu0 %v3456
    %v3540 = vpop.f32.mrb[0].mxu0
    %v3541 = vadd.f32 0.0, %v3540
    %v3542 = vpop.f32.mrb[0].mxu0
    %3543 = vmatprep.mubr.f32.mxu0 0.0
    %3544 = vmatmul.mubr.f32.gmra.mrb[0].mxu0 %v3459
    %v3545 = vpop.f32.mrb[0].mxu0
    %v3546 = vadd.f32 0.0, %v3545
    %v3547 = vpop.f32.mrb[0].mxu0
    %3548 = vmatprep.mubr.f32.mxu0 0.0
    %3549 = vmatmul.mubr.f32.gmra.mrb[0].mxu0 %v3462
    %v3550 = vpop.f32.mrb[0].mxu0
    %v3551 = vadd.f32 0.0, %v3550
    %v3552 = vpop.f32.mrb[0].mxu0
    %3553 = vdwg.mxu0
    %v3554 = vadd.f32 %v3430, %v3531
    %v3555 = vadd.f32 %v3431, %v3536
    %v3556 = vadd.f32 %v3432, %v3541
    %v3557 = vadd.f32 %v3433, %v3546
    %v3558 = vadd.f32 %v3434, %v3551
    %v3559 = vld [vmem:[#allocation3 + $0x9] sm:$0xff]
    %v3560 = vld [vmem:[#allocation3 + $0x11] sm:$0xff]
    %v3561 = vld [vmem:[#allocation3 + $0x19] sm:$0xff]
    %v3562 = vld [vmem:[#allocation3 + $0x21] sm:$0xff]
    %v3563 = vld [vmem:[#allocation3 + $0x29] sm:$0x1]
    %s3564 = scalar_lea.vmem %s6, 320
    %v3565 = vld [vmem:[%s3564] sm:$0xff]
    %v3566 = vld [vmem:[%s3564 + $0x8] sm:$0xff]
    %v3567 = vld [vmem:[%s3564 + $0x10] sm:$0xff]
    %v3568 = vld [vmem:[%s3564 + $0x18] sm:$0xff]
    %v3569 = vld [vmem:[%s3564 + $0x20] sm:$0xff]
    %v3570 = vld [vmem:[%s3564 + $0x28] sm:$0xff]
    %v3571 = vld [vmem:[%s3564 + $0x30] sm:$0xff]
    %v3572 = vld [vmem:[%s3564 + $0x38] sm:$0xff]
    %v3574 = vsel %vm2941, %v3559, 0
    %v3577 = vsel %vm2941, %v3560, 0
    %v3580 = vsel %vm2941, %v3561, 0
    %v3583 = vsel %vm2941, %v3562, 0
    %v3586 = vsel %vm2941, %v3563, 0
    %3588 = vmatprep.subr.mxu0 0.0
    %3589 = vmatpush1.msra.mxu0 %v3565
    %3590 = vmatprep.subr.mxu0 0.0
    %3591 = vmatpush1.msra.mxu0 %v3566
    %3592 = vmatprep.subr.mxu0 0.0
    %3593 = vmatpush1.msra.mxu0 %v3567
    %3594 = vmatprep.subr.mxu0 0.0
    %3595 = vmatpush1.msra.mxu0 %v3568
    %3596 = vmatprep.subr.mxu0 0.0
    %3597 = vmatpush1.msra.mxu0 %v3569
    %3598 = vmatprep.subr.mxu0 0.0
    %3599 = vmatpush1.msra.mxu0 %v3570
    %3600 = vmatprep.subr.mxu0 0.0
    %3601 = vmatpush1.msra.mxu0 %v3571
    %3602 = vmatprep.subr.mxu0 0.0
    %3603 = vmatpush1.msra.mxu0 %v3572
    %3604 = vmatprep.subr.mxu0 0.0
    %3605 = vmatpush1.msra.mxu0 0.0
    %3606 = vmatprep.subr.mxu0 0.0
    %3607 = vmatpush1.msra.mxu0 0.0
    %3608 = vmatprep.subr.mxu0 0.0
    %3609 = vmatpush1.msra.mxu0 0.0
    %3610 = vmatprep.subr.mxu0 0.0
    %3611 = vmatpush1.msra.mxu0 0.0
    %3612 = vmatprep.subr.mxu0 0.0
    %3613 = vmatpush1.msra.mxu0 0.0
    %3614 = vmatprep.subr.mxu0 0.0
    %3615 = vmatpush1.msra.mxu0 0.0
    %3616 = vmatprep.subr.mxu0 0.0
    %3617 = vmatpush1.msra.mxu0 0.0
    %3618 = vmatprep.subr.mxu0 0.0
    %3619 = vmatpush1.msra.mxu0 0.0
    %3620 = vmatprep.subr.mxu0 0.0
    %3621 = vmatpush1.msra.mxu0 0.0
    %3622 = vmatprep.subr.mxu0 0.0
    %3623 = vmatpush1.msra.mxu0 0.0
    %3624 = vmatprep.subr.mxu0 0.0
    %3625 = vmatpush1.msra.mxu0 0.0
    %3626 = vmatprep.subr.mxu0 0.0
    %3627 = vmatpush1.msra.mxu0 0.0
    %3628 = vmatprep.subr.mxu0 0.0
    %3629 = vmatpush1.msra.mxu0 0.0
    %3630 = vmatprep.subr.mxu0 0.0
    %3631 = vmatpush1.msra.mxu0 0.0
    %3632 = vmatprep.subr.mxu0 0.0
    %3633 = vmatpush1.msra.mxu0 0.0
    %3634 = vmatprep.subr.mxu0 0.0
    %3635 = vmatpush1.msra.mxu0 0.0
    %3636 = vmatprep.subr.mxu0 0.0
    %3637 = vmatpush1.msra.mxu0 0.0
    %3638 = vmatprep.subr.mxu0 0.0
    %3639 = vmatpush1.msra.mxu0 0.0
    %3640 = vmatprep.subr.mxu0 0.0
    %3641 = vmatpush1.msra.mxu0 0.0
    %3642 = vmatprep.subr.mxu0 0.0
    %3643 = vmatpush1.msra.mxu0 0.0
    %3644 = vmatprep.subr.mxu0 0.0
    %3645 = vmatpush1.msra.mxu0 0.0
    %3646 = vmatprep.subr.mxu0 0.0
    %3647 = vmatpush1.msra.mxu0 0.0
    %3648 = vmatprep.subr.mxu0 0.0
    %3649 = vmatpush1.msra.mxu0 0.0
    %3650 = vmatprep.subr.mxu0 0.0
    %3651 = vmatpush1.msra.mxu0 0.0
    %3652 = vmatprep.mubr.f32.mxu0 0.0
    %3653 = vmatmul.mubr.f32.gmra.mrb[0].mxu0 %v3574
    %v3654 = vpop.f32.mrb[0].mxu0
    %v3655 = vadd.f32 0.0, %v3654
    %v3656 = vpop.f32.mrb[0].mxu0
    %3657 = vmatprep.mubr.f32.mxu0 0.0
    %3658 = vmatmul.mubr.f32.gmra.mrb[0].mxu0 %v3577
    %v3659 = vpop.f32.mrb[0].mxu0
    %v3660 = vadd.f32 0.0, %v3659
    %v3661 = vpop.f32.mrb[0].mxu0
    %3662 = vmatprep.mubr.f32.mxu0 0.0
    %3663 = vmatmul.mubr.f32.gmra.mrb[0].mxu0 %v3580
    %v3664 = vpop.f32.mrb[0].mxu0
    %v3665 = vadd.f32 0.0, %v3664
    %v3666 = vpop.f32.mrb[0].mxu0
    %3667 = vmatprep.mubr.f32.mxu0 0.0
    %3668 = vmatmul.mubr.f32.gmra.mrb[0].mxu0 %v3583
    %v3669 = vpop.f32.mrb[0].mxu0
    %v3670 = vadd.f32 0.0, %v3669
    %v3671 = vpop.f32.mrb[0].mxu0
    %3672 = vmatprep.mubr.f32.mxu0 0.0
    %3673 = vmatmul.mubr.f32.gmra.mrb[0].mxu0 %v3586
    %v3674 = vpop.f32.mrb[0].mxu0
    %v3675 = vadd.f32 0.0, %v3674
    %v3676 = vpop.f32.mrb[0].mxu0
    %3677 = vdwg.mxu0
    %v3678 = vadd.f32 %v3554, %v3655
    %v3679 = vadd.f32 %v3555, %v3660
    %v3680 = vadd.f32 %v3556, %v3665
    %v3681 = vadd.f32 %v3557, %v3670
    %v3682 = vadd.f32 %v3558, %v3675
    %v3683 = vld [vmem:[#allocation3 + $0xe] sm:$0xff]
    %v3684 = vld [vmem:[#allocation3 + $0x16] sm:$0xff]
    %v3685 = vld [vmem:[#allocation3 + $0x1e] sm:$0xff]
    %v3686 = vld [vmem:[#allocation3 + $0x26] sm:$0xff]
    %v3687 = vld [vmem:[#allocation3 + $0x2e] sm:$0x1]
    %s3688 = scalar_lea.vmem %s6, 384
    %v3689 = vld [vmem:[%s3688] sm:$0xff]
    %v3690 = vld [vmem:[%s3688 + $0x8] sm:$0xff]
    %v3691 = vld [vmem:[%s3688 + $0x10] sm:$0xff]
    %v3692 = vld [vmem:[%s3688 + $0x18] sm:$0xff]
    %v3693 = vld [vmem:[%s3688 + $0x20] sm:$0xff]
    %v3694 = vld [vmem:[%s3688 + $0x28] sm:$0xff]
    %v3695 = vld [vmem:[%s3688 + $0x30] sm:$0xff]
    %v3696 = vld [vmem:[%s3688 + $0x38] sm:$0xff]
    %v3698 = vsel %vm2941, %v3683, 0
    %v3701 = vsel %vm2941, %v3684, 0
    %v3704 = vsel %vm2941, %v3685, 0
    %v3707 = vsel %vm2941, %v3686, 0
    %v3710 = vsel %vm2941, %v3687, 0
    %3712 = vmatprep.subr.mxu0 0.0
    %3713 = vmatpush1.msra.mxu0 %v3689
    %3714 = vmatprep.subr.mxu0 0.0
    %3715 = vmatpush1.msra.mxu0 %v3690
    %3716 = vmatprep.subr.mxu0 0.0
    %3717 = vmatpush1.msra.mxu0 %v3691
    %3718 = vmatprep.subr.mxu0 0.0
    %3719 = vmatpush1.msra.mxu0 %v3692
    %3720 = vmatprep.subr.mxu0 0.0
    %3721 = vmatpush1.msra.mxu0 %v3693
    %3722 = vmatprep.subr.mxu0 0.0
    %3723 = vmatpush1.msra.mxu0 %v3694
    %3724 = vmatprep.subr.mxu0 0.0
    %3725 = vmatpush1.msra.mxu0 %v3695
    %3726 = vmatprep.subr.mxu0 0.0
    %3727 = vmatpush1.msra.mxu0 %v3696
    %3728 = vmatprep.subr.mxu0 0.0
    %3729 = vmatpush1.msra.mxu0 0.0
    %3730 = vmatprep.subr.mxu0 0.0
    %3731 = vmatpush1.msra.mxu0 0.0
    %3732 = vmatprep.subr.mxu0 0.0
    %3733 = vmatpush1.msra.mxu0 0.0
    %3734 = vmatprep.subr.mxu0 0.0
    %3735 = vmatpush1.msra.mxu0 0.0
    %3736 = vmatprep.subr.mxu0 0.0
    %3737 = vmatpush1.msra.mxu0 0.0
    %3738 = vmatprep.subr.mxu0 0.0
    %3739 = vmatpush1.msra.mxu0 0.0
    %3740 = vmatprep.subr.mxu0 0.0
    %3741 = vmatpush1.msra.mxu0 0.0
    %3742 = vmatprep.subr.mxu0 0.0
    %3743 = vmatpush1.msra.mxu0 0.0
    %3744 = vmatprep.subr.mxu0 0.0
    %3745 = vmatpush1.msra.mxu0 0.0
    %3746 = vmatprep.subr.mxu0 0.0
    %3747 = vmatpush1.msra.mxu0 0.0
    %3748 = vmatprep.subr.mxu0 0.0
    %3749 = vmatpush1.msra.mxu0 0.0
    %3750 = vmatprep.subr.mxu0 0.0
    %3751 = vmatpush1.msra.mxu0 0.0
    %3752 = vmatprep.subr.mxu0 0.0
    %3753 = vmatpush1.msra.mxu0 0.0
    %3754 = vmatprep.subr.mxu0 0.0
    %3755 = vmatpush1.msra.mxu0 0.0
    %3756 = vmatprep.subr.mxu0 0.0
    %3757 = vmatpush1.msra.mxu0 0.0
    %3758 = vmatprep.subr.mxu0 0.0
    %3759 = vmatpush1.msra.mxu0 0.0
    %3760 = vmatprep.subr.mxu0 0.0
    %3761 = vmatpush1.msra.mxu0 0.0
    %3762 = vmatprep.subr.mxu0 0.0
    %3763 = vmatpush1.msra.mxu0 0.0
    %3764 = vmatprep.subr.mxu0 0.0
    %3765 = vmatpush1.msra.mxu0 0.0
    %3766 = vmatprep.subr.mxu0 0.0
    %3767 = vmatpush1.msra.mxu0 0.0
    %3768 = vmatprep.subr.mxu0 0.0
    %3769 = vmatpush1.msra.mxu0 0.0
    %3770 = vmatprep.subr.mxu0 0.0
    %3771 = vmatpush1.msra.mxu0 0.0
    %3772 = vmatprep.subr.mxu0 0.0
    %3773 = vmatpush1.msra.mxu0 0.0
    %3774 = vmatprep.subr.mxu0 0.0
    %3775 = vmatpush1.msra.mxu0 0.0
    %3776 = vmatprep.mubr.f32.mxu0 0.0
    %3777 = vmatmul.mubr.f32.gmra.mrb[0].mxu0 %v3698
    %v3778 = vpop.f32.mrb[0].mxu0
    %v3779 = vadd.f32 0.0, %v3778
    %v3780 = vpop.f32.mrb[0].mxu0
    %3781 = vmatprep.mubr.f32.mxu0 0.0
    %3782 = vmatmul.mubr.f32.gmra.mrb[0].mxu0 %v3701
    %v3783 = vpop.f32.mrb[0].mxu0
    %v3784 = vadd.f32 0.0, %v3783
    %v3785 = vpop.f32.mrb[0].mxu0
    %3786 = vmatprep.mubr.f32.mxu0 0.0
    %3787 = vmatmul.mubr.f32.gmra.mrb[0].mxu0 %v3704
    %v3788 = vpop.f32.mrb[0].mxu0
    %v3789 = vadd.f32 0.0, %v3788
    %v3790 = vpop.f32.mrb[0].mxu0
    %3791 = vmatprep.mubr.f32.mxu0 0.0
    %3792 = vmatmul.mubr.f32.gmra.mrb[0].mxu0 %v3707
    %v3793 = vpop.f32.mrb[0].mxu0
    %v3794 = vadd.f32 0.0, %v3793
    %v3795 = vpop.f32.mrb[0].mxu0
    %3796 = vmatprep.mubr.f32.mxu0 0.0
    %3797 = vmatmul.mubr.f32.gmra.mrb[0].mxu0 %v3710
    %v3798 = vpop.f32.mrb[0].mxu0
    %v3799 = vadd.f32 0.0, %v3798
    %v3800 = vpop.f32.mrb[0].mxu0
    %3801 = vdwg.mxu0
    %v3802 = vadd.f32 %v3678, %v3779
    %v3803 = vadd.f32 %v3679, %v3784
    %v3804 = vadd.f32 %v3680, %v3789
    %v3805 = vadd.f32 %v3681, %v3794
    %v3806 = vadd.f32 %v3682, %v3799
    %v3807 = vld [vmem:[#allocation3 + $0xf] sm:$0xff]
    %v3808 = vld [vmem:[#allocation3 + $0x17] sm:$0xff]
    %v3809 = vld [vmem:[#allocation3 + $0x1f] sm:$0xff]
    %v3810 = vld [vmem:[#allocation3 + $0x27] sm:$0xff]
    %v3811 = vld [vmem:[#allocation3 + $0x2f] sm:$0x1]
    %s3812 = scalar_lea.vmem %s6, 448
    %v3813 = vld [vmem:[%s3812] sm:$0xff]
    %v3814 = vld [vmem:[%s3812 + $0x8] sm:$0xff]
    %v3815 = vld [vmem:[%s3812 + $0x10] sm:$0xff]
    %v3816 = vld [vmem:[%s3812 + $0x18] sm:$0xff]
    %v3817 = vld [vmem:[%s3812 + $0x20] sm:$0xff]
    %v3818 = vld [vmem:[%s3812 + $0x28] sm:$0xff]
    %v3819 = vld [vmem:[%s3812 + $0x30] sm:$0xff]
    %v3820 = vld [vmem:[%s3812 + $0x38] sm:$0xff]
    %v3822 = vsel %vm2941, %v3807, 0
    %v3825 = vsel %vm2941, %v3808, 0
    %v3828 = vsel %vm2941, %v3809, 0
    %v3831 = vsel %vm2941, %v3810, 0
    %v3834 = vsel %vm2941, %v3811, 0
    %3836 = vmatprep.subr.mxu0 0.0
    %3837 = vmatpush1.msra.mxu0 %v3813
    %3838 = vmatprep.subr.mxu0 0.0
    %3839 = vmatpush1.msra.mxu0 %v3814
    %3840 = vmatprep.subr.mxu0 0.0
    %3841 = vmatpush1.msra.mxu0 %v3815
    %3842 = vmatprep.subr.mxu0 0.0
    %3843 = vmatpush1.msra.mxu0 %v3816
    %3844 = vmatprep.subr.mxu0 0.0
    %3845 = vmatpush1.msra.mxu0 %v3817
    %3846 = vmatprep.subr.mxu0 0.0
    %3847 = vmatpush1.msra.mxu0 %v3818
    %3848 = vmatprep.subr.mxu0 0.0
    %3849 = vmatpush1.msra.mxu0 %v3819
    %3850 = vmatprep.subr.mxu0 0.0
    %3851 = vmatpush1.msra.mxu0 %v3820
    %3852 = vmatprep.subr.mxu0 0.0
    %3853 = vmatpush1.msra.mxu0 0.0
    %3854 = vmatprep.subr.mxu0 0.0
    %3855 = vmatpush1.msra.mxu0 0.0
    %3856 = vmatprep.subr.mxu0 0.0
    %3857 = vmatpush1.msra.mxu0 0.0
    %3858 = vmatprep.subr.mxu0 0.0
    %3859 = vmatpush1.msra.mxu0 0.0
    %3860 = vmatprep.subr.mxu0 0.0
    %3861 = vmatpush1.msra.mxu0 0.0
    %3862 = vmatprep.subr.mxu0 0.0
    %3863 = vmatpush1.msra.mxu0 0.0
    %3864 = vmatprep.subr.mxu0 0.0
    %3865 = vmatpush1.msra.mxu0 0.0
    %3866 = vmatprep.subr.mxu0 0.0
    %3867 = vmatpush1.msra.mxu0 0.0
    %3868 = vmatprep.subr.mxu0 0.0
    %3869 = vmatpush1.msra.mxu0 0.0
    %3870 = vmatprep.subr.mxu0 0.0
    %3871 = vmatpush1.msra.mxu0 0.0
    %3872 = vmatprep.subr.mxu0 0.0
    %3873 = vmatpush1.msra.mxu0 0.0
    %3874 = vmatprep.subr.mxu0 0.0
    %3875 = vmatpush1.msra.mxu0 0.0
    %3876 = vmatprep.subr.mxu0 0.0
    %3877 = vmatpush1.msra.mxu0 0.0
    %3878 = vmatprep.subr.mxu0 0.0
    %3879 = vmatpush1.msra.mxu0 0.0
    %3880 = vmatprep.subr.mxu0 0.0
    %3881 = vmatpush1.msra.mxu0 0.0
    %3882 = vmatprep.subr.mxu0 0.0
    %3883 = vmatpush1.msra.mxu0 0.0
    %3884 = vmatprep.subr.mxu0 0.0
    %3885 = vmatpush1.msra.mxu0 0.0
    %3886 = vmatprep.subr.mxu0 0.0
    %3887 = vmatpush1.msra.mxu0 0.0
    %3888 = vmatprep.subr.mxu0 0.0
    %3889 = vmatpush1.msra.mxu0 0.0
    %3890 = vmatprep.subr.mxu0 0.0
    %3891 = vmatpush1.msra.mxu0 0.0
    %3892 = vmatprep.subr.mxu0 0.0
    %3893 = vmatpush1.msra.mxu0 0.0
    %3894 = vmatprep.subr.mxu0 0.0
    %3895 = vmatpush1.msra.mxu0 0.0
    %3896 = vmatprep.subr.mxu0 0.0
    %3897 = vmatpush1.msra.mxu0 0.0
    %3898 = vmatprep.subr.mxu0 0.0
    %3899 = vmatpush1.msra.mxu0 0.0
    %3900 = vmatprep.mubr.f32.mxu0 0.0
    %3901 = vmatmul.mubr.f32.gmra.mrb[0].mxu0 %v3822
    %v3902 = vpop.f32.mrb[0].mxu0
    %v3903 = vadd.f32 0.0, %v3902
    %v3904 = vpop.f32.mrb[0].mxu0
    %3905 = vmatprep.mubr.f32.mxu0 0.0
    %3906 = vmatmul.mubr.f32.gmra.mrb[0].mxu0 %v3825
    %v3907 = vpop.f32.mrb[0].mxu0
    %v3908 = vadd.f32 0.0, %v3907
    %v3909 = vpop.f32.mrb[0].mxu0
    %3910 = vmatprep.mubr.f32.mxu0 0.0
    %3911 = vmatmul.mubr.f32.gmra.mrb[0].mxu0 %v3828
    %v3912 = vpop.f32.mrb[0].mxu0
    %v3913 = vadd.f32 0.0, %v3912
    %v3914 = vpop.f32.mrb[0].mxu0
    %3915 = vmatprep.mubr.f32.mxu0 0.0
    %3916 = vmatmul.mubr.f32.gmra.mrb[0].mxu0 %v3831
    %v3917 = vpop.f32.mrb[0].mxu0
    %v3918 = vadd.f32 0.0, %v3917
    %v3919 = vpop.f32.mrb[0].mxu0
    %3920 = vmatprep.mubr.f32.mxu0 0.0
    %3921 = vmatmul.mubr.f32.gmra.mrb[0].mxu0 %v3834
    %v3922 = vpop.f32.mrb[0].mxu0
    %v3923 = vadd.f32 0.0, %v3922
    %v3924 = vpop.f32.mrb[0].mxu0
    %3925 = vdwg.mxu0
    %v3926 = vadd.f32 %v3802, %v3903
    %v3927 = vadd.f32 %v3803, %v3908
    %v3928 = vadd.f32 %v3804, %v3913
    %v3929 = vadd.f32 %v3805, %v3918
    %v3930 = vadd.f32 %v3806, %v3923
    %v3931 = vld [vmem:[#allocation3 + $0x10] sm:$0xff]
    %v3932 = vld [vmem:[#allocation3 + $0x18] sm:$0xff]
    %v3933 = vld [vmem:[#allocation3 + $0x20] sm:$0xff]
    %v3934 = vld [vmem:[#allocation3 + $0x28] sm:$0xff]
    %v3935 = vld [vmem:[#allocation3 + $0x30] sm:$0x1]
    %s3936 = scalar_lea.vmem %s6, 512
    %v3937 = vld [vmem:[%s3936] sm:$0xff]
    %v3938 = vld [vmem:[%s3936 + $0x8] sm:$0xff]
    %v3939 = vld [vmem:[%s3936 + $0x10] sm:$0xff]
    %v3940 = vld [vmem:[%s3936 + $0x18] sm:$0xff]
    %v3941 = vld [vmem:[%s3936 + $0x20] sm:$0xff]
    %v3942 = vld [vmem:[%s3936 + $0x28] sm:$0xff]
    %v3943 = vld [vmem:[%s3936 + $0x30] sm:$0xff]
    %v3944 = vld [vmem:[%s3936 + $0x38] sm:$0xff]
    %v3946 = vsel %vm2941, %v3931, 0
    %v3949 = vsel %vm2941, %v3932, 0
    %v3952 = vsel %vm2941, %v3933, 0
    %v3955 = vsel %vm2941, %v3934, 0
    %v3958 = vsel %vm2941, %v3935, 0
    %3960 = vmatprep.subr.mxu0 0.0
    %3961 = vmatpush1.msra.mxu0 %v3937
    %3962 = vmatprep.subr.mxu0 0.0
    %3963 = vmatpush1.msra.mxu0 %v3938
    %3964 = vmatprep.subr.mxu0 0.0
    %3965 = vmatpush1.msra.mxu0 %v3939
    %3966 = vmatprep.subr.mxu0 0.0
    %3967 = vmatpush1.msra.mxu0 %v3940
    %3968 = vmatprep.subr.mxu0 0.0
    %3969 = vmatpush1.msra.mxu0 %v3941
    %3970 = vmatprep.subr.mxu0 0.0
    %3971 = vmatpush1.msra.mxu0 %v3942
    %3972 = vmatprep.subr.mxu0 0.0
    %3973 = vmatpush1.msra.mxu0 %v3943
    %3974 = vmatprep.subr.mxu0 0.0
    %3975 = vmatpush1.msra.mxu0 %v3944
    %3976 = vmatprep.subr.mxu0 0.0
    %3977 = vmatpush1.msra.mxu0 0.0
    %3978 = vmatprep.subr.mxu0 0.0
    %3979 = vmatpush1.msra.mxu0 0.0
    %3980 = vmatprep.subr.mxu0 0.0
    %3981 = vmatpush1.msra.mxu0 0.0
    %3982 = vmatprep.subr.mxu0 0.0
    %3983 = vmatpush1.msra.mxu0 0.0
    %3984 = vmatprep.subr.mxu0 0.0
    %3985 = vmatpush1.msra.mxu0 0.0
    %3986 = vmatprep.subr.mxu0 0.0
    %3987 = vmatpush1.msra.mxu0 0.0
    %3988 = vmatprep.subr.mxu0 0.0
    %3989 = vmatpush1.msra.mxu0 0.0
    %3990 = vmatprep.subr.mxu0 0.0
    %3991 = vmatpush1.msra.mxu0 0.0
    %3992 = vmatprep.subr.mxu0 0.0
    %3993 = vmatpush1.msra.mxu0 0.0
    %3994 = vmatprep.subr.mxu0 0.0
    %3995 = vmatpush1.msra.mxu0 0.0
    %3996 = vmatprep.subr.mxu0 0.0
    %3997 = vmatpush1.msra.mxu0 0.0
    %3998 = vmatprep.subr.mxu0 0.0
    %3999 = vmatpush1.msra.mxu0 0.0
    %4000 = vmatprep.subr.mxu0 0.0
    %4001 = vmatpush1.msra.mxu0 0.0
    %4002 = vmatprep.subr.mxu0 0.0
    %4003 = vmatpush1.msra.mxu0 0.0
    %4004 = vmatprep.subr.mxu0 0.0
    %4005 = vmatpush1.msra.mxu0 0.0
    %4006 = vmatprep.subr.mxu0 0.0
    %4007 = vmatpush1.msra.mxu0 0.0
    %4008 = vmatprep.subr.mxu0 0.0
    %4009 = vmatpush1.msra.mxu0 0.0
    %4010 = vmatprep.subr.mxu0 0.0
    %4011 = vmatpush1.msra.mxu0 0.0
    %4012 = vmatprep.subr.mxu0 0.0
    %4013 = vmatpush1.msra.mxu0 0.0
    %4014 = vmatprep.subr.mxu0 0.0
    %4015 = vmatpush1.msra.mxu0 0.0
    %4016 = vmatprep.subr.mxu0 0.0
    %4017 = vmatpush1.msra.mxu0 0.0
    %4018 = vmatprep.subr.mxu0 0.0
    %4019 = vmatpush1.msra.mxu0 0.0
    %4020 = vmatprep.subr.mxu0 0.0
    %4021 = vmatpush1.msra.mxu0 0.0
    %4022 = vmatprep.subr.mxu0 0.0
    %4023 = vmatpush1.msra.mxu0 0.0
    %4024 = vmatprep.mubr.f32.mxu0 0.0
    %4025 = vmatmul.mubr.f32.gmra.mrb[0].mxu0 %v3946
    %v4026 = vpop.f32.mrb[0].mxu0
    %v4027 = vadd.f32 0.0, %v4026
    %v4028 = vpop.f32.mrb[0].mxu0
    %4029 = vmatprep.mubr.f32.mxu0 0.0
    %4030 = vmatmul.mubr.f32.gmra.mrb[0].mxu0 %v3949
    %v4031 = vpop.f32.mrb[0].mxu0
    %v4032 = vadd.f32 0.0, %v4031
    %v4033 = vpop.f32.mrb[0].mxu0
    %4034 = vmatprep.mubr.f32.mxu0 0.0
    %4035 = vmatmul.mubr.f32.gmra.mrb[0].mxu0 %v3952
    %v4036 = vpop.f32.mrb[0].mxu0
    %v4037 = vadd.f32 0.0, %v4036
    %v4038 = vpop.f32.mrb[0].mxu0
    %4039 = vmatprep.mubr.f32.mxu0 0.0
    %4040 = vmatmul.mubr.f32.gmra.mrb[0].mxu0 %v3955
    %v4041 = vpop.f32.mrb[0].mxu0
    %v4042 = vadd.f32 0.0, %v4041
    %v4043 = vpop.f32.mrb[0].mxu0
    %4044 = vmatprep.mubr.f32.mxu0 0.0
    %4045 = vmatmul.mubr.f32.gmra.mrb[0].mxu0 %v3958
    %v4046 = vpop.f32.mrb[0].mxu0
    %v4047 = vadd.f32 0.0, %v4046
    %v4048 = vpop.f32.mrb[0].mxu0
    %4049 = vdwg.mxu0
    %v4050 = vadd.f32 %v3926, %v4027
    %v4051 = vadd.f32 %v3927, %v4032
    %v4052 = vadd.f32 %v3928, %v4037
    %v4053 = vadd.f32 %v3929, %v4042
    %v4054 = vadd.f32 %v3930, %v4047
    %v4055 = vld [vmem:[%s7] sm:$0x1]
    %v4057 = vlaneseq
    %v4058 = vshrl.u32 %v4057, 7
    %v4059 = vsub.s32 0, %v4058
    %v4060 = vrot.slane %v4055, %v4059
    %v4062 = vadd.f32 %v4050, %v4060
    %v4063 = vadd.f32 %v4051, %v4060
    %v4064 = vadd.f32 %v4052, %v4060
    %v4065 = vadd.f32 %v4053, %v4060
    %v4066 = vadd.f32 %v4054, %v4060
    %v4067 = vld [vmem:[%s12] sm:$0xff]
    %v4068 = vld [vmem:[%s12 + $0x8] sm:$0xff]
    %v4069 = vld [vmem:[%s12 + $0x10] sm:$0xff]
    %v4070 = vld [vmem:[%s12 + $0x18] sm:$0xff]
    %v4071 = vld [vmem:[%s12 + $0x20] sm:$0xf]
    %v4076 = vrot.slane %v4062, 1
    %v4077 = vrot.slane %v4063, 1
    %v4078 = vsel %vm2593, %v4076, %v4077
    %v4079 = vrot.slane %v4064, 1
    %v4080 = vsel %vm2593, %v4077, %v4079
    %v4081 = vrot.slane %v4065, 1
    %v4082 = vsel %vm2593, %v4079, %v4081
    %v4087 = vmax.f32 %v4062, %v4078
    %v4088 = vmax.f32 %v4063, %v4080
    %v4089 = vmax.f32 %v4064, %v4082
    %v4090 = vmax.f32 %v4065, %v4081
    %v4092 = vrot.slane %v4066, 1
    %v4093 = vsel %vm2593, %v4081, %v4092
    %v4096 = vmax.f32 %v4062, %v4077
    %v4097 = vmax.f32 %v4065, %v4093
    %v4102 = vrot.slane %v4096, 7
    %v4103 = vrot.slane %v4088, 7
    %v4104 = vsel %vm138, %v4102, %v4103
    %v4105 = vrot.slane %v4089, 7
    %v4106 = vsel %vm138, %v4103, %v4105
    %v4107 = vrot.slane %v4097, 7
    %v4108 = vsel %vm138, %v4105, %v4107
    %v4113 = vmax.f32 %v4087, %v4104
    %v4114 = vmax.f32 %v4088, %v4106
    %v4115 = vmax.f32 %v4089, %v4108
    %v4116 = vmax.f32 %v4090, %v4107
    %v4117 = vxor.u32 %v4113, 2147483648
    %v4118 = vxor.u32 %v4114, 2147483648
    %v4119 = vxor.u32 %v4115, 2147483648
    %v4120 = vxor.u32 %v4116, 2147483648
    %v4121 = vmul.f32 %v4117, 1.442695
    %v4122 = vpow.pop %v4121
    %v4123 = vmul.f32 %v4118, 1.442695
    %v4124 = vpow.pop %v4123
    %v4125 = vmul.f32 %v4119, 1.442695
    %v4126 = vpow.pop %v4125
    %v4127 = vmul.f32 %v4120, 1.442695
    %v4128 = vpow.pop %v4127
    %v4129 = vadd.f32 %v4122, 1.0
    %v4130 = vadd.f32 %v4124, 1.0
    %v4131 = vadd.f32 %v4126, 1.0
    %v4132 = vadd.f32 %v4128, 1.0
    %v4133 = vrcp.pop %v4129
    %v4134 = vmul.f32 1.0, %v4133
    %v4135 = vrcp.pop %v4130
    %v4136 = vmul.f32 1.0, %v4135
    %v4137 = vrcp.pop %v4131
    %v4138 = vmul.f32 1.0, %v4137
    %v4139 = vrcp.pop %v4132
    %v4140 = vmul.f32 1.0, %v4139
    %vm4141 = vcmask 203776
    %v4143 = vsel %vm4141, %v4067, 0
    %v4146 = vsel %vm4141, %v4068, 0
    %v4149 = vsel %vm4141, %v4069, 0
    %v4152 = vsel %vm4141, %v4070, 0
    %v4155 = vsel %vm4141, %v4071, 0
    %v4158 = vsel %vm138, %v4140, 0
    %4160 = vmatprep.subr.mxu0 0.0
    %4161 = vmatpush1.msra.mxu0 %v4134
    %4162 = vmatprep.subr.mxu0 0.0
    %4163 = vmatpush1.msra.mxu0 %v4136
    %4164 = vmatprep.subr.mxu0 0.0
    %4165 = vmatpush1.msra.mxu0 %v4138
    %4166 = vmatprep.subr.mxu0 0.0
    %4167 = vmatpush1.msra.mxu0 %v4158
    %4168 = vmatprep.subr.mxu0 0.0
    %4169 = vmatpush1.msra.mxu0 0.0
    %4170 = vmatprep.subr.mxu0 0.0
    %4171 = vmatpush1.msra.mxu0 0.0
    %4172 = vmatprep.subr.mxu0 0.0
    %4173 = vmatpush1.msra.mxu0 0.0
    %4174 = vmatprep.subr.mxu0 0.0
    %4175 = vmatpush1.msra.mxu0 0.0
    %4176 = vmatprep.subr.mxu0 0.0
    %4177 = vmatpush1.msra.mxu0 0.0
    %4178 = vmatprep.subr.mxu0 0.0
    %4179 = vmatpush1.msra.mxu0 0.0
    %4180 = vmatprep.subr.mxu0 0.0
    %4181 = vmatpush1.msra.mxu0 0.0
    %4182 = vmatprep.subr.mxu0 0.0
    %4183 = vmatpush1.msra.mxu0 0.0
    %4184 = vmatprep.subr.mxu0 0.0
    %4185 = vmatpush1.msra.mxu0 0.0
    %4186 = vmatprep.subr.mxu0 0.0
    %4187 = vmatpush1.msra.mxu0 0.0
    %4188 = vmatprep.subr.mxu0 0.0
    %4189 = vmatpush1.msra.mxu0 0.0
    %4190 = vmatprep.subr.mxu0 0.0
    %4191 = vmatpush1.msra.mxu0 0.0
    %4192 = vmatprep.subr.mxu0 0.0
    %4193 = vmatpush1.msra.mxu0 0.0
    %4194 = vmatprep.subr.mxu0 0.0
    %4195 = vmatpush1.msra.mxu0 0.0
    %4196 = vmatprep.subr.mxu0 0.0
    %4197 = vmatpush1.msra.mxu0 0.0
    %4198 = vmatprep.subr.mxu0 0.0
    %4199 = vmatpush1.msra.mxu0 0.0
    %4200 = vmatprep.subr.mxu0 0.0
    %4201 = vmatpush1.msra.mxu0 0.0
    %4202 = vmatprep.subr.mxu0 0.0
    %4203 = vmatpush1.msra.mxu0 0.0
    %4204 = vmatprep.subr.mxu0 0.0
    %4205 = vmatpush1.msra.mxu0 0.0
    %4206 = vmatprep.subr.mxu0 0.0
    %4207 = vmatpush1.msra.mxu0 0.0
    %4208 = vmatprep.subr.mxu0 0.0
    %4209 = vmatpush1.msra.mxu0 0.0
    %4210 = vmatprep.subr.mxu0 0.0
    %4211 = vmatpush1.msra.mxu0 0.0
    %4212 = vmatprep.subr.mxu0 0.0
    %4213 = vmatpush1.msra.mxu0 0.0
    %4214 = vmatprep.subr.mxu0 0.0
    %4215 = vmatpush1.msra.mxu0 0.0
    %4216 = vmatprep.subr.mxu0 0.0
    %4217 = vmatpush1.msra.mxu0 0.0
    %4218 = vmatprep.subr.mxu0 0.0
    %4219 = vmatpush1.msra.mxu0 0.0
    %4220 = vmatprep.subr.mxu0 0.0
    %4221 = vmatpush1.msra.mxu0 0.0
    %4222 = vmatprep.subr.mxu0 0.0
    %4223 = vmatpush1.msra.mxu0 0.0
    %4224 = vmatprep.mubr.f32.mxu0 0.0
    %4225 = vmatmul.mubr.f32.gmra.mrb[0].mxu0 %v4143
    %v4226 = vpop.f32.mrb[0].mxu0
    %v4227 = vadd.f32 0.0, %v4226
    %v4228 = vpop.f32.mrb[0].mxu0
    %4229 = vmatprep.mubr.f32.mxu0 0.0
    %4230 = vmatmul.mubr.f32.gmra.mrb[0].mxu0 %v4146
    %v4231 = vpop.f32.mrb[0].mxu0
    %v4232 = vadd.f32 0.0, %v4231
    %v4233 = vpop.f32.mrb[0].mxu0
    %4234 = vmatprep.mubr.f32.mxu0 0.0
    %4235 = vmatmul.mubr.f32.gmra.mrb[0].mxu0 %v4149
    %v4236 = vpop.f32.mrb[0].mxu0
    %v4237 = vadd.f32 0.0, %v4236
    %v4238 = vpop.f32.mrb[0].mxu0
    %4239 = vmatprep.mubr.f32.mxu0 0.0
    %4240 = vmatmul.mubr.f32.gmra.mrb[0].mxu0 %v4152
    %v4241 = vpop.f32.mrb[0].mxu0
    %v4242 = vadd.f32 0.0, %v4241
    %v4243 = vpop.f32.mrb[0].mxu0
    %4244 = vmatprep.mubr.f32.mxu0 0.0
    %4245 = vmatmul.mubr.f32.gmra.mrb[0].mxu0 %v4155
    %v4246 = vpop.f32.mrb[0].mxu0
    %v4247 = vadd.f32 0.0, %v4246
    %v4248 = vpop.f32.mrb[0].mxu0
    %4249 = vdwg.mxu0
    %4250 = vst [vmem:[#allocation4] sm:$0xff] %v4227
    %4251 = vst [vmem:[#allocation4 + $0x8] sm:$0xff] %v4232
    %4252 = vst [vmem:[#allocation4 + $0x10] sm:$0xff] %v4237
    %4253 = vst [vmem:[#allocation4 + $0x18] sm:$0xff] %v4242
    %4254 = vst [vmem:[#allocation4 + $0x20] sm:$0xf] %v4247
    %v4255 = vld [vmem:[#allocation4] sm:$0xff]
    %v4256 = vld [vmem:[#allocation4 + $0x8] sm:$0xff]
    %v4257 = vld [vmem:[#allocation4 + $0x10] sm:$0x3f]
    %v4258 = vld [vmem:[%s8] sm:$0xff]
    %v4259 = vld [vmem:[%s8 + $0x8] sm:$0xff]
    %v4260 = vld [vmem:[%s8 + $0x10] sm:$0xff]
    %v4261 = vld [vmem:[%s8 + $0x18] sm:$0xff]
    %v4262 = vld [vmem:[%s8 + $0x20] sm:$0xff]
    %v4263 = vld [vmem:[%s8 + $0x28] sm:$0xff]
    %v4264 = vld [vmem:[%s8 + $0x30] sm:$0xff]
    %v4265 = vld [vmem:[%s8 + $0x38] sm:$0xff]
    %v4266 = vld [vmem:[%s8 + $0x40] sm:$0xff]
    %v4267 = vld [vmem:[%s8 + $0x48] sm:$0xff]
    %v4268 = vld [vmem:[%s8 + $0x50] sm:$0xff]
    %v4269 = vld [vmem:[%s8 + $0x58] sm:$0xff]
    %v4270 = vld [vmem:[%s8 + $0x60] sm:$0xff]
    %v4271 = vld [vmem:[%s8 + $0x68] sm:$0xff]
    %v4272 = vld [vmem:[%s8 + $0x70] sm:$0xff]
    %v4273 = vld [vmem:[%s8 + $0x78] sm:$0xff]
    %v4274 = vld [vmem:[#allocation4 + $0x1] sm:$0xff]
    %v4275 = vld [vmem:[#allocation4 + $0x9] sm:$0xff]
    %v4276 = vld [vmem:[#allocation4 + $0x11] sm:$0x3f]
    %s4277 = scalar_lea.vmem %s8, 128
    %v4278 = vld [vmem:[%s4277] sm:$0xff]
    %v4279 = vld [vmem:[%s4277 + $0x8] sm:$0xff]
    %v4280 = vld [vmem:[%s4277 + $0x10] sm:$0xff]
    %v4281 = vld [vmem:[%s4277 + $0x18] sm:$0xff]
    %v4282 = vld [vmem:[%s4277 + $0x20] sm:$0xff]
    %v4283 = vld [vmem:[%s4277 + $0x28] sm:$0xff]
    %v4284 = vld [vmem:[%s4277 + $0x30] sm:$0xff]
    %v4285 = vld [vmem:[%s4277 + $0x38] sm:$0xff]
    %v4286 = vld [vmem:[%s4277 + $0x40] sm:$0xff]
    %v4287 = vld [vmem:[%s4277 + $0x48] sm:$0xff]
    %v4288 = vld [vmem:[%s4277 + $0x50] sm:$0xff]
    %v4289 = vld [vmem:[%s4277 + $0x58] sm:$0xff]
    %v4290 = vld [vmem:[%s4277 + $0x60] sm:$0xff]
    %v4291 = vld [vmem:[%s4277 + $0x68] sm:$0xff]
    %v4292 = vld [vmem:[%s4277 + $0x70] sm:$0xff]
    %v4293 = vld [vmem:[%s4277 + $0x78] sm:$0xff]
    %4294 = vmatprep.subr.mxu0 0.0
    %4295 = vmatpush1.msra.mxu0 %v4278
    %4296 = vmatprep.subr.mxu0 0.0
    %4297 = vmatpush1.msra.mxu0 %v4279
    %4298 = vmatprep.subr.mxu0 0.0
    %4299 = vmatpush1.msra.mxu0 %v4280
    %4300 = vmatprep.subr.mxu0 0.0
    %4301 = vmatpush1.msra.mxu0 %v4281
    %4302 = vmatprep.subr.mxu0 0.0
    %4303 = vmatpush1.msra.mxu0 %v4282
    %4304 = vmatprep.subr.mxu0 0.0
    %4305 = vmatpush1.msra.mxu0 %v4283
    %4306 = vmatprep.subr.mxu0 0.0
    %4307 = vmatpush1.msra.mxu0 %v4284
    %4308 = vmatprep.subr.mxu0 0.0
    %4309 = vmatpush1.msra.mxu0 %v4285
    %4310 = vmatprep.subr.mxu0 0.0
    %4311 = vmatpush1.msra.mxu0 %v4286
    %4312 = vmatprep.subr.mxu0 0.0
    %4313 = vmatpush1.msra.mxu0 %v4287
    %4314 = vmatprep.subr.mxu0 0.0
    %4315 = vmatpush1.msra.mxu0 %v4288
    %4316 = vmatprep.subr.mxu0 0.0
    %4317 = vmatpush1.msra.mxu0 %v4289
    %4318 = vmatprep.subr.mxu0 0.0
    %4319 = vmatpush1.msra.mxu0 %v4290
    %4320 = vmatprep.subr.mxu0 0.0
    %4321 = vmatpush1.msra.mxu0 %v4291
    %4322 = vmatprep.subr.mxu0 0.0
    %4323 = vmatpush1.msra.mxu0 %v4292
    %4324 = vmatprep.subr.mxu0 0.0
    %4325 = vmatpush1.msra.mxu0 %v4293
    %4326 = vmatprep.subr.mxu0 0.0
    %4327 = vmatpush1.msra.mxu0 0.0
    %4328 = vmatprep.subr.mxu0 0.0
    %4329 = vmatpush1.msra.mxu0 0.0
    %4330 = vmatprep.subr.mxu0 0.0
    %4331 = vmatpush1.msra.mxu0 0.0
    %4332 = vmatprep.subr.mxu0 0.0
    %4333 = vmatpush1.msra.mxu0 0.0
    %4334 = vmatprep.subr.mxu0 0.0
    %4335 = vmatpush1.msra.mxu0 0.0
    %4336 = vmatprep.subr.mxu0 0.0
    %4337 = vmatpush1.msra.mxu0 0.0
    %4338 = vmatprep.subr.mxu0 0.0
    %4339 = vmatpush1.msra.mxu0 0.0
    %4340 = vmatprep.subr.mxu0 0.0
    %4341 = vmatpush1.msra.mxu0 0.0
    %4342 = vmatprep.subr.mxu0 0.0
    %4343 = vmatpush1.msra.mxu0 0.0
    %4344 = vmatprep.subr.mxu0 0.0
    %4345 = vmatpush1.msra.mxu0 0.0
    %4346 = vmatprep.subr.mxu0 0.0
    %4347 = vmatpush1.msra.mxu0 0.0
    %4348 = vmatprep.subr.mxu0 0.0
    %4349 = vmatpush1.msra.mxu0 0.0
    %4350 = vmatprep.subr.mxu0 0.0
    %4351 = vmatpush1.msra.mxu0 0.0
    %4352 = vmatprep.subr.mxu0 0.0
    %4353 = vmatpush1.msra.mxu0 0.0
    %4354 = vmatprep.subr.mxu0 0.0
    %4355 = vmatpush1.msra.mxu0 0.0
    %4356 = vmatprep.subr.mxu0 0.0
    %4357 = vmatpush1.msra.mxu0 0.0
    %4358 = vmatprep.mubr.f32.mxu0 0.0
    %4359 = vmatmul.mubr.f32.gmra.mrb[0].mxu0 %v4274
    %v4360 = vpop.f32.mrb[0].mxu0
    %v4361 = vadd.f32 0.0, %v4360
    %v4362 = vpop.f32.mrb[0].mxu0
    %4363 = vmatprep.mubr.f32.mxu0 0.0
    %4364 = vmatmul.mubr.f32.gmra.mrb[0].mxu0 %v4275
    %v4365 = vpop.f32.mrb[0].mxu0
    %v4366 = vadd.f32 0.0, %v4365
    %v4367 = vpop.f32.mrb[0].mxu0
    %4368 = vmatprep.mubr.f32.mxu0 0.0
    %4369 = vmatmul.mubr.f32.gmra.mrb[0].mxu0 %v4276
    %v4370 = vpop.f32.mrb[0].mxu0
    %v4371 = vadd.f32 0.0, %v4370
    %v4372 = vpop.f32.mrb[0].mxu0
    %4373 = vdwg.mxu0
    %4374 = vmatprep.subr.mxu0 0.0
    %4375 = vmatpush1.msra.mxu0 %v4258
    %4376 = vmatprep.subr.mxu0 0.0
    %4377 = vmatpush1.msra.mxu0 %v4259
    %4378 = vmatprep.subr.mxu0 0.0
    %4379 = vmatpush1.msra.mxu0 %v4260
    %4380 = vmatprep.subr.mxu0 0.0
    %4381 = vmatpush1.msra.mxu0 %v4261
    %4382 = vmatprep.subr.mxu0 0.0
    %4383 = vmatpush1.msra.mxu0 %v4262
    %4384 = vmatprep.subr.mxu0 0.0
    %4385 = vmatpush1.msra.mxu0 %v4263
    %4386 = vmatprep.subr.mxu0 0.0
    %4387 = vmatpush1.msra.mxu0 %v4264
    %4388 = vmatprep.subr.mxu0 0.0
    %4389 = vmatpush1.msra.mxu0 %v4265
    %4390 = vmatprep.subr.mxu0 0.0
    %4391 = vmatpush1.msra.mxu0 %v4266
    %4392 = vmatprep.subr.mxu0 0.0
    %4393 = vmatpush1.msra.mxu0 %v4267
    %4394 = vmatprep.subr.mxu0 0.0
    %4395 = vmatpush1.msra.mxu0 %v4268
    %4396 = vmatprep.subr.mxu0 0.0
    %4397 = vmatpush1.msra.mxu0 %v4269
    %4398 = vmatprep.subr.mxu0 0.0
    %4399 = vmatpush1.msra.mxu0 %v4270
    %4400 = vmatprep.subr.mxu0 0.0
    %4401 = vmatpush1.msra.mxu0 %v4271
    %4402 = vmatprep.subr.mxu0 0.0
    %4403 = vmatpush1.msra.mxu0 %v4272
    %4404 = vmatprep.subr.mxu0 0.0
    %4405 = vmatpush1.msra.mxu0 %v4273
    %4406 = vmatprep.subr.mxu0 0.0
    %4407 = vmatpush1.msra.mxu0 0.0
    %4408 = vmatprep.subr.mxu0 0.0
    %4409 = vmatpush1.msra.mxu0 0.0
    %4410 = vmatprep.subr.mxu0 0.0
    %4411 = vmatpush1.msra.mxu0 0.0
    %4412 = vmatprep.subr.mxu0 0.0
    %4413 = vmatpush1.msra.mxu0 0.0
    %4414 = vmatprep.subr.mxu0 0.0
    %4415 = vmatpush1.msra.mxu0 0.0
    %4416 = vmatprep.subr.mxu0 0.0
    %4417 = vmatpush1.msra.mxu0 0.0
    %4418 = vmatprep.subr.mxu0 0.0
    %4419 = vmatpush1.msra.mxu0 0.0
    %4420 = vmatprep.subr.mxu0 0.0
    %4421 = vmatpush1.msra.mxu0 0.0
    %4422 = vmatprep.subr.mxu0 0.0
    %4423 = vmatpush1.msra.mxu0 0.0
    %4424 = vmatprep.subr.mxu0 0.0
    %4425 = vmatpush1.msra.mxu0 0.0
    %4426 = vmatprep.subr.mxu0 0.0
    %4427 = vmatpush1.msra.mxu0 0.0
    %4428 = vmatprep.subr.mxu0 0.0
    %4429 = vmatpush1.msra.mxu0 0.0
    %4430 = vmatprep.subr.mxu0 0.0
    %4431 = vmatpush1.msra.mxu0 0.0
    %4432 = vmatprep.subr.mxu0 0.0
    %4433 = vmatpush1.msra.mxu0 0.0
    %4434 = vmatprep.subr.mxu0 0.0
    %4435 = vmatpush1.msra.mxu0 0.0
    %4436 = vmatprep.subr.mxu0 0.0
    %4437 = vmatpush1.msra.mxu0 0.0
    %4438 = vmatprep.mubr.f32.mxu0 0.0
    %4439 = vmatmul.mubr.f32.gmra.mrb[0].mxu0 %v4255
    %v4440 = vpop.f32.mrb[0].mxu0
    %v4441 = vadd.f32 %v4361, %v4440
    %v4442 = vpop.f32.mrb[0].mxu0
    %4443 = vmatprep.mubr.f32.mxu0 0.0
    %4444 = vmatmul.mubr.f32.gmra.mrb[0].mxu0 %v4256
    %v4445 = vpop.f32.mrb[0].mxu0
    %v4446 = vadd.f32 %v4366, %v4445
    %v4447 = vpop.f32.mrb[0].mxu0
    %4448 = vmatprep.mubr.f32.mxu0 0.0
    %4449 = vmatmul.mubr.f32.gmra.mrb[0].mxu0 %v4257
    %v4450 = vpop.f32.mrb[0].mxu0
    %v4451 = vadd.f32 %v4371, %v4450
    %v4452 = vpop.f32.mrb[0].mxu0
    %4453 = vdwg.mxu0
    %v4454 = vld [vmem:[#allocation4 + $0x2] sm:$0xff]
    %v4455 = vld [vmem:[#allocation4 + $0xa] sm:$0xff]
    %v4456 = vld [vmem:[#allocation4 + $0x12] sm:$0x3f]
    %s4457 = scalar_lea.vmem %s8, 256
    %v4458 = vld [vmem:[%s4457] sm:$0xff]
    %v4459 = vld [vmem:[%s4457 + $0x8] sm:$0xff]
    %v4460 = vld [vmem:[%s4457 + $0x10] sm:$0xff]
    %v4461 = vld [vmem:[%s4457 + $0x18] sm:$0xff]
    %v4462 = vld [vmem:[%s4457 + $0x20] sm:$0xff]
    %v4463 = vld [vmem:[%s4457 + $0x28] sm:$0xff]
    %v4464 = vld [vmem:[%s4457 + $0x30] sm:$0xff]
    %v4465 = vld [vmem:[%s4457 + $0x38] sm:$0xff]
    %v4466 = vld [vmem:[%s4457 + $0x40] sm:$0xff]
    %v4467 = vld [vmem:[%s4457 + $0x48] sm:$0xff]
    %v4468 = vld [vmem:[%s4457 + $0x50] sm:$0xff]
    %v4469 = vld [vmem:[%s4457 + $0x58] sm:$0xff]
    %v4470 = vld [vmem:[%s4457 + $0x60] sm:$0xff]
    %v4471 = vld [vmem:[%s4457 + $0x68] sm:$0xff]
    %v4472 = vld [vmem:[%s4457 + $0x70] sm:$0xff]
    %v4473 = vld [vmem:[%s4457 + $0x78] sm:$0xff]
    %4474 = vmatprep.subr.mxu0 0.0
    %4475 = vmatpush1.msra.mxu0 %v4458
    %4476 = vmatprep.subr.mxu0 0.0
    %4477 = vmatpush1.msra.mxu0 %v4459
    %4478 = vmatprep.subr.mxu0 0.0
    %4479 = vmatpush1.msra.mxu0 %v4460
    %4480 = vmatprep.subr.mxu0 0.0
    %4481 = vmatpush1.msra.mxu0 %v4461
    %4482 = vmatprep.subr.mxu0 0.0
    %4483 = vmatpush1.msra.mxu0 %v4462
    %4484 = vmatprep.subr.mxu0 0.0
    %4485 = vmatpush1.msra.mxu0 %v4463
    %4486 = vmatprep.subr.mxu0 0.0
    %4487 = vmatpush1.msra.mxu0 %v4464
    %4488 = vmatprep.subr.mxu0 0.0
    %4489 = vmatpush1.msra.mxu0 %v4465
    %4490 = vmatprep.subr.mxu0 0.0
    %4491 = vmatpush1.msra.mxu0 %v4466
    %4492 = vmatprep.subr.mxu0 0.0
    %4493 = vmatpush1.msra.mxu0 %v4467
    %4494 = vmatprep.subr.mxu0 0.0
    %4495 = vmatpush1.msra.mxu0 %v4468
    %4496 = vmatprep.subr.mxu0 0.0
    %4497 = vmatpush1.msra.mxu0 %v4469
    %4498 = vmatprep.subr.mxu0 0.0
    %4499 = vmatpush1.msra.mxu0 %v4470
    %4500 = vmatprep.subr.mxu0 0.0
    %4501 = vmatpush1.msra.mxu0 %v4471
    %4502 = vmatprep.subr.mxu0 0.0
    %4503 = vmatpush1.msra.mxu0 %v4472
    %4504 = vmatprep.subr.mxu0 0.0
    %4505 = vmatpush1.msra.mxu0 %v4473
    %4506 = vmatprep.subr.mxu0 0.0
    %4507 = vmatpush1.msra.mxu0 0.0
    %4508 = vmatprep.subr.mxu0 0.0
    %4509 = vmatpush1.msra.mxu0 0.0
    %4510 = vmatprep.subr.mxu0 0.0
    %4511 = vmatpush1.msra.mxu0 0.0
    %4512 = vmatprep.subr.mxu0 0.0
    %4513 = vmatpush1.msra.mxu0 0.0
    %4514 = vmatprep.subr.mxu0 0.0
    %4515 = vmatpush1.msra.mxu0 0.0
    %4516 = vmatprep.subr.mxu0 0.0
    %4517 = vmatpush1.msra.mxu0 0.0
    %4518 = vmatprep.subr.mxu0 0.0
    %4519 = vmatpush1.msra.mxu0 0.0
    %4520 = vmatprep.subr.mxu0 0.0
    %4521 = vmatpush1.msra.mxu0 0.0
    %4522 = vmatprep.subr.mxu0 0.0
    %4523 = vmatpush1.msra.mxu0 0.0
    %4524 = vmatprep.subr.mxu0 0.0
    %4525 = vmatpush1.msra.mxu0 0.0
    %4526 = vmatprep.subr.mxu0 0.0
    %4527 = vmatpush1.msra.mxu0 0.0
    %4528 = vmatprep.subr.mxu0 0.0
    %4529 = vmatpush1.msra.mxu0 0.0
    %4530 = vmatprep.subr.mxu0 0.0
    %4531 = vmatpush1.msra.mxu0 0.0
    %4532 = vmatprep.subr.mxu0 0.0
    %4533 = vmatpush1.msra.mxu0 0.0
    %4534 = vmatprep.subr.mxu0 0.0
    %4535 = vmatpush1.msra.mxu0 0.0
    %4536 = vmatprep.subr.mxu0 0.0
    %4537 = vmatpush1.msra.mxu0 0.0
    %4538 = vmatprep.mubr.f32.mxu0 0.0
    %4539 = vmatmul.mubr.f32.gmra.mrb[0].mxu0 %v4454
    %v4540 = vpop.f32.mrb[0].mxu0
    %v4541 = vadd.f32 0.0, %v4540
    %v4542 = vpop.f32.mrb[0].mxu0
    %4543 = vmatprep.mubr.f32.mxu0 0.0
    %4544 = vmatmul.mubr.f32.gmra.mrb[0].mxu0 %v4455
    %v4545 = vpop.f32.mrb[0].mxu0
    %v4546 = vadd.f32 0.0, %v4545
    %v4547 = vpop.f32.mrb[0].mxu0
    %4548 = vmatprep.mubr.f32.mxu0 0.0
    %4549 = vmatmul.mubr.f32.gmra.mrb[0].mxu0 %v4456
    %v4550 = vpop.f32.mrb[0].mxu0
    %v4551 = vadd.f32 0.0, %v4550
    %v4552 = vpop.f32.mrb[0].mxu0
    %4553 = vdwg.mxu0
    %v4554 = vadd.f32 %v4441, %v4541
    %v4555 = vadd.f32 %v4446, %v4546
    %v4556 = vadd.f32 %v4451, %v4551
    %v4557 = vld [vmem:[#allocation4 + $0x6] sm:$0xff]
    %v4558 = vld [vmem:[#allocation4 + $0xe] sm:$0xff]
    %v4559 = vld [vmem:[#allocation4 + $0x16] sm:$0x3f]
    %s4560 = scalar_lea.vmem %s8, 384
    %v4561 = vld [vmem:[%s4560] sm:$0xff]
    %v4562 = vld [vmem:[%s4560 + $0x8] sm:$0xff]
    %v4563 = vld [vmem:[%s4560 + $0x10] sm:$0xff]
    %v4564 = vld [vmem:[%s4560 + $0x18] sm:$0xff]
    %v4565 = vld [vmem:[%s4560 + $0x20] sm:$0xff]
    %v4566 = vld [vmem:[%s4560 + $0x28] sm:$0xff]
    %v4567 = vld [vmem:[%s4560 + $0x30] sm:$0xff]
    %v4568 = vld [vmem:[%s4560 + $0x38] sm:$0xff]
    %v4569 = vld [vmem:[%s4560 + $0x40] sm:$0xff]
    %v4570 = vld [vmem:[%s4560 + $0x48] sm:$0xff]
    %v4571 = vld [vmem:[%s4560 + $0x50] sm:$0xff]
    %v4572 = vld [vmem:[%s4560 + $0x58] sm:$0xff]
    %v4573 = vld [vmem:[%s4560 + $0x60] sm:$0xff]
    %v4574 = vld [vmem:[%s4560 + $0x68] sm:$0xff]
    %v4575 = vld [vmem:[%s4560 + $0x70] sm:$0xff]
    %v4576 = vld [vmem:[%s4560 + $0x78] sm:$0xff]
    %4577 = vmatprep.subr.mxu0 0.0
    %4578 = vmatpush1.msra.mxu0 %v4561
    %4579 = vmatprep.subr.mxu0 0.0
    %4580 = vmatpush1.msra.mxu0 %v4562
    %4581 = vmatprep.subr.mxu0 0.0
    %4582 = vmatpush1.msra.mxu0 %v4563
    %4583 = vmatprep.subr.mxu0 0.0
    %4584 = vmatpush1.msra.mxu0 %v4564
    %4585 = vmatprep.subr.mxu0 0.0
    %4586 = vmatpush1.msra.mxu0 %v4565
    %4587 = vmatprep.subr.mxu0 0.0
    %4588 = vmatpush1.msra.mxu0 %v4566
    %4589 = vmatprep.subr.mxu0 0.0
    %4590 = vmatpush1.msra.mxu0 %v4567
    %4591 = vmatprep.subr.mxu0 0.0
    %4592 = vmatpush1.msra.mxu0 %v4568
    %4593 = vmatprep.subr.mxu0 0.0
    %4594 = vmatpush1.msra.mxu0 %v4569
    %4595 = vmatprep.subr.mxu0 0.0
    %4596 = vmatpush1.msra.mxu0 %v4570
    %4597 = vmatprep.subr.mxu0 0.0
    %4598 = vmatpush1.msra.mxu0 %v4571
    %4599 = vmatprep.subr.mxu0 0.0
    %4600 = vmatpush1.msra.mxu0 %v4572
    %4601 = vmatprep.subr.mxu0 0.0
    %4602 = vmatpush1.msra.mxu0 %v4573
    %4603 = vmatprep.subr.mxu0 0.0
    %4604 = vmatpush1.msra.mxu0 %v4574
    %4605 = vmatprep.subr.mxu0 0.0
    %4606 = vmatpush1.msra.mxu0 %v4575
    %4607 = vmatprep.subr.mxu0 0.0
    %4608 = vmatpush1.msra.mxu0 %v4576
    %4609 = vmatprep.subr.mxu0 0.0
    %4610 = vmatpush1.msra.mxu0 0.0
    %4611 = vmatprep.subr.mxu0 0.0
    %4612 = vmatpush1.msra.mxu0 0.0
    %4613 = vmatprep.subr.mxu0 0.0
    %4614 = vmatpush1.msra.mxu0 0.0
    %4615 = vmatprep.subr.mxu0 0.0
    %4616 = vmatpush1.msra.mxu0 0.0
    %4617 = vmatprep.subr.mxu0 0.0
    %4618 = vmatpush1.msra.mxu0 0.0
    %4619 = vmatprep.subr.mxu0 0.0
    %4620 = vmatpush1.msra.mxu0 0.0
    %4621 = vmatprep.subr.mxu0 0.0
    %4622 = vmatpush1.msra.mxu0 0.0
    %4623 = vmatprep.subr.mxu0 0.0
    %4624 = vmatpush1.msra.mxu0 0.0
    %4625 = vmatprep.subr.mxu0 0.0
    %4626 = vmatpush1.msra.mxu0 0.0
    %4627 = vmatprep.subr.mxu0 0.0
    %4628 = vmatpush1.msra.mxu0 0.0
    %4629 = vmatprep.subr.mxu0 0.0
    %4630 = vmatpush1.msra.mxu0 0.0
    %4631 = vmatprep.subr.mxu0 0.0
    %4632 = vmatpush1.msra.mxu0 0.0
    %4633 = vmatprep.subr.mxu0 0.0
    %4634 = vmatpush1.msra.mxu0 0.0
    %4635 = vmatprep.subr.mxu0 0.0
    %4636 = vmatpush1.msra.mxu0 0.0
    %4637 = vmatprep.subr.mxu0 0.0
    %4638 = vmatpush1.msra.mxu0 0.0
    %4639 = vmatprep.subr.mxu0 0.0
    %4640 = vmatpush1.msra.mxu0 0.0
    %4641 = vmatprep.mubr.f32.mxu0 0.0
    %4642 = vmatmul.mubr.f32.gmra.mrb[0].mxu0 %v4557
    %v4643 = vpop.f32.mrb[0].mxu0
    %v4644 = vadd.f32 0.0, %v4643
    %v4645 = vpop.f32.mrb[0].mxu0
    %4646 = vmatprep.mubr.f32.mxu0 0.0
    %4647 = vmatmul.mubr.f32.gmra.mrb[0].mxu0 %v4558
    %v4648 = vpop.f32.mrb[0].mxu0
    %v4649 = vadd.f32 0.0, %v4648
    %v4650 = vpop.f32.mrb[0].mxu0
    %4651 = vmatprep.mubr.f32.mxu0 0.0
    %4652 = vmatmul.mubr.f32.gmra.mrb[0].mxu0 %v4559
    %v4653 = vpop.f32.mrb[0].mxu0
    %v4654 = vadd.f32 0.0, %v4653
    %v4655 = vpop.f32.mrb[0].mxu0
    %4656 = vdwg.mxu0
    %v4657 = vadd.f32 %v4554, %v4644
    %v4658 = vadd.f32 %v4555, %v4649
    %v4659 = vadd.f32 %v4556, %v4654
    %v4660 = vld [vmem:[#allocation4 + $0x7] sm:$0xff]
    %v4661 = vld [vmem:[#allocation4 + $0xf] sm:$0xff]
    %v4662 = vld [vmem:[#allocation4 + $0x17] sm:$0x3f]
    %s4663 = scalar_lea.vmem %s8, 512
    %v4664 = vld [vmem:[%s4663] sm:$0xff]
    %v4665 = vld [vmem:[%s4663 + $0x8] sm:$0xff]
    %v4666 = vld [vmem:[%s4663 + $0x10] sm:$0xff]
    %v4667 = vld [vmem:[%s4663 + $0x18] sm:$0xff]
    %v4668 = vld [vmem:[%s4663 + $0x20] sm:$0xff]
    %v4669 = vld [vmem:[%s4663 + $0x28] sm:$0xff]
    %v4670 = vld [vmem:[%s4663 + $0x30] sm:$0xff]
    %v4671 = vld [vmem:[%s4663 + $0x38] sm:$0xff]
    %v4672 = vld [vmem:[%s4663 + $0x40] sm:$0xff]
    %v4673 = vld [vmem:[%s4663 + $0x48] sm:$0xff]
    %v4674 = vld [vmem:[%s4663 + $0x50] sm:$0xff]
    %v4675 = vld [vmem:[%s4663 + $0x58] sm:$0xff]
    %v4676 = vld [vmem:[%s4663 + $0x60] sm:$0xff]
    %v4677 = vld [vmem:[%s4663 + $0x68] sm:$0xff]
    %v4678 = vld [vmem:[%s4663 + $0x70] sm:$0xff]
    %v4679 = vld [vmem:[%s4663 + $0x78] sm:$0xff]
    %4680 = vmatprep.subr.mxu0 0.0
    %4681 = vmatpush1.msra.mxu0 %v4664
    %4682 = vmatprep.subr.mxu0 0.0
    %4683 = vmatpush1.msra.mxu0 %v4665
    %4684 = vmatprep.subr.mxu0 0.0
    %4685 = vmatpush1.msra.mxu0 %v4666
    %4686 = vmatprep.subr.mxu0 0.0
    %4687 = vmatpush1.msra.mxu0 %v4667
    %4688 = vmatprep.subr.mxu0 0.0
    %4689 = vmatpush1.msra.mxu0 %v4668
    %4690 = vmatprep.subr.mxu0 0.0
    %4691 = vmatpush1.msra.mxu0 %v4669
    %4692 = vmatprep.subr.mxu0 0.0
    %4693 = vmatpush1.msra.mxu0 %v4670
    %4694 = vmatprep.subr.mxu0 0.0
    %4695 = vmatpush1.msra.mxu0 %v4671
    %4696 = vmatprep.subr.mxu0 0.0
    %4697 = vmatpush1.msra.mxu0 %v4672
    %4698 = vmatprep.subr.mxu0 0.0
    %4699 = vmatpush1.msra.mxu0 %v4673
    %4700 = vmatprep.subr.mxu0 0.0
    %4701 = vmatpush1.msra.mxu0 %v4674
    %4702 = vmatprep.subr.mxu0 0.0
    %4703 = vmatpush1.msra.mxu0 %v4675
    %4704 = vmatprep.subr.mxu0 0.0
    %4705 = vmatpush1.msra.mxu0 %v4676
    %4706 = vmatprep.subr.mxu0 0.0
    %4707 = vmatpush1.msra.mxu0 %v4677
    %4708 = vmatprep.subr.mxu0 0.0
    %4709 = vmatpush1.msra.mxu0 %v4678
    %4710 = vmatprep.subr.mxu0 0.0
    %4711 = vmatpush1.msra.mxu0 %v4679
    %4712 = vmatprep.subr.mxu0 0.0
    %4713 = vmatpush1.msra.mxu0 0.0
    %4714 = vmatprep.subr.mxu0 0.0
    %4715 = vmatpush1.msra.mxu0 0.0
    %4716 = vmatprep.subr.mxu0 0.0
    %4717 = vmatpush1.msra.mxu0 0.0
    %4718 = vmatprep.subr.mxu0 0.0
    %4719 = vmatpush1.msra.mxu0 0.0
    %4720 = vmatprep.subr.mxu0 0.0
    %4721 = vmatpush1.msra.mxu0 0.0
    %4722 = vmatprep.subr.mxu0 0.0
    %4723 = vmatpush1.msra.mxu0 0.0
    %4724 = vmatprep.subr.mxu0 0.0
    %4725 = vmatpush1.msra.mxu0 0.0
    %4726 = vmatprep.subr.mxu0 0.0
    %4727 = vmatpush1.msra.mxu0 0.0
    %4728 = vmatprep.subr.mxu0 0.0
    %4729 = vmatpush1.msra.mxu0 0.0
    %4730 = vmatprep.subr.mxu0 0.0
    %4731 = vmatpush1.msra.mxu0 0.0
    %4732 = vmatprep.subr.mxu0 0.0
    %4733 = vmatpush1.msra.mxu0 0.0
    %4734 = vmatprep.subr.mxu0 0.0
    %4735 = vmatpush1.msra.mxu0 0.0
    %4736 = vmatprep.subr.mxu0 0.0
    %4737 = vmatpush1.msra.mxu0 0.0
    %4738 = vmatprep.subr.mxu0 0.0
    %4739 = vmatpush1.msra.mxu0 0.0
    %4740 = vmatprep.subr.mxu0 0.0
    %4741 = vmatpush1.msra.mxu0 0.0
    %4742 = vmatprep.subr.mxu0 0.0
    %4743 = vmatpush1.msra.mxu0 0.0
    %4744 = vmatprep.mubr.f32.mxu0 0.0
    %4745 = vmatmul.mubr.f32.gmra.mrb[0].mxu0 %v4660
    %v4746 = vpop.f32.mrb[0].mxu0
    %v4747 = vadd.f32 0.0, %v4746
    %v4748 = vpop.f32.mrb[0].mxu0
    %4749 = vmatprep.mubr.f32.mxu0 0.0
    %4750 = vmatmul.mubr.f32.gmra.mrb[0].mxu0 %v4661
    %v4751 = vpop.f32.mrb[0].mxu0
    %v4752 = vadd.f32 0.0, %v4751
    %v4753 = vpop.f32.mrb[0].mxu0
    %4754 = vmatprep.mubr.f32.mxu0 0.0
    %4755 = vmatmul.mubr.f32.gmra.mrb[0].mxu0 %v4662
    %v4756 = vpop.f32.mrb[0].mxu0
    %v4757 = vadd.f32 0.0, %v4756
    %v4758 = vpop.f32.mrb[0].mxu0
    %4759 = vdwg.mxu0
    %v4760 = vadd.f32 %v4657, %v4747
    %v4761 = vadd.f32 %v4658, %v4752
    %v4762 = vadd.f32 %v4659, %v4757
    %v4763 = vld [vmem:[#allocation4 + $0x8] sm:$0xff]
    %v4764 = vld [vmem:[#allocation4 + $0x10] sm:$0xff]
    %v4765 = vld [vmem:[#allocation4 + $0x18] sm:$0x3f]
    %s4766 = scalar_lea.vmem %s8, 640
    %v4767 = vld [vmem:[%s4766] sm:$0xff]
    %v4768 = vld [vmem:[%s4766 + $0x8] sm:$0xff]
    %v4769 = vld [vmem:[%s4766 + $0x10] sm:$0xff]
    %v4770 = vld [vmem:[%s4766 + $0x18] sm:$0xff]
    %v4771 = vld [vmem:[%s4766 + $0x20] sm:$0xff]
    %v4772 = vld [vmem:[%s4766 + $0x28] sm:$0xff]
    %v4773 = vld [vmem:[%s4766 + $0x30] sm:$0xff]
    %v4774 = vld [vmem:[%s4766 + $0x38] sm:$0xff]
    %v4775 = vld [vmem:[%s4766 + $0x40] sm:$0xff]
    %v4776 = vld [vmem:[%s4766 + $0x48] sm:$0xff]
    %v4777 = vld [vmem:[%s4766 + $0x50] sm:$0xff]
    %v4778 = vld [vmem:[%s4766 + $0x58] sm:$0xff]
    %v4779 = vld [vmem:[%s4766 + $0x60] sm:$0xff]
    %v4780 = vld [vmem:[%s4766 + $0x68] sm:$0xff]
    %v4781 = vld [vmem:[%s4766 + $0x70] sm:$0xff]
    %v4782 = vld [vmem:[%s4766 + $0x78] sm:$0xff]
    %4783 = vmatprep.subr.mxu0 0.0
    %4784 = vmatpush1.msra.mxu0 %v4767
    %4785 = vmatprep.subr.mxu0 0.0
    %4786 = vmatpush1.msra.mxu0 %v4768
    %4787 = vmatprep.subr.mxu0 0.0
    %4788 = vmatpush1.msra.mxu0 %v4769
    %4789 = vmatprep.subr.mxu0 0.0
    %4790 = vmatpush1.msra.mxu0 %v4770
    %4791 = vmatprep.subr.mxu0 0.0
    %4792 = vmatpush1.msra.mxu0 %v4771
    %4793 = vmatprep.subr.mxu0 0.0
    %4794 = vmatpush1.msra.mxu0 %v4772
    %4795 = vmatprep.subr.mxu0 0.0
    %4796 = vmatpush1.msra.mxu0 %v4773
    %4797 = vmatprep.subr.mxu0 0.0
    %4798 = vmatpush1.msra.mxu0 %v4774
    %4799 = vmatprep.subr.mxu0 0.0
    %4800 = vmatpush1.msra.mxu0 %v4775
    %4801 = vmatprep.subr.mxu0 0.0
    %4802 = vmatpush1.msra.mxu0 %v4776
    %4803 = vmatprep.subr.mxu0 0.0
    %4804 = vmatpush1.msra.mxu0 %v4777
    %4805 = vmatprep.subr.mxu0 0.0
    %4806 = vmatpush1.msra.mxu0 %v4778
    %4807 = vmatprep.subr.mxu0 0.0
    %4808 = vmatpush1.msra.mxu0 %v4779
    %4809 = vmatprep.subr.mxu0 0.0
    %4810 = vmatpush1.msra.mxu0 %v4780
    %4811 = vmatprep.subr.mxu0 0.0
    %4812 = vmatpush1.msra.mxu0 %v4781
    %4813 = vmatprep.subr.mxu0 0.0
    %4814 = vmatpush1.msra.mxu0 %v4782
    %4815 = vmatprep.subr.mxu0 0.0
    %4816 = vmatpush1.msra.mxu0 0.0
    %4817 = vmatprep.subr.mxu0 0.0
    %4818 = vmatpush1.msra.mxu0 0.0
    %4819 = vmatprep.subr.mxu0 0.0
    %4820 = vmatpush1.msra.mxu0 0.0
    %4821 = vmatprep.subr.mxu0 0.0
    %4822 = vmatpush1.msra.mxu0 0.0
    %4823 = vmatprep.subr.mxu0 0.0
    %4824 = vmatpush1.msra.mxu0 0.0
    %4825 = vmatprep.subr.mxu0 0.0
    %4826 = vmatpush1.msra.mxu0 0.0
    %4827 = vmatprep.subr.mxu0 0.0
    %4828 = vmatpush1.msra.mxu0 0.0
    %4829 = vmatprep.subr.mxu0 0.0
    %4830 = vmatpush1.msra.mxu0 0.0
    %4831 = vmatprep.subr.mxu0 0.0
    %4832 = vmatpush1.msra.mxu0 0.0
    %4833 = vmatprep.subr.mxu0 0.0
    %4834 = vmatpush1.msra.mxu0 0.0
    %4835 = vmatprep.subr.mxu0 0.0
    %4836 = vmatpush1.msra.mxu0 0.0
    %4837 = vmatprep.subr.mxu0 0.0
    %4838 = vmatpush1.msra.mxu0 0.0
    %4839 = vmatprep.subr.mxu0 0.0
    %4840 = vmatpush1.msra.mxu0 0.0
    %4841 = vmatprep.subr.mxu0 0.0
    %4842 = vmatpush1.msra.mxu0 0.0
    %4843 = vmatprep.subr.mxu0 0.0
    %4844 = vmatpush1.msra.mxu0 0.0
    %4845 = vmatprep.subr.mxu0 0.0
    %4846 = vmatpush1.msra.mxu0 0.0
    %4847 = vmatprep.mubr.f32.mxu0 0.0
    %4848 = vmatmul.mubr.f32.gmra.mrb[0].mxu0 %v4763
    %v4849 = vpop.f32.mrb[0].mxu0
    %v4850 = vadd.f32 0.0, %v4849
    %v4851 = vpop.f32.mrb[0].mxu0
    %4852 = vmatprep.mubr.f32.mxu0 0.0
    %4853 = vmatmul.mubr.f32.gmra.mrb[0].mxu0 %v4764
    %v4854 = vpop.f32.mrb[0].mxu0
    %v4855 = vadd.f32 0.0, %v4854
    %v4856 = vpop.f32.mrb[0].mxu0
    %4857 = vmatprep.mubr.f32.mxu0 0.0
    %4858 = vmatmul.mubr.f32.gmra.mrb[0].mxu0 %v4765
    %v4859 = vpop.f32.mrb[0].mxu0
    %v4860 = vadd.f32 0.0, %v4859
    %v4861 = vpop.f32.mrb[0].mxu0
    %4862 = vdwg.mxu0
    %v4863 = vadd.f32 %v4760, %v4850
    %v4864 = vadd.f32 %v4761, %v4855
    %v4865 = vadd.f32 %v4762, %v4860
    %v4866 = vld [vmem:[#allocation4 + $0xc] sm:$0xff]
    %v4867 = vld [vmem:[#allocation4 + $0x14] sm:$0xff]
    %v4868 = vld [vmem:[#allocation4 + $0x1c] sm:$0x3f]
    %s4869 = scalar_lea.vmem %s8, 768
    %v4870 = vld [vmem:[%s4869] sm:$0xff]
    %v4871 = vld [vmem:[%s4869 + $0x8] sm:$0xff]
    %v4872 = vld [vmem:[%s4869 + $0x10] sm:$0xff]
    %v4873 = vld [vmem:[%s4869 + $0x18] sm:$0xff]
    %v4874 = vld [vmem:[%s4869 + $0x20] sm:$0xff]
    %v4875 = vld [vmem:[%s4869 + $0x28] sm:$0xff]
    %v4876 = vld [vmem:[%s4869 + $0x30] sm:$0xff]
    %v4877 = vld [vmem:[%s4869 + $0x38] sm:$0xff]
    %v4878 = vld [vmem:[%s4869 + $0x40] sm:$0xff]
    %v4879 = vld [vmem:[%s4869 + $0x48] sm:$0xff]
    %v4880 = vld [vmem:[%s4869 + $0x50] sm:$0xff]
    %v4881 = vld [vmem:[%s4869 + $0x58] sm:$0xff]
    %v4882 = vld [vmem:[%s4869 + $0x60] sm:$0xff]
    %v4883 = vld [vmem:[%s4869 + $0x68] sm:$0xff]
    %v4884 = vld [vmem:[%s4869 + $0x70] sm:$0xff]
    %v4885 = vld [vmem:[%s4869 + $0x78] sm:$0xff]
    %4886 = vmatprep.subr.mxu0 0.0
    %4887 = vmatpush1.msra.mxu0 %v4870
    %4888 = vmatprep.subr.mxu0 0.0
    %4889 = vmatpush1.msra.mxu0 %v4871
    %4890 = vmatprep.subr.mxu0 0.0
    %4891 = vmatpush1.msra.mxu0 %v4872
    %4892 = vmatprep.subr.mxu0 0.0
    %4893 = vmatpush1.msra.mxu0 %v4873
    %4894 = vmatprep.subr.mxu0 0.0
    %4895 = vmatpush1.msra.mxu0 %v4874
    %4896 = vmatprep.subr.mxu0 0.0
    %4897 = vmatpush1.msra.mxu0 %v4875
    %4898 = vmatprep.subr.mxu0 0.0
    %4899 = vmatpush1.msra.mxu0 %v4876
    %4900 = vmatprep.subr.mxu0 0.0
    %4901 = vmatpush1.msra.mxu0 %v4877
    %4902 = vmatprep.subr.mxu0 0.0
    %4903 = vmatpush1.msra.mxu0 %v4878
    %4904 = vmatprep.subr.mxu0 0.0
    %4905 = vmatpush1.msra.mxu0 %v4879
    %4906 = vmatprep.subr.mxu0 0.0
    %4907 = vmatpush1.msra.mxu0 %v4880
    %4908 = vmatprep.subr.mxu0 0.0
    %4909 = vmatpush1.msra.mxu0 %v4881
    %4910 = vmatprep.subr.mxu0 0.0
    %4911 = vmatpush1.msra.mxu0 %v4882
    %4912 = vmatprep.subr.mxu0 0.0
    %4913 = vmatpush1.msra.mxu0 %v4883
    %4914 = vmatprep.subr.mxu0 0.0
    %4915 = vmatpush1.msra.mxu0 %v4884
    %4916 = vmatprep.subr.mxu0 0.0
    %4917 = vmatpush1.msra.mxu0 %v4885
    %4918 = vmatprep.subr.mxu0 0.0
    %4919 = vmatpush1.msra.mxu0 0.0
    %4920 = vmatprep.subr.mxu0 0.0
    %4921 = vmatpush1.msra.mxu0 0.0
    %4922 = vmatprep.subr.mxu0 0.0
    %4923 = vmatpush1.msra.mxu0 0.0
    %4924 = vmatprep.subr.mxu0 0.0
    %4925 = vmatpush1.msra.mxu0 0.0
    %4926 = vmatprep.subr.mxu0 0.0
    %4927 = vmatpush1.msra.mxu0 0.0
    %4928 = vmatprep.subr.mxu0 0.0
    %4929 = vmatpush1.msra.mxu0 0.0
    %4930 = vmatprep.subr.mxu0 0.0
    %4931 = vmatpush1.msra.mxu0 0.0
    %4932 = vmatprep.subr.mxu0 0.0
    %4933 = vmatpush1.msra.mxu0 0.0
    %4934 = vmatprep.subr.mxu0 0.0
    %4935 = vmatpush1.msra.mxu0 0.0
    %4936 = vmatprep.subr.mxu0 0.0
    %4937 = vmatpush1.msra.mxu0 0.0
    %4938 = vmatprep.subr.mxu0 0.0
    %4939 = vmatpush1.msra.mxu0 0.0
    %4940 = vmatprep.subr.mxu0 0.0
    %4941 = vmatpush1.msra.mxu0 0.0
    %4942 = vmatprep.subr.mxu0 0.0
    %4943 = vmatpush1.msra.mxu0 0.0
    %4944 = vmatprep.subr.mxu0 0.0
    %4945 = vmatpush1.msra.mxu0 0.0
    %4946 = vmatprep.subr.mxu0 0.0
    %4947 = vmatpush1.msra.mxu0 0.0
    %4948 = vmatprep.subr.mxu0 0.0
    %4949 = vmatpush1.msra.mxu0 0.0
    %4950 = vmatprep.mubr.f32.mxu0 0.0
    %4951 = vmatmul.mubr.f32.gmra.mrb[0].mxu0 %v4866
    %v4952 = vpop.f32.mrb[0].mxu0
    %v4953 = vadd.f32 0.0, %v4952
    %v4954 = vpop.f32.mrb[0].mxu0
    %4955 = vmatprep.mubr.f32.mxu0 0.0
    %4956 = vmatmul.mubr.f32.gmra.mrb[0].mxu0 %v4867
    %v4957 = vpop.f32.mrb[0].mxu0
    %v4958 = vadd.f32 0.0, %v4957
    %v4959 = vpop.f32.mrb[0].mxu0
    %4960 = vmatprep.mubr.f32.mxu0 0.0
    %4961 = vmatmul.mubr.f32.gmra.mrb[0].mxu0 %v4868
    %v4962 = vpop.f32.mrb[0].mxu0
    %v4963 = vadd.f32 0.0, %v4962
    %v4964 = vpop.f32.mrb[0].mxu0
    %4965 = vdwg.mxu0
    %v4966 = vadd.f32 %v4863, %v4953
    %v4967 = vadd.f32 %v4864, %v4958
    %v4968 = vadd.f32 %v4865, %v4963
    %v4969 = vld [vmem:[#allocation4 + $0xd] sm:$0xff]
    %v4970 = vld [vmem:[#allocation4 + $0x15] sm:$0xff]
    %v4971 = vld [vmem:[#allocation4 + $0x1d] sm:$0x3f]
    %s4972 = scalar_lea.vmem %s8, 896
    %v4973 = vld [vmem:[%s4972] sm:$0xff]
    %v4974 = vld [vmem:[%s4972 + $0x8] sm:$0xff]
    %v4975 = vld [vmem:[%s4972 + $0x10] sm:$0xff]
    %v4976 = vld [vmem:[%s4972 + $0x18] sm:$0xff]
    %v4977 = vld [vmem:[%s4972 + $0x20] sm:$0xff]
    %v4978 = vld [vmem:[%s4972 + $0x28] sm:$0xff]
    %v4979 = vld [vmem:[%s4972 + $0x30] sm:$0xff]
    %v4980 = vld [vmem:[%s4972 + $0x38] sm:$0xff]
    %v4981 = vld [vmem:[%s4972 + $0x40] sm:$0xff]
    %v4982 = vld [vmem:[%s4972 + $0x48] sm:$0xff]
    %v4983 = vld [vmem:[%s4972 + $0x50] sm:$0xff]
    %v4984 = vld [vmem:[%s4972 + $0x58] sm:$0xff]
    %v4985 = vld [vmem:[%s4972 + $0x60] sm:$0xff]
    %v4986 = vld [vmem:[%s4972 + $0x68] sm:$0xff]
    %v4987 = vld [vmem:[%s4972 + $0x70] sm:$0xff]
    %v4988 = vld [vmem:[%s4972 + $0x78] sm:$0xff]
    %4989 = vmatprep.subr.mxu0 0.0
    %4990 = vmatpush1.msra.mxu0 %v4973
    %4991 = vmatprep.subr.mxu0 0.0
    %4992 = vmatpush1.msra.mxu0 %v4974
    %4993 = vmatprep.subr.mxu0 0.0
    %4994 = vmatpush1.msra.mxu0 %v4975
    %4995 = vmatprep.subr.mxu0 0.0
    %4996 = vmatpush1.msra.mxu0 %v4976
    %4997 = vmatprep.subr.mxu0 0.0
    %4998 = vmatpush1.msra.mxu0 %v4977
    %4999 = vmatprep.subr.mxu0 0.0
    %5000 = vmatpush1.msra.mxu0 %v4978
    %5001 = vmatprep.subr.mxu0 0.0
    %5002 = vmatpush1.msra.mxu0 %v4979
    %5003 = vmatprep.subr.mxu0 0.0
    %5004 = vmatpush1.msra.mxu0 %v4980
    %5005 = vmatprep.subr.mxu0 0.0
    %5006 = vmatpush1.msra.mxu0 %v4981
    %5007 = vmatprep.subr.mxu0 0.0
    %5008 = vmatpush1.msra.mxu0 %v4982
    %5009 = vmatprep.subr.mxu0 0.0
    %5010 = vmatpush1.msra.mxu0 %v4983
    %5011 = vmatprep.subr.mxu0 0.0
    %5012 = vmatpush1.msra.mxu0 %v4984
    %5013 = vmatprep.subr.mxu0 0.0
    %5014 = vmatpush1.msra.mxu0 %v4985
    %5015 = vmatprep.subr.mxu0 0.0
    %5016 = vmatpush1.msra.mxu0 %v4986
    %5017 = vmatprep.subr.mxu0 0.0
    %5018 = vmatpush1.msra.mxu0 %v4987
    %5019 = vmatprep.subr.mxu0 0.0
    %5020 = vmatpush1.msra.mxu0 %v4988
    %5021 = vmatprep.subr.mxu0 0.0
    %5022 = vmatpush1.msra.mxu0 0.0
    %5023 = vmatprep.subr.mxu0 0.0
    %5024 = vmatpush1.msra.mxu0 0.0
    %5025 = vmatprep.subr.mxu0 0.0
    %5026 = vmatpush1.msra.mxu0 0.0
    %5027 = vmatprep.subr.mxu0 0.0
    %5028 = vmatpush1.msra.mxu0 0.0
    %5029 = vmatprep.subr.mxu0 0.0
    %5030 = vmatpush1.msra.mxu0 0.0
    %5031 = vmatprep.subr.mxu0 0.0
    %5032 = vmatpush1.msra.mxu0 0.0
    %5033 = vmatprep.subr.mxu0 0.0
    %5034 = vmatpush1.msra.mxu0 0.0
    %5035 = vmatprep.subr.mxu0 0.0
    %5036 = vmatpush1.msra.mxu0 0.0
    %5037 = vmatprep.subr.mxu0 0.0
    %5038 = vmatpush1.msra.mxu0 0.0
    %5039 = vmatprep.subr.mxu0 0.0
    %5040 = vmatpush1.msra.mxu0 0.0
    %5041 = vmatprep.subr.mxu0 0.0
    %5042 = vmatpush1.msra.mxu0 0.0
    %5043 = vmatprep.subr.mxu0 0.0
    %5044 = vmatpush1.msra.mxu0 0.0
    %5045 = vmatprep.subr.mxu0 0.0
    %5046 = vmatpush1.msra.mxu0 0.0
    %5047 = vmatprep.subr.mxu0 0.0
    %5048 = vmatpush1.msra.mxu0 0.0
    %5049 = vmatprep.subr.mxu0 0.0
    %5050 = vmatpush1.msra.mxu0 0.0
    %5051 = vmatprep.subr.mxu0 0.0
    %5052 = vmatpush1.msra.mxu0 0.0
    %5053 = vmatprep.mubr.f32.mxu0 0.0
    %5054 = vmatmul.mubr.f32.gmra.mrb[0].mxu0 %v4969
    %v5055 = vpop.f32.mrb[0].mxu0
    %v5056 = vadd.f32 0.0, %v5055
    %v5057 = vpop.f32.mrb[0].mxu0
    %5058 = vmatprep.mubr.f32.mxu0 0.0
    %5059 = vmatmul.mubr.f32.gmra.mrb[0].mxu0 %v4970
    %v5060 = vpop.f32.mrb[0].mxu0
    %v5061 = vadd.f32 0.0, %v5060
    %v5062 = vpop.f32.mrb[0].mxu0
    %5063 = vmatprep.mubr.f32.mxu0 0.0
    %5064 = vmatmul.mubr.f32.gmra.mrb[0].mxu0 %v4971
    %v5065 = vpop.f32.mrb[0].mxu0
    %v5066 = vadd.f32 0.0, %v5065
    %v5067 = vpop.f32.mrb[0].mxu0
    %5068 = vdwg.mxu0
    %v5069 = vadd.f32 %v4966, %v5056
    %v5070 = vadd.f32 %v4967, %v5061
    %v5071 = vadd.f32 %v4968, %v5066
    %v5072 = vld [vmem:[#allocation4 + $0xe] sm:$0xff]
    %v5073 = vld [vmem:[#allocation4 + $0x16] sm:$0xff]
    %v5074 = vld [vmem:[#allocation4 + $0x1e] sm:$0x3f]
    %s5075 = scalar_lea.vmem %s8, 1024
    %v5076 = vld [vmem:[%s5075] sm:$0xff]
    %v5077 = vld [vmem:[%s5075 + $0x8] sm:$0xff]
    %v5078 = vld [vmem:[%s5075 + $0x10] sm:$0xff]
    %v5079 = vld [vmem:[%s5075 + $0x18] sm:$0xff]
    %v5080 = vld [vmem:[%s5075 + $0x20] sm:$0xff]
    %v5081 = vld [vmem:[%s5075 + $0x28] sm:$0xff]
    %v5082 = vld [vmem:[%s5075 + $0x30] sm:$0xff]
    %v5083 = vld [vmem:[%s5075 + $0x38] sm:$0xff]
    %v5084 = vld [vmem:[%s5075 + $0x40] sm:$0xff]
    %v5085 = vld [vmem:[%s5075 + $0x48] sm:$0xff]
    %v5086 = vld [vmem:[%s5075 + $0x50] sm:$0xff]
    %v5087 = vld [vmem:[%s5075 + $0x58] sm:$0xff]
    %v5088 = vld [vmem:[%s5075 + $0x60] sm:$0xff]
    %v5089 = vld [vmem:[%s5075 + $0x68] sm:$0xff]
    %v5090 = vld [vmem:[%s5075 + $0x70] sm:$0xff]
    %v5091 = vld [vmem:[%s5075 + $0x78] sm:$0xff]
    %5092 = vmatprep.subr.mxu0 0.0
    %5093 = vmatpush1.msra.mxu0 %v5076
    %5094 = vmatprep.subr.mxu0 0.0
    %5095 = vmatpush1.msra.mxu0 %v5077
    %5096 = vmatprep.subr.mxu0 0.0
    %5097 = vmatpush1.msra.mxu0 %v5078
    %5098 = vmatprep.subr.mxu0 0.0
    %5099 = vmatpush1.msra.mxu0 %v5079
    %5100 = vmatprep.subr.mxu0 0.0
    %5101 = vmatpush1.msra.mxu0 %v5080
    %5102 = vmatprep.subr.mxu0 0.0
    %5103 = vmatpush1.msra.mxu0 %v5081
    %5104 = vmatprep.subr.mxu0 0.0
    %5105 = vmatpush1.msra.mxu0 %v5082
    %5106 = vmatprep.subr.mxu0 0.0
    %5107 = vmatpush1.msra.mxu0 %v5083
    %5108 = vmatprep.subr.mxu0 0.0
    %5109 = vmatpush1.msra.mxu0 %v5084
    %5110 = vmatprep.subr.mxu0 0.0
    %5111 = vmatpush1.msra.mxu0 %v5085
    %5112 = vmatprep.subr.mxu0 0.0
    %5113 = vmatpush1.msra.mxu0 %v5086
    %5114 = vmatprep.subr.mxu0 0.0
    %5115 = vmatpush1.msra.mxu0 %v5087
    %5116 = vmatprep.subr.mxu0 0.0
    %5117 = vmatpush1.msra.mxu0 %v5088
    %5118 = vmatprep.subr.mxu0 0.0
    %5119 = vmatpush1.msra.mxu0 %v5089
    %5120 = vmatprep.subr.mxu0 0.0
    %5121 = vmatpush1.msra.mxu0 %v5090
    %5122 = vmatprep.subr.mxu0 0.0
    %5123 = vmatpush1.msra.mxu0 %v5091
    %5124 = vmatprep.subr.mxu0 0.0
    %5125 = vmatpush1.msra.mxu0 0.0
    %5126 = vmatprep.subr.mxu0 0.0
    %5127 = vmatpush1.msra.mxu0 0.0
    %5128 = vmatprep.subr.mxu0 0.0
    %5129 = vmatpush1.msra.mxu0 0.0
    %5130 = vmatprep.subr.mxu0 0.0
    %5131 = vmatpush1.msra.mxu0 0.0
    %5132 = vmatprep.subr.mxu0 0.0
    %5133 = vmatpush1.msra.mxu0 0.0
    %5134 = vmatprep.subr.mxu0 0.0
    %5135 = vmatpush1.msra.mxu0 0.0
    %5136 = vmatprep.subr.mxu0 0.0
    %5137 = vmatpush1.msra.mxu0 0.0
    %5138 = vmatprep.subr.mxu0 0.0
    %5139 = vmatpush1.msra.mxu0 0.0
    %5140 = vmatprep.subr.mxu0 0.0
    %5141 = vmatpush1.msra.mxu0 0.0
    %5142 = vmatprep.subr.mxu0 0.0
    %5143 = vmatpush1.msra.mxu0 0.0
    %5144 = vmatprep.subr.mxu0 0.0
    %5145 = vmatpush1.msra.mxu0 0.0
    %5146 = vmatprep.subr.mxu0 0.0
    %5147 = vmatpush1.msra.mxu0 0.0
    %5148 = vmatprep.subr.mxu0 0.0
    %5149 = vmatpush1.msra.mxu0 0.0
    %5150 = vmatprep.subr.mxu0 0.0
    %5151 = vmatpush1.msra.mxu0 0.0
    %5152 = vmatprep.subr.mxu0 0.0
    %5153 = vmatpush1.msra.mxu0 0.0
    %5154 = vmatprep.subr.mxu0 0.0
    %5155 = vmatpush1.msra.mxu0 0.0
    %5156 = vmatprep.mubr.f32.mxu0 0.0
    %5157 = vmatmul.mubr.f32.gmra.mrb[0].mxu0 %v5072
    %v5158 = vpop.f32.mrb[0].mxu0
    %v5159 = vadd.f32 0.0, %v5158
    %v5160 = vpop.f32.mrb[0].mxu0
    %5161 = vmatprep.mubr.f32.mxu0 0.0
    %5162 = vmatmul.mubr.f32.gmra.mrb[0].mxu0 %v5073
    %v5163 = vpop.f32.mrb[0].mxu0
    %v5164 = vadd.f32 0.0, %v5163
    %v5165 = vpop.f32.mrb[0].mxu0
    %5166 = vmatprep.mubr.f32.mxu0 0.0
    %5167 = vmatmul.mubr.f32.gmra.mrb[0].mxu0 %v5074
    %v5168 = vpop.f32.mrb[0].mxu0
    %v5169 = vadd.f32 0.0, %v5168
    %v5170 = vpop.f32.mrb[0].mxu0
    %5171 = vdwg.mxu0
    %v5172 = vadd.f32 %v5069, %v5159
    %v5173 = vadd.f32 %v5070, %v5164
    %v5174 = vadd.f32 %v5071, %v5169
    %v5175 = vld [vmem:[%s9] sm:$0x1]
    %v5177 = vlaneseq
    %v5178 = vshrl.u32 %v5177, 7
    %v5179 = vsub.s32 0, %v5178
    %v5180 = vrot.slane %v5175, %v5179
    %v5182 = vadd.f32 %v5172, %v5180
    %v5183 = vadd.f32 %v5173, %v5180
    %v5184 = vadd.f32 %v5174, %v5180
    %v5187 = vrot.slane %v5182, 1
    %v5188 = vrot.slane %v5183, 1
    %v5189 = vsel %vm2593, %v5187, %v5188
    %v5192 = vmax.f32 %v5182, %v5189
    %v5193 = vmax.f32 %v5183, %v5188
    %v5195 = vrot.slane %v5184, 1
    %v5196 = vsel %vm2593, %v5188, %v5195
    %v5199 = vmax.f32 %v5183, %v5196
    %v5200 = vmax.f32 %v5184, %v5195
    %vm5204 = vcmask 1041408
    %v5205 = vrot.slane %v5192, 6
    %v5206 = vrot.slane %v5199, 6
    %v5207 = vsel %vm5204, %v5205, %v5206
    %v5208 = vrot.slane %v5200, 6
    %v5209 = vsel %vm5204, %v5206, %v5208
    %v5212 = vmax.f32 %v5192, %v5207
    %v5213 = vmax.f32 %v5193, %v5209
    %v5214 = vxor.u32 %v5212, 2147483648
    %v5215 = vmul.f32 %v5214, 1.442695
    %v5216 = vpow.pop %v5215
    %v5217 = vadd.f32 %v5216, 1.0
    %v5218 = vrcp.pop %v5217
    %v5219 = vmul.f32 1.0, %v5218
    %s5220 = scalar_lea.vmem [#allocation5], %s69
    %5221 = vst [vmem:[%s5220] sm:$0x1] %v5219
    %s5222 = sadd.s32 %s69, 8
    %s5223 = scalar_lea.vmem [#allocation5], %s5222
    %5224 = vst [vmem:[%s5223 - $0x1] sm:$0x2] %v5219
    %s5225 = sadd.s32 %s69, 16
    %s5226 = scalar_lea.vmem [#allocation5], %s5225
    %5227 = vst [vmem:[%s5226 - $0x2] sm:$0x4] %v5219
    %v5228 = vxor.u32 %v5213, 2147483648
    %v5229 = vmul.f32 %v5228, 1.442695
    %v5230 = vpow.pop %v5229
    %v5231 = vadd.f32 %v5230, 1.0
    %v5232 = vrcp.pop %v5231
    %v5233 = vmul.f32 1.0, %v5232
    %s5234 = sadd.s32 %s69, 24
    %s5235 = scalar_lea.vmem [#allocation5], %s5234
    %5236 = vst [vmem:[%s5235 - $0x6] sm:$0x40] %v5219
    %s5237 = sadd.s32 %s69, 32
    %s5238 = scalar_lea.vmem [#allocation5], %s5237
    %5239 = vst [vmem:[%s5238 - $0x7] sm:$0x80] %v5219
    %s5240 = sadd.s32 %s69, 40
    %s5241 = scalar_lea.vmem [#allocation5], %s5240
    %5242 = vst [vmem:[%s5241] sm:$0x1] %v5233
    %s5243 = sadd.s32 %s69, 48
    %s5244 = scalar_lea.vmem [#allocation5], %s5243
    %5245 = vst [vmem:[%s5244 - $0x4] sm:$0x10] %v5233
    %s5246 = sadd.s32 %s69, 56
    %s5247 = scalar_lea.vmem [#allocation5], %s5246
    %5248 = vst [vmem:[%s5247 - $0x5] sm:$0x20] %v5233
    %s5249 = sadd.s32 %s69, 64
    %s5250 = scalar_lea.vmem [#allocation5], %s5249
    %5251 = vst [vmem:[%s5250 - $0x6] sm:$0x40] %v5233
  $region90: #{forward.1} parent=0 // loop_footer
    %s73 = sadd.s32 1, %s69
  $region91: #{forward.1} parent=0 // loop_footer_branch
    %68 = sbr.rel target = $region87
  $region92: #{forward.1} parent=0 // loop_exit
    _
  %v5252 = vld [vmem:[#allocation5] sm:$0xff]
  %v5253 = vld [vmem:[%s14] sm:$0xff]
  %v5254 = vld [vmem:[%s14 + $0x8] sm:$0xff]
  %v5255 = vld [vmem:[%s14 + $0x10] sm:$0xff]
  %v5256 = vld [vmem:[%s14 + $0x18] sm:$0xff]
  %v5257 = vld [vmem:[%s14 + $0x20] sm:$0xff]
  %v5258 = vld [vmem:[%s14 + $0x28] sm:$0xff]
  %v5259 = vld [vmem:[%s14 + $0x30] sm:$0xff]
  %v5260 = vld [vmem:[%s14 + $0x38] sm:$0xff]
  %v5261 = vld [vmem:[%s14 + $0x40] sm:$0xff]
  %v5262 = vld [vmem:[%s14 + $0x48] sm:$0xff]
  %v5263 = vld [vmem:[%s14 + $0x50] sm:$0xff]
  %v5264 = vld [vmem:[%s14 + $0x58] sm:$0xff]
  %v5265 = vld [vmem:[%s14 + $0x60] sm:$0xff]
  %v5266 = vld [vmem:[%s14 + $0x68] sm:$0xff]
  %v5267 = vld [vmem:[%s14 + $0x70] sm:$0xff]
  %v5268 = vld [vmem:[%s14 + $0x78] sm:$0xff]
  %v5269 = vld [vmem:[%s14 + $0x80] sm:$0xff]
  %v5270 = vld [vmem:[%s14 + $0x88] sm:$0xff]
  %v5271 = vld [vmem:[%s14 + $0x90] sm:$0xff]
  %v5272 = vld [vmem:[%s14 + $0x98] sm:$0xff]
  %v5273 = vld [vmem:[%s14 + $0xa0] sm:$0xff]
  %v5274 = vld [vmem:[%s14 + $0xa8] sm:$0xff]
  %v5275 = vld [vmem:[%s14 + $0xb0] sm:$0xff]
  %v5276 = vld [vmem:[%s14 + $0xb8] sm:$0xff]
  %v5277 = vld [vmem:[%s14 + $0xc0] sm:$0xff]
  %v5278 = vld [vmem:[%s14 + $0xc8] sm:$0xff]
  %v5279 = vld [vmem:[%s14 + $0xd0] sm:$0xff]
  %v5280 = vld [vmem:[%s14 + $0xd8] sm:$0xff]
  %v5281 = vld [vmem:[%s14 + $0xe0] sm:$0xff]
  %v5282 = vld [vmem:[%s14 + $0xe8] sm:$0xff]
  %v5283 = vld [vmem:[%s14 + $0xf0] sm:$0xff]
  %v5284 = vld [vmem:[%s14 + $0xf8] sm:$0xff]
  %v5285 = vld [vmem:[%s14 + $0x100] sm:$0xff]
  %v5286 = vld [vmem:[%s14 + $0x108] sm:$0xff]
  %v5287 = vld [vmem:[%s14 + $0x110] sm:$0xff]
  %v5288 = vld [vmem:[%s14 + $0x118] sm:$0xff]
  %v5289 = vld [vmem:[%s14 + $0x120] sm:$0xff]
  %v5290 = vld [vmem:[%s14 + $0x128] sm:$0xff]
  %v5291 = vld [vmem:[%s14 + $0x130] sm:$0xff]
  %v5292 = vld [vmem:[%s14 + $0x138] sm:$0xff]
  %v5293 = vld [vmem:[%s14 + $0x140] sm:$0xff]
  %v5294 = vld [vmem:[%s14 + $0x148] sm:$0xff]
  %v5295 = vld [vmem:[%s14 + $0x150] sm:$0xff]
  %v5296 = vld [vmem:[%s14 + $0x158] sm:$0xff]
  %v5297 = vld [vmem:[%s14 + $0x160] sm:$0xff]
  %v5298 = vld [vmem:[%s14 + $0x168] sm:$0xff]
  %v5299 = vld [vmem:[%s14 + $0x170] sm:$0xff]
  %v5300 = vld [vmem:[%s14 + $0x178] sm:$0xff]
  %v5301 = vld [vmem:[%s14 + $0x180] sm:$0xff]
  %v5302 = vld [vmem:[%s14 + $0x188] sm:$0xff]
  %v5303 = vld [vmem:[%s14 + $0x190] sm:$0xff]
  %v5304 = vld [vmem:[%s14 + $0x198] sm:$0xff]
  %v5305 = vld [vmem:[%s14 + $0x1a0] sm:$0xff]
  %v5306 = vld [vmem:[%s14 + $0x1a8] sm:$0xff]
  %v5307 = vld [vmem:[%s14 + $0x1b0] sm:$0xff]
  %v5308 = vld [vmem:[%s14 + $0x1b8] sm:$0xff]
  %v5309 = vld [vmem:[%s14 + $0x1c0] sm:$0xff]
  %v5310 = vld [vmem:[%s14 + $0x1c8] sm:$0xff]
  %v5311 = vld [vmem:[%s14 + $0x1d0] sm:$0xff]
  %v5312 = vld [vmem:[%s14 + $0x1d8] sm:$0xff]
  %v5313 = vld [vmem:[%s14 + $0x1e0] sm:$0xff]
  %v5314 = vld [vmem:[%s14 + $0x1e8] sm:$0xff]
  %v5315 = vld [vmem:[%s14 + $0x1f0] sm:$0xff]
  %v5316 = vld [vmem:[%s14 + $0x1f8] sm:$0xff]
  %v5317 = vld [vmem:[%s14 + $0x200] sm:$0xff]
  %v5318 = vld [vmem:[%s14 + $0x208] sm:$0xff]
  %v5319 = vld [vmem:[%s14 + $0x210] sm:$0xff]
  %v5320 = vld [vmem:[%s14 + $0x218] sm:$0xff]
  %v5321 = vld [vmem:[%s14 + $0x220] sm:$0xff]
  %v5322 = vld [vmem:[%s14 + $0x228] sm:$0xff]
  %v5323 = vld [vmem:[%s14 + $0x230] sm:$0xff]
  %v5324 = vld [vmem:[%s14 + $0x238] sm:$0xff]
  %v5325 = vld [vmem:[%s14 + $0x240] sm:$0xff]
  %v5326 = vld [vmem:[%s14 + $0x248] sm:$0xff]
  %v5327 = vld [vmem:[%s14 + $0x250] sm:$0xff]
  %v5328 = vld [vmem:[%s14 + $0x258] sm:$0xff]
  %v5329 = vld [vmem:[%s14 + $0x260] sm:$0xff]
  %v5330 = vld [vmem:[%s14 + $0x268] sm:$0xff]
  %v5331 = vld [vmem:[%s14 + $0x270] sm:$0xff]
  %v5332 = vld [vmem:[%s14 + $0x278] sm:$0xff]
  %s5333 = scalar_lea.vmem [#allocation5], 8
  %v5334 = vld [vmem:[%s5333] sm:$0xff]
  %s5335 = scalar_lea.vmem %s14, 640
  %v5336 = vld [vmem:[%s5335] sm:$0xff]
  %v5337 = vld [vmem:[%s5335 + $0x8] sm:$0xff]
  %v5338 = vld [vmem:[%s5335 + $0x10] sm:$0xff]
  %v5339 = vld [vmem:[%s5335 + $0x18] sm:$0xff]
  %v5340 = vld [vmem:[%s5335 + $0x20] sm:$0xff]
  %v5341 = vld [vmem:[%s5335 + $0x28] sm:$0xff]
  %v5342 = vld [vmem:[%s5335 + $0x30] sm:$0xff]
  %v5343 = vld [vmem:[%s5335 + $0x38] sm:$0xff]
  %v5344 = vld [vmem:[%s5335 + $0x40] sm:$0xff]
  %v5345 = vld [vmem:[%s5335 + $0x48] sm:$0xff]
  %v5346 = vld [vmem:[%s5335 + $0x50] sm:$0xff]
  %v5347 = vld [vmem:[%s5335 + $0x58] sm:$0xff]
  %v5348 = vld [vmem:[%s5335 + $0x60] sm:$0xff]
  %v5349 = vld [vmem:[%s5335 + $0x68] sm:$0xff]
  %v5350 = vld [vmem:[%s5335 + $0x70] sm:$0xff]
  %v5351 = vld [vmem:[%s5335 + $0x78] sm:$0xff]
  %v5352 = vld [vmem:[%s5335 + $0x80] sm:$0xff]
  %v5353 = vld [vmem:[%s5335 + $0x88] sm:$0xff]
  %v5354 = vld [vmem:[%s5335 + $0x90] sm:$0xff]
  %v5355 = vld [vmem:[%s5335 + $0x98] sm:$0xff]
  %v5356 = vld [vmem:[%s5335 + $0xa0] sm:$0xff]
  %v5357 = vld [vmem:[%s5335 + $0xa8] sm:$0xff]
  %v5358 = vld [vmem:[%s5335 + $0xb0] sm:$0xff]
  %v5359 = vld [vmem:[%s5335 + $0xb8] sm:$0xff]
  %v5360 = vld [vmem:[%s5335 + $0xc0] sm:$0xff]
  %v5361 = vld [vmem:[%s5335 + $0xc8] sm:$0xff]
  %v5362 = vld [vmem:[%s5335 + $0xd0] sm:$0xff]
  %v5363 = vld [vmem:[%s5335 + $0xd8] sm:$0xff]
  %v5364 = vld [vmem:[%s5335 + $0xe0] sm:$0xff]
  %v5365 = vld [vmem:[%s5335 + $0xe8] sm:$0xff]
  %v5366 = vld [vmem:[%s5335 + $0xf0] sm:$0xff]
  %v5367 = vld [vmem:[%s5335 + $0xf8] sm:$0xff]
  %v5368 = vld [vmem:[%s5335 + $0x100] sm:$0xff]
  %v5369 = vld [vmem:[%s5335 + $0x108] sm:$0xff]
  %v5370 = vld [vmem:[%s5335 + $0x110] sm:$0xff]
  %v5371 = vld [vmem:[%s5335 + $0x118] sm:$0xff]
  %v5372 = vld [vmem:[%s5335 + $0x120] sm:$0xff]
  %v5373 = vld [vmem:[%s5335 + $0x128] sm:$0xff]
  %v5374 = vld [vmem:[%s5335 + $0x130] sm:$0xff]
  %v5375 = vld [vmem:[%s5335 + $0x138] sm:$0xff]
  %v5376 = vld [vmem:[%s5335 + $0x140] sm:$0xff]
  %v5377 = vld [vmem:[%s5335 + $0x148] sm:$0xff]
  %v5378 = vld [vmem:[%s5335 + $0x150] sm:$0xff]
  %v5379 = vld [vmem:[%s5335 + $0x158] sm:$0xff]
  %v5380 = vld [vmem:[%s5335 + $0x160] sm:$0xff]
  %v5381 = vld [vmem:[%s5335 + $0x168] sm:$0xff]
  %v5382 = vld [vmem:[%s5335 + $0x170] sm:$0xff]
  %v5383 = vld [vmem:[%s5335 + $0x178] sm:$0xff]
  %v5384 = vld [vmem:[%s5335 + $0x180] sm:$0xff]
  %v5385 = vld [vmem:[%s5335 + $0x188] sm:$0xff]
  %v5386 = vld [vmem:[%s5335 + $0x190] sm:$0xff]
  %v5387 = vld [vmem:[%s5335 + $0x198] sm:$0xff]
  %v5388 = vld [vmem:[%s5335 + $0x1a0] sm:$0xff]
  %v5389 = vld [vmem:[%s5335 + $0x1a8] sm:$0xff]
  %v5390 = vld [vmem:[%s5335 + $0x1b0] sm:$0xff]
  %v5391 = vld [vmem:[%s5335 + $0x1b8] sm:$0xff]
  %v5392 = vld [vmem:[%s5335 + $0x1c0] sm:$0xff]
  %v5393 = vld [vmem:[%s5335 + $0x1c8] sm:$0xff]
  %v5394 = vld [vmem:[%s5335 + $0x1d0] sm:$0xff]
  %v5395 = vld [vmem:[%s5335 + $0x1d8] sm:$0xff]
  %v5396 = vld [vmem:[%s5335 + $0x1e0] sm:$0xff]
  %v5397 = vld [vmem:[%s5335 + $0x1e8] sm:$0xff]
  %v5398 = vld [vmem:[%s5335 + $0x1f0] sm:$0xff]
  %v5399 = vld [vmem:[%s5335 + $0x1f8] sm:$0xff]
  %v5400 = vld [vmem:[%s5335 + $0x200] sm:$0xff]
  %v5401 = vld [vmem:[%s5335 + $0x208] sm:$0xff]
  %v5402 = vld [vmem:[%s5335 + $0x210] sm:$0xff]
  %v5403 = vld [vmem:[%s5335 + $0x218] sm:$0xff]
  %v5404 = vld [vmem:[%s5335 + $0x220] sm:$0xff]
  %v5405 = vld [vmem:[%s5335 + $0x228] sm:$0xff]
  %v5406 = vld [vmem:[%s5335 + $0x230] sm:$0xff]
  %v5407 = vld [vmem:[%s5335 + $0x238] sm:$0xff]
  %v5408 = vld [vmem:[%s5335 + $0x240] sm:$0xff]
  %v5409 = vld [vmem:[%s5335 + $0x248] sm:$0xff]
  %v5410 = vld [vmem:[%s5335 + $0x250] sm:$0xff]
  %v5411 = vld [vmem:[%s5335 + $0x258] sm:$0xff]
  %v5412 = vld [vmem:[%s5335 + $0x260] sm:$0xff]
  %v5413 = vld [vmem:[%s5335 + $0x268] sm:$0xff]
  %v5414 = vld [vmem:[%s5335 + $0x270] sm:$0xff]
  %v5415 = vld [vmem:[%s5335 + $0x278] sm:$0xff]
  %5416 = vmatprep.subr.mxu0 %v5337
  %5417 = vmatpush1.msra.mxu0 %v5336
  %5418 = vmatprep.subr.mxu0 %v5342
  %5419 = vmatpush1.msra.mxu0 %v5341
  %5420 = vmatprep.subr.mxu0 %v5347
  %5421 = vmatpush1.msra.mxu0 %v5346
  %5422 = vmatprep.subr.mxu0 %v5352
  %5423 = vmatpush1.msra.mxu0 %v5351
  %5424 = vmatprep.subr.mxu0 %v5357
  %5425 = vmatpush1.msra.mxu0 %v5356
  %5426 = vmatprep.subr.mxu0 %v5362
  %5427 = vmatpush1.msra.mxu0 %v5361
  %5428 = vmatprep.subr.mxu0 %v5367
  %5429 = vmatpush1.msra.mxu0 %v5366
  %5430 = vmatprep.subr.mxu0 %v5372
  %5431 = vmatpush1.msra.mxu0 %v5371
  %5432 = vmatprep.subr.mxu0 %v5377
  %5433 = vmatpush1.msra.mxu0 %v5376
  %5434 = vmatprep.subr.mxu0 %v5382
  %5435 = vmatpush1.msra.mxu0 %v5381
  %5436 = vmatprep.subr.mxu0 %v5387
  %5437 = vmatpush1.msra.mxu0 %v5386
  %5438 = vmatprep.subr.mxu0 %v5392
  %5439 = vmatpush1.msra.mxu0 %v5391
  %5440 = vmatprep.subr.mxu0 %v5397
  %5441 = vmatpush1.msra.mxu0 %v5396
  %5442 = vmatprep.subr.mxu0 %v5402
  %5443 = vmatpush1.msra.mxu0 %v5401
  %5444 = vmatprep.subr.mxu0 %v5407
  %5445 = vmatpush1.msra.mxu0 %v5406
  %5446 = vmatprep.subr.mxu0 %v5412
  %5447 = vmatpush1.msra.mxu0 %v5411
  %5448 = vmatprep.subr.mxu0 0.0
  %5449 = vmatpush1.msra.mxu0 0.0
  %5450 = vmatprep.subr.mxu0 0.0
  %5451 = vmatpush1.msra.mxu0 0.0
  %5452 = vmatprep.subr.mxu0 0.0
  %5453 = vmatpush1.msra.mxu0 0.0
  %5454 = vmatprep.subr.mxu0 0.0
  %5455 = vmatpush1.msra.mxu0 0.0
  %5456 = vmatprep.subr.mxu0 0.0
  %5457 = vmatpush1.msra.mxu0 0.0
  %5458 = vmatprep.subr.mxu0 0.0
  %5459 = vmatpush1.msra.mxu0 0.0
  %5460 = vmatprep.subr.mxu0 0.0
  %5461 = vmatpush1.msra.mxu0 0.0
  %5462 = vmatprep.subr.mxu0 0.0
  %5463 = vmatpush1.msra.mxu0 0.0
  %5464 = vmatprep.subr.mxu0 0.0
  %5465 = vmatpush1.msra.mxu0 0.0
  %5466 = vmatprep.subr.mxu0 0.0
  %5467 = vmatpush1.msra.mxu0 0.0
  %5468 = vmatprep.subr.mxu0 0.0
  %5469 = vmatpush1.msra.mxu0 0.0
  %5470 = vmatprep.subr.mxu0 0.0
  %5471 = vmatpush1.msra.mxu0 0.0
  %5472 = vmatprep.subr.mxu0 0.0
  %5473 = vmatpush1.msra.mxu0 0.0
  %5474 = vmatprep.subr.mxu0 0.0
  %5475 = vmatpush1.msra.mxu0 0.0
  %5476 = vmatprep.subr.mxu0 0.0
  %5477 = vmatpush1.msra.mxu0 0.0
  %5478 = vmatprep.subr.mxu0 0.0
  %5479 = vmatpush1.msra.mxu0 0.0
  %5480 = vmatprep.mubr.f32.mxu0 0.0
  %5481 = vmatmul.mubr.f32.gmra.mrb[0].mxu0 %v5334
  %v5482 = vpop.f32.mrb[0].mxu0
  %v5483 = vadd.f32 0.0, %v5482
  %v5484 = vpop.f32.mrb[0].mxu0
  %v5485 = vadd.f32 0.0, %v5484
  %5486 = vdwg.mxu0
  %5487 = vmatprep.subr.mxu0 %v5339
  %5488 = vmatpush1.msra.mxu0 %v5338
  %5489 = vmatprep.subr.mxu0 %v5344
  %5490 = vmatpush1.msra.mxu0 %v5343
  %5491 = vmatprep.subr.mxu0 %v5349
  %5492 = vmatpush1.msra.mxu0 %v5348
  %5493 = vmatprep.subr.mxu0 %v5354
  %5494 = vmatpush1.msra.mxu0 %v5353
  %5495 = vmatprep.subr.mxu0 %v5359
  %5496 = vmatpush1.msra.mxu0 %v5358
  %5497 = vmatprep.subr.mxu0 %v5364
  %5498 = vmatpush1.msra.mxu0 %v5363
  %5499 = vmatprep.subr.mxu0 %v5369
  %5500 = vmatpush1.msra.mxu0 %v5368
  %5501 = vmatprep.subr.mxu0 %v5374
  %5502 = vmatpush1.msra.mxu0 %v5373
  %5503 = vmatprep.subr.mxu0 %v5379
  %5504 = vmatpush1.msra.mxu0 %v5378
  %5505 = vmatprep.subr.mxu0 %v5384
  %5506 = vmatpush1.msra.mxu0 %v5383
  %5507 = vmatprep.subr.mxu0 %v5389
  %5508 = vmatpush1.msra.mxu0 %v5388
  %5509 = vmatprep.subr.mxu0 %v5394
  %5510 = vmatpush1.msra.mxu0 %v5393
  %5511 = vmatprep.subr.mxu0 %v5399
  %5512 = vmatpush1.msra.mxu0 %v5398
  %5513 = vmatprep.subr.mxu0 %v5404
  %5514 = vmatpush1.msra.mxu0 %v5403
  %5515 = vmatprep.subr.mxu0 %v5409
  %5516 = vmatpush1.msra.mxu0 %v5408
  %5517 = vmatprep.subr.mxu0 %v5414
  %5518 = vmatpush1.msra.mxu0 %v5413
  %5519 = vmatprep.subr.mxu0 0.0
  %5520 = vmatpush1.msra.mxu0 0.0
  %5521 = vmatprep.subr.mxu0 0.0
  %5522 = vmatpush1.msra.mxu0 0.0
  %5523 = vmatprep.subr.mxu0 0.0
  %5524 = vmatpush1.msra.mxu0 0.0
  %5525 = vmatprep.subr.mxu0 0.0
  %5526 = vmatpush1.msra.mxu0 0.0
  %5527 = vmatprep.subr.mxu0 0.0
  %5528 = vmatpush1.msra.mxu0 0.0
  %5529 = vmatprep.subr.mxu0 0.0
  %5530 = vmatpush1.msra.mxu0 0.0
  %5531 = vmatprep.subr.mxu0 0.0
  %5532 = vmatpush1.msra.mxu0 0.0
  %5533 = vmatprep.subr.mxu0 0.0
  %5534 = vmatpush1.msra.mxu0 0.0
  %5535 = vmatprep.subr.mxu0 0.0
  %5536 = vmatpush1.msra.mxu0 0.0
  %5537 = vmatprep.subr.mxu0 0.0
  %5538 = vmatpush1.msra.mxu0 0.0
  %5539 = vmatprep.subr.mxu0 0.0
  %5540 = vmatpush1.msra.mxu0 0.0
  %5541 = vmatprep.subr.mxu0 0.0
  %5542 = vmatpush1.msra.mxu0 0.0
  %5543 = vmatprep.subr.mxu0 0.0
  %5544 = vmatpush1.msra.mxu0 0.0
  %5545 = vmatprep.subr.mxu0 0.0
  %5546 = vmatpush1.msra.mxu0 0.0
  %5547 = vmatprep.subr.mxu0 0.0
  %5548 = vmatpush1.msra.mxu0 0.0
  %5549 = vmatprep.subr.mxu0 0.0
  %5550 = vmatpush1.msra.mxu0 0.0
  %5551 = vmatprep.mubr.f32.mxu0 0.0
  %5552 = vmatmul.mubr.f32.gmra.mrb[0].mxu0 %v5334
  %v5553 = vpop.f32.mrb[0].mxu0
  %v5554 = vadd.f32 0.0, %v5553
  %v5555 = vpop.f32.mrb[0].mxu0
  %v5556 = vadd.f32 0.0, %v5555
  %5557 = vdwg.mxu0
  %5558 = vmatprep.subr.mxu0 0.0
  %5559 = vmatpush1.msra.mxu0 %v5340
  %5560 = vmatprep.subr.mxu0 0.0
  %5561 = vmatpush1.msra.mxu0 %v5345
  %5562 = vmatprep.subr.mxu0 0.0
  %5563 = vmatpush1.msra.mxu0 %v5350
  %5564 = vmatprep.subr.mxu0 0.0
  %5565 = vmatpush1.msra.mxu0 %v5355
  %5566 = vmatprep.subr.mxu0 0.0
  %5567 = vmatpush1.msra.mxu0 %v5360
  %5568 = vmatprep.subr.mxu0 0.0
  %5569 = vmatpush1.msra.mxu0 %v5365
  %5570 = vmatprep.subr.mxu0 0.0
  %5571 = vmatpush1.msra.mxu0 %v5370
  %5572 = vmatprep.subr.mxu0 0.0
  %5573 = vmatpush1.msra.mxu0 %v5375
  %5574 = vmatprep.subr.mxu0 0.0
  %5575 = vmatpush1.msra.mxu0 %v5380
  %5576 = vmatprep.subr.mxu0 0.0
  %5577 = vmatpush1.msra.mxu0 %v5385
  %5578 = vmatprep.subr.mxu0 0.0
  %5579 = vmatpush1.msra.mxu0 %v5390
  %5580 = vmatprep.subr.mxu0 0.0
  %5581 = vmatpush1.msra.mxu0 %v5395
  %5582 = vmatprep.subr.mxu0 0.0
  %5583 = vmatpush1.msra.mxu0 %v5400
  %5584 = vmatprep.subr.mxu0 0.0
  %5585 = vmatpush1.msra.mxu0 %v5405
  %5586 = vmatprep.subr.mxu0 0.0
  %5587 = vmatpush1.msra.mxu0 %v5410
  %5588 = vmatprep.subr.mxu0 0.0
  %5589 = vmatpush1.msra.mxu0 %v5415
  %5590 = vmatprep.subr.mxu0 0.0
  %5591 = vmatpush1.msra.mxu0 0.0
  %5592 = vmatprep.subr.mxu0 0.0
  %5593 = vmatpush1.msra.mxu0 0.0
  %5594 = vmatprep.subr.mxu0 0.0
  %5595 = vmatpush1.msra.mxu0 0.0
  %5596 = vmatprep.subr.mxu0 0.0
  %5597 = vmatpush1.msra.mxu0 0.0
  %5598 = vmatprep.subr.mxu0 0.0
  %5599 = vmatpush1.msra.mxu0 0.0
  %5600 = vmatprep.subr.mxu0 0.0
  %5601 = vmatpush1.msra.mxu0 0.0
  %5602 = vmatprep.subr.mxu0 0.0
  %5603 = vmatpush1.msra.mxu0 0.0
  %5604 = vmatprep.subr.mxu0 0.0
  %5605 = vmatpush1.msra.mxu0 0.0
  %5606 = vmatprep.subr.mxu0 0.0
  %5607 = vmatpush1.msra.mxu0 0.0
  %5608 = vmatprep.subr.mxu0 0.0
  %5609 = vmatpush1.msra.mxu0 0.0
  %5610 = vmatprep.subr.mxu0 0.0
  %5611 = vmatpush1.msra.mxu0 0.0
  %5612 = vmatprep.subr.mxu0 0.0
  %5613 = vmatpush1.msra.mxu0 0.0
  %5614 = vmatprep.subr.mxu0 0.0
  %5615 = vmatpush1.msra.mxu0 0.0
  %5616 = vmatprep.subr.mxu0 0.0
  %5617 = vmatpush1.msra.mxu0 0.0
  %5618 = vmatprep.subr.mxu0 0.0
  %5619 = vmatpush1.msra.mxu0 0.0
  %5620 = vmatprep.subr.mxu0 0.0
  %5621 = vmatpush1.msra.mxu0 0.0
  %5622 = vmatprep.mubr.f32.mxu0 0.0
  %5623 = vmatmul.mubr.f32.gmra.mrb[0].mxu0 %v5334
  %v5624 = vpop.f32.mrb[0].mxu0
  %v5625 = vadd.f32 0.0, %v5624
  %v5626 = vpop.f32.mrb[0].mxu0
  %5627 = vdwg.mxu0
  %5628 = vmatprep.subr.mxu0 %v5254
  %5629 = vmatpush1.msra.mxu0 %v5253
  %5630 = vmatprep.subr.mxu0 %v5259
  %5631 = vmatpush1.msra.mxu0 %v5258
  %5632 = vmatprep.subr.mxu0 %v5264
  %5633 = vmatpush1.msra.mxu0 %v5263
  %5634 = vmatprep.subr.mxu0 %v5269
  %5635 = vmatpush1.msra.mxu0 %v5268
  %5636 = vmatprep.subr.mxu0 %v5274
  %5637 = vmatpush1.msra.mxu0 %v5273
  %5638 = vmatprep.subr.mxu0 %v5279
  %5639 = vmatpush1.msra.mxu0 %v5278
  %5640 = vmatprep.subr.mxu0 %v5284
  %5641 = vmatpush1.msra.mxu0 %v5283
  %5642 = vmatprep.subr.mxu0 %v5289
  %5643 = vmatpush1.msra.mxu0 %v5288
  %5644 = vmatprep.subr.mxu0 %v5294
  %5645 = vmatpush1.msra.mxu0 %v5293
  %5646 = vmatprep.subr.mxu0 %v5299
  %5647 = vmatpush1.msra.mxu0 %v5298
  %5648 = vmatprep.subr.mxu0 %v5304
  %5649 = vmatpush1.msra.mxu0 %v5303
  %5650 = vmatprep.subr.mxu0 %v5309
  %5651 = vmatpush1.msra.mxu0 %v5308
  %5652 = vmatprep.subr.mxu0 %v5314
  %5653 = vmatpush1.msra.mxu0 %v5313
  %5654 = vmatprep.subr.mxu0 %v5319
  %5655 = vmatpush1.msra.mxu0 %v5318
  %5656 = vmatprep.subr.mxu0 %v5324
  %5657 = vmatpush1.msra.mxu0 %v5323
  %5658 = vmatprep.subr.mxu0 %v5329
  %5659 = vmatpush1.msra.mxu0 %v5328
  %5660 = vmatprep.subr.mxu0 0.0
  %5661 = vmatpush1.msra.mxu0 0.0
  %5662 = vmatprep.subr.mxu0 0.0
  %5663 = vmatpush1.msra.mxu0 0.0
  %5664 = vmatprep.subr.mxu0 0.0
  %5665 = vmatpush1.msra.mxu0 0.0
  %5666 = vmatprep.subr.mxu0 0.0
  %5667 = vmatpush1.msra.mxu0 0.0
  %5668 = vmatprep.subr.mxu0 0.0
  %5669 = vmatpush1.msra.mxu0 0.0
  %5670 = vmatprep.subr.mxu0 0.0
  %5671 = vmatpush1.msra.mxu0 0.0
  %5672 = vmatprep.subr.mxu0 0.0
  %5673 = vmatpush1.msra.mxu0 0.0
  %5674 = vmatprep.subr.mxu0 0.0
  %5675 = vmatpush1.msra.mxu0 0.0
  %5676 = vmatprep.subr.mxu0 0.0
  %5677 = vmatpush1.msra.mxu0 0.0
  %5678 = vmatprep.subr.mxu0 0.0
  %5679 = vmatpush1.msra.mxu0 0.0
  %5680 = vmatprep.subr.mxu0 0.0
  %5681 = vmatpush1.msra.mxu0 0.0
  %5682 = vmatprep.subr.mxu0 0.0
  %5683 = vmatpush1.msra.mxu0 0.0
  %5684 = vmatprep.subr.mxu0 0.0
  %5685 = vmatpush1.msra.mxu0 0.0
  %5686 = vmatprep.subr.mxu0 0.0
  %5687 = vmatpush1.msra.mxu0 0.0
  %5688 = vmatprep.subr.mxu0 0.0
  %5689 = vmatpush1.msra.mxu0 0.0
  %5690 = vmatprep.subr.mxu0 0.0
  %5691 = vmatpush1.msra.mxu0 0.0
  %5692 = vmatprep.mubr.f32.mxu0 0.0
  %5693 = vmatmul.mubr.f32.gmra.mrb[0].mxu0 %v5252
  %v5694 = vpop.f32.mrb[0].mxu0
  %v5695 = vadd.f32 %v5483, %v5694
  %v5696 = vpop.f32.mrb[0].mxu0
  %v5697 = vadd.f32 %v5485, %v5696
  %5698 = vdwg.mxu0
  %5699 = vmatprep.subr.mxu0 %v5256
  %5700 = vmatpush1.msra.mxu0 %v5255
  %5701 = vmatprep.subr.mxu0 %v5261
  %5702 = vmatpush1.msra.mxu0 %v5260
  %5703 = vmatprep.subr.mxu0 %v5266
  %5704 = vmatpush1.msra.mxu0 %v5265
  %5705 = vmatprep.subr.mxu0 %v5271
  %5706 = vmatpush1.msra.mxu0 %v5270
  %5707 = vmatprep.subr.mxu0 %v5276
  %5708 = vmatpush1.msra.mxu0 %v5275
  %5709 = vmatprep.subr.mxu0 %v5281
  %5710 = vmatpush1.msra.mxu0 %v5280
  %5711 = vmatprep.subr.mxu0 %v5286
  %5712 = vmatpush1.msra.mxu0 %v5285
  %5713 = vmatprep.subr.mxu0 %v5291
  %5714 = vmatpush1.msra.mxu0 %v5290
  %5715 = vmatprep.subr.mxu0 %v5296
  %5716 = vmatpush1.msra.mxu0 %v5295
  %5717 = vmatprep.subr.mxu0 %v5301
  %5718 = vmatpush1.msra.mxu0 %v5300
  %5719 = vmatprep.subr.mxu0 %v5306
  %5720 = vmatpush1.msra.mxu0 %v5305
  %5721 = vmatprep.subr.mxu0 %v5311
  %5722 = vmatpush1.msra.mxu0 %v5310
  %5723 = vmatprep.subr.mxu0 %v5316
  %5724 = vmatpush1.msra.mxu0 %v5315
  %5725 = vmatprep.subr.mxu0 %v5321
  %5726 = vmatpush1.msra.mxu0 %v5320
  %5727 = vmatprep.subr.mxu0 %v5326
  %5728 = vmatpush1.msra.mxu0 %v5325
  %5729 = vmatprep.subr.mxu0 %v5331
  %5730 = vmatpush1.msra.mxu0 %v5330
  %5731 = vmatprep.subr.mxu0 0.0
  %5732 = vmatpush1.msra.mxu0 0.0
  %5733 = vmatprep.subr.mxu0 0.0
  %5734 = vmatpush1.msra.mxu0 0.0
  %5735 = vmatprep.subr.mxu0 0.0
  %5736 = vmatpush1.msra.mxu0 0.0
  %5737 = vmatprep.subr.mxu0 0.0
  %5738 = vmatpush1.msra.mxu0 0.0
  %5739 = vmatprep.subr.mxu0 0.0
  %5740 = vmatpush1.msra.mxu0 0.0
  %5741 = vmatprep.subr.mxu0 0.0
  %5742 = vmatpush1.msra.mxu0 0.0
  %5743 = vmatprep.subr.mxu0 0.0
  %5744 = vmatpush1.msra.mxu0 0.0
  %5745 = vmatprep.subr.mxu0 0.0
  %5746 = vmatpush1.msra.mxu0 0.0
  %5747 = vmatprep.subr.mxu0 0.0
  %5748 = vmatpush1.msra.mxu0 0.0
  %5749 = vmatprep.subr.mxu0 0.0
  %5750 = vmatpush1.msra.mxu0 0.0
  %5751 = vmatprep.subr.mxu0 0.0
  %5752 = vmatpush1.msra.mxu0 0.0
  %5753 = vmatprep.subr.mxu0 0.0
  %5754 = vmatpush1.msra.mxu0 0.0
  %5755 = vmatprep.subr.mxu0 0.0
  %5756 = vmatpush1.msra.mxu0 0.0
  %5757 = vmatprep.subr.mxu0 0.0
  %5758 = vmatpush1.msra.mxu0 0.0
  %5759 = vmatprep.subr.mxu0 0.0
  %5760 = vmatpush1.msra.mxu0 0.0
  %5761 = vmatprep.subr.mxu0 0.0
  %5762 = vmatpush1.msra.mxu0 0.0
  %5763 = vmatprep.mubr.f32.mxu0 0.0
  %5764 = vmatmul.mubr.f32.gmra.mrb[0].mxu0 %v5252
  %v5765 = vpop.f32.mrb[0].mxu0
  %v5766 = vadd.f32 %v5554, %v5765
  %v5767 = vpop.f32.mrb[0].mxu0
  %v5768 = vadd.f32 %v5556, %v5767
  %5769 = vdwg.mxu0
  %5770 = vmatprep.subr.mxu0 0.0
  %5771 = vmatpush1.msra.mxu0 %v5257
  %5772 = vmatprep.subr.mxu0 0.0
  %5773 = vmatpush1.msra.mxu0 %v5262
  %5774 = vmatprep.subr.mxu0 0.0
  %5775 = vmatpush1.msra.mxu0 %v5267
  %5776 = vmatprep.subr.mxu0 0.0
  %5777 = vmatpush1.msra.mxu0 %v5272
  %5778 = vmatprep.subr.mxu0 0.0
  %5779 = vmatpush1.msra.mxu0 %v5277
  %5780 = vmatprep.subr.mxu0 0.0
  %5781 = vmatpush1.msra.mxu0 %v5282
  %5782 = vmatprep.subr.mxu0 0.0
  %5783 = vmatpush1.msra.mxu0 %v5287
  %5784 = vmatprep.subr.mxu0 0.0
  %5785 = vmatpush1.msra.mxu0 %v5292
  %5786 = vmatprep.subr.mxu0 0.0
  %5787 = vmatpush1.msra.mxu0 %v5297
  %5788 = vmatprep.subr.mxu0 0.0
  %5789 = vmatpush1.msra.mxu0 %v5302
  %5790 = vmatprep.subr.mxu0 0.0
  %5791 = vmatpush1.msra.mxu0 %v5307
  %5792 = vmatprep.subr.mxu0 0.0
  %5793 = vmatpush1.msra.mxu0 %v5312
  %5794 = vmatprep.subr.mxu0 0.0
  %5795 = vmatpush1.msra.mxu0 %v5317
  %5796 = vmatprep.subr.mxu0 0.0
  %5797 = vmatpush1.msra.mxu0 %v5322
  %5798 = vmatprep.subr.mxu0 0.0
  %5799 = vmatpush1.msra.mxu0 %v5327
  %5800 = vmatprep.subr.mxu0 0.0
  %5801 = vmatpush1.msra.mxu0 %v5332
  %5802 = vmatprep.subr.mxu0 0.0
  %5803 = vmatpush1.msra.mxu0 0.0
  %5804 = vmatprep.subr.mxu0 0.0
  %5805 = vmatpush1.msra.mxu0 0.0
  %5806 = vmatprep.subr.mxu0 0.0
  %5807 = vmatpush1.msra.mxu0 0.0
  %5808 = vmatprep.subr.mxu0 0.0
  %5809 = vmatpush1.msra.mxu0 0.0
  %5810 = vmatprep.subr.mxu0 0.0
  %5811 = vmatpush1.msra.mxu0 0.0
  %5812 = vmatprep.subr.mxu0 0.0
  %5813 = vmatpush1.msra.mxu0 0.0
  %5814 = vmatprep.subr.mxu0 0.0
  %5815 = vmatpush1.msra.mxu0 0.0
  %5816 = vmatprep.subr.mxu0 0.0
  %5817 = vmatpush1.msra.mxu0 0.0
  %5818 = vmatprep.subr.mxu0 0.0
  %5819 = vmatpush1.msra.mxu0 0.0
  %5820 = vmatprep.subr.mxu0 0.0
  %5821 = vmatpush1.msra.mxu0 0.0
  %5822 = vmatprep.subr.mxu0 0.0
  %5823 = vmatpush1.msra.mxu0 0.0
  %5824 = vmatprep.subr.mxu0 0.0
  %5825 = vmatpush1.msra.mxu0 0.0
  %5826 = vmatprep.subr.mxu0 0.0
  %5827 = vmatpush1.msra.mxu0 0.0
  %5828 = vmatprep.subr.mxu0 0.0
  %5829 = vmatpush1.msra.mxu0 0.0
  %5830 = vmatprep.subr.mxu0 0.0
  %5831 = vmatpush1.msra.mxu0 0.0
  %5832 = vmatprep.subr.mxu0 0.0
  %5833 = vmatpush1.msra.mxu0 0.0
  %5834 = vmatprep.mubr.f32.mxu0 0.0
  %5835 = vmatmul.mubr.f32.gmra.mrb[0].mxu0 %v5252
  %v5836 = vpop.f32.mrb[0].mxu0
  %v5837 = vadd.f32 %v5625, %v5836
  %v5838 = vpop.f32.mrb[0].mxu0
  %5839 = vdwg.mxu0
  %s5840 = scalar_lea.vmem [#allocation5], 16
  %v5841 = vld [vmem:[%s5840] sm:$0xff]
  %s5842 = scalar_lea.vmem %s14, 1280
  %v5843 = vld [vmem:[%s5842] sm:$0xff]
  %v5844 = vld [vmem:[%s5842 + $0x8] sm:$0xff]
  %v5845 = vld [vmem:[%s5842 + $0x10] sm:$0xff]
  %v5846 = vld [vmem:[%s5842 + $0x18] sm:$0xff]
  %v5847 = vld [vmem:[%s5842 + $0x20] sm:$0xff]
  %v5848 = vld [vmem:[%s5842 + $0x28] sm:$0xff]
  %v5849 = vld [vmem:[%s5842 + $0x30] sm:$0xff]
  %v5850 = vld [vmem:[%s5842 + $0x38] sm:$0xff]
  %v5851 = vld [vmem:[%s5842 + $0x40] sm:$0xff]
  %v5852 = vld [vmem:[%s5842 + $0x48] sm:$0xff]
  %v5853 = vld [vmem:[%s5842 + $0x50] sm:$0xff]
  %v5854 = vld [vmem:[%s5842 + $0x58] sm:$0xff]
  %v5855 = vld [vmem:[%s5842 + $0x60] sm:$0xff]
  %v5856 = vld [vmem:[%s5842 + $0x68] sm:$0xff]
  %v5857 = vld [vmem:[%s5842 + $0x70] sm:$0xff]
  %v5858 = vld [vmem:[%s5842 + $0x78] sm:$0xff]
  %v5859 = vld [vmem:[%s5842 + $0x80] sm:$0xff]
  %v5860 = vld [vmem:[%s5842 + $0x88] sm:$0xff]
  %v5861 = vld [vmem:[%s5842 + $0x90] sm:$0xff]
  %v5862 = vld [vmem:[%s5842 + $0x98] sm:$0xff]
  %v5863 = vld [vmem:[%s5842 + $0xa0] sm:$0xff]
  %v5864 = vld [vmem:[%s5842 + $0xa8] sm:$0xff]
  %v5865 = vld [vmem:[%s5842 + $0xb0] sm:$0xff]
  %v5866 = vld [vmem:[%s5842 + $0xb8] sm:$0xff]
  %v5867 = vld [vmem:[%s5842 + $0xc0] sm:$0xff]
  %v5868 = vld [vmem:[%s5842 + $0xc8] sm:$0xff]
  %v5869 = vld [vmem:[%s5842 + $0xd0] sm:$0xff]
  %v5870 = vld [vmem:[%s5842 + $0xd8] sm:$0xff]
  %v5871 = vld [vmem:[%s5842 + $0xe0] sm:$0xff]
  %v5872 = vld [vmem:[%s5842 + $0xe8] sm:$0xff]
  %v5873 = vld [vmem:[%s5842 + $0xf0] sm:$0xff]
  %v5874 = vld [vmem:[%s5842 + $0xf8] sm:$0xff]
  %v5875 = vld [vmem:[%s5842 + $0x100] sm:$0xff]
  %v5876 = vld [vmem:[%s5842 + $0x108] sm:$0xff]
  %v5877 = vld [vmem:[%s5842 + $0x110] sm:$0xff]
  %v5878 = vld [vmem:[%s5842 + $0x118] sm:$0xff]
  %v5879 = vld [vmem:[%s5842 + $0x120] sm:$0xff]
  %v5880 = vld [vmem:[%s5842 + $0x128] sm:$0xff]
  %v5881 = vld [vmem:[%s5842 + $0x130] sm:$0xff]
  %v5882 = vld [vmem:[%s5842 + $0x138] sm:$0xff]
  %v5883 = vld [vmem:[%s5842 + $0x140] sm:$0xff]
  %v5884 = vld [vmem:[%s5842 + $0x148] sm:$0xff]
  %v5885 = vld [vmem:[%s5842 + $0x150] sm:$0xff]
  %v5886 = vld [vmem:[%s5842 + $0x158] sm:$0xff]
  %v5887 = vld [vmem:[%s5842 + $0x160] sm:$0xff]
  %v5888 = vld [vmem:[%s5842 + $0x168] sm:$0xff]
  %v5889 = vld [vmem:[%s5842 + $0x170] sm:$0xff]
  %v5890 = vld [vmem:[%s5842 + $0x178] sm:$0xff]
  %v5891 = vld [vmem:[%s5842 + $0x180] sm:$0xff]
  %v5892 = vld [vmem:[%s5842 + $0x188] sm:$0xff]
  %v5893 = vld [vmem:[%s5842 + $0x190] sm:$0xff]
  %v5894 = vld [vmem:[%s5842 + $0x198] sm:$0xff]
  %v5895 = vld [vmem:[%s5842 + $0x1a0] sm:$0xff]
  %v5896 = vld [vmem:[%s5842 + $0x1a8] sm:$0xff]
  %v5897 = vld [vmem:[%s5842 + $0x1b0] sm:$0xff]
  %v5898 = vld [vmem:[%s5842 + $0x1b8] sm:$0xff]
  %v5899 = vld [vmem:[%s5842 + $0x1c0] sm:$0xff]
  %v5900 = vld [vmem:[%s5842 + $0x1c8] sm:$0xff]
  %v5901 = vld [vmem:[%s5842 + $0x1d0] sm:$0xff]
  %v5902 = vld [vmem:[%s5842 + $0x1d8] sm:$0xff]
  %v5903 = vld [vmem:[%s5842 + $0x1e0] sm:$0xff]
  %v5904 = vld [vmem:[%s5842 + $0x1e8] sm:$0xff]
  %v5905 = vld [vmem:[%s5842 + $0x1f0] sm:$0xff]
  %v5906 = vld [vmem:[%s5842 + $0x1f8] sm:$0xff]
  %v5907 = vld [vmem:[%s5842 + $0x200] sm:$0xff]
  %v5908 = vld [vmem:[%s5842 + $0x208] sm:$0xff]
  %v5909 = vld [vmem:[%s5842 + $0x210] sm:$0xff]
  %v5910 = vld [vmem:[%s5842 + $0x218] sm:$0xff]
  %v5911 = vld [vmem:[%s5842 + $0x220] sm:$0xff]
  %v5912 = vld [vmem:[%s5842 + $0x228] sm:$0xff]
  %v5913 = vld [vmem:[%s5842 + $0x230] sm:$0xff]
  %v5914 = vld [vmem:[%s5842 + $0x238] sm:$0xff]
  %v5915 = vld [vmem:[%s5842 + $0x240] sm:$0xff]
  %v5916 = vld [vmem:[%s5842 + $0x248] sm:$0xff]
  %v5917 = vld [vmem:[%s5842 + $0x250] sm:$0xff]
  %v5918 = vld [vmem:[%s5842 + $0x258] sm:$0xff]
  %v5919 = vld [vmem:[%s5842 + $0x260] sm:$0xff]
  %v5920 = vld [vmem:[%s5842 + $0x268] sm:$0xff]
  %v5921 = vld [vmem:[%s5842 + $0x270] sm:$0xff]
  %v5922 = vld [vmem:[%s5842 + $0x278] sm:$0xff]
  %5923 = vmatprep.subr.mxu0 %v5844
  %5924 = vmatpush1.msra.mxu0 %v5843
  %5925 = vmatprep.subr.mxu0 %v5849
  %5926 = vmatpush1.msra.mxu0 %v5848
  %5927 = vmatprep.subr.mxu0 %v5854
  %5928 = vmatpush1.msra.mxu0 %v5853
  %5929 = vmatprep.subr.mxu0 %v5859
  %5930 = vmatpush1.msra.mxu0 %v5858
  %5931 = vmatprep.subr.mxu0 %v5864
  %5932 = vmatpush1.msra.mxu0 %v5863
  %5933 = vmatprep.subr.mxu0 %v5869
  %5934 = vmatpush1.msra.mxu0 %v5868
  %5935 = vmatprep.subr.mxu0 %v5874
  %5936 = vmatpush1.msra.mxu0 %v5873
  %5937 = vmatprep.subr.mxu0 %v5879
  %5938 = vmatpush1.msra.mxu0 %v5878
  %5939 = vmatprep.subr.mxu0 %v5884
  %5940 = vmatpush1.msra.mxu0 %v5883
  %5941 = vmatprep.subr.mxu0 %v5889
  %5942 = vmatpush1.msra.mxu0 %v5888
  %5943 = vmatprep.subr.mxu0 %v5894
  %5944 = vmatpush1.msra.mxu0 %v5893
  %5945 = vmatprep.subr.mxu0 %v5899
  %5946 = vmatpush1.msra.mxu0 %v5898
  %5947 = vmatprep.subr.mxu0 %v5904
  %5948 = vmatpush1.msra.mxu0 %v5903
  %5949 = vmatprep.subr.mxu0 %v5909
  %5950 = vmatpush1.msra.mxu0 %v5908
  %5951 = vmatprep.subr.mxu0 %v5914
  %5952 = vmatpush1.msra.mxu0 %v5913
  %5953 = vmatprep.subr.mxu0 %v5919
  %5954 = vmatpush1.msra.mxu0 %v5918
  %5955 = vmatprep.subr.mxu0 0.0
  %5956 = vmatpush1.msra.mxu0 0.0
  %5957 = vmatprep.subr.mxu0 0.0
  %5958 = vmatpush1.msra.mxu0 0.0
  %5959 = vmatprep.subr.mxu0 0.0
  %5960 = vmatpush1.msra.mxu0 0.0
  %5961 = vmatprep.subr.mxu0 0.0
  %5962 = vmatpush1.msra.mxu0 0.0
  %5963 = vmatprep.subr.mxu0 0.0
  %5964 = vmatpush1.msra.mxu0 0.0
  %5965 = vmatprep.subr.mxu0 0.0
  %5966 = vmatpush1.msra.mxu0 0.0
  %5967 = vmatprep.subr.mxu0 0.0
  %5968 = vmatpush1.msra.mxu0 0.0
  %5969 = vmatprep.subr.mxu0 0.0
  %5970 = vmatpush1.msra.mxu0 0.0
  %5971 = vmatprep.subr.mxu0 0.0
  %5972 = vmatpush1.msra.mxu0 0.0
  %5973 = vmatprep.subr.mxu0 0.0
  %5974 = vmatpush1.msra.mxu0 0.0
  %5975 = vmatprep.subr.mxu0 0.0
  %5976 = vmatpush1.msra.mxu0 0.0
  %5977 = vmatprep.subr.mxu0 0.0
  %5978 = vmatpush1.msra.mxu0 0.0
  %5979 = vmatprep.subr.mxu0 0.0
  %5980 = vmatpush1.msra.mxu0 0.0
  %5981 = vmatprep.subr.mxu0 0.0
  %5982 = vmatpush1.msra.mxu0 0.0
  %5983 = vmatprep.subr.mxu0 0.0
  %5984 = vmatpush1.msra.mxu0 0.0
  %5985 = vmatprep.subr.mxu0 0.0
  %5986 = vmatpush1.msra.mxu0 0.0
  %5987 = vmatprep.mubr.f32.mxu0 0.0
  %5988 = vmatmul.mubr.f32.gmra.mrb[0].mxu0 %v5841
  %v5989 = vpop.f32.mrb[0].mxu0
  %v5990 = vadd.f32 0.0, %v5989
  %v5991 = vpop.f32.mrb[0].mxu0
  %v5992 = vadd.f32 0.0, %v5991
  %5993 = vdwg.mxu0
  %5994 = vmatprep.subr.mxu0 %v5846
  %5995 = vmatpush1.msra.mxu0 %v5845
  %5996 = vmatprep.subr.mxu0 %v5851
  %5997 = vmatpush1.msra.mxu0 %v5850
  %5998 = vmatprep.subr.mxu0 %v5856
  %5999 = vmatpush1.msra.mxu0 %v5855
  %6000 = vmatprep.subr.mxu0 %v5861
  %6001 = vmatpush1.msra.mxu0 %v5860
  %6002 = vmatprep.subr.mxu0 %v5866
  %6003 = vmatpush1.msra.mxu0 %v5865
  %6004 = vmatprep.subr.mxu0 %v5871
  %6005 = vmatpush1.msra.mxu0 %v5870
  %6006 = vmatprep.subr.mxu0 %v5876
  %6007 = vmatpush1.msra.mxu0 %v5875
  %6008 = vmatprep.subr.mxu0 %v5881
  %6009 = vmatpush1.msra.mxu0 %v5880
  %6010 = vmatprep.subr.mxu0 %v5886
  %6011 = vmatpush1.msra.mxu0 %v5885
  %6012 = vmatprep.subr.mxu0 %v5891
  %6013 = vmatpush1.msra.mxu0 %v5890
  %6014 = vmatprep.subr.mxu0 %v5896
  %6015 = vmatpush1.msra.mxu0 %v5895
  %6016 = vmatprep.subr.mxu0 %v5901
  %6017 = vmatpush1.msra.mxu0 %v5900
  %6018 = vmatprep.subr.mxu0 %v5906
  %6019 = vmatpush1.msra.mxu0 %v5905
  %6020 = vmatprep.subr.mxu0 %v5911
  %6021 = vmatpush1.msra.mxu0 %v5910
  %6022 = vmatprep.subr.mxu0 %v5916
  %6023 = vmatpush1.msra.mxu0 %v5915
  %6024 = vmatprep.subr.mxu0 %v5921
  %6025 = vmatpush1.msra.mxu0 %v5920
  %6026 = vmatprep.subr.mxu0 0.0
  %6027 = vmatpush1.msra.mxu0 0.0
  %6028 = vmatprep.subr.mxu0 0.0
  %6029 = vmatpush1.msra.mxu0 0.0
  %6030 = vmatprep.subr.mxu0 0.0
  %6031 = vmatpush1.msra.mxu0 0.0
  %6032 = vmatprep.subr.mxu0 0.0
  %6033 = vmatpush1.msra.mxu0 0.0
  %6034 = vmatprep.subr.mxu0 0.0
  %6035 = vmatpush1.msra.mxu0 0.0
  %6036 = vmatprep.subr.mxu0 0.0
  %6037 = vmatpush1.msra.mxu0 0.0
  %6038 = vmatprep.subr.mxu0 0.0
  %6039 = vmatpush1.msra.mxu0 0.0
  %6040 = vmatprep.subr.mxu0 0.0
  %6041 = vmatpush1.msra.mxu0 0.0
  %6042 = vmatprep.subr.mxu0 0.0
  %6043 = vmatpush1.msra.mxu0 0.0
  %6044 = vmatprep.subr.mxu0 0.0
  %6045 = vmatpush1.msra.mxu0 0.0
  %6046 = vmatprep.subr.mxu0 0.0
  %6047 = vmatpush1.msra.mxu0 0.0
  %6048 = vmatprep.subr.mxu0 0.0
  %6049 = vmatpush1.msra.mxu0 0.0
  %6050 = vmatprep.subr.mxu0 0.0
  %6051 = vmatpush1.msra.mxu0 0.0
  %6052 = vmatprep.subr.mxu0 0.0
  %6053 = vmatpush1.msra.mxu0 0.0
  %6054 = vmatprep.subr.mxu0 0.0
  %6055 = vmatpush1.msra.mxu0 0.0
  %6056 = vmatprep.subr.mxu0 0.0
  %6057 = vmatpush1.msra.mxu0 0.0
  %6058 = vmatprep.mubr.f32.mxu0 0.0
  %6059 = vmatmul.mubr.f32.gmra.mrb[0].mxu0 %v5841
  %v6060 = vpop.f32.mrb[0].mxu0
  %v6061 = vadd.f32 0.0, %v6060
  %v6062 = vpop.f32.mrb[0].mxu0
  %v6063 = vadd.f32 0.0, %v6062
  %6064 = vdwg.mxu0
  %6065 = vmatprep.subr.mxu0 0.0
  %6066 = vmatpush1.msra.mxu0 %v5847
  %6067 = vmatprep.subr.mxu0 0.0
  %6068 = vmatpush1.msra.mxu0 %v5852
  %6069 = vmatprep.subr.mxu0 0.0
  %6070 = vmatpush1.msra.mxu0 %v5857
  %6071 = vmatprep.subr.mxu0 0.0
  %6072 = vmatpush1.msra.mxu0 %v5862
  %6073 = vmatprep.subr.mxu0 0.0
  %6074 = vmatpush1.msra.mxu0 %v5867
  %6075 = vmatprep.subr.mxu0 0.0
  %6076 = vmatpush1.msra.mxu0 %v5872
  %6077 = vmatprep.subr.mxu0 0.0
  %6078 = vmatpush1.msra.mxu0 %v5877
  %6079 = vmatprep.subr.mxu0 0.0
  %6080 = vmatpush1.msra.mxu0 %v5882
  %6081 = vmatprep.subr.mxu0 0.0
  %6082 = vmatpush1.msra.mxu0 %v5887
  %6083 = vmatprep.subr.mxu0 0.0
  %6084 = vmatpush1.msra.mxu0 %v5892
  %6085 = vmatprep.subr.mxu0 0.0
  %6086 = vmatpush1.msra.mxu0 %v5897
  %6087 = vmatprep.subr.mxu0 0.0
  %6088 = vmatpush1.msra.mxu0 %v5902
  %6089 = vmatprep.subr.mxu0 0.0
  %6090 = vmatpush1.msra.mxu0 %v5907
  %6091 = vmatprep.subr.mxu0 0.0
  %6092 = vmatpush1.msra.mxu0 %v5912
  %6093 = vmatprep.subr.mxu0 0.0
  %6094 = vmatpush1.msra.mxu0 %v5917
  %6095 = vmatprep.subr.mxu0 0.0
  %6096 = vmatpush1.msra.mxu0 %v5922
  %6097 = vmatprep.subr.mxu0 0.0
  %6098 = vmatpush1.msra.mxu0 0.0
  %6099 = vmatprep.subr.mxu0 0.0
  %6100 = vmatpush1.msra.mxu0 0.0
  %6101 = vmatprep.subr.mxu0 0.0
  %6102 = vmatpush1.msra.mxu0 0.0
  %6103 = vmatprep.subr.mxu0 0.0
  %6104 = vmatpush1.msra.mxu0 0.0
  %6105 = vmatprep.subr.mxu0 0.0
  %6106 = vmatpush1.msra.mxu0 0.0
  %6107 = vmatprep.subr.mxu0 0.0
  %6108 = vmatpush1.msra.mxu0 0.0
  %6109 = vmatprep.subr.mxu0 0.0
  %6110 = vmatpush1.msra.mxu0 0.0
  %6111 = vmatprep.subr.mxu0 0.0
  %6112 = vmatpush1.msra.mxu0 0.0
  %6113 = vmatprep.subr.mxu0 0.0
  %6114 = vmatpush1.msra.mxu0 0.0
  %6115 = vmatprep.subr.mxu0 0.0
  %6116 = vmatpush1.msra.mxu0 0.0
  %6117 = vmatprep.subr.mxu0 0.0
  %6118 = vmatpush1.msra.mxu0 0.0
  %6119 = vmatprep.subr.mxu0 0.0
  %6120 = vmatpush1.msra.mxu0 0.0
  %6121 = vmatprep.subr.mxu0 0.0
  %6122 = vmatpush1.msra.mxu0 0.0
  %6123 = vmatprep.subr.mxu0 0.0
  %6124 = vmatpush1.msra.mxu0 0.0
  %6125 = vmatprep.subr.mxu0 0.0
  %6126 = vmatpush1.msra.mxu0 0.0
  %6127 = vmatprep.subr.mxu0 0.0
  %6128 = vmatpush1.msra.mxu0 0.0
  %6129 = vmatprep.mubr.f32.mxu0 0.0
  %6130 = vmatmul.mubr.f32.gmra.mrb[0].mxu0 %v5841
  %v6131 = vpop.f32.mrb[0].mxu0
  %v6132 = vadd.f32 0.0, %v6131
  %v6133 = vpop.f32.mrb[0].mxu0
  %6134 = vdwg.mxu0
  %v6135 = vadd.f32 %v5695, %v5990
  %v6136 = vadd.f32 %v5697, %v5992
  %v6137 = vadd.f32 %v5766, %v6061
  %v6138 = vadd.f32 %v5768, %v6063
  %v6139 = vadd.f32 %v5837, %v6132
  %s6140 = scalar_lea.vmem [#allocation5], 24
  %v6141 = vld [vmem:[%s6140] sm:$0xff]
  %s6142 = scalar_lea.vmem %s14, 1920
  %v6143 = vld [vmem:[%s6142] sm:$0xff]
  %v6144 = vld [vmem:[%s6142 + $0x8] sm:$0xff]
  %v6145 = vld [vmem:[%s6142 + $0x10] sm:$0xff]
  %v6146 = vld [vmem:[%s6142 + $0x18] sm:$0xff]
  %v6147 = vld [vmem:[%s6142 + $0x20] sm:$0xff]
  %v6148 = vld [vmem:[%s6142 + $0x28] sm:$0xff]
  %v6149 = vld [vmem:[%s6142 + $0x30] sm:$0xff]
  %v6150 = vld [vmem:[%s6142 + $0x38] sm:$0xff]
  %v6151 = vld [vmem:[%s6142 + $0x40] sm:$0xff]
  %v6152 = vld [vmem:[%s6142 + $0x48] sm:$0xff]
  %v6153 = vld [vmem:[%s6142 + $0x50] sm:$0xff]
  %v6154 = vld [vmem:[%s6142 + $0x58] sm:$0xff]
  %v6155 = vld [vmem:[%s6142 + $0x60] sm:$0xff]
  %v6156 = vld [vmem:[%s6142 + $0x68] sm:$0xff]
  %v6157 = vld [vmem:[%s6142 + $0x70] sm:$0xff]
  %v6158 = vld [vmem:[%s6142 + $0x78] sm:$0xff]
  %v6159 = vld [vmem:[%s6142 + $0x80] sm:$0xff]
  %v6160 = vld [vmem:[%s6142 + $0x88] sm:$0xff]
  %v6161 = vld [vmem:[%s6142 + $0x90] sm:$0xff]
  %v6162 = vld [vmem:[%s6142 + $0x98] sm:$0xff]
  %v6163 = vld [vmem:[%s6142 + $0xa0] sm:$0xff]
  %v6164 = vld [vmem:[%s6142 + $0xa8] sm:$0xff]
  %v6165 = vld [vmem:[%s6142 + $0xb0] sm:$0xff]
  %v6166 = vld [vmem:[%s6142 + $0xb8] sm:$0xff]
  %v6167 = vld [vmem:[%s6142 + $0xc0] sm:$0xff]
  %v6168 = vld [vmem:[%s6142 + $0xc8] sm:$0xff]
  %v6169 = vld [vmem:[%s6142 + $0xd0] sm:$0xff]
  %v6170 = vld [vmem:[%s6142 + $0xd8] sm:$0xff]
  %v6171 = vld [vmem:[%s6142 + $0xe0] sm:$0xff]
  %v6172 = vld [vmem:[%s6142 + $0xe8] sm:$0xff]
  %v6173 = vld [vmem:[%s6142 + $0xf0] sm:$0xff]
  %v6174 = vld [vmem:[%s6142 + $0xf8] sm:$0xff]
  %v6175 = vld [vmem:[%s6142 + $0x100] sm:$0xff]
  %v6176 = vld [vmem:[%s6142 + $0x108] sm:$0xff]
  %v6177 = vld [vmem:[%s6142 + $0x110] sm:$0xff]
  %v6178 = vld [vmem:[%s6142 + $0x118] sm:$0xff]
  %v6179 = vld [vmem:[%s6142 + $0x120] sm:$0xff]
  %v6180 = vld [vmem:[%s6142 + $0x128] sm:$0xff]
  %v6181 = vld [vmem:[%s6142 + $0x130] sm:$0xff]
  %v6182 = vld [vmem:[%s6142 + $0x138] sm:$0xff]
  %v6183 = vld [vmem:[%s6142 + $0x140] sm:$0xff]
  %v6184 = vld [vmem:[%s6142 + $0x148] sm:$0xff]
  %v6185 = vld [vmem:[%s6142 + $0x150] sm:$0xff]
  %v6186 = vld [vmem:[%s6142 + $0x158] sm:$0xff]
  %v6187 = vld [vmem:[%s6142 + $0x160] sm:$0xff]
  %v6188 = vld [vmem:[%s6142 + $0x168] sm:$0xff]
  %v6189 = vld [vmem:[%s6142 + $0x170] sm:$0xff]
  %v6190 = vld [vmem:[%s6142 + $0x178] sm:$0xff]
  %v6191 = vld [vmem:[%s6142 + $0x180] sm:$0xff]
  %v6192 = vld [vmem:[%s6142 + $0x188] sm:$0xff]
  %v6193 = vld [vmem:[%s6142 + $0x190] sm:$0xff]
  %v6194 = vld [vmem:[%s6142 + $0x198] sm:$0xff]
  %v6195 = vld [vmem:[%s6142 + $0x1a0] sm:$0xff]
  %v6196 = vld [vmem:[%s6142 + $0x1a8] sm:$0xff]
  %v6197 = vld [vmem:[%s6142 + $0x1b0] sm:$0xff]
  %v6198 = vld [vmem:[%s6142 + $0x1b8] sm:$0xff]
  %v6199 = vld [vmem:[%s6142 + $0x1c0] sm:$0xff]
  %v6200 = vld [vmem:[%s6142 + $0x1c8] sm:$0xff]
  %v6201 = vld [vmem:[%s6142 + $0x1d0] sm:$0xff]
  %v6202 = vld [vmem:[%s6142 + $0x1d8] sm:$0xff]
  %v6203 = vld [vmem:[%s6142 + $0x1e0] sm:$0xff]
  %v6204 = vld [vmem:[%s6142 + $0x1e8] sm:$0xff]
  %v6205 = vld [vmem:[%s6142 + $0x1f0] sm:$0xff]
  %v6206 = vld [vmem:[%s6142 + $0x1f8] sm:$0xff]
  %v6207 = vld [vmem:[%s6142 + $0x200] sm:$0xff]
  %v6208 = vld [vmem:[%s6142 + $0x208] sm:$0xff]
  %v6209 = vld [vmem:[%s6142 + $0x210] sm:$0xff]
  %v6210 = vld [vmem:[%s6142 + $0x218] sm:$0xff]
  %v6211 = vld [vmem:[%s6142 + $0x220] sm:$0xff]
  %v6212 = vld [vmem:[%s6142 + $0x228] sm:$0xff]
  %v6213 = vld [vmem:[%s6142 + $0x230] sm:$0xff]
  %v6214 = vld [vmem:[%s6142 + $0x238] sm:$0xff]
  %v6215 = vld [vmem:[%s6142 + $0x240] sm:$0xff]
  %v6216 = vld [vmem:[%s6142 + $0x248] sm:$0xff]
  %v6217 = vld [vmem:[%s6142 + $0x250] sm:$0xff]
  %v6218 = vld [vmem:[%s6142 + $0x258] sm:$0xff]
  %v6219 = vld [vmem:[%s6142 + $0x260] sm:$0xff]
  %v6220 = vld [vmem:[%s6142 + $0x268] sm:$0xff]
  %v6221 = vld [vmem:[%s6142 + $0x270] sm:$0xff]
  %v6222 = vld [vmem:[%s6142 + $0x278] sm:$0xff]
  %6223 = vmatprep.subr.mxu0 %v6144
  %6224 = vmatpush1.msra.mxu0 %v6143
  %6225 = vmatprep.subr.mxu0 %v6149
  %6226 = vmatpush1.msra.mxu0 %v6148
  %6227 = vmatprep.subr.mxu0 %v6154
  %6228 = vmatpush1.msra.mxu0 %v6153
  %6229 = vmatprep.subr.mxu0 %v6159
  %6230 = vmatpush1.msra.mxu0 %v6158
  %6231 = vmatprep.subr.mxu0 %v6164
  %6232 = vmatpush1.msra.mxu0 %v6163
  %6233 = vmatprep.subr.mxu0 %v6169
  %6234 = vmatpush1.msra.mxu0 %v6168
  %6235 = vmatprep.subr.mxu0 %v6174
  %6236 = vmatpush1.msra.mxu0 %v6173
  %6237 = vmatprep.subr.mxu0 %v6179
  %6238 = vmatpush1.msra.mxu0 %v6178
  %6239 = vmatprep.subr.mxu0 %v6184
  %6240 = vmatpush1.msra.mxu0 %v6183
  %6241 = vmatprep.subr.mxu0 %v6189
  %6242 = vmatpush1.msra.mxu0 %v6188
  %6243 = vmatprep.subr.mxu0 %v6194
  %6244 = vmatpush1.msra.mxu0 %v6193
  %6245 = vmatprep.subr.mxu0 %v6199
  %6246 = vmatpush1.msra.mxu0 %v6198
  %6247 = vmatprep.subr.mxu0 %v6204
  %6248 = vmatpush1.msra.mxu0 %v6203
  %6249 = vmatprep.subr.mxu0 %v6209
  %6250 = vmatpush1.msra.mxu0 %v6208
  %6251 = vmatprep.subr.mxu0 %v6214
  %6252 = vmatpush1.msra.mxu0 %v6213
  %6253 = vmatprep.subr.mxu0 %v6219
  %6254 = vmatpush1.msra.mxu0 %v6218
  %6255 = vmatprep.subr.mxu0 0.0
  %6256 = vmatpush1.msra.mxu0 0.0
  %6257 = vmatprep.subr.mxu0 0.0
  %6258 = vmatpush1.msra.mxu0 0.0
  %6259 = vmatprep.subr.mxu0 0.0
  %6260 = vmatpush1.msra.mxu0 0.0
  %6261 = vmatprep.subr.mxu0 0.0
  %6262 = vmatpush1.msra.mxu0 0.0
  %6263 = vmatprep.subr.mxu0 0.0
  %6264 = vmatpush1.msra.mxu0 0.0
  %6265 = vmatprep.subr.mxu0 0.0
  %6266 = vmatpush1.msra.mxu0 0.0
  %6267 = vmatprep.subr.mxu0 0.0
  %6268 = vmatpush1.msra.mxu0 0.0
  %6269 = vmatprep.subr.mxu0 0.0
  %6270 = vmatpush1.msra.mxu0 0.0
  %6271 = vmatprep.subr.mxu0 0.0
  %6272 = vmatpush1.msra.mxu0 0.0
  %6273 = vmatprep.subr.mxu0 0.0
  %6274 = vmatpush1.msra.mxu0 0.0
  %6275 = vmatprep.subr.mxu0 0.0
  %6276 = vmatpush1.msra.mxu0 0.0
  %6277 = vmatprep.subr.mxu0 0.0
  %6278 = vmatpush1.msra.mxu0 0.0
  %6279 = vmatprep.subr.mxu0 0.0
  %6280 = vmatpush1.msra.mxu0 0.0
  %6281 = vmatprep.subr.mxu0 0.0
  %6282 = vmatpush1.msra.mxu0 0.0
  %6283 = vmatprep.subr.mxu0 0.0
  %6284 = vmatpush1.msra.mxu0 0.0
  %6285 = vmatprep.subr.mxu0 0.0
  %6286 = vmatpush1.msra.mxu0 0.0
  %6287 = vmatprep.mubr.f32.mxu0 0.0
  %6288 = vmatmul.mubr.f32.gmra.mrb[0].mxu0 %v6141
  %v6289 = vpop.f32.mrb[0].mxu0
  %v6290 = vadd.f32 0.0, %v6289
  %v6291 = vpop.f32.mrb[0].mxu0
  %v6292 = vadd.f32 0.0, %v6291
  %6293 = vdwg.mxu0
  %6294 = vmatprep.subr.mxu0 %v6146
  %6295 = vmatpush1.msra.mxu0 %v6145
  %6296 = vmatprep.subr.mxu0 %v6151
  %6297 = vmatpush1.msra.mxu0 %v6150
  %6298 = vmatprep.subr.mxu0 %v6156
  %6299 = vmatpush1.msra.mxu0 %v6155
  %6300 = vmatprep.subr.mxu0 %v6161
  %6301 = vmatpush1.msra.mxu0 %v6160
  %6302 = vmatprep.subr.mxu0 %v6166
  %6303 = vmatpush1.msra.mxu0 %v6165
  %6304 = vmatprep.subr.mxu0 %v6171
  %6305 = vmatpush1.msra.mxu0 %v6170
  %6306 = vmatprep.subr.mxu0 %v6176
  %6307 = vmatpush1.msra.mxu0 %v6175
  %6308 = vmatprep.subr.mxu0 %v6181
  %6309 = vmatpush1.msra.mxu0 %v6180
  %6310 = vmatprep.subr.mxu0 %v6186
  %6311 = vmatpush1.msra.mxu0 %v6185
  %6312 = vmatprep.subr.mxu0 %v6191
  %6313 = vmatpush1.msra.mxu0 %v6190
  %6314 = vmatprep.subr.mxu0 %v6196
  %6315 = vmatpush1.msra.mxu0 %v6195
  %6316 = vmatprep.subr.mxu0 %v6201
  %6317 = vmatpush1.msra.mxu0 %v6200
  %6318 = vmatprep.subr.mxu0 %v6206
  %6319 = vmatpush1.msra.mxu0 %v6205
  %6320 = vmatprep.subr.mxu0 %v6211
  %6321 = vmatpush1.msra.mxu0 %v6210
  %6322 = vmatprep.subr.mxu0 %v6216
  %6323 = vmatpush1.msra.mxu0 %v6215
  %6324 = vmatprep.subr.mxu0 %v6221
  %6325 = vmatpush1.msra.mxu0 %v6220
  %6326 = vmatprep.subr.mxu0 0.0
  %6327 = vmatpush1.msra.mxu0 0.0
  %6328 = vmatprep.subr.mxu0 0.0
  %6329 = vmatpush1.msra.mxu0 0.0
  %6330 = vmatprep.subr.mxu0 0.0
  %6331 = vmatpush1.msra.mxu0 0.0
  %6332 = vmatprep.subr.mxu0 0.0
  %6333 = vmatpush1.msra.mxu0 0.0
  %6334 = vmatprep.subr.mxu0 0.0
  %6335 = vmatpush1.msra.mxu0 0.0
  %6336 = vmatprep.subr.mxu0 0.0
  %6337 = vmatpush1.msra.mxu0 0.0
  %6338 = vmatprep.subr.mxu0 0.0
  %6339 = vmatpush1.msra.mxu0 0.0
  %6340 = vmatprep.subr.mxu0 0.0
  %6341 = vmatpush1.msra.mxu0 0.0
  %6342 = vmatprep.subr.mxu0 0.0
  %6343 = vmatpush1.msra.mxu0 0.0
  %6344 = vmatprep.subr.mxu0 0.0
  %6345 = vmatpush1.msra.mxu0 0.0
  %6346 = vmatprep.subr.mxu0 0.0
  %6347 = vmatpush1.msra.mxu0 0.0
  %6348 = vmatprep.subr.mxu0 0.0
  %6349 = vmatpush1.msra.mxu0 0.0
  %6350 = vmatprep.subr.mxu0 0.0
  %6351 = vmatpush1.msra.mxu0 0.0
  %6352 = vmatprep.subr.mxu0 0.0
  %6353 = vmatpush1.msra.mxu0 0.0
  %6354 = vmatprep.subr.mxu0 0.0
  %6355 = vmatpush1.msra.mxu0 0.0
  %6356 = vmatprep.subr.mxu0 0.0
  %6357 = vmatpush1.msra.mxu0 0.0
  %6358 = vmatprep.mubr.f32.mxu0 0.0
  %6359 = vmatmul.mubr.f32.gmra.mrb[0].mxu0 %v6141
  %v6360 = vpop.f32.mrb[0].mxu0
  %v6361 = vadd.f32 0.0, %v6360
  %v6362 = vpop.f32.mrb[0].mxu0
  %v6363 = vadd.f32 0.0, %v6362
  %6364 = vdwg.mxu0
  %6365 = vmatprep.subr.mxu0 0.0
  %6366 = vmatpush1.msra.mxu0 %v6147
  %6367 = vmatprep.subr.mxu0 0.0
  %6368 = vmatpush1.msra.mxu0 %v6152
  %6369 = vmatprep.subr.mxu0 0.0
  %6370 = vmatpush1.msra.mxu0 %v6157
  %6371 = vmatprep.subr.mxu0 0.0
  %6372 = vmatpush1.msra.mxu0 %v6162
  %6373 = vmatprep.subr.mxu0 0.0
  %6374 = vmatpush1.msra.mxu0 %v6167
  %6375 = vmatprep.subr.mxu0 0.0
  %6376 = vmatpush1.msra.mxu0 %v6172
  %6377 = vmatprep.subr.mxu0 0.0
  %6378 = vmatpush1.msra.mxu0 %v6177
  %6379 = vmatprep.subr.mxu0 0.0
  %6380 = vmatpush1.msra.mxu0 %v6182
  %6381 = vmatprep.subr.mxu0 0.0
  %6382 = vmatpush1.msra.mxu0 %v6187
  %6383 = vmatprep.subr.mxu0 0.0
  %6384 = vmatpush1.msra.mxu0 %v6192
  %6385 = vmatprep.subr.mxu0 0.0
  %6386 = vmatpush1.msra.mxu0 %v6197
  %6387 = vmatprep.subr.mxu0 0.0
  %6388 = vmatpush1.msra.mxu0 %v6202
  %6389 = vmatprep.subr.mxu0 0.0
  %6390 = vmatpush1.msra.mxu0 %v6207
  %6391 = vmatprep.subr.mxu0 0.0
  %6392 = vmatpush1.msra.mxu0 %v6212
  %6393 = vmatprep.subr.mxu0 0.0
  %6394 = vmatpush1.msra.mxu0 %v6217
  %6395 = vmatprep.subr.mxu0 0.0
  %6396 = vmatpush1.msra.mxu0 %v6222
  %6397 = vmatprep.subr.mxu0 0.0
  %6398 = vmatpush1.msra.mxu0 0.0
  %6399 = vmatprep.subr.mxu0 0.0
  %6400 = vmatpush1.msra.mxu0 0.0
  %6401 = vmatprep.subr.mxu0 0.0
  %6402 = vmatpush1.msra.mxu0 0.0
  %6403 = vmatprep.subr.mxu0 0.0
  %6404 = vmatpush1.msra.mxu0 0.0
  %6405 = vmatprep.subr.mxu0 0.0
  %6406 = vmatpush1.msra.mxu0 0.0
  %6407 = vmatprep.subr.mxu0 0.0
  %6408 = vmatpush1.msra.mxu0 0.0
  %6409 = vmatprep.subr.mxu0 0.0
  %6410 = vmatpush1.msra.mxu0 0.0
  %6411 = vmatprep.subr.mxu0 0.0
  %6412 = vmatpush1.msra.mxu0 0.0
  %6413 = vmatprep.subr.mxu0 0.0
  %6414 = vmatpush1.msra.mxu0 0.0
  %6415 = vmatprep.subr.mxu0 0.0
  %6416 = vmatpush1.msra.mxu0 0.0
  %6417 = vmatprep.subr.mxu0 0.0
  %6418 = vmatpush1.msra.mxu0 0.0
  %6419 = vmatprep.subr.mxu0 0.0
  %6420 = vmatpush1.msra.mxu0 0.0
  %6421 = vmatprep.subr.mxu0 0.0
  %6422 = vmatpush1.msra.mxu0 0.0
  %6423 = vmatprep.subr.mxu0 0.0
  %6424 = vmatpush1.msra.mxu0 0.0
  %6425 = vmatprep.subr.mxu0 0.0
  %6426 = vmatpush1.msra.mxu0 0.0
  %6427 = vmatprep.subr.mxu0 0.0
  %6428 = vmatpush1.msra.mxu0 0.0
  %6429 = vmatprep.mubr.f32.mxu0 0.0
  %6430 = vmatmul.mubr.f32.gmra.mrb[0].mxu0 %v6141
  %v6431 = vpop.f32.mrb[0].mxu0
  %v6432 = vadd.f32 0.0, %v6431
  %v6433 = vpop.f32.mrb[0].mxu0
  %6434 = vdwg.mxu0
  %v6435 = vadd.f32 %v6135, %v6290
  %v6436 = vadd.f32 %v6136, %v6292
  %v6437 = vadd.f32 %v6137, %v6361
  %v6438 = vadd.f32 %v6138, %v6363
  %v6439 = vadd.f32 %v6139, %v6432
  %s6440 = scalar_lea.vmem [#allocation5], 32
  %v6441 = vld [vmem:[%s6440] sm:$0xff]
  %s6442 = scalar_lea.vmem %s14, 2560
  %v6443 = vld [vmem:[%s6442] sm:$0xff]
  %v6444 = vld [vmem:[%s6442 + $0x8] sm:$0xff]
  %v6445 = vld [vmem:[%s6442 + $0x10] sm:$0xff]
  %v6446 = vld [vmem:[%s6442 + $0x18] sm:$0xff]
  %v6447 = vld [vmem:[%s6442 + $0x20] sm:$0xff]
  %v6448 = vld [vmem:[%s6442 + $0x28] sm:$0xff]
  %v6449 = vld [vmem:[%s6442 + $0x30] sm:$0xff]
  %v6450 = vld [vmem:[%s6442 + $0x38] sm:$0xff]
  %v6451 = vld [vmem:[%s6442 + $0x40] sm:$0xff]
  %v6452 = vld [vmem:[%s6442 + $0x48] sm:$0xff]
  %v6453 = vld [vmem:[%s6442 + $0x50] sm:$0xff]
  %v6454 = vld [vmem:[%s6442 + $0x58] sm:$0xff]
  %v6455 = vld [vmem:[%s6442 + $0x60] sm:$0xff]
  %v6456 = vld [vmem:[%s6442 + $0x68] sm:$0xff]
  %v6457 = vld [vmem:[%s6442 + $0x70] sm:$0xff]
  %v6458 = vld [vmem:[%s6442 + $0x78] sm:$0xff]
  %v6459 = vld [vmem:[%s6442 + $0x80] sm:$0xff]
  %v6460 = vld [vmem:[%s6442 + $0x88] sm:$0xff]
  %v6461 = vld [vmem:[%s6442 + $0x90] sm:$0xff]
  %v6462 = vld [vmem:[%s6442 + $0x98] sm:$0xff]
  %v6463 = vld [vmem:[%s6442 + $0xa0] sm:$0xff]
  %v6464 = vld [vmem:[%s6442 + $0xa8] sm:$0xff]
  %v6465 = vld [vmem:[%s6442 + $0xb0] sm:$0xff]
  %v6466 = vld [vmem:[%s6442 + $0xb8] sm:$0xff]
  %v6467 = vld [vmem:[%s6442 + $0xc0] sm:$0xff]
  %v6468 = vld [vmem:[%s6442 + $0xc8] sm:$0xff]
  %v6469 = vld [vmem:[%s6442 + $0xd0] sm:$0xff]
  %v6470 = vld [vmem:[%s6442 + $0xd8] sm:$0xff]
  %v6471 = vld [vmem:[%s6442 + $0xe0] sm:$0xff]
  %v6472 = vld [vmem:[%s6442 + $0xe8] sm:$0xff]
  %v6473 = vld [vmem:[%s6442 + $0xf0] sm:$0xff]
  %v6474 = vld [vmem:[%s6442 + $0xf8] sm:$0xff]
  %v6475 = vld [vmem:[%s6442 + $0x100] sm:$0xff]
  %v6476 = vld [vmem:[%s6442 + $0x108] sm:$0xff]
  %v6477 = vld [vmem:[%s6442 + $0x110] sm:$0xff]
  %v6478 = vld [vmem:[%s6442 + $0x118] sm:$0xff]
  %v6479 = vld [vmem:[%s6442 + $0x120] sm:$0xff]
  %v6480 = vld [vmem:[%s6442 + $0x128] sm:$0xff]
  %v6481 = vld [vmem:[%s6442 + $0x130] sm:$0xff]
  %v6482 = vld [vmem:[%s6442 + $0x138] sm:$0xff]
  %v6483 = vld [vmem:[%s6442 + $0x140] sm:$0xff]
  %v6484 = vld [vmem:[%s6442 + $0x148] sm:$0xff]
  %v6485 = vld [vmem:[%s6442 + $0x150] sm:$0xff]
  %v6486 = vld [vmem:[%s6442 + $0x158] sm:$0xff]
  %v6487 = vld [vmem:[%s6442 + $0x160] sm:$0xff]
  %v6488 = vld [vmem:[%s6442 + $0x168] sm:$0xff]
  %v6489 = vld [vmem:[%s6442 + $0x170] sm:$0xff]
  %v6490 = vld [vmem:[%s6442 + $0x178] sm:$0xff]
  %v6491 = vld [vmem:[%s6442 + $0x180] sm:$0xff]
  %v6492 = vld [vmem:[%s6442 + $0x188] sm:$0xff]
  %v6493 = vld [vmem:[%s6442 + $0x190] sm:$0xff]
  %v6494 = vld [vmem:[%s6442 + $0x198] sm:$0xff]
  %v6495 = vld [vmem:[%s6442 + $0x1a0] sm:$0xff]
  %v6496 = vld [vmem:[%s6442 + $0x1a8] sm:$0xff]
  %v6497 = vld [vmem:[%s6442 + $0x1b0] sm:$0xff]
  %v6498 = vld [vmem:[%s6442 + $0x1b8] sm:$0xff]
  %v6499 = vld [vmem:[%s6442 + $0x1c0] sm:$0xff]
  %v6500 = vld [vmem:[%s6442 + $0x1c8] sm:$0xff]
  %v6501 = vld [vmem:[%s6442 + $0x1d0] sm:$0xff]
  %v6502 = vld [vmem:[%s6442 + $0x1d8] sm:$0xff]
  %v6503 = vld [vmem:[%s6442 + $0x1e0] sm:$0xff]
  %v6504 = vld [vmem:[%s6442 + $0x1e8] sm:$0xff]
  %v6505 = vld [vmem:[%s6442 + $0x1f0] sm:$0xff]
  %v6506 = vld [vmem:[%s6442 + $0x1f8] sm:$0xff]
  %v6507 = vld [vmem:[%s6442 + $0x200] sm:$0xff]
  %v6508 = vld [vmem:[%s6442 + $0x208] sm:$0xff]
  %v6509 = vld [vmem:[%s6442 + $0x210] sm:$0xff]
  %v6510 = vld [vmem:[%s6442 + $0x218] sm:$0xff]
  %v6511 = vld [vmem:[%s6442 + $0x220] sm:$0xff]
  %v6512 = vld [vmem:[%s6442 + $0x228] sm:$0xff]
  %v6513 = vld [vmem:[%s6442 + $0x230] sm:$0xff]
  %v6514 = vld [vmem:[%s6442 + $0x238] sm:$0xff]
  %v6515 = vld [vmem:[%s6442 + $0x240] sm:$0xff]
  %v6516 = vld [vmem:[%s6442 + $0x248] sm:$0xff]
  %v6517 = vld [vmem:[%s6442 + $0x250] sm:$0xff]
  %v6518 = vld [vmem:[%s6442 + $0x258] sm:$0xff]
  %v6519 = vld [vmem:[%s6442 + $0x260] sm:$0xff]
  %v6520 = vld [vmem:[%s6442 + $0x268] sm:$0xff]
  %v6521 = vld [vmem:[%s6442 + $0x270] sm:$0xff]
  %v6522 = vld [vmem:[%s6442 + $0x278] sm:$0xff]
  %6523 = vmatprep.subr.mxu0 %v6444
  %6524 = vmatpush1.msra.mxu0 %v6443
  %6525 = vmatprep.subr.mxu0 %v6449
  %6526 = vmatpush1.msra.mxu0 %v6448
  %6527 = vmatprep.subr.mxu0 %v6454
  %6528 = vmatpush1.msra.mxu0 %v6453
  %6529 = vmatprep.subr.mxu0 %v6459
  %6530 = vmatpush1.msra.mxu0 %v6458
  %6531 = vmatprep.subr.mxu0 %v6464
  %6532 = vmatpush1.msra.mxu0 %v6463
  %6533 = vmatprep.subr.mxu0 %v6469
  %6534 = vmatpush1.msra.mxu0 %v6468
  %6535 = vmatprep.subr.mxu0 %v6474
  %6536 = vmatpush1.msra.mxu0 %v6473
  %6537 = vmatprep.subr.mxu0 %v6479
  %6538 = vmatpush1.msra.mxu0 %v6478
  %6539 = vmatprep.subr.mxu0 %v6484
  %6540 = vmatpush1.msra.mxu0 %v6483
  %6541 = vmatprep.subr.mxu0 %v6489
  %6542 = vmatpush1.msra.mxu0 %v6488
  %6543 = vmatprep.subr.mxu0 %v6494
  %6544 = vmatpush1.msra.mxu0 %v6493
  %6545 = vmatprep.subr.mxu0 %v6499
  %6546 = vmatpush1.msra.mxu0 %v6498
  %6547 = vmatprep.subr.mxu0 %v6504
  %6548 = vmatpush1.msra.mxu0 %v6503
  %6549 = vmatprep.subr.mxu0 %v6509
  %6550 = vmatpush1.msra.mxu0 %v6508
  %6551 = vmatprep.subr.mxu0 %v6514
  %6552 = vmatpush1.msra.mxu0 %v6513
  %6553 = vmatprep.subr.mxu0 %v6519
  %6554 = vmatpush1.msra.mxu0 %v6518
  %6555 = vmatprep.subr.mxu0 0.0
  %6556 = vmatpush1.msra.mxu0 0.0
  %6557 = vmatprep.subr.mxu0 0.0
  %6558 = vmatpush1.msra.mxu0 0.0
  %6559 = vmatprep.subr.mxu0 0.0
  %6560 = vmatpush1.msra.mxu0 0.0
  %6561 = vmatprep.subr.mxu0 0.0
  %6562 = vmatpush1.msra.mxu0 0.0
  %6563 = vmatprep.subr.mxu0 0.0
  %6564 = vmatpush1.msra.mxu0 0.0
  %6565 = vmatprep.subr.mxu0 0.0
  %6566 = vmatpush1.msra.mxu0 0.0
  %6567 = vmatprep.subr.mxu0 0.0
  %6568 = vmatpush1.msra.mxu0 0.0
  %6569 = vmatprep.subr.mxu0 0.0
  %6570 = vmatpush1.msra.mxu0 0.0
  %6571 = vmatprep.subr.mxu0 0.0
  %6572 = vmatpush1.msra.mxu0 0.0
  %6573 = vmatprep.subr.mxu0 0.0
  %6574 = vmatpush1.msra.mxu0 0.0
  %6575 = vmatprep.subr.mxu0 0.0
  %6576 = vmatpush1.msra.mxu0 0.0
  %6577 = vmatprep.subr.mxu0 0.0
  %6578 = vmatpush1.msra.mxu0 0.0
  %6579 = vmatprep.subr.mxu0 0.0
  %6580 = vmatpush1.msra.mxu0 0.0
  %6581 = vmatprep.subr.mxu0 0.0
  %6582 = vmatpush1.msra.mxu0 0.0
  %6583 = vmatprep.subr.mxu0 0.0
  %6584 = vmatpush1.msra.mxu0 0.0
  %6585 = vmatprep.subr.mxu0 0.0
  %6586 = vmatpush1.msra.mxu0 0.0
  %6587 = vmatprep.mubr.f32.mxu0 0.0
  %6588 = vmatmul.mubr.f32.gmra.mrb[0].mxu0 %v6441
  %v6589 = vpop.f32.mrb[0].mxu0
  %v6590 = vadd.f32 0.0, %v6589
  %v6591 = vpop.f32.mrb[0].mxu0
  %v6592 = vadd.f32 0.0, %v6591
  %6593 = vdwg.mxu0
  %6594 = vmatprep.subr.mxu0 %v6446
  %6595 = vmatpush1.msra.mxu0 %v6445
  %6596 = vmatprep.subr.mxu0 %v6451
  %6597 = vmatpush1.msra.mxu0 %v6450
  %6598 = vmatprep.subr.mxu0 %v6456
  %6599 = vmatpush1.msra.mxu0 %v6455
  %6600 = vmatprep.subr.mxu0 %v6461
  %6601 = vmatpush1.msra.mxu0 %v6460
  %6602 = vmatprep.subr.mxu0 %v6466
  %6603 = vmatpush1.msra.mxu0 %v6465
  %6604 = vmatprep.subr.mxu0 %v6471
  %6605 = vmatpush1.msra.mxu0 %v6470
  %6606 = vmatprep.subr.mxu0 %v6476
  %6607 = vmatpush1.msra.mxu0 %v6475
  %6608 = vmatprep.subr.mxu0 %v6481
  %6609 = vmatpush1.msra.mxu0 %v6480
  %6610 = vmatprep.subr.mxu0 %v6486
  %6611 = vmatpush1.msra.mxu0 %v6485
  %6612 = vmatprep.subr.mxu0 %v6491
  %6613 = vmatpush1.msra.mxu0 %v6490
  %6614 = vmatprep.subr.mxu0 %v6496
  %6615 = vmatpush1.msra.mxu0 %v6495
  %6616 = vmatprep.subr.mxu0 %v6501
  %6617 = vmatpush1.msra.mxu0 %v6500
  %6618 = vmatprep.subr.mxu0 %v6506
  %6619 = vmatpush1.msra.mxu0 %v6505
  %6620 = vmatprep.subr.mxu0 %v6511
  %6621 = vmatpush1.msra.mxu0 %v6510
  %6622 = vmatprep.subr.mxu0 %v6516
  %6623 = vmatpush1.msra.mxu0 %v6515
  %6624 = vmatprep.subr.mxu0 %v6521
  %6625 = vmatpush1.msra.mxu0 %v6520
  %6626 = vmatprep.subr.mxu0 0.0
  %6627 = vmatpush1.msra.mxu0 0.0
  %6628 = vmatprep.subr.mxu0 0.0
  %6629 = vmatpush1.msra.mxu0 0.0
  %6630 = vmatprep.subr.mxu0 0.0
  %6631 = vmatpush1.msra.mxu0 0.0
  %6632 = vmatprep.subr.mxu0 0.0
  %6633 = vmatpush1.msra.mxu0 0.0
  %6634 = vmatprep.subr.mxu0 0.0
  %6635 = vmatpush1.msra.mxu0 0.0
  %6636 = vmatprep.subr.mxu0 0.0
  %6637 = vmatpush1.msra.mxu0 0.0
  %6638 = vmatprep.subr.mxu0 0.0
  %6639 = vmatpush1.msra.mxu0 0.0
  %6640 = vmatprep.subr.mxu0 0.0
  %6641 = vmatpush1.msra.mxu0 0.0
  %6642 = vmatprep.subr.mxu0 0.0
  %6643 = vmatpush1.msra.mxu0 0.0
  %6644 = vmatprep.subr.mxu0 0.0
  %6645 = vmatpush1.msra.mxu0 0.0
  %6646 = vmatprep.subr.mxu0 0.0
  %6647 = vmatpush1.msra.mxu0 0.0
  %6648 = vmatprep.subr.mxu0 0.0
  %6649 = vmatpush1.msra.mxu0 0.0
  %6650 = vmatprep.subr.mxu0 0.0
  %6651 = vmatpush1.msra.mxu0 0.0
  %6652 = vmatprep.subr.mxu0 0.0
  %6653 = vmatpush1.msra.mxu0 0.0
  %6654 = vmatprep.subr.mxu0 0.0
  %6655 = vmatpush1.msra.mxu0 0.0
  %6656 = vmatprep.subr.mxu0 0.0
  %6657 = vmatpush1.msra.mxu0 0.0
  %6658 = vmatprep.mubr.f32.mxu0 0.0
  %6659 = vmatmul.mubr.f32.gmra.mrb[0].mxu0 %v6441
  %v6660 = vpop.f32.mrb[0].mxu0
  %v6661 = vadd.f32 0.0, %v6660
  %v6662 = vpop.f32.mrb[0].mxu0
  %v6663 = vadd.f32 0.0, %v6662
  %6664 = vdwg.mxu0
  %6665 = vmatprep.subr.mxu0 0.0
  %6666 = vmatpush1.msra.mxu0 %v6447
  %6667 = vmatprep.subr.mxu0 0.0
  %6668 = vmatpush1.msra.mxu0 %v6452
  %6669 = vmatprep.subr.mxu0 0.0
  %6670 = vmatpush1.msra.mxu0 %v6457
  %6671 = vmatprep.subr.mxu0 0.0
  %6672 = vmatpush1.msra.mxu0 %v6462
  %6673 = vmatprep.subr.mxu0 0.0
  %6674 = vmatpush1.msra.mxu0 %v6467
  %6675 = vmatprep.subr.mxu0 0.0
  %6676 = vmatpush1.msra.mxu0 %v6472
  %6677 = vmatprep.subr.mxu0 0.0
  %6678 = vmatpush1.msra.mxu0 %v6477
  %6679 = vmatprep.subr.mxu0 0.0
  %6680 = vmatpush1.msra.mxu0 %v6482
  %6681 = vmatprep.subr.mxu0 0.0
  %6682 = vmatpush1.msra.mxu0 %v6487
  %6683 = vmatprep.subr.mxu0 0.0
  %6684 = vmatpush1.msra.mxu0 %v6492
  %6685 = vmatprep.subr.mxu0 0.0
  %6686 = vmatpush1.msra.mxu0 %v6497
  %6687 = vmatprep.subr.mxu0 0.0
  %6688 = vmatpush1.msra.mxu0 %v6502
  %6689 = vmatprep.subr.mxu0 0.0
  %6690 = vmatpush1.msra.mxu0 %v6507
  %6691 = vmatprep.subr.mxu0 0.0
  %6692 = vmatpush1.msra.mxu0 %v6512
  %6693 = vmatprep.subr.mxu0 0.0
  %6694 = vmatpush1.msra.mxu0 %v6517
  %6695 = vmatprep.subr.mxu0 0.0
  %6696 = vmatpush1.msra.mxu0 %v6522
  %6697 = vmatprep.subr.mxu0 0.0
  %6698 = vmatpush1.msra.mxu0 0.0
  %6699 = vmatprep.subr.mxu0 0.0
  %6700 = vmatpush1.msra.mxu0 0.0
  %6701 = vmatprep.subr.mxu0 0.0
  %6702 = vmatpush1.msra.mxu0 0.0
  %6703 = vmatprep.subr.mxu0 0.0
  %6704 = vmatpush1.msra.mxu0 0.0
  %6705 = vmatprep.subr.mxu0 0.0
  %6706 = vmatpush1.msra.mxu0 0.0
  %6707 = vmatprep.subr.mxu0 0.0
  %6708 = vmatpush1.msra.mxu0 0.0
  %6709 = vmatprep.subr.mxu0 0.0
  %6710 = vmatpush1.msra.mxu0 0.0
  %6711 = vmatprep.subr.mxu0 0.0
  %6712 = vmatpush1.msra.mxu0 0.0
  %6713 = vmatprep.subr.mxu0 0.0
  %6714 = vmatpush1.msra.mxu0 0.0
  %6715 = vmatprep.subr.mxu0 0.0
  %6716 = vmatpush1.msra.mxu0 0.0
  %6717 = vmatprep.subr.mxu0 0.0
  %6718 = vmatpush1.msra.mxu0 0.0
  %6719 = vmatprep.subr.mxu0 0.0
  %6720 = vmatpush1.msra.mxu0 0.0
  %6721 = vmatprep.subr.mxu0 0.0
  %6722 = vmatpush1.msra.mxu0 0.0
  %6723 = vmatprep.subr.mxu0 0.0
  %6724 = vmatpush1.msra.mxu0 0.0
  %6725 = vmatprep.subr.mxu0 0.0
  %6726 = vmatpush1.msra.mxu0 0.0
  %6727 = vmatprep.subr.mxu0 0.0
  %6728 = vmatpush1.msra.mxu0 0.0
  %6729 = vmatprep.mubr.f32.mxu0 0.0
  %6730 = vmatmul.mubr.f32.gmra.mrb[0].mxu0 %v6441
  %v6731 = vpop.f32.mrb[0].mxu0
  %v6732 = vadd.f32 0.0, %v6731
  %v6733 = vpop.f32.mrb[0].mxu0
  %6734 = vdwg.mxu0
  %v6735 = vadd.f32 %v6435, %v6590
  %v6736 = vadd.f32 %v6436, %v6592
  %v6737 = vadd.f32 %v6437, %v6661
  %v6738 = vadd.f32 %v6438, %v6663
  %v6739 = vadd.f32 %v6439, %v6732
  %s6740 = scalar_lea.vmem [#allocation5], 40
  %v6741 = vld [vmem:[%s6740] sm:$0xff]
  %s6742 = scalar_lea.vmem %s14, 3200
  %v6743 = vld [vmem:[%s6742] sm:$0xff]
  %v6744 = vld [vmem:[%s6742 + $0x8] sm:$0xff]
  %v6745 = vld [vmem:[%s6742 + $0x10] sm:$0xff]
  %v6746 = vld [vmem:[%s6742 + $0x18] sm:$0xff]
  %v6747 = vld [vmem:[%s6742 + $0x20] sm:$0xff]
  %v6748 = vld [vmem:[%s6742 + $0x28] sm:$0xff]
  %v6749 = vld [vmem:[%s6742 + $0x30] sm:$0xff]
  %v6750 = vld [vmem:[%s6742 + $0x38] sm:$0xff]
  %v6751 = vld [vmem:[%s6742 + $0x40] sm:$0xff]
  %v6752 = vld [vmem:[%s6742 + $0x48] sm:$0xff]
  %v6753 = vld [vmem:[%s6742 + $0x50] sm:$0xff]
  %v6754 = vld [vmem:[%s6742 + $0x58] sm:$0xff]
  %v6755 = vld [vmem:[%s6742 + $0x60] sm:$0xff]
  %v6756 = vld [vmem:[%s6742 + $0x68] sm:$0xff]
  %v6757 = vld [vmem:[%s6742 + $0x70] sm:$0xff]
  %v6758 = vld [vmem:[%s6742 + $0x78] sm:$0xff]
  %v6759 = vld [vmem:[%s6742 + $0x80] sm:$0xff]
  %v6760 = vld [vmem:[%s6742 + $0x88] sm:$0xff]
  %v6761 = vld [vmem:[%s6742 + $0x90] sm:$0xff]
  %v6762 = vld [vmem:[%s6742 + $0x98] sm:$0xff]
  %v6763 = vld [vmem:[%s6742 + $0xa0] sm:$0xff]
  %v6764 = vld [vmem:[%s6742 + $0xa8] sm:$0xff]
  %v6765 = vld [vmem:[%s6742 + $0xb0] sm:$0xff]
  %v6766 = vld [vmem:[%s6742 + $0xb8] sm:$0xff]
  %v6767 = vld [vmem:[%s6742 + $0xc0] sm:$0xff]
  %v6768 = vld [vmem:[%s6742 + $0xc8] sm:$0xff]
  %v6769 = vld [vmem:[%s6742 + $0xd0] sm:$0xff]
  %v6770 = vld [vmem:[%s6742 + $0xd8] sm:$0xff]
  %v6771 = vld [vmem:[%s6742 + $0xe0] sm:$0xff]
  %v6772 = vld [vmem:[%s6742 + $0xe8] sm:$0xff]
  %v6773 = vld [vmem:[%s6742 + $0xf0] sm:$0xff]
  %v6774 = vld [vmem:[%s6742 + $0xf8] sm:$0xff]
  %v6775 = vld [vmem:[%s6742 + $0x100] sm:$0xff]
  %v6776 = vld [vmem:[%s6742 + $0x108] sm:$0xff]
  %v6777 = vld [vmem:[%s6742 + $0x110] sm:$0xff]
  %v6778 = vld [vmem:[%s6742 + $0x118] sm:$0xff]
  %v6779 = vld [vmem:[%s6742 + $0x120] sm:$0xff]
  %v6780 = vld [vmem:[%s6742 + $0x128] sm:$0xff]
  %v6781 = vld [vmem:[%s6742 + $0x130] sm:$0xff]
  %v6782 = vld [vmem:[%s6742 + $0x138] sm:$0xff]
  %v6783 = vld [vmem:[%s6742 + $0x140] sm:$0xff]
  %v6784 = vld [vmem:[%s6742 + $0x148] sm:$0xff]
  %v6785 = vld [vmem:[%s6742 + $0x150] sm:$0xff]
  %v6786 = vld [vmem:[%s6742 + $0x158] sm:$0xff]
  %v6787 = vld [vmem:[%s6742 + $0x160] sm:$0xff]
  %v6788 = vld [vmem:[%s6742 + $0x168] sm:$0xff]
  %v6789 = vld [vmem:[%s6742 + $0x170] sm:$0xff]
  %v6790 = vld [vmem:[%s6742 + $0x178] sm:$0xff]
  %v6791 = vld [vmem:[%s6742 + $0x180] sm:$0xff]
  %v6792 = vld [vmem:[%s6742 + $0x188] sm:$0xff]
  %v6793 = vld [vmem:[%s6742 + $0x190] sm:$0xff]
  %v6794 = vld [vmem:[%s6742 + $0x198] sm:$0xff]
  %v6795 = vld [vmem:[%s6742 + $0x1a0] sm:$0xff]
  %v6796 = vld [vmem:[%s6742 + $0x1a8] sm:$0xff]
  %v6797 = vld [vmem:[%s6742 + $0x1b0] sm:$0xff]
  %v6798 = vld [vmem:[%s6742 + $0x1b8] sm:$0xff]
  %v6799 = vld [vmem:[%s6742 + $0x1c0] sm:$0xff]
  %v6800 = vld [vmem:[%s6742 + $0x1c8] sm:$0xff]
  %v6801 = vld [vmem:[%s6742 + $0x1d0] sm:$0xff]
  %v6802 = vld [vmem:[%s6742 + $0x1d8] sm:$0xff]
  %v6803 = vld [vmem:[%s6742 + $0x1e0] sm:$0xff]
  %v6804 = vld [vmem:[%s6742 + $0x1e8] sm:$0xff]
  %v6805 = vld [vmem:[%s6742 + $0x1f0] sm:$0xff]
  %v6806 = vld [vmem:[%s6742 + $0x1f8] sm:$0xff]
  %v6807 = vld [vmem:[%s6742 + $0x200] sm:$0xff]
  %v6808 = vld [vmem:[%s6742 + $0x208] sm:$0xff]
  %v6809 = vld [vmem:[%s6742 + $0x210] sm:$0xff]
  %v6810 = vld [vmem:[%s6742 + $0x218] sm:$0xff]
  %v6811 = vld [vmem:[%s6742 + $0x220] sm:$0xff]
  %v6812 = vld [vmem:[%s6742 + $0x228] sm:$0xff]
  %v6813 = vld [vmem:[%s6742 + $0x230] sm:$0xff]
  %v6814 = vld [vmem:[%s6742 + $0x238] sm:$0xff]
  %v6815 = vld [vmem:[%s6742 + $0x240] sm:$0xff]
  %v6816 = vld [vmem:[%s6742 + $0x248] sm:$0xff]
  %v6817 = vld [vmem:[%s6742 + $0x250] sm:$0xff]
  %v6818 = vld [vmem:[%s6742 + $0x258] sm:$0xff]
  %v6819 = vld [vmem:[%s6742 + $0x260] sm:$0xff]
  %v6820 = vld [vmem:[%s6742 + $0x268] sm:$0xff]
  %v6821 = vld [vmem:[%s6742 + $0x270] sm:$0xff]
  %v6822 = vld [vmem:[%s6742 + $0x278] sm:$0xff]
  %6823 = vmatprep.subr.mxu0 %v6744
  %6824 = vmatpush1.msra.mxu0 %v6743
  %6825 = vmatprep.subr.mxu0 %v6749
  %6826 = vmatpush1.msra.mxu0 %v6748
  %6827 = vmatprep.subr.mxu0 %v6754
  %6828 = vmatpush1.msra.mxu0 %v6753
  %6829 = vmatprep.subr.mxu0 %v6759
  %6830 = vmatpush1.msra.mxu0 %v6758
  %6831 = vmatprep.subr.mxu0 %v6764
  %6832 = vmatpush1.msra.mxu0 %v6763
  %6833 = vmatprep.subr.mxu0 %v6769
  %6834 = vmatpush1.msra.mxu0 %v6768
  %6835 = vmatprep.subr.mxu0 %v6774
  %6836 = vmatpush1.msra.mxu0 %v6773
  %6837 = vmatprep.subr.mxu0 %v6779
  %6838 = vmatpush1.msra.mxu0 %v6778
  %6839 = vmatprep.subr.mxu0 %v6784
  %6840 = vmatpush1.msra.mxu0 %v6783
  %6841 = vmatprep.subr.mxu0 %v6789
  %6842 = vmatpush1.msra.mxu0 %v6788
  %6843 = vmatprep.subr.mxu0 %v6794
  %6844 = vmatpush1.msra.mxu0 %v6793
  %6845 = vmatprep.subr.mxu0 %v6799
  %6846 = vmatpush1.msra.mxu0 %v6798
  %6847 = vmatprep.subr.mxu0 %v6804
  %6848 = vmatpush1.msra.mxu0 %v6803
  %6849 = vmatprep.subr.mxu0 %v6809
  %6850 = vmatpush1.msra.mxu0 %v6808
  %6851 = vmatprep.subr.mxu0 %v6814
  %6852 = vmatpush1.msra.mxu0 %v6813
  %6853 = vmatprep.subr.mxu0 %v6819
  %6854 = vmatpush1.msra.mxu0 %v6818
  %6855 = vmatprep.subr.mxu0 0.0
  %6856 = vmatpush1.msra.mxu0 0.0
  %6857 = vmatprep.subr.mxu0 0.0
  %6858 = vmatpush1.msra.mxu0 0.0
  %6859 = vmatprep.subr.mxu0 0.0
  %6860 = vmatpush1.msra.mxu0 0.0
  %6861 = vmatprep.subr.mxu0 0.0
  %6862 = vmatpush1.msra.mxu0 0.0
  %6863 = vmatprep.subr.mxu0 0.0
  %6864 = vmatpush1.msra.mxu0 0.0
  %6865 = vmatprep.subr.mxu0 0.0
  %6866 = vmatpush1.msra.mxu0 0.0
  %6867 = vmatprep.subr.mxu0 0.0
  %6868 = vmatpush1.msra.mxu0 0.0
  %6869 = vmatprep.subr.mxu0 0.0
  %6870 = vmatpush1.msra.mxu0 0.0
  %6871 = vmatprep.subr.mxu0 0.0
  %6872 = vmatpush1.msra.mxu0 0.0
  %6873 = vmatprep.subr.mxu0 0.0
  %6874 = vmatpush1.msra.mxu0 0.0
  %6875 = vmatprep.subr.mxu0 0.0
  %6876 = vmatpush1.msra.mxu0 0.0
  %6877 = vmatprep.subr.mxu0 0.0
  %6878 = vmatpush1.msra.mxu0 0.0
  %6879 = vmatprep.subr.mxu0 0.0
  %6880 = vmatpush1.msra.mxu0 0.0
  %6881 = vmatprep.subr.mxu0 0.0
  %6882 = vmatpush1.msra.mxu0 0.0
  %6883 = vmatprep.subr.mxu0 0.0
  %6884 = vmatpush1.msra.mxu0 0.0
  %6885 = vmatprep.subr.mxu0 0.0
  %6886 = vmatpush1.msra.mxu0 0.0
  %6887 = vmatprep.mubr.f32.mxu0 0.0
  %6888 = vmatmul.mubr.f32.gmra.mrb[0].mxu0 %v6741
  %v6889 = vpop.f32.mrb[0].mxu0
  %v6890 = vadd.f32 0.0, %v6889
  %v6891 = vpop.f32.mrb[0].mxu0
  %v6892 = vadd.f32 0.0, %v6891
  %6893 = vdwg.mxu0
  %6894 = vmatprep.subr.mxu0 %v6746
  %6895 = vmatpush1.msra.mxu0 %v6745
  %6896 = vmatprep.subr.mxu0 %v6751
  %6897 = vmatpush1.msra.mxu0 %v6750
  %6898 = vmatprep.subr.mxu0 %v6756
  %6899 = vmatpush1.msra.mxu0 %v6755
  %6900 = vmatprep.subr.mxu0 %v6761
  %6901 = vmatpush1.msra.mxu0 %v6760
  %6902 = vmatprep.subr.mxu0 %v6766
  %6903 = vmatpush1.msra.mxu0 %v6765
  %6904 = vmatprep.subr.mxu0 %v6771
  %6905 = vmatpush1.msra.mxu0 %v6770
  %6906 = vmatprep.subr.mxu0 %v6776
  %6907 = vmatpush1.msra.mxu0 %v6775
  %6908 = vmatprep.subr.mxu0 %v6781
  %6909 = vmatpush1.msra.mxu0 %v6780
  %6910 = vmatprep.subr.mxu0 %v6786
  %6911 = vmatpush1.msra.mxu0 %v6785
  %6912 = vmatprep.subr.mxu0 %v6791
  %6913 = vmatpush1.msra.mxu0 %v6790
  %6914 = vmatprep.subr.mxu0 %v6796
  %6915 = vmatpush1.msra.mxu0 %v6795
  %6916 = vmatprep.subr.mxu0 %v6801
  %6917 = vmatpush1.msra.mxu0 %v6800
  %6918 = vmatprep.subr.mxu0 %v6806
  %6919 = vmatpush1.msra.mxu0 %v6805
  %6920 = vmatprep.subr.mxu0 %v6811
  %6921 = vmatpush1.msra.mxu0 %v6810
  %6922 = vmatprep.subr.mxu0 %v6816
  %6923 = vmatpush1.msra.mxu0 %v6815
  %6924 = vmatprep.subr.mxu0 %v6821
  %6925 = vmatpush1.msra.mxu0 %v6820
  %6926 = vmatprep.subr.mxu0 0.0
  %6927 = vmatpush1.msra.mxu0 0.0
  %6928 = vmatprep.subr.mxu0 0.0
  %6929 = vmatpush1.msra.mxu0 0.0
  %6930 = vmatprep.subr.mxu0 0.0
  %6931 = vmatpush1.msra.mxu0 0.0
  %6932 = vmatprep.subr.mxu0 0.0
  %6933 = vmatpush1.msra.mxu0 0.0
  %6934 = vmatprep.subr.mxu0 0.0
  %6935 = vmatpush1.msra.mxu0 0.0
  %6936 = vmatprep.subr.mxu0 0.0
  %6937 = vmatpush1.msra.mxu0 0.0
  %6938 = vmatprep.subr.mxu0 0.0
  %6939 = vmatpush1.msra.mxu0 0.0
  %6940 = vmatprep.subr.mxu0 0.0
  %6941 = vmatpush1.msra.mxu0 0.0
  %6942 = vmatprep.subr.mxu0 0.0
  %6943 = vmatpush1.msra.mxu0 0.0
  %6944 = vmatprep.subr.mxu0 0.0
  %6945 = vmatpush1.msra.mxu0 0.0
  %6946 = vmatprep.subr.mxu0 0.0
  %6947 = vmatpush1.msra.mxu0 0.0
  %6948 = vmatprep.subr.mxu0 0.0
  %6949 = vmatpush1.msra.mxu0 0.0
  %6950 = vmatprep.subr.mxu0 0.0
  %6951 = vmatpush1.msra.mxu0 0.0
  %6952 = vmatprep.subr.mxu0 0.0
  %6953 = vmatpush1.msra.mxu0 0.0
  %6954 = vmatprep.subr.mxu0 0.0
  %6955 = vmatpush1.msra.mxu0 0.0
  %6956 = vmatprep.subr.mxu0 0.0
  %6957 = vmatpush1.msra.mxu0 0.0
  %6958 = vmatprep.mubr.f32.mxu0 0.0
  %6959 = vmatmul.mubr.f32.gmra.mrb[0].mxu0 %v6741
  %v6960 = vpop.f32.mrb[0].mxu0
  %v6961 = vadd.f32 0.0, %v6960
  %v6962 = vpop.f32.mrb[0].mxu0
  %v6963 = vadd.f32 0.0, %v6962
  %6964 = vdwg.mxu0
  %6965 = vmatprep.subr.mxu0 0.0
  %6966 = vmatpush1.msra.mxu0 %v6747
  %6967 = vmatprep.subr.mxu0 0.0
  %6968 = vmatpush1.msra.mxu0 %v6752
  %6969 = vmatprep.subr.mxu0 0.0
  %6970 = vmatpush1.msra.mxu0 %v6757
  %6971 = vmatprep.subr.mxu0 0.0
  %6972 = vmatpush1.msra.mxu0 %v6762
  %6973 = vmatprep.subr.mxu0 0.0
  %6974 = vmatpush1.msra.mxu0 %v6767
  %6975 = vmatprep.subr.mxu0 0.0
  %6976 = vmatpush1.msra.mxu0 %v6772
  %6977 = vmatprep.subr.mxu0 0.0
  %6978 = vmatpush1.msra.mxu0 %v6777
  %6979 = vmatprep.subr.mxu0 0.0
  %6980 = vmatpush1.msra.mxu0 %v6782
  %6981 = vmatprep.subr.mxu0 0.0
  %6982 = vmatpush1.msra.mxu0 %v6787
  %6983 = vmatprep.subr.mxu0 0.0
  %6984 = vmatpush1.msra.mxu0 %v6792
  %6985 = vmatprep.subr.mxu0 0.0
  %6986 = vmatpush1.msra.mxu0 %v6797
  %6987 = vmatprep.subr.mxu0 0.0
  %6988 = vmatpush1.msra.mxu0 %v6802
  %6989 = vmatprep.subr.mxu0 0.0
  %6990 = vmatpush1.msra.mxu0 %v6807
  %6991 = vmatprep.subr.mxu0 0.0
  %6992 = vmatpush1.msra.mxu0 %v6812
  %6993 = vmatprep.subr.mxu0 0.0
  %6994 = vmatpush1.msra.mxu0 %v6817
  %6995 = vmatprep.subr.mxu0 0.0
  %6996 = vmatpush1.msra.mxu0 %v6822
  %6997 = vmatprep.subr.mxu0 0.0
  %6998 = vmatpush1.msra.mxu0 0.0
  %6999 = vmatprep.subr.mxu0 0.0
  %7000 = vmatpush1.msra.mxu0 0.0
  %7001 = vmatprep.subr.mxu0 0.0
  %7002 = vmatpush1.msra.mxu0 0.0
  %7003 = vmatprep.subr.mxu0 0.0
  %7004 = vmatpush1.msra.mxu0 0.0
  %7005 = vmatprep.subr.mxu0 0.0
  %7006 = vmatpush1.msra.mxu0 0.0
  %7007 = vmatprep.subr.mxu0 0.0
  %7008 = vmatpush1.msra.mxu0 0.0
  %7009 = vmatprep.subr.mxu0 0.0
  %7010 = vmatpush1.msra.mxu0 0.0
  %7011 = vmatprep.subr.mxu0 0.0
  %7012 = vmatpush1.msra.mxu0 0.0
  %7013 = vmatprep.subr.mxu0 0.0
  %7014 = vmatpush1.msra.mxu0 0.0
  %7015 = vmatprep.subr.mxu0 0.0
  %7016 = vmatpush1.msra.mxu0 0.0
  %7017 = vmatprep.subr.mxu0 0.0
  %7018 = vmatpush1.msra.mxu0 0.0
  %7019 = vmatprep.subr.mxu0 0.0
  %7020 = vmatpush1.msra.mxu0 0.0
  %7021 = vmatprep.subr.mxu0 0.0
  %7022 = vmatpush1.msra.mxu0 0.0
  %7023 = vmatprep.subr.mxu0 0.0
  %7024 = vmatpush1.msra.mxu0 0.0
  %7025 = vmatprep.subr.mxu0 0.0
  %7026 = vmatpush1.msra.mxu0 0.0
  %7027 = vmatprep.subr.mxu0 0.0
  %7028 = vmatpush1.msra.mxu0 0.0
  %7029 = vmatprep.mubr.f32.mxu0 0.0
  %7030 = vmatmul.mubr.f32.gmra.mrb[0].mxu0 %v6741
  %v7031 = vpop.f32.mrb[0].mxu0
  %v7032 = vadd.f32 0.0, %v7031
  %v7033 = vpop.f32.mrb[0].mxu0
  %7034 = vdwg.mxu0
  %v7035 = vadd.f32 %v6735, %v6890
  %v7036 = vadd.f32 %v6736, %v6892
  %v7037 = vadd.f32 %v6737, %v6961
  %v7038 = vadd.f32 %v6738, %v6963
  %v7039 = vadd.f32 %v6739, %v7032
  %s7040 = scalar_lea.vmem [#allocation5], 48
  %v7041 = vld [vmem:[%s7040] sm:$0xff]
  %s7042 = scalar_lea.vmem %s14, 3840
  %v7043 = vld [vmem:[%s7042] sm:$0xff]
  %v7044 = vld [vmem:[%s7042 + $0x8] sm:$0xff]
  %v7045 = vld [vmem:[%s7042 + $0x10] sm:$0xff]
  %v7046 = vld [vmem:[%s7042 + $0x18] sm:$0xff]
  %v7047 = vld [vmem:[%s7042 + $0x20] sm:$0xff]
  %v7048 = vld [vmem:[%s7042 + $0x28] sm:$0xff]
  %v7049 = vld [vmem:[%s7042 + $0x30] sm:$0xff]
  %v7050 = vld [vmem:[%s7042 + $0x38] sm:$0xff]
  %v7051 = vld [vmem:[%s7042 + $0x40] sm:$0xff]
  %v7052 = vld [vmem:[%s7042 + $0x48] sm:$0xff]
  %v7053 = vld [vmem:[%s7042 + $0x50] sm:$0xff]
  %v7054 = vld [vmem:[%s7042 + $0x58] sm:$0xff]
  %v7055 = vld [vmem:[%s7042 + $0x60] sm:$0xff]
  %v7056 = vld [vmem:[%s7042 + $0x68] sm:$0xff]
  %v7057 = vld [vmem:[%s7042 + $0x70] sm:$0xff]
  %v7058 = vld [vmem:[%s7042 + $0x78] sm:$0xff]
  %v7059 = vld [vmem:[%s7042 + $0x80] sm:$0xff]
  %v7060 = vld [vmem:[%s7042 + $0x88] sm:$0xff]
  %v7061 = vld [vmem:[%s7042 + $0x90] sm:$0xff]
  %v7062 = vld [vmem:[%s7042 + $0x98] sm:$0xff]
  %v7063 = vld [vmem:[%s7042 + $0xa0] sm:$0xff]
  %v7064 = vld [vmem:[%s7042 + $0xa8] sm:$0xff]
  %v7065 = vld [vmem:[%s7042 + $0xb0] sm:$0xff]
  %v7066 = vld [vmem:[%s7042 + $0xb8] sm:$0xff]
  %v7067 = vld [vmem:[%s7042 + $0xc0] sm:$0xff]
  %v7068 = vld [vmem:[%s7042 + $0xc8] sm:$0xff]
  %v7069 = vld [vmem:[%s7042 + $0xd0] sm:$0xff]
  %v7070 = vld [vmem:[%s7042 + $0xd8] sm:$0xff]
  %v7071 = vld [vmem:[%s7042 + $0xe0] sm:$0xff]
  %v7072 = vld [vmem:[%s7042 + $0xe8] sm:$0xff]
  %v7073 = vld [vmem:[%s7042 + $0xf0] sm:$0xff]
  %v7074 = vld [vmem:[%s7042 + $0xf8] sm:$0xff]
  %v7075 = vld [vmem:[%s7042 + $0x100] sm:$0xff]
  %v7076 = vld [vmem:[%s7042 + $0x108] sm:$0xff]
  %v7077 = vld [vmem:[%s7042 + $0x110] sm:$0xff]
  %v7078 = vld [vmem:[%s7042 + $0x118] sm:$0xff]
  %v7079 = vld [vmem:[%s7042 + $0x120] sm:$0xff]
  %v7080 = vld [vmem:[%s7042 + $0x128] sm:$0xff]
  %v7081 = vld [vmem:[%s7042 + $0x130] sm:$0xff]
  %v7082 = vld [vmem:[%s7042 + $0x138] sm:$0xff]
  %v7083 = vld [vmem:[%s7042 + $0x140] sm:$0xff]
  %v7084 = vld [vmem:[%s7042 + $0x148] sm:$0xff]
  %v7085 = vld [vmem:[%s7042 + $0x150] sm:$0xff]
  %v7086 = vld [vmem:[%s7042 + $0x158] sm:$0xff]
  %v7087 = vld [vmem:[%s7042 + $0x160] sm:$0xff]
  %v7088 = vld [vmem:[%s7042 + $0x168] sm:$0xff]
  %v7089 = vld [vmem:[%s7042 + $0x170] sm:$0xff]
  %v7090 = vld [vmem:[%s7042 + $0x178] sm:$0xff]
  %v7091 = vld [vmem:[%s7042 + $0x180] sm:$0xff]
  %v7092 = vld [vmem:[%s7042 + $0x188] sm:$0xff]
  %v7093 = vld [vmem:[%s7042 + $0x190] sm:$0xff]
  %v7094 = vld [vmem:[%s7042 + $0x198] sm:$0xff]
  %v7095 = vld [vmem:[%s7042 + $0x1a0] sm:$0xff]
  %v7096 = vld [vmem:[%s7042 + $0x1a8] sm:$0xff]
  %v7097 = vld [vmem:[%s7042 + $0x1b0] sm:$0xff]
  %v7098 = vld [vmem:[%s7042 + $0x1b8] sm:$0xff]
  %v7099 = vld [vmem:[%s7042 + $0x1c0] sm:$0xff]
  %v7100 = vld [vmem:[%s7042 + $0x1c8] sm:$0xff]
  %v7101 = vld [vmem:[%s7042 + $0x1d0] sm:$0xff]
  %v7102 = vld [vmem:[%s7042 + $0x1d8] sm:$0xff]
  %v7103 = vld [vmem:[%s7042 + $0x1e0] sm:$0xff]
  %v7104 = vld [vmem:[%s7042 + $0x1e8] sm:$0xff]
  %v7105 = vld [vmem:[%s7042 + $0x1f0] sm:$0xff]
  %v7106 = vld [vmem:[%s7042 + $0x1f8] sm:$0xff]
  %v7107 = vld [vmem:[%s7042 + $0x200] sm:$0xff]
  %v7108 = vld [vmem:[%s7042 + $0x208] sm:$0xff]
  %v7109 = vld [vmem:[%s7042 + $0x210] sm:$0xff]
  %v7110 = vld [vmem:[%s7042 + $0x218] sm:$0xff]
  %v7111 = vld [vmem:[%s7042 + $0x220] sm:$0xff]
  %v7112 = vld [vmem:[%s7042 + $0x228] sm:$0xff]
  %v7113 = vld [vmem:[%s7042 + $0x230] sm:$0xff]
  %v7114 = vld [vmem:[%s7042 + $0x238] sm:$0xff]
  %v7115 = vld [vmem:[%s7042 + $0x240] sm:$0xff]
  %v7116 = vld [vmem:[%s7042 + $0x248] sm:$0xff]
  %v7117 = vld [vmem:[%s7042 + $0x250] sm:$0xff]
  %v7118 = vld [vmem:[%s7042 + $0x258] sm:$0xff]
  %v7119 = vld [vmem:[%s7042 + $0x260] sm:$0xff]
  %v7120 = vld [vmem:[%s7042 + $0x268] sm:$0xff]
  %v7121 = vld [vmem:[%s7042 + $0x270] sm:$0xff]
  %v7122 = vld [vmem:[%s7042 + $0x278] sm:$0xff]
  %7123 = vmatprep.subr.mxu0 %v7044
  %7124 = vmatpush1.msra.mxu0 %v7043
  %7125 = vmatprep.subr.mxu0 %v7049
  %7126 = vmatpush1.msra.mxu0 %v7048
  %7127 = vmatprep.subr.mxu0 %v7054
  %7128 = vmatpush1.msra.mxu0 %v7053
  %7129 = vmatprep.subr.mxu0 %v7059
  %7130 = vmatpush1.msra.mxu0 %v7058
  %7131 = vmatprep.subr.mxu0 %v7064
  %7132 = vmatpush1.msra.mxu0 %v7063
  %7133 = vmatprep.subr.mxu0 %v7069
  %7134 = vmatpush1.msra.mxu0 %v7068
  %7135 = vmatprep.subr.mxu0 %v7074
  %7136 = vmatpush1.msra.mxu0 %v7073
  %7137 = vmatprep.subr.mxu0 %v7079
  %7138 = vmatpush1.msra.mxu0 %v7078
  %7139 = vmatprep.subr.mxu0 %v7084
  %7140 = vmatpush1.msra.mxu0 %v7083
  %7141 = vmatprep.subr.mxu0 %v7089
  %7142 = vmatpush1.msra.mxu0 %v7088
  %7143 = vmatprep.subr.mxu0 %v7094
  %7144 = vmatpush1.msra.mxu0 %v7093
  %7145 = vmatprep.subr.mxu0 %v7099
  %7146 = vmatpush1.msra.mxu0 %v7098
  %7147 = vmatprep.subr.mxu0 %v7104
  %7148 = vmatpush1.msra.mxu0 %v7103
  %7149 = vmatprep.subr.mxu0 %v7109
  %7150 = vmatpush1.msra.mxu0 %v7108
  %7151 = vmatprep.subr.mxu0 %v7114
  %7152 = vmatpush1.msra.mxu0 %v7113
  %7153 = vmatprep.subr.mxu0 %v7119
  %7154 = vmatpush1.msra.mxu0 %v7118
  %7155 = vmatprep.subr.mxu0 0.0
  %7156 = vmatpush1.msra.mxu0 0.0
  %7157 = vmatprep.subr.mxu0 0.0
  %7158 = vmatpush1.msra.mxu0 0.0
  %7159 = vmatprep.subr.mxu0 0.0
  %7160 = vmatpush1.msra.mxu0 0.0
  %7161 = vmatprep.subr.mxu0 0.0
  %7162 = vmatpush1.msra.mxu0 0.0
  %7163 = vmatprep.subr.mxu0 0.0
  %7164 = vmatpush1.msra.mxu0 0.0
  %7165 = vmatprep.subr.mxu0 0.0
  %7166 = vmatpush1.msra.mxu0 0.0
  %7167 = vmatprep.subr.mxu0 0.0
  %7168 = vmatpush1.msra.mxu0 0.0
  %7169 = vmatprep.subr.mxu0 0.0
  %7170 = vmatpush1.msra.mxu0 0.0
  %7171 = vmatprep.subr.mxu0 0.0
  %7172 = vmatpush1.msra.mxu0 0.0
  %7173 = vmatprep.subr.mxu0 0.0
  %7174 = vmatpush1.msra.mxu0 0.0
  %7175 = vmatprep.subr.mxu0 0.0
  %7176 = vmatpush1.msra.mxu0 0.0
  %7177 = vmatprep.subr.mxu0 0.0
  %7178 = vmatpush1.msra.mxu0 0.0
  %7179 = vmatprep.subr.mxu0 0.0
  %7180 = vmatpush1.msra.mxu0 0.0
  %7181 = vmatprep.subr.mxu0 0.0
  %7182 = vmatpush1.msra.mxu0 0.0
  %7183 = vmatprep.subr.mxu0 0.0
  %7184 = vmatpush1.msra.mxu0 0.0
  %7185 = vmatprep.subr.mxu0 0.0
  %7186 = vmatpush1.msra.mxu0 0.0
  %7187 = vmatprep.mubr.f32.mxu0 0.0
  %7188 = vmatmul.mubr.f32.gmra.mrb[0].mxu0 %v7041
  %v7189 = vpop.f32.mrb[0].mxu0
  %v7190 = vadd.f32 0.0, %v7189
  %v7191 = vpop.f32.mrb[0].mxu0
  %v7192 = vadd.f32 0.0, %v7191
  %7193 = vdwg.mxu0
  %7194 = vmatprep.subr.mxu0 %v7046
  %7195 = vmatpush1.msra.mxu0 %v7045
  %7196 = vmatprep.subr.mxu0 %v7051
  %7197 = vmatpush1.msra.mxu0 %v7050
  %7198 = vmatprep.subr.mxu0 %v7056
  %7199 = vmatpush1.msra.mxu0 %v7055
  %7200 = vmatprep.subr.mxu0 %v7061
  %7201 = vmatpush1.msra.mxu0 %v7060
  %7202 = vmatprep.subr.mxu0 %v7066
  %7203 = vmatpush1.msra.mxu0 %v7065
  %7204 = vmatprep.subr.mxu0 %v7071
  %7205 = vmatpush1.msra.mxu0 %v7070
  %7206 = vmatprep.subr.mxu0 %v7076
  %7207 = vmatpush1.msra.mxu0 %v7075
  %7208 = vmatprep.subr.mxu0 %v7081
  %7209 = vmatpush1.msra.mxu0 %v7080
  %7210 = vmatprep.subr.mxu0 %v7086
  %7211 = vmatpush1.msra.mxu0 %v7085
  %7212 = vmatprep.subr.mxu0 %v7091
  %7213 = vmatpush1.msra.mxu0 %v7090
  %7214 = vmatprep.subr.mxu0 %v7096
  %7215 = vmatpush1.msra.mxu0 %v7095
  %7216 = vmatprep.subr.mxu0 %v7101
  %7217 = vmatpush1.msra.mxu0 %v7100
  %7218 = vmatprep.subr.mxu0 %v7106
  %7219 = vmatpush1.msra.mxu0 %v7105
  %7220 = vmatprep.subr.mxu0 %v7111
  %7221 = vmatpush1.msra.mxu0 %v7110
  %7222 = vmatprep.subr.mxu0 %v7116
  %7223 = vmatpush1.msra.mxu0 %v7115
  %7224 = vmatprep.subr.mxu0 %v7121
  %7225 = vmatpush1.msra.mxu0 %v7120
  %7226 = vmatprep.subr.mxu0 0.0
  %7227 = vmatpush1.msra.mxu0 0.0
  %7228 = vmatprep.subr.mxu0 0.0
  %7229 = vmatpush1.msra.mxu0 0.0
  %7230 = vmatprep.subr.mxu0 0.0
  %7231 = vmatpush1.msra.mxu0 0.0
  %7232 = vmatprep.subr.mxu0 0.0
  %7233 = vmatpush1.msra.mxu0 0.0
  %7234 = vmatprep.subr.mxu0 0.0
  %7235 = vmatpush1.msra.mxu0 0.0
  %7236 = vmatprep.subr.mxu0 0.0
  %7237 = vmatpush1.msra.mxu0 0.0
  %7238 = vmatprep.subr.mxu0 0.0
  %7239 = vmatpush1.msra.mxu0 0.0
  %7240 = vmatprep.subr.mxu0 0.0
  %7241 = vmatpush1.msra.mxu0 0.0
  %7242 = vmatprep.subr.mxu0 0.0
  %7243 = vmatpush1.msra.mxu0 0.0
  %7244 = vmatprep.subr.mxu0 0.0
  %7245 = vmatpush1.msra.mxu0 0.0
  %7246 = vmatprep.subr.mxu0 0.0
  %7247 = vmatpush1.msra.mxu0 0.0
  %7248 = vmatprep.subr.mxu0 0.0
  %7249 = vmatpush1.msra.mxu0 0.0
  %7250 = vmatprep.subr.mxu0 0.0
  %7251 = vmatpush1.msra.mxu0 0.0
  %7252 = vmatprep.subr.mxu0 0.0
  %7253 = vmatpush1.msra.mxu0 0.0
  %7254 = vmatprep.subr.mxu0 0.0
  %7255 = vmatpush1.msra.mxu0 0.0
  %7256 = vmatprep.subr.mxu0 0.0
  %7257 = vmatpush1.msra.mxu0 0.0
  %7258 = vmatprep.mubr.f32.mxu0 0.0
  %7259 = vmatmul.mubr.f32.gmra.mrb[0].mxu0 %v7041
  %v7260 = vpop.f32.mrb[0].mxu0
  %v7261 = vadd.f32 0.0, %v7260
  %v7262 = vpop.f32.mrb[0].mxu0
  %v7263 = vadd.f32 0.0, %v7262
  %7264 = vdwg.mxu0
  %7265 = vmatprep.subr.mxu0 0.0
  %7266 = vmatpush1.msra.mxu0 %v7047
  %7267 = vmatprep.subr.mxu0 0.0
  %7268 = vmatpush1.msra.mxu0 %v7052
  %7269 = vmatprep.subr.mxu0 0.0
  %7270 = vmatpush1.msra.mxu0 %v7057
  %7271 = vmatprep.subr.mxu0 0.0
  %7272 = vmatpush1.msra.mxu0 %v7062
  %7273 = vmatprep.subr.mxu0 0.0
  %7274 = vmatpush1.msra.mxu0 %v7067
  %7275 = vmatprep.subr.mxu0 0.0
  %7276 = vmatpush1.msra.mxu0 %v7072
  %7277 = vmatprep.subr.mxu0 0.0
  %7278 = vmatpush1.msra.mxu0 %v7077
  %7279 = vmatprep.subr.mxu0 0.0
  %7280 = vmatpush1.msra.mxu0 %v7082
  %7281 = vmatprep.subr.mxu0 0.0
  %7282 = vmatpush1.msra.mxu0 %v7087
  %7283 = vmatprep.subr.mxu0 0.0
  %7284 = vmatpush1.msra.mxu0 %v7092
  %7285 = vmatprep.subr.mxu0 0.0
  %7286 = vmatpush1.msra.mxu0 %v7097
  %7287 = vmatprep.subr.mxu0 0.0
  %7288 = vmatpush1.msra.mxu0 %v7102
  %7289 = vmatprep.subr.mxu0 0.0
  %7290 = vmatpush1.msra.mxu0 %v7107
  %7291 = vmatprep.subr.mxu0 0.0
  %7292 = vmatpush1.msra.mxu0 %v7112
  %7293 = vmatprep.subr.mxu0 0.0
  %7294 = vmatpush1.msra.mxu0 %v7117
  %7295 = vmatprep.subr.mxu0 0.0
  %7296 = vmatpush1.msra.mxu0 %v7122
  %7297 = vmatprep.subr.mxu0 0.0
  %7298 = vmatpush1.msra.mxu0 0.0
  %7299 = vmatprep.subr.mxu0 0.0
  %7300 = vmatpush1.msra.mxu0 0.0
  %7301 = vmatprep.subr.mxu0 0.0
  %7302 = vmatpush1.msra.mxu0 0.0
  %7303 = vmatprep.subr.mxu0 0.0
  %7304 = vmatpush1.msra.mxu0 0.0
  %7305 = vmatprep.subr.mxu0 0.0
  %7306 = vmatpush1.msra.mxu0 0.0
  %7307 = vmatprep.subr.mxu0 0.0
  %7308 = vmatpush1.msra.mxu0 0.0
  %7309 = vmatprep.subr.mxu0 0.0
  %7310 = vmatpush1.msra.mxu0 0.0
  %7311 = vmatprep.subr.mxu0 0.0
  %7312 = vmatpush1.msra.mxu0 0.0
  %7313 = vmatprep.subr.mxu0 0.0
  %7314 = vmatpush1.msra.mxu0 0.0
  %7315 = vmatprep.subr.mxu0 0.0
  %7316 = vmatpush1.msra.mxu0 0.0
  %7317 = vmatprep.subr.mxu0 0.0
  %7318 = vmatpush1.msra.mxu0 0.0
  %7319 = vmatprep.subr.mxu0 0.0
  %7320 = vmatpush1.msra.mxu0 0.0
  %7321 = vmatprep.subr.mxu0 0.0
  %7322 = vmatpush1.msra.mxu0 0.0
  %7323 = vmatprep.subr.mxu0 0.0
  %7324 = vmatpush1.msra.mxu0 0.0
  %7325 = vmatprep.subr.mxu0 0.0
  %7326 = vmatpush1.msra.mxu0 0.0
  %7327 = vmatprep.subr.mxu0 0.0
  %7328 = vmatpush1.msra.mxu0 0.0
  %7329 = vmatprep.mubr.f32.mxu0 0.0
  %7330 = vmatmul.mubr.f32.gmra.mrb[0].mxu0 %v7041
  %v7331 = vpop.f32.mrb[0].mxu0
  %v7332 = vadd.f32 0.0, %v7331
  %v7333 = vpop.f32.mrb[0].mxu0
  %7334 = vdwg.mxu0
  %v7335 = vadd.f32 %v7035, %v7190
  %v7336 = vadd.f32 %v7036, %v7192
  %v7337 = vadd.f32 %v7037, %v7261
  %v7338 = vadd.f32 %v7038, %v7263
  %v7339 = vadd.f32 %v7039, %v7332
  %s7340 = scalar_lea.vmem [#allocation5], 56
  %v7341 = vld [vmem:[%s7340] sm:$0xff]
  %s7342 = scalar_lea.vmem %s14, 4480
  %v7343 = vld [vmem:[%s7342] sm:$0xff]
  %v7344 = vld [vmem:[%s7342 + $0x8] sm:$0xff]
  %v7345 = vld [vmem:[%s7342 + $0x10] sm:$0xff]
  %v7346 = vld [vmem:[%s7342 + $0x18] sm:$0xff]
  %v7347 = vld [vmem:[%s7342 + $0x20] sm:$0xff]
  %v7348 = vld [vmem:[%s7342 + $0x28] sm:$0xff]
  %v7349 = vld [vmem:[%s7342 + $0x30] sm:$0xff]
  %v7350 = vld [vmem:[%s7342 + $0x38] sm:$0xff]
  %v7351 = vld [vmem:[%s7342 + $0x40] sm:$0xff]
  %v7352 = vld [vmem:[%s7342 + $0x48] sm:$0xff]
  %v7353 = vld [vmem:[%s7342 + $0x50] sm:$0xff]
  %v7354 = vld [vmem:[%s7342 + $0x58] sm:$0xff]
  %v7355 = vld [vmem:[%s7342 + $0x60] sm:$0xff]
  %v7356 = vld [vmem:[%s7342 + $0x68] sm:$0xff]
  %v7357 = vld [vmem:[%s7342 + $0x70] sm:$0xff]
  %v7358 = vld [vmem:[%s7342 + $0x78] sm:$0xff]
  %v7359 = vld [vmem:[%s7342 + $0x80] sm:$0xff]
  %v7360 = vld [vmem:[%s7342 + $0x88] sm:$0xff]
  %v7361 = vld [vmem:[%s7342 + $0x90] sm:$0xff]
  %v7362 = vld [vmem:[%s7342 + $0x98] sm:$0xff]
  %v7363 = vld [vmem:[%s7342 + $0xa0] sm:$0xff]
  %v7364 = vld [vmem:[%s7342 + $0xa8] sm:$0xff]
  %v7365 = vld [vmem:[%s7342 + $0xb0] sm:$0xff]
  %v7366 = vld [vmem:[%s7342 + $0xb8] sm:$0xff]
  %v7367 = vld [vmem:[%s7342 + $0xc0] sm:$0xff]
  %v7368 = vld [vmem:[%s7342 + $0xc8] sm:$0xff]
  %v7369 = vld [vmem:[%s7342 + $0xd0] sm:$0xff]
  %v7370 = vld [vmem:[%s7342 + $0xd8] sm:$0xff]
  %v7371 = vld [vmem:[%s7342 + $0xe0] sm:$0xff]
  %v7372 = vld [vmem:[%s7342 + $0xe8] sm:$0xff]
  %v7373 = vld [vmem:[%s7342 + $0xf0] sm:$0xff]
  %v7374 = vld [vmem:[%s7342 + $0xf8] sm:$0xff]
  %v7375 = vld [vmem:[%s7342 + $0x100] sm:$0xff]
  %v7376 = vld [vmem:[%s7342 + $0x108] sm:$0xff]
  %v7377 = vld [vmem:[%s7342 + $0x110] sm:$0xff]
  %v7378 = vld [vmem:[%s7342 + $0x118] sm:$0xff]
  %v7379 = vld [vmem:[%s7342 + $0x120] sm:$0xff]
  %v7380 = vld [vmem:[%s7342 + $0x128] sm:$0xff]
  %v7381 = vld [vmem:[%s7342 + $0x130] sm:$0xff]
  %v7382 = vld [vmem:[%s7342 + $0x138] sm:$0xff]
  %v7383 = vld [vmem:[%s7342 + $0x140] sm:$0xff]
  %v7384 = vld [vmem:[%s7342 + $0x148] sm:$0xff]
  %v7385 = vld [vmem:[%s7342 + $0x150] sm:$0xff]
  %v7386 = vld [vmem:[%s7342 + $0x158] sm:$0xff]
  %v7387 = vld [vmem:[%s7342 + $0x160] sm:$0xff]
  %v7388 = vld [vmem:[%s7342 + $0x168] sm:$0xff]
  %v7389 = vld [vmem:[%s7342 + $0x170] sm:$0xff]
  %v7390 = vld [vmem:[%s7342 + $0x178] sm:$0xff]
  %v7391 = vld [vmem:[%s7342 + $0x180] sm:$0xff]
  %v7392 = vld [vmem:[%s7342 + $0x188] sm:$0xff]
  %v7393 = vld [vmem:[%s7342 + $0x190] sm:$0xff]
  %v7394 = vld [vmem:[%s7342 + $0x198] sm:$0xff]
  %v7395 = vld [vmem:[%s7342 + $0x1a0] sm:$0xff]
  %v7396 = vld [vmem:[%s7342 + $0x1a8] sm:$0xff]
  %v7397 = vld [vmem:[%s7342 + $0x1b0] sm:$0xff]
  %v7398 = vld [vmem:[%s7342 + $0x1b8] sm:$0xff]
  %v7399 = vld [vmem:[%s7342 + $0x1c0] sm:$0xff]
  %v7400 = vld [vmem:[%s7342 + $0x1c8] sm:$0xff]
  %v7401 = vld [vmem:[%s7342 + $0x1d0] sm:$0xff]
  %v7402 = vld [vmem:[%s7342 + $0x1d8] sm:$0xff]
  %v7403 = vld [vmem:[%s7342 + $0x1e0] sm:$0xff]
  %v7404 = vld [vmem:[%s7342 + $0x1e8] sm:$0xff]
  %v7405 = vld [vmem:[%s7342 + $0x1f0] sm:$0xff]
  %v7406 = vld [vmem:[%s7342 + $0x1f8] sm:$0xff]
  %v7407 = vld [vmem:[%s7342 + $0x200] sm:$0xff]
  %v7408 = vld [vmem:[%s7342 + $0x208] sm:$0xff]
  %v7409 = vld [vmem:[%s7342 + $0x210] sm:$0xff]
  %v7410 = vld [vmem:[%s7342 + $0x218] sm:$0xff]
  %v7411 = vld [vmem:[%s7342 + $0x220] sm:$0xff]
  %v7412 = vld [vmem:[%s7342 + $0x228] sm:$0xff]
  %v7413 = vld [vmem:[%s7342 + $0x230] sm:$0xff]
  %v7414 = vld [vmem:[%s7342 + $0x238] sm:$0xff]
  %v7415 = vld [vmem:[%s7342 + $0x240] sm:$0xff]
  %v7416 = vld [vmem:[%s7342 + $0x248] sm:$0xff]
  %v7417 = vld [vmem:[%s7342 + $0x250] sm:$0xff]
  %v7418 = vld [vmem:[%s7342 + $0x258] sm:$0xff]
  %v7419 = vld [vmem:[%s7342 + $0x260] sm:$0xff]
  %v7420 = vld [vmem:[%s7342 + $0x268] sm:$0xff]
  %v7421 = vld [vmem:[%s7342 + $0x270] sm:$0xff]
  %v7422 = vld [vmem:[%s7342 + $0x278] sm:$0xff]
  %7423 = vmatprep.subr.mxu0 %v7344
  %7424 = vmatpush1.msra.mxu0 %v7343
  %7425 = vmatprep.subr.mxu0 %v7349
  %7426 = vmatpush1.msra.mxu0 %v7348
  %7427 = vmatprep.subr.mxu0 %v7354
  %7428 = vmatpush1.msra.mxu0 %v7353
  %7429 = vmatprep.subr.mxu0 %v7359
  %7430 = vmatpush1.msra.mxu0 %v7358
  %7431 = vmatprep.subr.mxu0 %v7364
  %7432 = vmatpush1.msra.mxu0 %v7363
  %7433 = vmatprep.subr.mxu0 %v7369
  %7434 = vmatpush1.msra.mxu0 %v7368
  %7435 = vmatprep.subr.mxu0 %v7374
  %7436 = vmatpush1.msra.mxu0 %v7373
  %7437 = vmatprep.subr.mxu0 %v7379
  %7438 = vmatpush1.msra.mxu0 %v7378
  %7439 = vmatprep.subr.mxu0 %v7384
  %7440 = vmatpush1.msra.mxu0 %v7383
  %7441 = vmatprep.subr.mxu0 %v7389
  %7442 = vmatpush1.msra.mxu0 %v7388
  %7443 = vmatprep.subr.mxu0 %v7394
  %7444 = vmatpush1.msra.mxu0 %v7393
  %7445 = vmatprep.subr.mxu0 %v7399
  %7446 = vmatpush1.msra.mxu0 %v7398
  %7447 = vmatprep.subr.mxu0 %v7404
  %7448 = vmatpush1.msra.mxu0 %v7403
  %7449 = vmatprep.subr.mxu0 %v7409
  %7450 = vmatpush1.msra.mxu0 %v7408
  %7451 = vmatprep.subr.mxu0 %v7414
  %7452 = vmatpush1.msra.mxu0 %v7413
  %7453 = vmatprep.subr.mxu0 %v7419
  %7454 = vmatpush1.msra.mxu0 %v7418
  %7455 = vmatprep.subr.mxu0 0.0
  %7456 = vmatpush1.msra.mxu0 0.0
  %7457 = vmatprep.subr.mxu0 0.0
  %7458 = vmatpush1.msra.mxu0 0.0
  %7459 = vmatprep.subr.mxu0 0.0
  %7460 = vmatpush1.msra.mxu0 0.0
  %7461 = vmatprep.subr.mxu0 0.0
  %7462 = vmatpush1.msra.mxu0 0.0
  %7463 = vmatprep.subr.mxu0 0.0
  %7464 = vmatpush1.msra.mxu0 0.0
  %7465 = vmatprep.subr.mxu0 0.0
  %7466 = vmatpush1.msra.mxu0 0.0
  %7467 = vmatprep.subr.mxu0 0.0
  %7468 = vmatpush1.msra.mxu0 0.0
  %7469 = vmatprep.subr.mxu0 0.0
  %7470 = vmatpush1.msra.mxu0 0.0
  %7471 = vmatprep.subr.mxu0 0.0
  %7472 = vmatpush1.msra.mxu0 0.0
  %7473 = vmatprep.subr.mxu0 0.0
  %7474 = vmatpush1.msra.mxu0 0.0
  %7475 = vmatprep.subr.mxu0 0.0
  %7476 = vmatpush1.msra.mxu0 0.0
  %7477 = vmatprep.subr.mxu0 0.0
  %7478 = vmatpush1.msra.mxu0 0.0
  %7479 = vmatprep.subr.mxu0 0.0
  %7480 = vmatpush1.msra.mxu0 0.0
  %7481 = vmatprep.subr.mxu0 0.0
  %7482 = vmatpush1.msra.mxu0 0.0
  %7483 = vmatprep.subr.mxu0 0.0
  %7484 = vmatpush1.msra.mxu0 0.0
  %7485 = vmatprep.subr.mxu0 0.0
  %7486 = vmatpush1.msra.mxu0 0.0
  %7487 = vmatprep.mubr.f32.mxu0 0.0
  %7488 = vmatmul.mubr.f32.gmra.mrb[0].mxu0 %v7341
  %v7489 = vpop.f32.mrb[0].mxu0
  %v7490 = vadd.f32 0.0, %v7489
  %v7491 = vpop.f32.mrb[0].mxu0
  %v7492 = vadd.f32 0.0, %v7491
  %7493 = vdwg.mxu0
  %7494 = vmatprep.subr.mxu0 %v7346
  %7495 = vmatpush1.msra.mxu0 %v7345
  %7496 = vmatprep.subr.mxu0 %v7351
  %7497 = vmatpush1.msra.mxu0 %v7350
  %7498 = vmatprep.subr.mxu0 %v7356
  %7499 = vmatpush1.msra.mxu0 %v7355
  %7500 = vmatprep.subr.mxu0 %v7361
  %7501 = vmatpush1.msra.mxu0 %v7360
  %7502 = vmatprep.subr.mxu0 %v7366
  %7503 = vmatpush1.msra.mxu0 %v7365
  %7504 = vmatprep.subr.mxu0 %v7371
  %7505 = vmatpush1.msra.mxu0 %v7370
  %7506 = vmatprep.subr.mxu0 %v7376
  %7507 = vmatpush1.msra.mxu0 %v7375
  %7508 = vmatprep.subr.mxu0 %v7381
  %7509 = vmatpush1.msra.mxu0 %v7380
  %7510 = vmatprep.subr.mxu0 %v7386
  %7511 = vmatpush1.msra.mxu0 %v7385
  %7512 = vmatprep.subr.mxu0 %v7391
  %7513 = vmatpush1.msra.mxu0 %v7390
  %7514 = vmatprep.subr.mxu0 %v7396
  %7515 = vmatpush1.msra.mxu0 %v7395
  %7516 = vmatprep.subr.mxu0 %v7401
  %7517 = vmatpush1.msra.mxu0 %v7400
  %7518 = vmatprep.subr.mxu0 %v7406
  %7519 = vmatpush1.msra.mxu0 %v7405
  %7520 = vmatprep.subr.mxu0 %v7411
  %7521 = vmatpush1.msra.mxu0 %v7410
  %7522 = vmatprep.subr.mxu0 %v7416
  %7523 = vmatpush1.msra.mxu0 %v7415
  %7524 = vmatprep.subr.mxu0 %v7421
  %7525 = vmatpush1.msra.mxu0 %v7420
  %7526 = vmatprep.subr.mxu0 0.0
  %7527 = vmatpush1.msra.mxu0 0.0
  %7528 = vmatprep.subr.mxu0 0.0
  %7529 = vmatpush1.msra.mxu0 0.0
  %7530 = vmatprep.subr.mxu0 0.0
  %7531 = vmatpush1.msra.mxu0 0.0
  %7532 = vmatprep.subr.mxu0 0.0
  %7533 = vmatpush1.msra.mxu0 0.0
  %7534 = vmatprep.subr.mxu0 0.0
  %7535 = vmatpush1.msra.mxu0 0.0
  %7536 = vmatprep.subr.mxu0 0.0
  %7537 = vmatpush1.msra.mxu0 0.0
  %7538 = vmatprep.subr.mxu0 0.0
  %7539 = vmatpush1.msra.mxu0 0.0
  %7540 = vmatprep.subr.mxu0 0.0
  %7541 = vmatpush1.msra.mxu0 0.0
  %7542 = vmatprep.subr.mxu0 0.0
  %7543 = vmatpush1.msra.mxu0 0.0
  %7544 = vmatprep.subr.mxu0 0.0
  %7545 = vmatpush1.msra.mxu0 0.0
  %7546 = vmatprep.subr.mxu0 0.0
  %7547 = vmatpush1.msra.mxu0 0.0
  %7548 = vmatprep.subr.mxu0 0.0
  %7549 = vmatpush1.msra.mxu0 0.0
  %7550 = vmatprep.subr.mxu0 0.0
  %7551 = vmatpush1.msra.mxu0 0.0
  %7552 = vmatprep.subr.mxu0 0.0
  %7553 = vmatpush1.msra.mxu0 0.0
  %7554 = vmatprep.subr.mxu0 0.0
  %7555 = vmatpush1.msra.mxu0 0.0
  %7556 = vmatprep.subr.mxu0 0.0
  %7557 = vmatpush1.msra.mxu0 0.0
  %7558 = vmatprep.mubr.f32.mxu0 0.0
  %7559 = vmatmul.mubr.f32.gmra.mrb[0].mxu0 %v7341
  %v7560 = vpop.f32.mrb[0].mxu0
  %v7561 = vadd.f32 0.0, %v7560
  %v7562 = vpop.f32.mrb[0].mxu0
  %v7563 = vadd.f32 0.0, %v7562
  %7564 = vdwg.mxu0
  %7565 = vmatprep.subr.mxu0 0.0
  %7566 = vmatpush1.msra.mxu0 %v7347
  %7567 = vmatprep.subr.mxu0 0.0
  %7568 = vmatpush1.msra.mxu0 %v7352
  %7569 = vmatprep.subr.mxu0 0.0
  %7570 = vmatpush1.msra.mxu0 %v7357
  %7571 = vmatprep.subr.mxu0 0.0
  %7572 = vmatpush1.msra.mxu0 %v7362
  %7573 = vmatprep.subr.mxu0 0.0
  %7574 = vmatpush1.msra.mxu0 %v7367
  %7575 = vmatprep.subr.mxu0 0.0
  %7576 = vmatpush1.msra.mxu0 %v7372
  %7577 = vmatprep.subr.mxu0 0.0
  %7578 = vmatpush1.msra.mxu0 %v7377
  %7579 = vmatprep.subr.mxu0 0.0
  %7580 = vmatpush1.msra.mxu0 %v7382
  %7581 = vmatprep.subr.mxu0 0.0
  %7582 = vmatpush1.msra.mxu0 %v7387
  %7583 = vmatprep.subr.mxu0 0.0
  %7584 = vmatpush1.msra.mxu0 %v7392
  %7585 = vmatprep.subr.mxu0 0.0
  %7586 = vmatpush1.msra.mxu0 %v7397
  %7587 = vmatprep.subr.mxu0 0.0
  %7588 = vmatpush1.msra.mxu0 %v7402
  %7589 = vmatprep.subr.mxu0 0.0
  %7590 = vmatpush1.msra.mxu0 %v7407
  %7591 = vmatprep.subr.mxu0 0.0
  %7592 = vmatpush1.msra.mxu0 %v7412
  %7593 = vmatprep.subr.mxu0 0.0
  %7594 = vmatpush1.msra.mxu0 %v7417
  %7595 = vmatprep.subr.mxu0 0.0
  %7596 = vmatpush1.msra.mxu0 %v7422
  %7597 = vmatprep.subr.mxu0 0.0
  %7598 = vmatpush1.msra.mxu0 0.0
  %7599 = vmatprep.subr.mxu0 0.0
  %7600 = vmatpush1.msra.mxu0 0.0
  %7601 = vmatprep.subr.mxu0 0.0
  %7602 = vmatpush1.msra.mxu0 0.0
  %7603 = vmatprep.subr.mxu0 0.0
  %7604 = vmatpush1.msra.mxu0 0.0
  %7605 = vmatprep.subr.mxu0 0.0
  %7606 = vmatpush1.msra.mxu0 0.0
  %7607 = vmatprep.subr.mxu0 0.0
  %7608 = vmatpush1.msra.mxu0 0.0
  %7609 = vmatprep.subr.mxu0 0.0
  %7610 = vmatpush1.msra.mxu0 0.0
  %7611 = vmatprep.subr.mxu0 0.0
  %7612 = vmatpush1.msra.mxu0 0.0
  %7613 = vmatprep.subr.mxu0 0.0
  %7614 = vmatpush1.msra.mxu0 0.0
  %7615 = vmatprep.subr.mxu0 0.0
  %7616 = vmatpush1.msra.mxu0 0.0
  %7617 = vmatprep.subr.mxu0 0.0
  %7618 = vmatpush1.msra.mxu0 0.0
  %7619 = vmatprep.subr.mxu0 0.0
  %7620 = vmatpush1.msra.mxu0 0.0
  %7621 = vmatprep.subr.mxu0 0.0
  %7622 = vmatpush1.msra.mxu0 0.0
  %7623 = vmatprep.subr.mxu0 0.0
  %7624 = vmatpush1.msra.mxu0 0.0
  %7625 = vmatprep.subr.mxu0 0.0
  %7626 = vmatpush1.msra.mxu0 0.0
  %7627 = vmatprep.subr.mxu0 0.0
  %7628 = vmatpush1.msra.mxu0 0.0
  %7629 = vmatprep.mubr.f32.mxu0 0.0
  %7630 = vmatmul.mubr.f32.gmra.mrb[0].mxu0 %v7341
  %v7631 = vpop.f32.mrb[0].mxu0
  %v7632 = vadd.f32 0.0, %v7631
  %v7633 = vpop.f32.mrb[0].mxu0
  %7634 = vdwg.mxu0
  %v7635 = vadd.f32 %v7335, %v7490
  %v7636 = vadd.f32 %v7336, %v7492
  %v7637 = vadd.f32 %v7337, %v7561
  %v7638 = vadd.f32 %v7338, %v7563
  %v7639 = vadd.f32 %v7339, %v7632
  %s7640 = scalar_lea.vmem [#allocation5], 64
  %v7641 = vld [vmem:[%s7640] sm:$0xff]
  %s7642 = scalar_lea.vmem %s14, 5120
  %v7643 = vld [vmem:[%s7642] sm:$0xff]
  %v7644 = vld [vmem:[%s7642 + $0x8] sm:$0xff]
  %v7645 = vld [vmem:[%s7642 + $0x10] sm:$0xff]
  %v7646 = vld [vmem:[%s7642 + $0x18] sm:$0xff]
  %v7647 = vld [vmem:[%s7642 + $0x20] sm:$0xff]
  %v7648 = vld [vmem:[%s7642 + $0x28] sm:$0xff]
  %v7649 = vld [vmem:[%s7642 + $0x30] sm:$0xff]
  %v7650 = vld [vmem:[%s7642 + $0x38] sm:$0xff]
  %v7651 = vld [vmem:[%s7642 + $0x40] sm:$0xff]
  %v7652 = vld [vmem:[%s7642 + $0x48] sm:$0xff]
  %v7653 = vld [vmem:[%s7642 + $0x50] sm:$0xff]
  %v7654 = vld [vmem:[%s7642 + $0x58] sm:$0xff]
  %v7655 = vld [vmem:[%s7642 + $0x60] sm:$0xff]
  %v7656 = vld [vmem:[%s7642 + $0x68] sm:$0xff]
  %v7657 = vld [vmem:[%s7642 + $0x70] sm:$0xff]
  %v7658 = vld [vmem:[%s7642 + $0x78] sm:$0xff]
  %v7659 = vld [vmem:[%s7642 + $0x80] sm:$0xff]
  %v7660 = vld [vmem:[%s7642 + $0x88] sm:$0xff]
  %v7661 = vld [vmem:[%s7642 + $0x90] sm:$0xff]
  %v7662 = vld [vmem:[%s7642 + $0x98] sm:$0xff]
  %v7663 = vld [vmem:[%s7642 + $0xa0] sm:$0xff]
  %v7664 = vld [vmem:[%s7642 + $0xa8] sm:$0xff]
  %v7665 = vld [vmem:[%s7642 + $0xb0] sm:$0xff]
  %v7666 = vld [vmem:[%s7642 + $0xb8] sm:$0xff]
  %v7667 = vld [vmem:[%s7642 + $0xc0] sm:$0xff]
  %v7668 = vld [vmem:[%s7642 + $0xc8] sm:$0xff]
  %v7669 = vld [vmem:[%s7642 + $0xd0] sm:$0xff]
  %v7670 = vld [vmem:[%s7642 + $0xd8] sm:$0xff]
  %v7671 = vld [vmem:[%s7642 + $0xe0] sm:$0xff]
  %v7672 = vld [vmem:[%s7642 + $0xe8] sm:$0xff]
  %v7673 = vld [vmem:[%s7642 + $0xf0] sm:$0xff]
  %v7674 = vld [vmem:[%s7642 + $0xf8] sm:$0xff]
  %v7675 = vld [vmem:[%s7642 + $0x100] sm:$0xff]
  %v7676 = vld [vmem:[%s7642 + $0x108] sm:$0xff]
  %v7677 = vld [vmem:[%s7642 + $0x110] sm:$0xff]
  %v7678 = vld [vmem:[%s7642 + $0x118] sm:$0xff]
  %v7679 = vld [vmem:[%s7642 + $0x120] sm:$0xff]
  %v7680 = vld [vmem:[%s7642 + $0x128] sm:$0xff]
  %v7681 = vld [vmem:[%s7642 + $0x130] sm:$0xff]
  %v7682 = vld [vmem:[%s7642 + $0x138] sm:$0xff]
  %v7683 = vld [vmem:[%s7642 + $0x140] sm:$0xff]
  %v7684 = vld [vmem:[%s7642 + $0x148] sm:$0xff]
  %v7685 = vld [vmem:[%s7642 + $0x150] sm:$0xff]
  %v7686 = vld [vmem:[%s7642 + $0x158] sm:$0xff]
  %v7687 = vld [vmem:[%s7642 + $0x160] sm:$0xff]
  %v7688 = vld [vmem:[%s7642 + $0x168] sm:$0xff]
  %v7689 = vld [vmem:[%s7642 + $0x170] sm:$0xff]
  %v7690 = vld [vmem:[%s7642 + $0x178] sm:$0xff]
  %v7691 = vld [vmem:[%s7642 + $0x180] sm:$0xff]
  %v7692 = vld [vmem:[%s7642 + $0x188] sm:$0xff]
  %v7693 = vld [vmem:[%s7642 + $0x190] sm:$0xff]
  %v7694 = vld [vmem:[%s7642 + $0x198] sm:$0xff]
  %v7695 = vld [vmem:[%s7642 + $0x1a0] sm:$0xff]
  %v7696 = vld [vmem:[%s7642 + $0x1a8] sm:$0xff]
  %v7697 = vld [vmem:[%s7642 + $0x1b0] sm:$0xff]
  %v7698 = vld [vmem:[%s7642 + $0x1b8] sm:$0xff]
  %v7699 = vld [vmem:[%s7642 + $0x1c0] sm:$0xff]
  %v7700 = vld [vmem:[%s7642 + $0x1c8] sm:$0xff]
  %v7701 = vld [vmem:[%s7642 + $0x1d0] sm:$0xff]
  %v7702 = vld [vmem:[%s7642 + $0x1d8] sm:$0xff]
  %v7703 = vld [vmem:[%s7642 + $0x1e0] sm:$0xff]
  %v7704 = vld [vmem:[%s7642 + $0x1e8] sm:$0xff]
  %v7705 = vld [vmem:[%s7642 + $0x1f0] sm:$0xff]
  %v7706 = vld [vmem:[%s7642 + $0x1f8] sm:$0xff]
  %v7707 = vld [vmem:[%s7642 + $0x200] sm:$0xff]
  %v7708 = vld [vmem:[%s7642 + $0x208] sm:$0xff]
  %v7709 = vld [vmem:[%s7642 + $0x210] sm:$0xff]
  %v7710 = vld [vmem:[%s7642 + $0x218] sm:$0xff]
  %v7711 = vld [vmem:[%s7642 + $0x220] sm:$0xff]
  %v7712 = vld [vmem:[%s7642 + $0x228] sm:$0xff]
  %v7713 = vld [vmem:[%s7642 + $0x230] sm:$0xff]
  %v7714 = vld [vmem:[%s7642 + $0x238] sm:$0xff]
  %v7715 = vld [vmem:[%s7642 + $0x240] sm:$0xff]
  %v7716 = vld [vmem:[%s7642 + $0x248] sm:$0xff]
  %v7717 = vld [vmem:[%s7642 + $0x250] sm:$0xff]
  %v7718 = vld [vmem:[%s7642 + $0x258] sm:$0xff]
  %v7719 = vld [vmem:[%s7642 + $0x260] sm:$0xff]
  %v7720 = vld [vmem:[%s7642 + $0x268] sm:$0xff]
  %v7721 = vld [vmem:[%s7642 + $0x270] sm:$0xff]
  %v7722 = vld [vmem:[%s7642 + $0x278] sm:$0xff]
  %7723 = vmatprep.subr.mxu0 %v7644
  %7724 = vmatpush1.msra.mxu0 %v7643
  %7725 = vmatprep.subr.mxu0 %v7649
  %7726 = vmatpush1.msra.mxu0 %v7648
  %7727 = vmatprep.subr.mxu0 %v7654
  %7728 = vmatpush1.msra.mxu0 %v7653
  %7729 = vmatprep.subr.mxu0 %v7659
  %7730 = vmatpush1.msra.mxu0 %v7658
  %7731 = vmatprep.subr.mxu0 %v7664
  %7732 = vmatpush1.msra.mxu0 %v7663
  %7733 = vmatprep.subr.mxu0 %v7669
  %7734 = vmatpush1.msra.mxu0 %v7668
  %7735 = vmatprep.subr.mxu0 %v7674
  %7736 = vmatpush1.msra.mxu0 %v7673
  %7737 = vmatprep.subr.mxu0 %v7679
  %7738 = vmatpush1.msra.mxu0 %v7678
  %7739 = vmatprep.subr.mxu0 %v7684
  %7740 = vmatpush1.msra.mxu0 %v7683
  %7741 = vmatprep.subr.mxu0 %v7689
  %7742 = vmatpush1.msra.mxu0 %v7688
  %7743 = vmatprep.subr.mxu0 %v7694
  %7744 = vmatpush1.msra.mxu0 %v7693
  %7745 = vmatprep.subr.mxu0 %v7699
  %7746 = vmatpush1.msra.mxu0 %v7698
  %7747 = vmatprep.subr.mxu0 %v7704
  %7748 = vmatpush1.msra.mxu0 %v7703
  %7749 = vmatprep.subr.mxu0 %v7709
  %7750 = vmatpush1.msra.mxu0 %v7708
  %7751 = vmatprep.subr.mxu0 %v7714
  %7752 = vmatpush1.msra.mxu0 %v7713
  %7753 = vmatprep.subr.mxu0 %v7719
  %7754 = vmatpush1.msra.mxu0 %v7718
  %7755 = vmatprep.subr.mxu0 0.0
  %7756 = vmatpush1.msra.mxu0 0.0
  %7757 = vmatprep.subr.mxu0 0.0
  %7758 = vmatpush1.msra.mxu0 0.0
  %7759 = vmatprep.subr.mxu0 0.0
  %7760 = vmatpush1.msra.mxu0 0.0
  %7761 = vmatprep.subr.mxu0 0.0
  %7762 = vmatpush1.msra.mxu0 0.0
  %7763 = vmatprep.subr.mxu0 0.0
  %7764 = vmatpush1.msra.mxu0 0.0
  %7765 = vmatprep.subr.mxu0 0.0
  %7766 = vmatpush1.msra.mxu0 0.0
  %7767 = vmatprep.subr.mxu0 0.0
  %7768 = vmatpush1.msra.mxu0 0.0
  %7769 = vmatprep.subr.mxu0 0.0
  %7770 = vmatpush1.msra.mxu0 0.0
  %7771 = vmatprep.subr.mxu0 0.0
  %7772 = vmatpush1.msra.mxu0 0.0
  %7773 = vmatprep.subr.mxu0 0.0
  %7774 = vmatpush1.msra.mxu0 0.0
  %7775 = vmatprep.subr.mxu0 0.0
  %7776 = vmatpush1.msra.mxu0 0.0
  %7777 = vmatprep.subr.mxu0 0.0
  %7778 = vmatpush1.msra.mxu0 0.0
  %7779 = vmatprep.subr.mxu0 0.0
  %7780 = vmatpush1.msra.mxu0 0.0
  %7781 = vmatprep.subr.mxu0 0.0
  %7782 = vmatpush1.msra.mxu0 0.0
  %7783 = vmatprep.subr.mxu0 0.0
  %7784 = vmatpush1.msra.mxu0 0.0
  %7785 = vmatprep.subr.mxu0 0.0
  %7786 = vmatpush1.msra.mxu0 0.0
  %7787 = vmatprep.mubr.f32.mxu0 0.0
  %7788 = vmatmul.mubr.f32.gmra.mrb[0].mxu0 %v7641
  %v7789 = vpop.f32.mrb[0].mxu0
  %v7790 = vadd.f32 0.0, %v7789
  %v7791 = vpop.f32.mrb[0].mxu0
  %v7792 = vadd.f32 0.0, %v7791
  %7793 = vdwg.mxu0
  %7794 = vmatprep.subr.mxu0 %v7646
  %7795 = vmatpush1.msra.mxu0 %v7645
  %7796 = vmatprep.subr.mxu0 %v7651
  %7797 = vmatpush1.msra.mxu0 %v7650
  %7798 = vmatprep.subr.mxu0 %v7656
  %7799 = vmatpush1.msra.mxu0 %v7655
  %7800 = vmatprep.subr.mxu0 %v7661
  %7801 = vmatpush1.msra.mxu0 %v7660
  %7802 = vmatprep.subr.mxu0 %v7666
  %7803 = vmatpush1.msra.mxu0 %v7665
  %7804 = vmatprep.subr.mxu0 %v7671
  %7805 = vmatpush1.msra.mxu0 %v7670
  %7806 = vmatprep.subr.mxu0 %v7676
  %7807 = vmatpush1.msra.mxu0 %v7675
  %7808 = vmatprep.subr.mxu0 %v7681
  %7809 = vmatpush1.msra.mxu0 %v7680
  %7810 = vmatprep.subr.mxu0 %v7686
  %7811 = vmatpush1.msra.mxu0 %v7685
  %7812 = vmatprep.subr.mxu0 %v7691
  %7813 = vmatpush1.msra.mxu0 %v7690
  %7814 = vmatprep.subr.mxu0 %v7696
  %7815 = vmatpush1.msra.mxu0 %v7695
  %7816 = vmatprep.subr.mxu0 %v7701
  %7817 = vmatpush1.msra.mxu0 %v7700
  %7818 = vmatprep.subr.mxu0 %v7706
  %7819 = vmatpush1.msra.mxu0 %v7705
  %7820 = vmatprep.subr.mxu0 %v7711
  %7821 = vmatpush1.msra.mxu0 %v7710
  %7822 = vmatprep.subr.mxu0 %v7716
  %7823 = vmatpush1.msra.mxu0 %v7715
  %7824 = vmatprep.subr.mxu0 %v7721
  %7825 = vmatpush1.msra.mxu0 %v7720
  %7826 = vmatprep.subr.mxu0 0.0
  %7827 = vmatpush1.msra.mxu0 0.0
  %7828 = vmatprep.subr.mxu0 0.0
  %7829 = vmatpush1.msra.mxu0 0.0
  %7830 = vmatprep.subr.mxu0 0.0
  %7831 = vmatpush1.msra.mxu0 0.0
  %7832 = vmatprep.subr.mxu0 0.0
  %7833 = vmatpush1.msra.mxu0 0.0
  %7834 = vmatprep.subr.mxu0 0.0
  %7835 = vmatpush1.msra.mxu0 0.0
  %7836 = vmatprep.subr.mxu0 0.0
  %7837 = vmatpush1.msra.mxu0 0.0
  %7838 = vmatprep.subr.mxu0 0.0
  %7839 = vmatpush1.msra.mxu0 0.0
  %7840 = vmatprep.subr.mxu0 0.0
  %7841 = vmatpush1.msra.mxu0 0.0
  %7842 = vmatprep.subr.mxu0 0.0
  %7843 = vmatpush1.msra.mxu0 0.0
  %7844 = vmatprep.subr.mxu0 0.0
  %7845 = vmatpush1.msra.mxu0 0.0
  %7846 = vmatprep.subr.mxu0 0.0
  %7847 = vmatpush1.msra.mxu0 0.0
  %7848 = vmatprep.subr.mxu0 0.0
  %7849 = vmatpush1.msra.mxu0 0.0
  %7850 = vmatprep.subr.mxu0 0.0
  %7851 = vmatpush1.msra.mxu0 0.0
  %7852 = vmatprep.subr.mxu0 0.0
  %7853 = vmatpush1.msra.mxu0 0.0
  %7854 = vmatprep.subr.mxu0 0.0
  %7855 = vmatpush1.msra.mxu0 0.0
  %7856 = vmatprep.subr.mxu0 0.0
  %7857 = vmatpush1.msra.mxu0 0.0
  %7858 = vmatprep.mubr.f32.mxu0 0.0
  %7859 = vmatmul.mubr.f32.gmra.mrb[0].mxu0 %v7641
  %v7860 = vpop.f32.mrb[0].mxu0
  %v7861 = vadd.f32 0.0, %v7860
  %v7862 = vpop.f32.mrb[0].mxu0
  %v7863 = vadd.f32 0.0, %v7862
  %7864 = vdwg.mxu0
  %7865 = vmatprep.subr.mxu0 0.0
  %7866 = vmatpush1.msra.mxu0 %v7647
  %7867 = vmatprep.subr.mxu0 0.0
  %7868 = vmatpush1.msra.mxu0 %v7652
  %7869 = vmatprep.subr.mxu0 0.0
  %7870 = vmatpush1.msra.mxu0 %v7657
  %7871 = vmatprep.subr.mxu0 0.0
  %7872 = vmatpush1.msra.mxu0 %v7662
  %7873 = vmatprep.subr.mxu0 0.0
  %7874 = vmatpush1.msra.mxu0 %v7667
  %7875 = vmatprep.subr.mxu0 0.0
  %7876 = vmatpush1.msra.mxu0 %v7672
  %7877 = vmatprep.subr.mxu0 0.0
  %7878 = vmatpush1.msra.mxu0 %v7677
  %7879 = vmatprep.subr.mxu0 0.0
  %7880 = vmatpush1.msra.mxu0 %v7682
  %7881 = vmatprep.subr.mxu0 0.0
  %7882 = vmatpush1.msra.mxu0 %v7687
  %7883 = vmatprep.subr.mxu0 0.0
  %7884 = vmatpush1.msra.mxu0 %v7692
  %7885 = vmatprep.subr.mxu0 0.0
  %7886 = vmatpush1.msra.mxu0 %v7697
  %7887 = vmatprep.subr.mxu0 0.0
  %7888 = vmatpush1.msra.mxu0 %v7702
  %7889 = vmatprep.subr.mxu0 0.0
  %7890 = vmatpush1.msra.mxu0 %v7707
  %7891 = vmatprep.subr.mxu0 0.0
  %7892 = vmatpush1.msra.mxu0 %v7712
  %7893 = vmatprep.subr.mxu0 0.0
  %7894 = vmatpush1.msra.mxu0 %v7717
  %7895 = vmatprep.subr.mxu0 0.0
  %7896 = vmatpush1.msra.mxu0 %v7722
  %7897 = vmatprep.subr.mxu0 0.0
  %7898 = vmatpush1.msra.mxu0 0.0
  %7899 = vmatprep.subr.mxu0 0.0
  %7900 = vmatpush1.msra.mxu0 0.0
  %7901 = vmatprep.subr.mxu0 0.0
  %7902 = vmatpush1.msra.mxu0 0.0
  %7903 = vmatprep.subr.mxu0 0.0
  %7904 = vmatpush1.msra.mxu0 0.0
  %7905 = vmatprep.subr.mxu0 0.0
  %7906 = vmatpush1.msra.mxu0 0.0
  %7907 = vmatprep.subr.mxu0 0.0
  %7908 = vmatpush1.msra.mxu0 0.0
  %7909 = vmatprep.subr.mxu0 0.0
  %7910 = vmatpush1.msra.mxu0 0.0
  %7911 = vmatprep.subr.mxu0 0.0
  %7912 = vmatpush1.msra.mxu0 0.0
  %7913 = vmatprep.subr.mxu0 0.0
  %7914 = vmatpush1.msra.mxu0 0.0
  %7915 = vmatprep.subr.mxu0 0.0
  %7916 = vmatpush1.msra.mxu0 0.0
  %7917 = vmatprep.subr.mxu0 0.0
  %7918 = vmatpush1.msra.mxu0 0.0
  %7919 = vmatprep.subr.mxu0 0.0
  %7920 = vmatpush1.msra.mxu0 0.0
  %7921 = vmatprep.subr.mxu0 0.0
  %7922 = vmatpush1.msra.mxu0 0.0
  %7923 = vmatprep.subr.mxu0 0.0
  %7924 = vmatpush1.msra.mxu0 0.0
  %7925 = vmatprep.subr.mxu0 0.0
  %7926 = vmatpush1.msra.mxu0 0.0
  %7927 = vmatprep.subr.mxu0 0.0
  %7928 = vmatpush1.msra.mxu0 0.0
  %7929 = vmatprep.mubr.f32.mxu0 0.0
  %7930 = vmatmul.mubr.f32.gmra.mrb[0].mxu0 %v7641
  %v7931 = vpop.f32.mrb[0].mxu0
  %v7932 = vadd.f32 0.0, %v7931
  %v7933 = vpop.f32.mrb[0].mxu0
  %7934 = vdwg.mxu0
  %v7935 = vadd.f32 %v7635, %v7790
  %v7936 = vadd.f32 %v7636, %v7792
  %v7937 = vadd.f32 %v7637, %v7861
  %v7938 = vadd.f32 %v7638, %v7863
  %v7939 = vadd.f32 %v7639, %v7932
  %v7940 = vld [vmem:[%s15] sm:$0x1f]
  %v7942 = vlaneseq
  %v7943 = vshrl.u32 %v7942, 7
  %v7944 = vsub.s32 0, %v7943
  %v7945 = vrot.slane %v7940, %v7944
  %v7946 = vlaneseq
  %v7947 = vshrl.u32 %v7946, 7
  %v7948 = vsub.s32 1, %v7947
  %v7949 = vrot.slane %v7940, %v7948
  %v7950 = vlaneseq
  %v7951 = vshrl.u32 %v7950, 7
  %v7952 = vsub.s32 2, %v7951
  %v7953 = vrot.slane %v7940, %v7952
  %v7954 = vlaneseq
  %v7955 = vshrl.u32 %v7954, 7
  %v7956 = vsub.s32 3, %v7955
  %v7957 = vrot.slane %v7940, %v7956
  %v7958 = vlaneseq
  %v7959 = vshrl.u32 %v7958, 7
  %v7960 = vsub.s32 4, %v7959
  %v7961 = vrot.slane %v7940, %v7960
  %v7967 = vadd.f32 %v7935, %v7945
  %v7968 = vadd.f32 %v7936, %v7949
  %v7969 = vadd.f32 %v7937, %v7953
  %v7970 = vadd.f32 %v7938, %v7957
  %v7971 = vadd.f32 %v7939, %v7961
  %v7972 = vmax.f32 %v7967, 0.0
  %v7973 = vmax.f32 %v7968, 0.0
  %v7974 = vmax.f32 %v7969, 0.0
  %v7975 = vmax.f32 %v7970, 0.0
  %v7976 = vmax.f32 %v7971, 0.0
  %v7977 = vld [vmem:[%s16] sm:$0xff]
  %v7978 = vld [vmem:[%s16 + $0x8] sm:$0xff]
  %v7979 = vld [vmem:[%s16 + $0x10] sm:$0xff]
  %v7980 = vld [vmem:[%s16 + $0x18] sm:$0xff]
  %v7981 = vld [vmem:[%s16 + $0x20] sm:$0xff]
  %v7982 = vld [vmem:[%s16 + $0x28] sm:$0xff]
  %v7983 = vld [vmem:[%s16 + $0x30] sm:$0xff]
  %v7984 = vld [vmem:[%s16 + $0x38] sm:$0xff]
  %v7985 = vld [vmem:[%s16 + $0x40] sm:$0xff]
  %v7986 = vld [vmem:[%s16 + $0x48] sm:$0xff]
  %v7987 = vld [vmem:[%s16 + $0x50] sm:$0xff]
  %v7988 = vld [vmem:[%s16 + $0x58] sm:$0xff]
  %v7989 = vld [vmem:[%s16 + $0x60] sm:$0xff]
  %v7990 = vld [vmem:[%s16 + $0x68] sm:$0xff]
  %v7991 = vld [vmem:[%s16 + $0x70] sm:$0xff]
  %v7992 = vld [vmem:[%s16 + $0x78] sm:$0xff]
  %v7993 = vld [vmem:[%s16 + $0x80] sm:$0xff]
  %v7994 = vld [vmem:[%s16 + $0x88] sm:$0xff]
  %v7995 = vld [vmem:[%s16 + $0x90] sm:$0xff]
  %v7996 = vld [vmem:[%s16 + $0x98] sm:$0xff]
  %v7997 = vld [vmem:[%s16 + $0xa0] sm:$0xff]
  %v7998 = vld [vmem:[%s16 + $0xa8] sm:$0xff]
  %v7999 = vld [vmem:[%s16 + $0xb0] sm:$0xff]
  %v8000 = vld [vmem:[%s16 + $0xb8] sm:$0xff]
  %v8001 = vld [vmem:[%s16 + $0xc0] sm:$0xff]
  %v8002 = vld [vmem:[%s16 + $0xc8] sm:$0xff]
  %v8003 = vld [vmem:[%s16 + $0xd0] sm:$0xff]
  %v8004 = vld [vmem:[%s16 + $0xd8] sm:$0xff]
  %v8005 = vld [vmem:[%s16 + $0xe0] sm:$0xff]
  %v8006 = vld [vmem:[%s16 + $0xe8] sm:$0xff]
  %v8007 = vld [vmem:[%s16 + $0xf0] sm:$0xff]
  %v8008 = vld [vmem:[%s16 + $0xf8] sm:$0xff]
  %v8009 = vld [vmem:[%s16 + $0x100] sm:$0xff]
  %v8010 = vld [vmem:[%s16 + $0x108] sm:$0xff]
  %v8011 = vld [vmem:[%s16 + $0x110] sm:$0xff]
  %v8012 = vld [vmem:[%s16 + $0x118] sm:$0xff]
  %v8013 = vld [vmem:[%s16 + $0x120] sm:$0xff]
  %v8014 = vld [vmem:[%s16 + $0x128] sm:$0xff]
  %v8015 = vld [vmem:[%s16 + $0x130] sm:$0xff]
  %v8016 = vld [vmem:[%s16 + $0x138] sm:$0xff]
  %v8017 = vld [vmem:[%s16 + $0x140] sm:$0xff]
  %v8018 = vld [vmem:[%s16 + $0x148] sm:$0xff]
  %v8019 = vld [vmem:[%s16 + $0x150] sm:$0xff]
  %v8020 = vld [vmem:[%s16 + $0x158] sm:$0xff]
  %v8021 = vld [vmem:[%s16 + $0x160] sm:$0xff]
  %v8022 = vld [vmem:[%s16 + $0x168] sm:$0xff]
  %v8023 = vld [vmem:[%s16 + $0x170] sm:$0xff]
  %v8024 = vld [vmem:[%s16 + $0x178] sm:$0xff]
  %v8025 = vld [vmem:[%s16 + $0x180] sm:$0xff]
  %v8026 = vld [vmem:[%s16 + $0x188] sm:$0xff]
  %v8027 = vld [vmem:[%s16 + $0x190] sm:$0xff]
  %v8028 = vld [vmem:[%s16 + $0x198] sm:$0xff]
  %v8029 = vld [vmem:[%s16 + $0x1a0] sm:$0xff]
  %v8030 = vld [vmem:[%s16 + $0x1a8] sm:$0xff]
  %v8031 = vld [vmem:[%s16 + $0x1b0] sm:$0xff]
  %v8032 = vld [vmem:[%s16 + $0x1b8] sm:$0xff]
  %v8033 = vld [vmem:[%s16 + $0x1c0] sm:$0xff]
  %v8034 = vld [vmem:[%s16 + $0x1c8] sm:$0xff]
  %v8035 = vld [vmem:[%s16 + $0x1d0] sm:$0xff]
  %v8036 = vld [vmem:[%s16 + $0x1d8] sm:$0xff]
  %v8037 = vld [vmem:[%s16 + $0x1e0] sm:$0xff]
  %v8038 = vld [vmem:[%s16 + $0x1e8] sm:$0xff]
  %v8039 = vld [vmem:[%s16 + $0x1f0] sm:$0xff]
  %v8040 = vld [vmem:[%s16 + $0x1f8] sm:$0xff]
  %v8041 = vld [vmem:[%s16 + $0x200] sm:$0xff]
  %v8042 = vld [vmem:[%s16 + $0x208] sm:$0xff]
  %v8043 = vld [vmem:[%s16 + $0x210] sm:$0xff]
  %v8044 = vld [vmem:[%s16 + $0x218] sm:$0xff]
  %v8045 = vld [vmem:[%s16 + $0x220] sm:$0xff]
  %v8046 = vld [vmem:[%s16 + $0x228] sm:$0xff]
  %v8047 = vld [vmem:[%s16 + $0x230] sm:$0xff]
  %v8048 = vld [vmem:[%s16 + $0x238] sm:$0xff]
  %v8049 = vld [vmem:[%s16 + $0x240] sm:$0xff]
  %v8050 = vld [vmem:[%s16 + $0x248] sm:$0xff]
  %v8051 = vld [vmem:[%s16 + $0x250] sm:$0xff]
  %v8052 = vld [vmem:[%s16 + $0x258] sm:$0xff]
  %v8053 = vld [vmem:[%s16 + $0x260] sm:$0xff]
  %v8054 = vld [vmem:[%s16 + $0x268] sm:$0xff]
  %v8055 = vld [vmem:[%s16 + $0x270] sm:$0xff]
  %v8056 = vld [vmem:[%s16 + $0x278] sm:$0xff]
  %v8057 = vld [vmem:[%s16 + $0x280] sm:$0xff]
  %v8058 = vld [vmem:[%s16 + $0x288] sm:$0xff]
  %v8059 = vld [vmem:[%s16 + $0x290] sm:$0xff]
  %v8060 = vld [vmem:[%s16 + $0x298] sm:$0xff]
  %v8061 = vld [vmem:[%s16 + $0x2a0] sm:$0xff]
  %v8062 = vld [vmem:[%s16 + $0x2a8] sm:$0xff]
  %v8063 = vld [vmem:[%s16 + $0x2b0] sm:$0xff]
  %v8064 = vld [vmem:[%s16 + $0x2b8] sm:$0xff]
  %v8065 = vld [vmem:[%s16 + $0x2c0] sm:$0xff]
  %v8066 = vld [vmem:[%s16 + $0x2c8] sm:$0xff]
  %v8067 = vld [vmem:[%s16 + $0x2d0] sm:$0xff]
  %v8068 = vld [vmem:[%s16 + $0x2d8] sm:$0xff]
  %v8069 = vld [vmem:[%s16 + $0x2e0] sm:$0xff]
  %v8070 = vld [vmem:[%s16 + $0x2e8] sm:$0xff]
  %v8071 = vld [vmem:[%s16 + $0x2f0] sm:$0xff]
  %v8072 = vld [vmem:[%s16 + $0x2f8] sm:$0xff]
  %v8073 = vld [vmem:[%s16 + $0x300] sm:$0xff]
  %v8074 = vld [vmem:[%s16 + $0x308] sm:$0xff]
  %v8075 = vld [vmem:[%s16 + $0x310] sm:$0xff]
  %v8076 = vld [vmem:[%s16 + $0x318] sm:$0xff]
  %v8077 = vld [vmem:[%s16 + $0x320] sm:$0xff]
  %v8078 = vld [vmem:[%s16 + $0x328] sm:$0xff]
  %v8079 = vld [vmem:[%s16 + $0x330] sm:$0xff]
  %v8080 = vld [vmem:[%s16 + $0x338] sm:$0xff]
  %v8081 = vld [vmem:[%s16 + $0x340] sm:$0xff]
  %v8082 = vld [vmem:[%s16 + $0x348] sm:$0xff]
  %v8083 = vld [vmem:[%s16 + $0x350] sm:$0xff]
  %v8084 = vld [vmem:[%s16 + $0x358] sm:$0xff]
  %v8085 = vld [vmem:[%s16 + $0x360] sm:$0xff]
  %v8086 = vld [vmem:[%s16 + $0x368] sm:$0xff]
  %v8087 = vld [vmem:[%s16 + $0x370] sm:$0xff]
  %v8088 = vld [vmem:[%s16 + $0x378] sm:$0xff]
  %v8089 = vld [vmem:[%s16 + $0x380] sm:$0xff]
  %v8090 = vld [vmem:[%s16 + $0x388] sm:$0xff]
  %v8091 = vld [vmem:[%s16 + $0x390] sm:$0xff]
  %v8092 = vld [vmem:[%s16 + $0x398] sm:$0xff]
  %v8093 = vld [vmem:[%s16 + $0x3a0] sm:$0xff]
  %v8094 = vld [vmem:[%s16 + $0x3a8] sm:$0xff]
  %v8095 = vld [vmem:[%s16 + $0x3b0] sm:$0xff]
  %v8096 = vld [vmem:[%s16 + $0x3b8] sm:$0xff]
  %v8097 = vld [vmem:[%s16 + $0x3c0] sm:$0xff]
  %v8098 = vld [vmem:[%s16 + $0x3c8] sm:$0xff]
  %v8099 = vld [vmem:[%s16 + $0x3d0] sm:$0xff]
  %v8100 = vld [vmem:[%s16 + $0x3d8] sm:$0xff]
  %v8101 = vld [vmem:[%s16 + $0x3e0] sm:$0xff]
  %v8102 = vld [vmem:[%s16 + $0x3e8] sm:$0xff]
  %v8103 = vld [vmem:[%s16 + $0x3f0] sm:$0xff]
  %v8104 = vld [vmem:[%s16 + $0x3f8] sm:$0xff]
  %v8105 = vld [vmem:[%s16 + $0x400] sm:$0xff]
  %v8106 = vld [vmem:[%s16 + $0x408] sm:$0xff]
  %v8107 = vld [vmem:[%s16 + $0x410] sm:$0xff]
  %v8108 = vld [vmem:[%s16 + $0x418] sm:$0xff]
  %v8109 = vld [vmem:[%s16 + $0x420] sm:$0xff]
  %v8110 = vld [vmem:[%s16 + $0x428] sm:$0xff]
  %v8111 = vld [vmem:[%s16 + $0x430] sm:$0xff]
  %v8112 = vld [vmem:[%s16 + $0x438] sm:$0xff]
  %v8113 = vld [vmem:[%s16 + $0x440] sm:$0xff]
  %v8114 = vld [vmem:[%s16 + $0x448] sm:$0xff]
  %v8115 = vld [vmem:[%s16 + $0x450] sm:$0xff]
  %v8116 = vld [vmem:[%s16 + $0x458] sm:$0xff]
  %v8117 = vld [vmem:[%s16 + $0x460] sm:$0xff]
  %v8118 = vld [vmem:[%s16 + $0x468] sm:$0xff]
  %v8119 = vld [vmem:[%s16 + $0x470] sm:$0xff]
  %v8120 = vld [vmem:[%s16 + $0x478] sm:$0xff]
  %v8121 = vld [vmem:[%s16 + $0x480] sm:$0xff]
  %v8122 = vld [vmem:[%s16 + $0x488] sm:$0xff]
  %v8123 = vld [vmem:[%s16 + $0x490] sm:$0xff]
  %v8124 = vld [vmem:[%s16 + $0x498] sm:$0xff]
  %v8125 = vld [vmem:[%s16 + $0x4a0] sm:$0xff]
  %v8126 = vld [vmem:[%s16 + $0x4a8] sm:$0xff]
  %v8127 = vld [vmem:[%s16 + $0x4b0] sm:$0xff]
  %v8128 = vld [vmem:[%s16 + $0x4b8] sm:$0xff]
  %v8129 = vld [vmem:[%s16 + $0x4c0] sm:$0xff]
  %v8130 = vld [vmem:[%s16 + $0x4c8] sm:$0xff]
  %v8131 = vld [vmem:[%s16 + $0x4d0] sm:$0xff]
  %v8132 = vld [vmem:[%s16 + $0x4d8] sm:$0xff]
  %v8133 = vld [vmem:[%s16 + $0x4e0] sm:$0xff]
  %v8134 = vld [vmem:[%s16 + $0x4e8] sm:$0xff]
  %v8135 = vld [vmem:[%s16 + $0x4f0] sm:$0xff]
  %v8136 = vld [vmem:[%s16 + $0x4f8] sm:$0xff]
  %v8137 = vld [vmem:[%s16 + $0x500] sm:$0xff]
  %v8138 = vld [vmem:[%s16 + $0x508] sm:$0xff]
  %v8139 = vld [vmem:[%s16 + $0x510] sm:$0xff]
  %v8140 = vld [vmem:[%s16 + $0x518] sm:$0xff]
  %v8141 = vld [vmem:[%s16 + $0x520] sm:$0xff]
  %v8142 = vld [vmem:[%s16 + $0x528] sm:$0xff]
  %v8143 = vld [vmem:[%s16 + $0x530] sm:$0xff]
  %v8144 = vld [vmem:[%s16 + $0x538] sm:$0xff]
  %v8145 = vld [vmem:[%s16 + $0x540] sm:$0xff]
  %v8146 = vld [vmem:[%s16 + $0x548] sm:$0xff]
  %v8147 = vld [vmem:[%s16 + $0x550] sm:$0xff]
  %v8148 = vld [vmem:[%s16 + $0x558] sm:$0xff]
  %v8149 = vld [vmem:[%s16 + $0x560] sm:$0xff]
  %v8150 = vld [vmem:[%s16 + $0x568] sm:$0xff]
  %v8151 = vld [vmem:[%s16 + $0x570] sm:$0xff]
  %v8152 = vld [vmem:[%s16 + $0x578] sm:$0xff]
  %v8153 = vld [vmem:[%s16 + $0x580] sm:$0xff]
  %v8154 = vld [vmem:[%s16 + $0x588] sm:$0xff]
  %v8155 = vld [vmem:[%s16 + $0x590] sm:$0xff]
  %v8156 = vld [vmem:[%s16 + $0x598] sm:$0xff]
  %v8157 = vld [vmem:[%s16 + $0x5a0] sm:$0xff]
  %v8158 = vld [vmem:[%s16 + $0x5a8] sm:$0xff]
  %v8159 = vld [vmem:[%s16 + $0x5b0] sm:$0xff]
  %v8160 = vld [vmem:[%s16 + $0x5b8] sm:$0xff]
  %v8161 = vld [vmem:[%s16 + $0x5c0] sm:$0xff]
  %v8162 = vld [vmem:[%s16 + $0x5c8] sm:$0xff]
  %v8163 = vld [vmem:[%s16 + $0x5d0] sm:$0xff]
  %v8164 = vld [vmem:[%s16 + $0x5d8] sm:$0xff]
  %v8165 = vld [vmem:[%s16 + $0x5e0] sm:$0xff]
  %v8166 = vld [vmem:[%s16 + $0x5e8] sm:$0xff]
  %v8167 = vld [vmem:[%s16 + $0x5f0] sm:$0xff]
  %v8168 = vld [vmem:[%s16 + $0x5f8] sm:$0xff]
  %v8169 = vld [vmem:[%s16 + $0x600] sm:$0xff]
  %v8170 = vld [vmem:[%s16 + $0x608] sm:$0xff]
  %v8171 = vld [vmem:[%s16 + $0x610] sm:$0xff]
  %v8172 = vld [vmem:[%s16 + $0x618] sm:$0xff]
  %v8173 = vld [vmem:[%s16 + $0x620] sm:$0xff]
  %v8174 = vld [vmem:[%s16 + $0x628] sm:$0xff]
  %v8175 = vld [vmem:[%s16 + $0x630] sm:$0xff]
  %v8176 = vld [vmem:[%s16 + $0x638] sm:$0xff]
  %v8177 = vld [vmem:[%s16 + $0x640] sm:$0xff]
  %v8178 = vld [vmem:[%s16 + $0x648] sm:$0xff]
  %v8179 = vld [vmem:[%s16 + $0x650] sm:$0xff]
  %v8180 = vld [vmem:[%s16 + $0x658] sm:$0xff]
  %v8181 = vld [vmem:[%s16 + $0x660] sm:$0xff]
  %v8182 = vld [vmem:[%s16 + $0x668] sm:$0xff]
  %v8183 = vld [vmem:[%s16 + $0x670] sm:$0xff]
  %v8184 = vld [vmem:[%s16 + $0x678] sm:$0xff]
  %v8185 = vld [vmem:[%s16 + $0x680] sm:$0xff]
  %v8186 = vld [vmem:[%s16 + $0x688] sm:$0xff]
  %v8187 = vld [vmem:[%s16 + $0x690] sm:$0xff]
  %v8188 = vld [vmem:[%s16 + $0x698] sm:$0xff]
  %v8189 = vld [vmem:[%s16 + $0x6a0] sm:$0xff]
  %v8190 = vld [vmem:[%s16 + $0x6a8] sm:$0xff]
  %v8191 = vld [vmem:[%s16 + $0x6b0] sm:$0xff]
  %v8192 = vld [vmem:[%s16 + $0x6b8] sm:$0xff]
  %v8193 = vld [vmem:[%s16 + $0x6c0] sm:$0xff]
  %v8194 = vld [vmem:[%s16 + $0x6c8] sm:$0xff]
  %v8195 = vld [vmem:[%s16 + $0x6d0] sm:$0xff]
  %v8196 = vld [vmem:[%s16 + $0x6d8] sm:$0xff]
  %v8197 = vld [vmem:[%s16 + $0x6e0] sm:$0xff]
  %v8198 = vld [vmem:[%s16 + $0x6e8] sm:$0xff]
  %v8199 = vld [vmem:[%s16 + $0x6f0] sm:$0xff]
  %v8200 = vld [vmem:[%s16 + $0x6f8] sm:$0xff]
  %v8201 = vld [vmem:[%s16 + $0x700] sm:$0xff]
  %v8202 = vld [vmem:[%s16 + $0x708] sm:$0xff]
  %v8203 = vld [vmem:[%s16 + $0x710] sm:$0xff]
  %v8204 = vld [vmem:[%s16 + $0x718] sm:$0xff]
  %v8205 = vld [vmem:[%s16 + $0x720] sm:$0xff]
  %v8206 = vld [vmem:[%s16 + $0x728] sm:$0xff]
  %v8207 = vld [vmem:[%s16 + $0x730] sm:$0xff]
  %v8208 = vld [vmem:[%s16 + $0x738] sm:$0xff]
  %v8209 = vld [vmem:[%s16 + $0x740] sm:$0xff]
  %v8210 = vld [vmem:[%s16 + $0x748] sm:$0xff]
  %v8211 = vld [vmem:[%s16 + $0x750] sm:$0xff]
  %v8212 = vld [vmem:[%s16 + $0x758] sm:$0xff]
  %v8213 = vld [vmem:[%s16 + $0x760] sm:$0xff]
  %v8214 = vld [vmem:[%s16 + $0x768] sm:$0xff]
  %v8215 = vld [vmem:[%s16 + $0x770] sm:$0xff]
  %v8216 = vld [vmem:[%s16 + $0x778] sm:$0xff]
  %v8217 = vld [vmem:[%s16 + $0x780] sm:$0xff]
  %v8218 = vld [vmem:[%s16 + $0x788] sm:$0xff]
  %v8219 = vld [vmem:[%s16 + $0x790] sm:$0xff]
  %v8220 = vld [vmem:[%s16 + $0x798] sm:$0xff]
  %v8221 = vld [vmem:[%s16 + $0x7a0] sm:$0xff]
  %v8222 = vld [vmem:[%s16 + $0x7a8] sm:$0xff]
  %v8223 = vld [vmem:[%s16 + $0x7b0] sm:$0xff]
  %v8224 = vld [vmem:[%s16 + $0x7b8] sm:$0xff]
  %v8225 = vld [vmem:[%s16 + $0x7c0] sm:$0xff]
  %v8226 = vld [vmem:[%s16 + $0x7c8] sm:$0xff]
  %v8227 = vld [vmem:[%s16 + $0x7d0] sm:$0xff]
  %v8228 = vld [vmem:[%s16 + $0x7d8] sm:$0xff]
  %v8229 = vld [vmem:[%s16 + $0x7e0] sm:$0xff]
  %v8230 = vld [vmem:[%s16 + $0x7e8] sm:$0xff]
  %v8231 = vld [vmem:[%s16 + $0x7f0] sm:$0xff]
  %v8232 = vld [vmem:[%s16 + $0x7f8] sm:$0xff]
  %v8233 = vld [vmem:[%s16 + $0x800] sm:$0xff]
  %v8234 = vld [vmem:[%s16 + $0x808] sm:$0xff]
  %v8235 = vld [vmem:[%s16 + $0x810] sm:$0xff]
  %v8236 = vld [vmem:[%s16 + $0x818] sm:$0xff]
  %v8237 = vld [vmem:[%s16 + $0x820] sm:$0xff]
  %v8238 = vld [vmem:[%s16 + $0x828] sm:$0xff]
  %v8239 = vld [vmem:[%s16 + $0x830] sm:$0xff]
  %v8240 = vld [vmem:[%s16 + $0x838] sm:$0xff]
  %v8241 = vld [vmem:[%s16 + $0x840] sm:$0xff]
  %v8242 = vld [vmem:[%s16 + $0x848] sm:$0xff]
  %v8243 = vld [vmem:[%s16 + $0x850] sm:$0xff]
  %v8244 = vld [vmem:[%s16 + $0x858] sm:$0xff]
  %v8245 = vld [vmem:[%s16 + $0x860] sm:$0xff]
  %v8246 = vld [vmem:[%s16 + $0x868] sm:$0xff]
  %v8247 = vld [vmem:[%s16 + $0x870] sm:$0xff]
  %v8248 = vld [vmem:[%s16 + $0x878] sm:$0xff]
  %v8249 = vld [vmem:[%s16 + $0x880] sm:$0xff]
  %v8250 = vld [vmem:[%s16 + $0x888] sm:$0xff]
  %v8251 = vld [vmem:[%s16 + $0x890] sm:$0xff]
  %v8252 = vld [vmem:[%s16 + $0x898] sm:$0xff]
  %v8253 = vld [vmem:[%s16 + $0x8a0] sm:$0xff]
  %v8254 = vld [vmem:[%s16 + $0x8a8] sm:$0xff]
  %v8255 = vld [vmem:[%s16 + $0x8b0] sm:$0xff]
  %v8256 = vld [vmem:[%s16 + $0x8b8] sm:$0xff]
  %v8257 = vld [vmem:[%s16 + $0x8c0] sm:$0xff]
  %v8258 = vld [vmem:[%s16 + $0x8c8] sm:$0xff]
  %v8259 = vld [vmem:[%s16 + $0x8d0] sm:$0xff]
  %v8260 = vld [vmem:[%s16 + $0x8d8] sm:$0xff]
  %v8261 = vld [vmem:[%s16 + $0x8e0] sm:$0xff]
  %v8262 = vld [vmem:[%s16 + $0x8e8] sm:$0xff]
  %v8263 = vld [vmem:[%s16 + $0x8f0] sm:$0xff]
  %v8264 = vld [vmem:[%s16 + $0x8f8] sm:$0xff]
  %v8265 = vld [vmem:[%s16 + $0x900] sm:$0xff]
  %v8266 = vld [vmem:[%s16 + $0x908] sm:$0xff]
  %v8267 = vld [vmem:[%s16 + $0x910] sm:$0xff]
  %v8268 = vld [vmem:[%s16 + $0x918] sm:$0xff]
  %v8269 = vld [vmem:[%s16 + $0x920] sm:$0xff]
  %v8270 = vld [vmem:[%s16 + $0x928] sm:$0xff]
  %v8271 = vld [vmem:[%s16 + $0x930] sm:$0xff]
  %v8272 = vld [vmem:[%s16 + $0x938] sm:$0xff]
  %v8273 = vld [vmem:[%s16 + $0x940] sm:$0xff]
  %v8274 = vld [vmem:[%s16 + $0x948] sm:$0xff]
  %v8275 = vld [vmem:[%s16 + $0x950] sm:$0xff]
  %v8276 = vld [vmem:[%s16 + $0x958] sm:$0xff]
  %v8277 = vld [vmem:[%s16 + $0x960] sm:$0xff]
  %v8278 = vld [vmem:[%s16 + $0x968] sm:$0xff]
  %v8279 = vld [vmem:[%s16 + $0x970] sm:$0xff]
  %v8280 = vld [vmem:[%s16 + $0x978] sm:$0xff]
  %v8281 = vld [vmem:[%s16 + $0x980] sm:$0xff]
  %v8282 = vld [vmem:[%s16 + $0x988] sm:$0xff]
  %v8283 = vld [vmem:[%s16 + $0x990] sm:$0xff]
  %v8284 = vld [vmem:[%s16 + $0x998] sm:$0xff]
  %v8285 = vld [vmem:[%s16 + $0x9a0] sm:$0xff]
  %v8286 = vld [vmem:[%s16 + $0x9a8] sm:$0xff]
  %v8287 = vld [vmem:[%s16 + $0x9b0] sm:$0xff]
  %v8288 = vld [vmem:[%s16 + $0x9b8] sm:$0xff]
  %v8289 = vld [vmem:[%s16 + $0x9c0] sm:$0xff]
  %v8290 = vld [vmem:[%s16 + $0x9c8] sm:$0xff]
  %v8291 = vld [vmem:[%s16 + $0x9d0] sm:$0xff]
  %v8292 = vld [vmem:[%s16 + $0x9d8] sm:$0xff]
  %v8293 = vld [vmem:[%s16 + $0x9e0] sm:$0xff]
  %v8294 = vld [vmem:[%s16 + $0x9e8] sm:$0xff]
  %v8295 = vld [vmem:[%s16 + $0x9f0] sm:$0xff]
  %v8296 = vld [vmem:[%s16 + $0x9f8] sm:$0xff]
  %v8297 = vld [vmem:[%s17] sm:$0xf]
  %v8299 = vlaneseq
  %v8300 = vshrl.u32 %v8299, 7
  %v8301 = vsub.s32 0, %v8300
  %v8302 = vrot.slane %v8297, %v8301
  %v8303 = vlaneseq
  %v8304 = vshrl.u32 %v8303, 7
  %v8305 = vsub.s32 1, %v8304
  %v8306 = vrot.slane %v8297, %v8305
  %v8307 = vlaneseq
  %v8308 = vshrl.u32 %v8307, 7
  %v8309 = vsub.s32 2, %v8308
  %v8310 = vrot.slane %v8297, %v8309
  %v8311 = vlaneseq
  %v8312 = vshrl.u32 %v8311, 7
  %v8313 = vsub.s32 3, %v8312
  %v8314 = vrot.slane %v8297, %v8313
  %8319 = vmatprep.subr.mxu0 %v7978
  %8320 = vmatpush1.msra.mxu0 %v7977
  %8321 = vmatprep.subr.mxu0 %v7982
  %8322 = vmatpush1.msra.mxu0 %v7981
  %8323 = vmatprep.subr.mxu0 %v7986
  %8324 = vmatpush1.msra.mxu0 %v7985
  %8325 = vmatprep.subr.mxu0 %v7990
  %8326 = vmatpush1.msra.mxu0 %v7989
  %8327 = vmatprep.subr.mxu0 %v7994
  %8328 = vmatpush1.msra.mxu0 %v7993
  %8329 = vmatprep.subr.mxu0 %v7998
  %8330 = vmatpush1.msra.mxu0 %v7997
  %8331 = vmatprep.subr.mxu0 %v8002
  %8332 = vmatpush1.msra.mxu0 %v8001
  %8333 = vmatprep.subr.mxu0 %v8006
  %8334 = vmatpush1.msra.mxu0 %v8005
  %8335 = vmatprep.subr.mxu0 %v8010
  %8336 = vmatpush1.msra.mxu0 %v8009
  %8337 = vmatprep.subr.mxu0 %v8014
  %8338 = vmatpush1.msra.mxu0 %v8013
  %8339 = vmatprep.subr.mxu0 %v8018
  %8340 = vmatpush1.msra.mxu0 %v8017
  %8341 = vmatprep.subr.mxu0 %v8022
  %8342 = vmatpush1.msra.mxu0 %v8021
  %8343 = vmatprep.subr.mxu0 %v8026
  %8344 = vmatpush1.msra.mxu0 %v8025
  %8345 = vmatprep.subr.mxu0 %v8030
  %8346 = vmatpush1.msra.mxu0 %v8029
  %8347 = vmatprep.subr.mxu0 %v8034
  %8348 = vmatpush1.msra.mxu0 %v8033
  %8349 = vmatprep.subr.mxu0 %v8038
  %8350 = vmatpush1.msra.mxu0 %v8037
  %8351 = vmatprep.subr.mxu0 %v8042
  %8352 = vmatpush1.msra.mxu0 %v8041
  %8353 = vmatprep.subr.mxu0 %v8046
  %8354 = vmatpush1.msra.mxu0 %v8045
  %8355 = vmatprep.subr.mxu0 %v8050
  %8356 = vmatpush1.msra.mxu0 %v8049
  %8357 = vmatprep.subr.mxu0 %v8054
  %8358 = vmatpush1.msra.mxu0 %v8053
  %8359 = vmatprep.subr.mxu0 %v8058
  %8360 = vmatpush1.msra.mxu0 %v8057
  %8361 = vmatprep.subr.mxu0 %v8062
  %8362 = vmatpush1.msra.mxu0 %v8061
  %8363 = vmatprep.subr.mxu0 %v8066
  %8364 = vmatpush1.msra.mxu0 %v8065
  %8365 = vmatprep.subr.mxu0 %v8070
  %8366 = vmatpush1.msra.mxu0 %v8069
  %8367 = vmatprep.subr.mxu0 %v8074
  %8368 = vmatpush1.msra.mxu0 %v8073
  %8369 = vmatprep.subr.mxu0 %v8078
  %8370 = vmatpush1.msra.mxu0 %v8077
  %8371 = vmatprep.subr.mxu0 %v8082
  %8372 = vmatpush1.msra.mxu0 %v8081
  %8373 = vmatprep.subr.mxu0 %v8086
  %8374 = vmatpush1.msra.mxu0 %v8085
  %8375 = vmatprep.subr.mxu0 %v8090
  %8376 = vmatpush1.msra.mxu0 %v8089
  %8377 = vmatprep.subr.mxu0 %v8094
  %8378 = vmatpush1.msra.mxu0 %v8093
  %8379 = vmatprep.subr.mxu0 %v8098
  %8380 = vmatpush1.msra.mxu0 %v8097
  %8381 = vmatprep.subr.mxu0 %v8102
  %8382 = vmatpush1.msra.mxu0 %v8101
  %8383 = vmatprep.mubr.f32.mxu0 %v7973
  %8384 = vmatmul.mubr.f32.gmra.mrb[0].mxu0 %v7972
  %v8385 = vpop.f32.mrb[0].mxu0
  %v8386 = vadd.f32 %v8302, %v8385
  %v8387 = vpop.f32.mrb[0].mxu0
  %v8388 = vadd.f32 %v8306, %v8387
  %8389 = vdwg.mxu0
  %8390 = vmatprep.subr.mxu0 %v8106
  %8391 = vmatpush1.msra.mxu0 %v8105
  %8392 = vmatprep.subr.mxu0 %v8110
  %8393 = vmatpush1.msra.mxu0 %v8109
  %8394 = vmatprep.subr.mxu0 %v8114
  %8395 = vmatpush1.msra.mxu0 %v8113
  %8396 = vmatprep.subr.mxu0 %v8118
  %8397 = vmatpush1.msra.mxu0 %v8117
  %8398 = vmatprep.subr.mxu0 %v8122
  %8399 = vmatpush1.msra.mxu0 %v8121
  %8400 = vmatprep.subr.mxu0 %v8126
  %8401 = vmatpush1.msra.mxu0 %v8125
  %8402 = vmatprep.subr.mxu0 %v8130
  %8403 = vmatpush1.msra.mxu0 %v8129
  %8404 = vmatprep.subr.mxu0 %v8134
  %8405 = vmatpush1.msra.mxu0 %v8133
  %8406 = vmatprep.subr.mxu0 %v8138
  %8407 = vmatpush1.msra.mxu0 %v8137
  %8408 = vmatprep.subr.mxu0 %v8142
  %8409 = vmatpush1.msra.mxu0 %v8141
  %8410 = vmatprep.subr.mxu0 %v8146
  %8411 = vmatpush1.msra.mxu0 %v8145
  %8412 = vmatprep.subr.mxu0 %v8150
  %8413 = vmatpush1.msra.mxu0 %v8149
  %8414 = vmatprep.subr.mxu0 %v8154
  %8415 = vmatpush1.msra.mxu0 %v8153
  %8416 = vmatprep.subr.mxu0 %v8158
  %8417 = vmatpush1.msra.mxu0 %v8157
  %8418 = vmatprep.subr.mxu0 %v8162
  %8419 = vmatpush1.msra.mxu0 %v8161
  %8420 = vmatprep.subr.mxu0 %v8166
  %8421 = vmatpush1.msra.mxu0 %v8165
  %8422 = vmatprep.subr.mxu0 %v8170
  %8423 = vmatpush1.msra.mxu0 %v8169
  %8424 = vmatprep.subr.mxu0 %v8174
  %8425 = vmatpush1.msra.mxu0 %v8173
  %8426 = vmatprep.subr.mxu0 %v8178
  %8427 = vmatpush1.msra.mxu0 %v8177
  %8428 = vmatprep.subr.mxu0 %v8182
  %8429 = vmatpush1.msra.mxu0 %v8181
  %8430 = vmatprep.subr.mxu0 %v8186
  %8431 = vmatpush1.msra.mxu0 %v8185
  %8432 = vmatprep.subr.mxu0 %v8190
  %8433 = vmatpush1.msra.mxu0 %v8189
  %8434 = vmatprep.subr.mxu0 %v8194
  %8435 = vmatpush1.msra.mxu0 %v8193
  %8436 = vmatprep.subr.mxu0 %v8198
  %8437 = vmatpush1.msra.mxu0 %v8197
  %8438 = vmatprep.subr.mxu0 %v8202
  %8439 = vmatpush1.msra.mxu0 %v8201
  %8440 = vmatprep.subr.mxu0 %v8206
  %8441 = vmatpush1.msra.mxu0 %v8205
  %8442 = vmatprep.subr.mxu0 %v8210
  %8443 = vmatpush1.msra.mxu0 %v8209
  %8444 = vmatprep.subr.mxu0 %v8214
  %8445 = vmatpush1.msra.mxu0 %v8213
  %8446 = vmatprep.subr.mxu0 %v8218
  %8447 = vmatpush1.msra.mxu0 %v8217
  %8448 = vmatprep.subr.mxu0 %v8222
  %8449 = vmatpush1.msra.mxu0 %v8221
  %8450 = vmatprep.subr.mxu0 %v8226
  %8451 = vmatpush1.msra.mxu0 %v8225
  %8452 = vmatprep.subr.mxu0 %v8230
  %8453 = vmatpush1.msra.mxu0 %v8229
  %8454 = vmatprep.mubr.f32.mxu0 %v7975
  %8455 = vmatmul.mubr.f32.gmra.mrb[0].mxu0 %v7974
  %v8456 = vpop.f32.mrb[0].mxu0
  %v8457 = vadd.f32 %v8386, %v8456
  %v8458 = vpop.f32.mrb[0].mxu0
  %v8459 = vadd.f32 %v8388, %v8458
  %8460 = vdwg.mxu0
  %8461 = vmatprep.subr.mxu0 %v8234
  %8462 = vmatpush1.msra.mxu0 %v8233
  %8463 = vmatprep.subr.mxu0 %v8238
  %8464 = vmatpush1.msra.mxu0 %v8237
  %8465 = vmatprep.subr.mxu0 %v8242
  %8466 = vmatpush1.msra.mxu0 %v8241
  %8467 = vmatprep.subr.mxu0 %v8246
  %8468 = vmatpush1.msra.mxu0 %v8245
  %8469 = vmatprep.subr.mxu0 %v8250
  %8470 = vmatpush1.msra.mxu0 %v8249
  %8471 = vmatprep.subr.mxu0 %v8254
  %8472 = vmatpush1.msra.mxu0 %v8253
  %8473 = vmatprep.subr.mxu0 %v8258
  %8474 = vmatpush1.msra.mxu0 %v8257
  %8475 = vmatprep.subr.mxu0 %v8262
  %8476 = vmatpush1.msra.mxu0 %v8261
  %8477 = vmatprep.subr.mxu0 %v8266
  %8478 = vmatpush1.msra.mxu0 %v8265
  %8479 = vmatprep.subr.mxu0 %v8270
  %8480 = vmatpush1.msra.mxu0 %v8269
  %8481 = vmatprep.subr.mxu0 %v8274
  %8482 = vmatpush1.msra.mxu0 %v8273
  %8483 = vmatprep.subr.mxu0 %v8278
  %8484 = vmatpush1.msra.mxu0 %v8277
  %8485 = vmatprep.subr.mxu0 %v8282
  %8486 = vmatpush1.msra.mxu0 %v8281
  %8487 = vmatprep.subr.mxu0 %v8286
  %8488 = vmatpush1.msra.mxu0 %v8285
  %8489 = vmatprep.subr.mxu0 %v8290
  %8490 = vmatpush1.msra.mxu0 %v8289
  %8491 = vmatprep.subr.mxu0 %v8294
  %8492 = vmatpush1.msra.mxu0 %v8293
  %8493 = vmatprep.subr.mxu0 0.0
  %8494 = vmatpush1.msra.mxu0 0.0
  %8495 = vmatprep.subr.mxu0 0.0
  %8496 = vmatpush1.msra.mxu0 0.0
  %8497 = vmatprep.subr.mxu0 0.0
  %8498 = vmatpush1.msra.mxu0 0.0
  %8499 = vmatprep.subr.mxu0 0.0
  %8500 = vmatpush1.msra.mxu0 0.0
  %8501 = vmatprep.subr.mxu0 0.0
  %8502 = vmatpush1.msra.mxu0 0.0
  %8503 = vmatprep.subr.mxu0 0.0
  %8504 = vmatpush1.msra.mxu0 0.0
  %8505 = vmatprep.subr.mxu0 0.0
  %8506 = vmatpush1.msra.mxu0 0.0
  %8507 = vmatprep.subr.mxu0 0.0
  %8508 = vmatpush1.msra.mxu0 0.0
  %8509 = vmatprep.subr.mxu0 0.0
  %8510 = vmatpush1.msra.mxu0 0.0
  %8511 = vmatprep.subr.mxu0 0.0
  %8512 = vmatpush1.msra.mxu0 0.0
  %8513 = vmatprep.subr.mxu0 0.0
  %8514 = vmatpush1.msra.mxu0 0.0
  %8515 = vmatprep.subr.mxu0 0.0
  %8516 = vmatpush1.msra.mxu0 0.0
  %8517 = vmatprep.subr.mxu0 0.0
  %8518 = vmatpush1.msra.mxu0 0.0
  %8519 = vmatprep.subr.mxu0 0.0
  %8520 = vmatpush1.msra.mxu0 0.0
  %8521 = vmatprep.subr.mxu0 0.0
  %8522 = vmatpush1.msra.mxu0 0.0
  %8523 = vmatprep.subr.mxu0 0.0
  %8524 = vmatpush1.msra.mxu0 0.0
  %8525 = vmatprep.mubr.f32.mxu0 0.0
  %8526 = vmatmul.mubr.f32.gmra.mrb[0].mxu0 %v7976
  %v8527 = vpop.f32.mrb[0].mxu0
  %v8528 = vadd.f32 %v8457, %v8527
  %v8529 = vpop.f32.mrb[0].mxu0
  %v8530 = vadd.f32 %v8459, %v8529
  %8531 = vdwg.mxu0
  %8532 = vmatprep.subr.mxu0 %v7980
  %8533 = vmatpush1.msra.mxu0 %v7979
  %8534 = vmatprep.subr.mxu0 %v7984
  %8535 = vmatpush1.msra.mxu0 %v7983
  %8536 = vmatprep.subr.mxu0 %v7988
  %8537 = vmatpush1.msra.mxu0 %v7987
  %8538 = vmatprep.subr.mxu0 %v7992
  %8539 = vmatpush1.msra.mxu0 %v7991
  %8540 = vmatprep.subr.mxu0 %v7996
  %8541 = vmatpush1.msra.mxu0 %v7995
  %8542 = vmatprep.subr.mxu0 %v8000
  %8543 = vmatpush1.msra.mxu0 %v7999
  %8544 = vmatprep.subr.mxu0 %v8004
  %8545 = vmatpush1.msra.mxu0 %v8003
  %8546 = vmatprep.subr.mxu0 %v8008
  %8547 = vmatpush1.msra.mxu0 %v8007
  %8548 = vmatprep.subr.mxu0 %v8012
  %8549 = vmatpush1.msra.mxu0 %v8011
  %8550 = vmatprep.subr.mxu0 %v8016
  %8551 = vmatpush1.msra.mxu0 %v8015
  %8552 = vmatprep.subr.mxu0 %v8020
  %8553 = vmatpush1.msra.mxu0 %v8019
  %8554 = vmatprep.subr.mxu0 %v8024
  %8555 = vmatpush1.msra.mxu0 %v8023
  %8556 = vmatprep.subr.mxu0 %v8028
  %8557 = vmatpush1.msra.mxu0 %v8027
  %8558 = vmatprep.subr.mxu0 %v8032
  %8559 = vmatpush1.msra.mxu0 %v8031
  %8560 = vmatprep.subr.mxu0 %v8036
  %8561 = vmatpush1.msra.mxu0 %v8035
  %8562 = vmatprep.subr.mxu0 %v8040
  %8563 = vmatpush1.msra.mxu0 %v8039
  %8564 = vmatprep.subr.mxu0 %v8044
  %8565 = vmatpush1.msra.mxu0 %v8043
  %8566 = vmatprep.subr.mxu0 %v8048
  %8567 = vmatpush1.msra.mxu0 %v8047
  %8568 = vmatprep.subr.mxu0 %v8052
  %8569 = vmatpush1.msra.mxu0 %v8051
  %8570 = vmatprep.subr.mxu0 %v8056
  %8571 = vmatpush1.msra.mxu0 %v8055
  %8572 = vmatprep.subr.mxu0 %v8060
  %8573 = vmatpush1.msra.mxu0 %v8059
  %8574 = vmatprep.subr.mxu0 %v8064
  %8575 = vmatpush1.msra.mxu0 %v8063
  %8576 = vmatprep.subr.mxu0 %v8068
  %8577 = vmatpush1.msra.mxu0 %v8067
  %8578 = vmatprep.subr.mxu0 %v8072
  %8579 = vmatpush1.msra.mxu0 %v8071
  %8580 = vmatprep.subr.mxu0 %v8076
  %8581 = vmatpush1.msra.mxu0 %v8075
  %8582 = vmatprep.subr.mxu0 %v8080
  %8583 = vmatpush1.msra.mxu0 %v8079
  %8584 = vmatprep.subr.mxu0 %v8084
  %8585 = vmatpush1.msra.mxu0 %v8083
  %8586 = vmatprep.subr.mxu0 %v8088
  %8587 = vmatpush1.msra.mxu0 %v8087
  %8588 = vmatprep.subr.mxu0 %v8092
  %8589 = vmatpush1.msra.mxu0 %v8091
  %8590 = vmatprep.subr.mxu0 %v8096
  %8591 = vmatpush1.msra.mxu0 %v8095
  %8592 = vmatprep.subr.mxu0 %v8100
  %8593 = vmatpush1.msra.mxu0 %v8099
  %8594 = vmatprep.subr.mxu0 %v8104
  %8595 = vmatpush1.msra.mxu0 %v8103
  %8596 = vmatprep.mubr.f32.mxu0 %v7973
  %8597 = vmatmul.mubr.f32.gmra.mrb[0].mxu0 %v7972
  %v8598 = vpop.f32.mrb[0].mxu0
  %v8599 = vadd.f32 %v8310, %v8598
  %v8600 = vpop.f32.mrb[0].mxu0
  %v8601 = vadd.f32 %v8314, %v8600
  %8602 = vdwg.mxu0
  %8603 = vmatprep.subr.mxu0 %v8108
  %8604 = vmatpush1.msra.mxu0 %v8107
  %8605 = vmatprep.subr.mxu0 %v8112
  %8606 = vmatpush1.msra.mxu0 %v8111
  %8607 = vmatprep.subr.mxu0 %v8116
  %8608 = vmatpush1.msra.mxu0 %v8115
  %8609 = vmatprep.subr.mxu0 %v8120
  %8610 = vmatpush1.msra.mxu0 %v8119
  %8611 = vmatprep.subr.mxu0 %v8124
  %8612 = vmatpush1.msra.mxu0 %v8123
  %8613 = vmatprep.subr.mxu0 %v8128
  %8614 = vmatpush1.msra.mxu0 %v8127
  %8615 = vmatprep.subr.mxu0 %v8132
  %8616 = vmatpush1.msra.mxu0 %v8131
  %8617 = vmatprep.subr.mxu0 %v8136
  %8618 = vmatpush1.msra.mxu0 %v8135
  %8619 = vmatprep.subr.mxu0 %v8140
  %8620 = vmatpush1.msra.mxu0 %v8139
  %8621 = vmatprep.subr.mxu0 %v8144
  %8622 = vmatpush1.msra.mxu0 %v8143
  %8623 = vmatprep.subr.mxu0 %v8148
  %8624 = vmatpush1.msra.mxu0 %v8147
  %8625 = vmatprep.subr.mxu0 %v8152
  %8626 = vmatpush1.msra.mxu0 %v8151
  %8627 = vmatprep.subr.mxu0 %v8156
  %8628 = vmatpush1.msra.mxu0 %v8155
  %8629 = vmatprep.subr.mxu0 %v8160
  %8630 = vmatpush1.msra.mxu0 %v8159
  %8631 = vmatprep.subr.mxu0 %v8164
  %8632 = vmatpush1.msra.mxu0 %v8163
  %8633 = vmatprep.subr.mxu0 %v8168
  %8634 = vmatpush1.msra.mxu0 %v8167
  %8635 = vmatprep.subr.mxu0 %v8172
  %8636 = vmatpush1.msra.mxu0 %v8171
  %8637 = vmatprep.subr.mxu0 %v8176
  %8638 = vmatpush1.msra.mxu0 %v8175
  %8639 = vmatprep.subr.mxu0 %v8180
  %8640 = vmatpush1.msra.mxu0 %v8179
  %8641 = vmatprep.subr.mxu0 %v8184
  %8642 = vmatpush1.msra.mxu0 %v8183
  %8643 = vmatprep.subr.mxu0 %v8188
  %8644 = vmatpush1.msra.mxu0 %v8187
  %8645 = vmatprep.subr.mxu0 %v8192
  %8646 = vmatpush1.msra.mxu0 %v8191
  %8647 = vmatprep.subr.mxu0 %v8196
  %8648 = vmatpush1.msra.mxu0 %v8195
  %8649 = vmatprep.subr.mxu0 %v8200
  %8650 = vmatpush1.msra.mxu0 %v8199
  %8651 = vmatprep.subr.mxu0 %v8204
  %8652 = vmatpush1.msra.mxu0 %v8203
  %8653 = vmatprep.subr.mxu0 %v8208
  %8654 = vmatpush1.msra.mxu0 %v8207
  %8655 = vmatprep.subr.mxu0 %v8212
  %8656 = vmatpush1.msra.mxu0 %v8211
  %8657 = vmatprep.subr.mxu0 %v8216
  %8658 = vmatpush1.msra.mxu0 %v8215
  %8659 = vmatprep.subr.mxu0 %v8220
  %8660 = vmatpush1.msra.mxu0 %v8219
  %8661 = vmatprep.subr.mxu0 %v8224
  %8662 = vmatpush1.msra.mxu0 %v8223
  %8663 = vmatprep.subr.mxu0 %v8228
  %8664 = vmatpush1.msra.mxu0 %v8227
  %8665 = vmatprep.subr.mxu0 %v8232
  %8666 = vmatpush1.msra.mxu0 %v8231
  %8667 = vmatprep.mubr.f32.mxu0 %v7975
  %8668 = vmatmul.mubr.f32.gmra.mrb[0].mxu0 %v7974
  %v8669 = vpop.f32.mrb[0].mxu0
  %v8670 = vadd.f32 %v8599, %v8669
  %v8671 = vpop.f32.mrb[0].mxu0
  %v8672 = vadd.f32 %v8601, %v8671
  %8673 = vdwg.mxu0
  %8674 = vmatprep.subr.mxu0 %v8236
  %8675 = vmatpush1.msra.mxu0 %v8235
  %8676 = vmatprep.subr.mxu0 %v8240
  %8677 = vmatpush1.msra.mxu0 %v8239
  %8678 = vmatprep.subr.mxu0 %v8244
  %8679 = vmatpush1.msra.mxu0 %v8243
  %8680 = vmatprep.subr.mxu0 %v8248
  %8681 = vmatpush1.msra.mxu0 %v8247
  %8682 = vmatprep.subr.mxu0 %v8252
  %8683 = vmatpush1.msra.mxu0 %v8251
  %8684 = vmatprep.subr.mxu0 %v8256
  %8685 = vmatpush1.msra.mxu0 %v8255
  %8686 = vmatprep.subr.mxu0 %v8260
  %8687 = vmatpush1.msra.mxu0 %v8259
  %8688 = vmatprep.subr.mxu0 %v8264
  %8689 = vmatpush1.msra.mxu0 %v8263
  %8690 = vmatprep.subr.mxu0 %v8268
  %8691 = vmatpush1.msra.mxu0 %v8267
  %8692 = vmatprep.subr.mxu0 %v8272
  %8693 = vmatpush1.msra.mxu0 %v8271
  %8694 = vmatprep.subr.mxu0 %v8276
  %8695 = vmatpush1.msra.mxu0 %v8275
  %8696 = vmatprep.subr.mxu0 %v8280
  %8697 = vmatpush1.msra.mxu0 %v8279
  %8698 = vmatprep.subr.mxu0 %v8284
  %8699 = vmatpush1.msra.mxu0 %v8283
  %8700 = vmatprep.subr.mxu0 %v8288
  %8701 = vmatpush1.msra.mxu0 %v8287
  %8702 = vmatprep.subr.mxu0 %v8292
  %8703 = vmatpush1.msra.mxu0 %v8291
  %8704 = vmatprep.subr.mxu0 %v8296
  %8705 = vmatpush1.msra.mxu0 %v8295
  %8706 = vmatprep.subr.mxu0 0.0
  %8707 = vmatpush1.msra.mxu0 0.0
  %8708 = vmatprep.subr.mxu0 0.0
  %8709 = vmatpush1.msra.mxu0 0.0
  %8710 = vmatprep.subr.mxu0 0.0
  %8711 = vmatpush1.msra.mxu0 0.0
  %8712 = vmatprep.subr.mxu0 0.0
  %8713 = vmatpush1.msra.mxu0 0.0
  %8714 = vmatprep.subr.mxu0 0.0
  %8715 = vmatpush1.msra.mxu0 0.0
  %8716 = vmatprep.subr.mxu0 0.0
  %8717 = vmatpush1.msra.mxu0 0.0
  %8718 = vmatprep.subr.mxu0 0.0
  %8719 = vmatpush1.msra.mxu0 0.0
  %8720 = vmatprep.subr.mxu0 0.0
  %8721 = vmatpush1.msra.mxu0 0.0
  %8722 = vmatprep.subr.mxu0 0.0
  %8723 = vmatpush1.msra.mxu0 0.0
  %8724 = vmatprep.subr.mxu0 0.0
  %8725 = vmatpush1.msra.mxu0 0.0
  %8726 = vmatprep.subr.mxu0 0.0
  %8727 = vmatpush1.msra.mxu0 0.0
  %8728 = vmatprep.subr.mxu0 0.0
  %8729 = vmatpush1.msra.mxu0 0.0
  %8730 = vmatprep.subr.mxu0 0.0
  %8731 = vmatpush1.msra.mxu0 0.0
  %8732 = vmatprep.subr.mxu0 0.0
  %8733 = vmatpush1.msra.mxu0 0.0
  %8734 = vmatprep.subr.mxu0 0.0
  %8735 = vmatpush1.msra.mxu0 0.0
  %8736 = vmatprep.subr.mxu0 0.0
  %8737 = vmatpush1.msra.mxu0 0.0
  %8738 = vmatprep.mubr.f32.mxu0 0.0
  %8739 = vmatmul.mubr.f32.gmra.mrb[0].mxu0 %v7976
  %v8740 = vpop.f32.mrb[0].mxu0
  %v8741 = vadd.f32 %v8670, %v8740
  %v8742 = vpop.f32.mrb[0].mxu0
  %v8743 = vadd.f32 %v8672, %v8742
  %8744 = vdwg.mxu0
  %v8745 = vmax.f32 %v8528, 0.0
  %v8746 = vmax.f32 %v8530, 0.0
  %v8747 = vmax.f32 %v8741, 0.0
  %v8748 = vmax.f32 %v8743, 0.0
  %v8749 = vld [vmem:[%s18] sm:$0xff]
  %v8750 = vld [vmem:[%s18 + $0x8] sm:$0xff]
  %v8751 = vld [vmem:[%s18 + $0x10] sm:$0xff]
  %v8752 = vld [vmem:[%s18 + $0x18] sm:$0xff]
  %v8753 = vld [vmem:[%s18 + $0x20] sm:$0xff]
  %v8754 = vld [vmem:[%s18 + $0x28] sm:$0xff]
  %v8755 = vld [vmem:[%s18 + $0x30] sm:$0xff]
  %v8756 = vld [vmem:[%s18 + $0x38] sm:$0xff]
  %v8757 = vld [vmem:[%s18 + $0x40] sm:$0xff]
  %v8758 = vld [vmem:[%s18 + $0x48] sm:$0xff]
  %v8759 = vld [vmem:[%s18 + $0x50] sm:$0xff]
  %v8760 = vld [vmem:[%s18 + $0x58] sm:$0xff]
  %v8761 = vld [vmem:[%s18 + $0x60] sm:$0xff]
  %v8762 = vld [vmem:[%s18 + $0x68] sm:$0xff]
  %v8763 = vld [vmem:[%s18 + $0x70] sm:$0xff]
  %v8764 = vld [vmem:[%s18 + $0x78] sm:$0xff]
  %v8765 = vld [vmem:[%s18 + $0x80] sm:$0xff]
  %v8766 = vld [vmem:[%s18 + $0x88] sm:$0xff]
  %v8767 = vld [vmem:[%s18 + $0x90] sm:$0xff]
  %v8768 = vld [vmem:[%s18 + $0x98] sm:$0xff]
  %v8769 = vld [vmem:[%s18 + $0xa0] sm:$0xff]
  %v8770 = vld [vmem:[%s18 + $0xa8] sm:$0xff]
  %v8771 = vld [vmem:[%s18 + $0xb0] sm:$0xff]
  %v8772 = vld [vmem:[%s18 + $0xb8] sm:$0xff]
  %v8773 = vld [vmem:[%s18 + $0xc0] sm:$0xff]
  %v8774 = vld [vmem:[%s18 + $0xc8] sm:$0xff]
  %v8775 = vld [vmem:[%s18 + $0xd0] sm:$0xff]
  %v8776 = vld [vmem:[%s18 + $0xd8] sm:$0xff]
  %v8777 = vld [vmem:[%s18 + $0xe0] sm:$0xff]
  %v8778 = vld [vmem:[%s18 + $0xe8] sm:$0xff]
  %v8779 = vld [vmem:[%s18 + $0xf0] sm:$0xff]
  %v8780 = vld [vmem:[%s18 + $0xf8] sm:$0xff]
  %v8781 = vld [vmem:[%s18 + $0x100] sm:$0xff]
  %v8782 = vld [vmem:[%s18 + $0x108] sm:$0xff]
  %v8783 = vld [vmem:[%s18 + $0x110] sm:$0xff]
  %v8784 = vld [vmem:[%s18 + $0x118] sm:$0xff]
  %v8785 = vld [vmem:[%s18 + $0x120] sm:$0xff]
  %v8786 = vld [vmem:[%s18 + $0x128] sm:$0xff]
  %v8787 = vld [vmem:[%s18 + $0x130] sm:$0xff]
  %v8788 = vld [vmem:[%s18 + $0x138] sm:$0xff]
  %v8789 = vld [vmem:[%s18 + $0x140] sm:$0xff]
  %v8790 = vld [vmem:[%s18 + $0x148] sm:$0xff]
  %v8791 = vld [vmem:[%s18 + $0x150] sm:$0xff]
  %v8792 = vld [vmem:[%s18 + $0x158] sm:$0xff]
  %v8793 = vld [vmem:[%s18 + $0x160] sm:$0xff]
  %v8794 = vld [vmem:[%s18 + $0x168] sm:$0xff]
  %v8795 = vld [vmem:[%s18 + $0x170] sm:$0xff]
  %v8796 = vld [vmem:[%s18 + $0x178] sm:$0xff]
  %v8797 = vld [vmem:[%s18 + $0x180] sm:$0xff]
  %v8798 = vld [vmem:[%s18 + $0x188] sm:$0xff]
  %v8799 = vld [vmem:[%s18 + $0x190] sm:$0xff]
  %v8800 = vld [vmem:[%s18 + $0x198] sm:$0xff]
  %v8801 = vld [vmem:[%s18 + $0x1a0] sm:$0xff]
  %v8802 = vld [vmem:[%s18 + $0x1a8] sm:$0xff]
  %v8803 = vld [vmem:[%s18 + $0x1b0] sm:$0xff]
  %v8804 = vld [vmem:[%s18 + $0x1b8] sm:$0xff]
  %v8805 = vld [vmem:[%s18 + $0x1c0] sm:$0xff]
  %v8806 = vld [vmem:[%s18 + $0x1c8] sm:$0xff]
  %v8807 = vld [vmem:[%s18 + $0x1d0] sm:$0xff]
  %v8808 = vld [vmem:[%s18 + $0x1d8] sm:$0xff]
  %v8809 = vld [vmem:[%s18 + $0x1e0] sm:$0xff]
  %v8810 = vld [vmem:[%s18 + $0x1e8] sm:$0xff]
  %v8811 = vld [vmem:[%s18 + $0x1f0] sm:$0xff]
  %v8812 = vld [vmem:[%s18 + $0x1f8] sm:$0xff]
  %v8813 = vld [vmem:[%s18 + $0x200] sm:$0xff]
  %v8814 = vld [vmem:[%s18 + $0x208] sm:$0xff]
  %v8815 = vld [vmem:[%s18 + $0x210] sm:$0xff]
  %v8816 = vld [vmem:[%s18 + $0x218] sm:$0xff]
  %v8817 = vld [vmem:[%s18 + $0x220] sm:$0xff]
  %v8818 = vld [vmem:[%s18 + $0x228] sm:$0xff]
  %v8819 = vld [vmem:[%s18 + $0x230] sm:$0xff]
  %v8820 = vld [vmem:[%s18 + $0x238] sm:$0xff]
  %v8821 = vld [vmem:[%s18 + $0x240] sm:$0xff]
  %v8822 = vld [vmem:[%s18 + $0x248] sm:$0xff]
  %v8823 = vld [vmem:[%s18 + $0x250] sm:$0xff]
  %v8824 = vld [vmem:[%s18 + $0x258] sm:$0xff]
  %v8825 = vld [vmem:[%s18 + $0x260] sm:$0xff]
  %v8826 = vld [vmem:[%s18 + $0x268] sm:$0xff]
  %v8827 = vld [vmem:[%s18 + $0x270] sm:$0xff]
  %v8828 = vld [vmem:[%s18 + $0x278] sm:$0xff]
  %v8829 = vld [vmem:[%s18 + $0x280] sm:$0xff]
  %v8830 = vld [vmem:[%s18 + $0x288] sm:$0xff]
  %v8831 = vld [vmem:[%s18 + $0x290] sm:$0xff]
  %v8832 = vld [vmem:[%s18 + $0x298] sm:$0xff]
  %v8833 = vld [vmem:[%s18 + $0x2a0] sm:$0xff]
  %v8834 = vld [vmem:[%s18 + $0x2a8] sm:$0xff]
  %v8835 = vld [vmem:[%s18 + $0x2b0] sm:$0xff]
  %v8836 = vld [vmem:[%s18 + $0x2b8] sm:$0xff]
  %v8837 = vld [vmem:[%s18 + $0x2c0] sm:$0xff]
  %v8838 = vld [vmem:[%s18 + $0x2c8] sm:$0xff]
  %v8839 = vld [vmem:[%s18 + $0x2d0] sm:$0xff]
  %v8840 = vld [vmem:[%s18 + $0x2d8] sm:$0xff]
  %v8841 = vld [vmem:[%s18 + $0x2e0] sm:$0xff]
  %v8842 = vld [vmem:[%s18 + $0x2e8] sm:$0xff]
  %v8843 = vld [vmem:[%s18 + $0x2f0] sm:$0xff]
  %v8844 = vld [vmem:[%s18 + $0x2f8] sm:$0xff]
  %v8845 = vld [vmem:[%s18 + $0x300] sm:$0xff]
  %v8846 = vld [vmem:[%s18 + $0x308] sm:$0xff]
  %v8847 = vld [vmem:[%s18 + $0x310] sm:$0xff]
  %v8848 = vld [vmem:[%s18 + $0x318] sm:$0xff]
  %v8849 = vld [vmem:[%s18 + $0x320] sm:$0xff]
  %v8850 = vld [vmem:[%s18 + $0x328] sm:$0xff]
  %v8851 = vld [vmem:[%s18 + $0x330] sm:$0xff]
  %v8852 = vld [vmem:[%s18 + $0x338] sm:$0xff]
  %v8853 = vld [vmem:[%s18 + $0x340] sm:$0xff]
  %v8854 = vld [vmem:[%s18 + $0x348] sm:$0xff]
  %v8855 = vld [vmem:[%s18 + $0x350] sm:$0xff]
  %v8856 = vld [vmem:[%s18 + $0x358] sm:$0xff]
  %v8857 = vld [vmem:[%s18 + $0x360] sm:$0xff]
  %v8858 = vld [vmem:[%s18 + $0x368] sm:$0xff]
  %v8859 = vld [vmem:[%s18 + $0x370] sm:$0xff]
  %v8860 = vld [vmem:[%s18 + $0x378] sm:$0xff]
  %v8861 = vld [vmem:[%s1] sm:$0xff]
  %v8862 = vld [vmem:[%s1 + $0x8] sm:$0xff]
  %v8863 = vld [vmem:[%s1 + $0x10] sm:$0xff]
  %v8864 = vld [vmem:[%s1 + $0x18] sm:$0xff]
  %v8865 = vld [vmem:[%s19] sm:$0xff]
  %v8866 = vld [vmem:[%s19 + $0x8] sm:$0xff]
  %v8867 = vld [vmem:[%s19 + $0x10] sm:$0xff]
  %v8868 = vld [vmem:[%s19 + $0x18] sm:$0xff]
  %v8869 = vld [vmem:[%s19 + $0x20] sm:$0xff]
  %v8870 = vld [vmem:[%s19 + $0x28] sm:$0xff]
  %v8871 = vld [vmem:[%s19 + $0x30] sm:$0xff]
  %v8872 = vld [vmem:[%s19 + $0x38] sm:$0xff]
  %v8873 = vld [vmem:[%s19 + $0x40] sm:$0xff]
  %v8874 = vld [vmem:[%s19 + $0x48] sm:$0xff]
  %v8875 = vld [vmem:[%s19 + $0x50] sm:$0xff]
  %v8876 = vld [vmem:[%s19 + $0x58] sm:$0xff]
  %v8877 = vld [vmem:[%s19 + $0x60] sm:$0xff]
  %v8878 = vld [vmem:[%s19 + $0x68] sm:$0xff]
  %v8879 = vld [vmem:[%s19 + $0x70] sm:$0xff]
  %v8880 = vld [vmem:[%s19 + $0x78] sm:$0xff]
  %v8881 = vld [vmem:[%s19 + $0x80] sm:$0xff]
  %v8882 = vld [vmem:[%s19 + $0x88] sm:$0xff]
  %v8883 = vld [vmem:[%s19 + $0x90] sm:$0xff]
  %v8884 = vld [vmem:[%s19 + $0x98] sm:$0xff]
  %v8885 = vld [vmem:[%s19 + $0xa0] sm:$0xff]
  %v8886 = vld [vmem:[%s19 + $0xa8] sm:$0xff]
  %v8887 = vld [vmem:[%s19 + $0xb0] sm:$0xff]
  %v8888 = vld [vmem:[%s19 + $0xb8] sm:$0xff]
  %v8889 = vld [vmem:[%s19 + $0xc0] sm:$0xff]
  %v8890 = vld [vmem:[%s19 + $0xc8] sm:$0xff]
  %v8891 = vld [vmem:[%s19 + $0xd0] sm:$0xff]
  %v8892 = vld [vmem:[%s19 + $0xd8] sm:$0xff]
  %v8893 = vld [vmem:[%s19 + $0xe0] sm:$0xff]
  %v8894 = vld [vmem:[%s19 + $0xe8] sm:$0xff]
  %v8895 = vld [vmem:[%s19 + $0xf0] sm:$0xff]
  %v8896 = vld [vmem:[%s19 + $0xf8] sm:$0xff]
  %v8897 = vld [vmem:[%s19 + $0x100] sm:$0xff]
  %v8898 = vld [vmem:[%s19 + $0x108] sm:$0xff]
  %v8899 = vld [vmem:[%s19 + $0x110] sm:$0xff]
  %v8900 = vld [vmem:[%s19 + $0x118] sm:$0xff]
  %v8901 = vld [vmem:[%s19 + $0x120] sm:$0xff]
  %v8902 = vld [vmem:[%s19 + $0x128] sm:$0xff]
  %v8903 = vld [vmem:[%s19 + $0x130] sm:$0xff]
  %v8904 = vld [vmem:[%s19 + $0x138] sm:$0xff]
  %v8905 = vld [vmem:[%s19 + $0x140] sm:$0xff]
  %v8906 = vld [vmem:[%s19 + $0x148] sm:$0xff]
  %v8907 = vld [vmem:[%s19 + $0x150] sm:$0xff]
  %v8908 = vld [vmem:[%s19 + $0x158] sm:$0xff]
  %v8909 = vld [vmem:[%s19 + $0x160] sm:$0xff]
  %v8910 = vld [vmem:[%s19 + $0x168] sm:$0xff]
  %v8911 = vld [vmem:[%s19 + $0x170] sm:$0xff]
  %v8912 = vld [vmem:[%s19 + $0x178] sm:$0xff]
  %v8913 = vld [vmem:[%s19 + $0x180] sm:$0xff]
  %v8914 = vld [vmem:[%s19 + $0x188] sm:$0xff]
  %v8915 = vld [vmem:[%s19 + $0x190] sm:$0xff]
  %v8916 = vld [vmem:[%s19 + $0x198] sm:$0xff]
  %v8917 = vld [vmem:[%s19 + $0x1a0] sm:$0xff]
  %v8918 = vld [vmem:[%s19 + $0x1a8] sm:$0xff]
  %v8919 = vld [vmem:[%s19 + $0x1b0] sm:$0xff]
  %v8920 = vld [vmem:[%s19 + $0x1b8] sm:$0xff]
  %v8921 = vld [vmem:[%s19 + $0x1c0] sm:$0xff]
  %v8922 = vld [vmem:[%s19 + $0x1c8] sm:$0xff]
  %v8923 = vld [vmem:[%s19 + $0x1d0] sm:$0xff]
  %v8924 = vld [vmem:[%s19 + $0x1d8] sm:$0xff]
  %v8925 = vld [vmem:[%s19 + $0x1e0] sm:$0xff]
  %v8926 = vld [vmem:[%s19 + $0x1e8] sm:$0xff]
  %v8927 = vld [vmem:[%s19 + $0x1f0] sm:$0xff]
  %v8928 = vld [vmem:[%s19 + $0x1f8] sm:$0xff]
  %v8929 = vld [vmem:[%s19 + $0x200] sm:$0xff]
  %v8930 = vld [vmem:[%s19 + $0x208] sm:$0xff]
  %v8931 = vld [vmem:[%s19 + $0x210] sm:$0xff]
  %v8932 = vld [vmem:[%s19 + $0x218] sm:$0xff]
  %v8933 = vld [vmem:[%s19 + $0x220] sm:$0xff]
  %v8934 = vld [vmem:[%s19 + $0x228] sm:$0xff]
  %v8935 = vld [vmem:[%s19 + $0x230] sm:$0xff]
  %v8936 = vld [vmem:[%s19 + $0x238] sm:$0xff]
  %v8937 = vld [vmem:[%s19 + $0x240] sm:$0xff]
  %v8938 = vld [vmem:[%s19 + $0x248] sm:$0xff]
  %v8939 = vld [vmem:[%s19 + $0x250] sm:$0xff]
  %v8940 = vld [vmem:[%s19 + $0x258] sm:$0xff]
  %v8941 = vld [vmem:[%s19 + $0x260] sm:$0xff]
  %v8942 = vld [vmem:[%s19 + $0x268] sm:$0xff]
  %v8943 = vld [vmem:[%s19 + $0x270] sm:$0xff]
  %v8944 = vld [vmem:[%s19 + $0x278] sm:$0xff]
  %v8945 = vld [vmem:[%s19 + $0x280] sm:$0xff]
  %v8946 = vld [vmem:[%s19 + $0x288] sm:$0xff]
  %v8947 = vld [vmem:[%s19 + $0x290] sm:$0xff]
  %v8948 = vld [vmem:[%s19 + $0x298] sm:$0xff]
  %v8949 = vld [vmem:[%s19 + $0x2a0] sm:$0xff]
  %v8950 = vld [vmem:[%s19 + $0x2a8] sm:$0xff]
  %v8951 = vld [vmem:[%s19 + $0x2b0] sm:$0xff]
  %v8952 = vld [vmem:[%s19 + $0x2b8] sm:$0xff]
  %v8953 = vld [vmem:[%s19 + $0x2c0] sm:$0xff]
  %v8954 = vld [vmem:[%s19 + $0x2c8] sm:$0xff]
  %v8955 = vld [vmem:[%s19 + $0x2d0] sm:$0xff]
  %v8956 = vld [vmem:[%s19 + $0x2d8] sm:$0xff]
  %v8957 = vld [vmem:[%s19 + $0x2e0] sm:$0xff]
  %v8958 = vld [vmem:[%s19 + $0x2e8] sm:$0xff]
  %v8959 = vld [vmem:[%s19 + $0x2f0] sm:$0xff]
  %v8960 = vld [vmem:[%s19 + $0x2f8] sm:$0xff]
  %v8961 = vld [vmem:[%s19 + $0x300] sm:$0xff]
  %v8962 = vld [vmem:[%s19 + $0x308] sm:$0xff]
  %v8963 = vld [vmem:[%s19 + $0x310] sm:$0xff]
  %v8964 = vld [vmem:[%s19 + $0x318] sm:$0xff]
  %vm8965 = vcmask 130048
  %v8967 = vsel %vm8965, %v8864, 0
  %8969 = vmatprep.subr.mxu0 %v8866
  %8970 = vmatpush1.msra.mxu0 %v8865
  %8971 = vmatprep.subr.mxu0 %v8868
  %8972 = vmatpush1.msra.mxu0 %v8867
  %8973 = vmatprep.subr.mxu0 %v8870
  %8974 = vmatpush1.msra.mxu0 %v8869
  %8975 = vmatprep.subr.mxu0 %v8872
  %8976 = vmatpush1.msra.mxu0 %v8871
  %8977 = vmatprep.subr.mxu0 %v8874
  %8978 = vmatpush1.msra.mxu0 %v8873
  %8979 = vmatprep.subr.mxu0 %v8876
  %8980 = vmatpush1.msra.mxu0 %v8875
  %8981 = vmatprep.subr.mxu0 %v8878
  %8982 = vmatpush1.msra.mxu0 %v8877
  %8983 = vmatprep.subr.mxu0 %v8880
  %8984 = vmatpush1.msra.mxu0 %v8879
  %8985 = vmatprep.subr.mxu0 %v8882
  %8986 = vmatpush1.msra.mxu0 %v8881
  %8987 = vmatprep.subr.mxu0 %v8884
  %8988 = vmatpush1.msra.mxu0 %v8883
  %8989 = vmatprep.subr.mxu0 %v8886
  %8990 = vmatpush1.msra.mxu0 %v8885
  %8991 = vmatprep.subr.mxu0 %v8888
  %8992 = vmatpush1.msra.mxu0 %v8887
  %8993 = vmatprep.subr.mxu0 %v8890
  %8994 = vmatpush1.msra.mxu0 %v8889
  %8995 = vmatprep.subr.mxu0 %v8892
  %8996 = vmatpush1.msra.mxu0 %v8891
  %8997 = vmatprep.subr.mxu0 %v8894
  %8998 = vmatpush1.msra.mxu0 %v8893
  %8999 = vmatprep.subr.mxu0 %v8896
  %9000 = vmatpush1.msra.mxu0 %v8895
  %9001 = vmatprep.subr.mxu0 %v8898
  %9002 = vmatpush1.msra.mxu0 %v8897
  %9003 = vmatprep.subr.mxu0 %v8900
  %9004 = vmatpush1.msra.mxu0 %v8899
  %9005 = vmatprep.subr.mxu0 %v8902
  %9006 = vmatpush1.msra.mxu0 %v8901
  %9007 = vmatprep.subr.mxu0 %v8904
  %9008 = vmatpush1.msra.mxu0 %v8903
  %9009 = vmatprep.subr.mxu0 %v8906
  %9010 = vmatpush1.msra.mxu0 %v8905
  %9011 = vmatprep.subr.mxu0 %v8908
  %9012 = vmatpush1.msra.mxu0 %v8907
  %9013 = vmatprep.subr.mxu0 %v8910
  %9014 = vmatpush1.msra.mxu0 %v8909
  %9015 = vmatprep.subr.mxu0 %v8912
  %9016 = vmatpush1.msra.mxu0 %v8911
  %9017 = vmatprep.subr.mxu0 %v8914
  %9018 = vmatpush1.msra.mxu0 %v8913
  %9019 = vmatprep.subr.mxu0 %v8916
  %9020 = vmatpush1.msra.mxu0 %v8915
  %9021 = vmatprep.subr.mxu0 %v8918
  %9022 = vmatpush1.msra.mxu0 %v8917
  %9023 = vmatprep.subr.mxu0 %v8920
  %9024 = vmatpush1.msra.mxu0 %v8919
  %9025 = vmatprep.subr.mxu0 %v8922
  %9026 = vmatpush1.msra.mxu0 %v8921
  %9027 = vmatprep.subr.mxu0 %v8924
  %9028 = vmatpush1.msra.mxu0 %v8923
  %9029 = vmatprep.subr.mxu0 %v8926
  %9030 = vmatpush1.msra.mxu0 %v8925
  %9031 = vmatprep.subr.mxu0 %v8928
  %9032 = vmatpush1.msra.mxu0 %v8927
  %9033 = vmatprep.mubr.f32.mxu0 %v8862
  %9034 = vmatmul.mubr.f32.gmra.mrb[0].mxu0 %v8861
  %v9035 = vpop.f32.mrb[0].mxu0
  %v9036 = vadd.f32 0.0, %v9035
  %v9037 = vpop.f32.mrb[0].mxu0
  %v9038 = vadd.f32 0.0, %v9037
  %9039 = vdwg.mxu0
  %9040 = vmatprep.subr.mxu0 %v8930
  %9041 = vmatpush1.msra.mxu0 %v8929
  %9042 = vmatprep.subr.mxu0 %v8932
  %9043 = vmatpush1.msra.mxu0 %v8931
  %9044 = vmatprep.subr.mxu0 %v8934
  %9045 = vmatpush1.msra.mxu0 %v8933
  %9046 = vmatprep.subr.mxu0 %v8936
  %9047 = vmatpush1.msra.mxu0 %v8935
  %9048 = vmatprep.subr.mxu0 %v8938
  %9049 = vmatpush1.msra.mxu0 %v8937
  %9050 = vmatprep.subr.mxu0 %v8940
  %9051 = vmatpush1.msra.mxu0 %v8939
  %9052 = vmatprep.subr.mxu0 %v8942
  %9053 = vmatpush1.msra.mxu0 %v8941
  %9054 = vmatprep.subr.mxu0 %v8944
  %9055 = vmatpush1.msra.mxu0 %v8943
  %9056 = vmatprep.subr.mxu0 %v8946
  %9057 = vmatpush1.msra.mxu0 %v8945
  %9058 = vmatprep.subr.mxu0 %v8948
  %9059 = vmatpush1.msra.mxu0 %v8947
  %9060 = vmatprep.subr.mxu0 %v8950
  %9061 = vmatpush1.msra.mxu0 %v8949
  %9062 = vmatprep.subr.mxu0 %v8952
  %9063 = vmatpush1.msra.mxu0 %v8951
  %9064 = vmatprep.subr.mxu0 %v8954
  %9065 = vmatpush1.msra.mxu0 %v8953
  %9066 = vmatprep.subr.mxu0 %v8956
  %9067 = vmatpush1.msra.mxu0 %v8955
  %9068 = vmatprep.subr.mxu0 %v8958
  %9069 = vmatpush1.msra.mxu0 %v8957
  %9070 = vmatprep.subr.mxu0 %v8960
  %9071 = vmatpush1.msra.mxu0 %v8959
  %9072 = vmatprep.subr.mxu0 %v8962
  %9073 = vmatpush1.msra.mxu0 %v8961
  %9074 = vmatprep.subr.mxu0 %v8964
  %9075 = vmatpush1.msra.mxu0 %v8963
  %9076 = vmatprep.subr.mxu0 0.0
  %9077 = vmatpush1.msra.mxu0 0.0
  %9078 = vmatprep.subr.mxu0 0.0
  %9079 = vmatpush1.msra.mxu0 0.0
  %9080 = vmatprep.subr.mxu0 0.0
  %9081 = vmatpush1.msra.mxu0 0.0
  %9082 = vmatprep.subr.mxu0 0.0
  %9083 = vmatpush1.msra.mxu0 0.0
  %9084 = vmatprep.subr.mxu0 0.0
  %9085 = vmatpush1.msra.mxu0 0.0
  %9086 = vmatprep.subr.mxu0 0.0
  %9087 = vmatpush1.msra.mxu0 0.0
  %9088 = vmatprep.subr.mxu0 0.0
  %9089 = vmatpush1.msra.mxu0 0.0
  %9090 = vmatprep.subr.mxu0 0.0
  %9091 = vmatpush1.msra.mxu0 0.0
  %9092 = vmatprep.subr.mxu0 0.0
  %9093 = vmatpush1.msra.mxu0 0.0
  %9094 = vmatprep.subr.mxu0 0.0
  %9095 = vmatpush1.msra.mxu0 0.0
  %9096 = vmatprep.subr.mxu0 0.0
  %9097 = vmatpush1.msra.mxu0 0.0
  %9098 = vmatprep.subr.mxu0 0.0
  %9099 = vmatpush1.msra.mxu0 0.0
  %9100 = vmatprep.subr.mxu0 0.0
  %9101 = vmatpush1.msra.mxu0 0.0
  %9102 = vmatprep.subr.mxu0 0.0
  %9103 = vmatpush1.msra.mxu0 0.0
  %9104 = vmatprep.mubr.f32.mxu0 %v8967
  %9105 = vmatmul.mubr.f32.gmra.mrb[0].mxu0 %v8863
  %v9106 = vpop.f32.mrb[0].mxu0
  %v9107 = vadd.f32 %v9036, %v9106
  %v9108 = vpop.f32.mrb[0].mxu0
  %v9109 = vadd.f32 %v9038, %v9108
  %9110 = vdwg.mxu0
  %vm9111 = vcmask 523264
  %v9113 = vsel %vm9111, %v8748, 0
  %9115 = vmatprep.subr.mxu0 %v8750
  %9116 = vmatpush1.msra.mxu0 %v8749
  %9117 = vmatprep.subr.mxu0 %v8752
  %9118 = vmatpush1.msra.mxu0 %v8751
  %9119 = vmatprep.subr.mxu0 %v8754
  %9120 = vmatpush1.msra.mxu0 %v8753
  %9121 = vmatprep.subr.mxu0 %v8756
  %9122 = vmatpush1.msra.mxu0 %v8755
  %9123 = vmatprep.subr.mxu0 %v8758
  %9124 = vmatpush1.msra.mxu0 %v8757
  %9125 = vmatprep.subr.mxu0 %v8760
  %9126 = vmatpush1.msra.mxu0 %v8759
  %9127 = vmatprep.subr.mxu0 %v8762
  %9128 = vmatpush1.msra.mxu0 %v8761
  %9129 = vmatprep.subr.mxu0 %v8764
  %9130 = vmatpush1.msra.mxu0 %v8763
  %9131 = vmatprep.subr.mxu0 %v8766
  %9132 = vmatpush1.msra.mxu0 %v8765
  %9133 = vmatprep.subr.mxu0 %v8768
  %9134 = vmatpush1.msra.mxu0 %v8767
  %9135 = vmatprep.subr.mxu0 %v8770
  %9136 = vmatpush1.msra.mxu0 %v8769
  %9137 = vmatprep.subr.mxu0 %v8772
  %9138 = vmatpush1.msra.mxu0 %v8771
  %9139 = vmatprep.subr.mxu0 %v8774
  %9140 = vmatpush1.msra.mxu0 %v8773
  %9141 = vmatprep.subr.mxu0 %v8776
  %9142 = vmatpush1.msra.mxu0 %v8775
  %9143 = vmatprep.subr.mxu0 %v8778
  %9144 = vmatpush1.msra.mxu0 %v8777
  %9145 = vmatprep.subr.mxu0 %v8780
  %9146 = vmatpush1.msra.mxu0 %v8779
  %9147 = vmatprep.subr.mxu0 %v8782
  %9148 = vmatpush1.msra.mxu0 %v8781
  %9149 = vmatprep.subr.mxu0 %v8784
  %9150 = vmatpush1.msra.mxu0 %v8783
  %9151 = vmatprep.subr.mxu0 %v8786
  %9152 = vmatpush1.msra.mxu0 %v8785
  %9153 = vmatprep.subr.mxu0 %v8788
  %9154 = vmatpush1.msra.mxu0 %v8787
  %9155 = vmatprep.subr.mxu0 %v8790
  %9156 = vmatpush1.msra.mxu0 %v8789
  %9157 = vmatprep.subr.mxu0 %v8792
  %9158 = vmatpush1.msra.mxu0 %v8791
  %9159 = vmatprep.subr.mxu0 %v8794
  %9160 = vmatpush1.msra.mxu0 %v8793
  %9161 = vmatprep.subr.mxu0 %v8796
  %9162 = vmatpush1.msra.mxu0 %v8795
  %9163 = vmatprep.subr.mxu0 %v8798
  %9164 = vmatpush1.msra.mxu0 %v8797
  %9165 = vmatprep.subr.mxu0 %v8800
  %9166 = vmatpush1.msra.mxu0 %v8799
  %9167 = vmatprep.subr.mxu0 %v8802
  %9168 = vmatpush1.msra.mxu0 %v8801
  %9169 = vmatprep.subr.mxu0 %v8804
  %9170 = vmatpush1.msra.mxu0 %v8803
  %9171 = vmatprep.subr.mxu0 %v8806
  %9172 = vmatpush1.msra.mxu0 %v8805
  %9173 = vmatprep.subr.mxu0 %v8808
  %9174 = vmatpush1.msra.mxu0 %v8807
  %9175 = vmatprep.subr.mxu0 %v8810
  %9176 = vmatpush1.msra.mxu0 %v8809
  %9177 = vmatprep.subr.mxu0 %v8812
  %9178 = vmatpush1.msra.mxu0 %v8811
  %9179 = vmatprep.mubr.f32.mxu0 %v8746
  %9180 = vmatmul.mubr.f32.gmra.mrb[0].mxu0 %v8745
  %v9181 = vpop.f32.mrb[0].mxu0
  %v9182 = vadd.f32 %v9107, %v9181
  %v9183 = vpop.f32.mrb[0].mxu0
  %v9184 = vadd.f32 %v9109, %v9183
  %9185 = vdwg.mxu0
  %9186 = vmatprep.subr.mxu0 %v8814
  %9187 = vmatpush1.msra.mxu0 %v8813
  %9188 = vmatprep.subr.mxu0 %v8816
  %9189 = vmatpush1.msra.mxu0 %v8815
  %9190 = vmatprep.subr.mxu0 %v8818
  %9191 = vmatpush1.msra.mxu0 %v8817
  %9192 = vmatprep.subr.mxu0 %v8820
  %9193 = vmatpush1.msra.mxu0 %v8819
  %9194 = vmatprep.subr.mxu0 %v8822
  %9195 = vmatpush1.msra.mxu0 %v8821
  %9196 = vmatprep.subr.mxu0 %v8824
  %9197 = vmatpush1.msra.mxu0 %v8823
  %9198 = vmatprep.subr.mxu0 %v8826
  %9199 = vmatpush1.msra.mxu0 %v8825
  %9200 = vmatprep.subr.mxu0 %v8828
  %9201 = vmatpush1.msra.mxu0 %v8827
  %9202 = vmatprep.subr.mxu0 %v8830
  %9203 = vmatpush1.msra.mxu0 %v8829
  %9204 = vmatprep.subr.mxu0 %v8832
  %9205 = vmatpush1.msra.mxu0 %v8831
  %9206 = vmatprep.subr.mxu0 %v8834
  %9207 = vmatpush1.msra.mxu0 %v8833
  %9208 = vmatprep.subr.mxu0 %v8836
  %9209 = vmatpush1.msra.mxu0 %v8835
  %9210 = vmatprep.subr.mxu0 %v8838
  %9211 = vmatpush1.msra.mxu0 %v8837
  %9212 = vmatprep.subr.mxu0 %v8840
  %9213 = vmatpush1.msra.mxu0 %v8839
  %9214 = vmatprep.subr.mxu0 %v8842
  %9215 = vmatpush1.msra.mxu0 %v8841
  %9216 = vmatprep.subr.mxu0 %v8844
  %9217 = vmatpush1.msra.mxu0 %v8843
  %9218 = vmatprep.subr.mxu0 %v8846
  %9219 = vmatpush1.msra.mxu0 %v8845
  %9220 = vmatprep.subr.mxu0 %v8848
  %9221 = vmatpush1.msra.mxu0 %v8847
  %9222 = vmatprep.subr.mxu0 %v8850
  %9223 = vmatpush1.msra.mxu0 %v8849
  %9224 = vmatprep.subr.mxu0 %v8852
  %9225 = vmatpush1.msra.mxu0 %v8851
  %9226 = vmatprep.subr.mxu0 %v8854
  %9227 = vmatpush1.msra.mxu0 %v8853
  %9228 = vmatprep.subr.mxu0 %v8856
  %9229 = vmatpush1.msra.mxu0 %v8855
  %9230 = vmatprep.subr.mxu0 %v8858
  %9231 = vmatpush1.msra.mxu0 %v8857
  %9232 = vmatprep.subr.mxu0 %v8860
  %9233 = vmatpush1.msra.mxu0 %v8859
  %9234 = vmatprep.subr.mxu0 0.0
  %9235 = vmatpush1.msra.mxu0 0.0
  %9236 = vmatprep.subr.mxu0 0.0
  %9237 = vmatpush1.msra.mxu0 0.0
  %9238 = vmatprep.subr.mxu0 0.0
  %9239 = vmatpush1.msra.mxu0 0.0
  %9240 = vmatprep.subr.mxu0 0.0
  %9241 = vmatpush1.msra.mxu0 0.0
  %9242 = vmatprep.subr.mxu0 0.0
  %9243 = vmatpush1.msra.mxu0 0.0
  %9244 = vmatprep.subr.mxu0 0.0
  %9245 = vmatpush1.msra.mxu0 0.0
  %9246 = vmatprep.subr.mxu0 0.0
  %9247 = vmatpush1.msra.mxu0 0.0
  %9248 = vmatprep.subr.mxu0 0.0
  %9249 = vmatpush1.msra.mxu0 0.0
  %9250 = vmatprep.mubr.f32.mxu0 %v9113
  %9251 = vmatmul.mubr.f32.gmra.mrb[0].mxu0 %v8747
  %v9252 = vpop.f32.mrb[0].mxu0
  %v9253 = vadd.f32 %v9182, %v9252
  %v9254 = vpop.f32.mrb[0].mxu0
  %v9255 = vadd.f32 %v9184, %v9254
  %9256 = vdwg.mxu0
  %v9257 = vld [vmem:[%s20] sm:$0x3]
  %v9259 = vlaneseq
  %v9260 = vshrl.u32 %v9259, 7
  %v9261 = vsub.s32 0, %v9260
  %v9262 = vrot.slane %v9257, %v9261
  %v9263 = vlaneseq
  %v9264 = vshrl.u32 %v9263, 7
  %v9265 = vsub.s32 1, %v9264
  %v9266 = vrot.slane %v9257, %v9265
  %v9269 = vadd.f32 %v9253, %v9262
  %v9270 = vadd.f32 %v9255, %v9266
  %v9271 = vxor.u32 %v9269, 2147483648
  %v9272 = vxor.u32 %v9270, 2147483648
  %v9273 = vmul.f32 %v9271, 1.442695
  %v9274 = vpow.pop %v9273
  %v9275 = vmul.f32 %v9272, 1.442695
  %v9276 = vpow.pop %v9275
  %v9277 = vadd.f32 %v9274, 1.0
  %v9278 = vadd.f32 %v9276, 1.0
  %v9279 = vrcp.pop %v9277
  %v9280 = vmul.f32 1.0, %v9279
  %v9281 = vrcp.pop %v9278
  %v9282 = vmul.f32 1.0, %v9281
  %9283 = vst [vmem:[%s21] sm:$0xff] %v9280
  %9284 = vst [vmem:[%s21 + $0x8] sm:$0xff] %v9282
  // Predicated region
  $region93: #{forward.1} parent=0 // pred_check
    _
  $region94: #{forward.1} parent=0 // pred_check_branch
    %9286 = sbr.rel (0) target = $region96
  $region95: #{forward.1} parent=0 // pred_region
    _
  $region96: #{forward.1} parent=0 // pred_fallthru
    _
  // Predicated region
  $region97: #{forward.1} parent=0 // pred_check
    _
  $region98: #{forward.1} parent=0 // pred_check_branch
    %9288 = sbr.rel (0) target = $region100
  $region99: #{forward.1} parent=0 // pred_region
    _
  $region100: #{forward.1} parent=0 // pred_fallthru
    _

</llo_original>
